<compile_context>
chip_gen: v6e
topology: v6e:2x2x1
jax: 0.10.0
libtpu: 0.0.40
codegen_flags: <defaults>
</compile_context>

<pallas_src>
import jax
import jax.numpy as jnp
from jax.experimental import pallas as pl
from jax.experimental.pallas import tpu as pltpu

# ---- model dimensions (from the PyTorch module) ----
C_IN, C1, C2 = 6, 16, 32
K1, K2 = 5, 3
L = 80                     # conv1 input length -> 40 after pool1 -> 20 after pool2
L4 = L // 4                # 20 : number of position-blocks (4 conv1 outputs each)
NPH = L4 + 1               # 21 : phase-array blocks per sample (includes conv1 halo)
HIDDEN = 128
NUM_CLASSES = 8
EPS = 1e-5

# ---- kernel layout constants ----
BB = 128                   # samples per grid step = lane-block width (one vreg column)
MXU_DTYPE = jnp.float32    # flip to jnp.bfloat16 on v6e/v7x if looser tolerance is OK


def _dot(a, b):
    return jnp.dot(a.astype(MXU_DTYPE), b.astype(MXU_DTYPE),
                   preferred_element_type=jnp.float32)


def fused_cnn_kernel(x_ref, a_ref, t1_ref, v_ref, t2_ref,
                     wfc1_ref, bfc1_ref, wfc2_ref, bfc2_ref, out_ref):
    """Forward pass for one block of BB samples (column index = pos_block*BB + sample)."""
    xp = x_ref[0]                                        # (4*C_IN, NPH*BB)
    W = L4 * BB                                          # 20*BB output columns

    # ---- conv1 (+ BN scale folded): all 4 output phases in 2 fused-tap matmuls ----
    h = _dot(a_ref[0], xp[:, 0:W]) + _dot(a_ref[1], xp[:, BB:BB + W])     # (4*C1, W)
    h = jnp.maximum(h + t1_ref[...], 0.0)

    # ---- maxpool1: exact element-wise max of adjacent-position phases (no gather) ----
    p1e = jnp.maximum(h[0:C1], h[C1:2 * C1])             # pooled even positions (C1, W)
    p1o = jnp.maximum(h[2 * C1:3 * C1], h[3 * C1:4 * C1])  # pooled odd positions (C1, W)

    # ---- conv2 input: stack even/odd pooled phases + zero lane-blocks (= conv2 pad) ----
    zpad = jnp.zeros((2 * C1, BB), jnp.float32)
    p1 = jnp.concatenate(
        [zpad, jnp.concatenate([p1e, p1o], axis=0), zpad], axis=1)   # (2*C1, (L4+2)*BB)

    # ---- conv2 (+ BN scale folded): even/odd output phases in 3 fused-tap matmuls ----
    g = (_dot(v_ref[0], p1[:, 0:W]) +
         _dot(v_ref[1], p1[:, BB:BB + W]) +
         _dot(v_ref[2], p1[:, 2 * BB:2 * BB + W]))                    # (2*C2, W)
    g = jnp.maximum(g + t2_ref[...], 0.0)

    # ---- maxpool2: element-wise max of even/odd conv2 phases ----
    p2 = jnp.maximum(g[0:C2], g[C2:2 * C2])              # (C2, W), column = m*BB + b

    # ---- fc1: stack the L4 pooled-position blocks along the contraction axis
    #      -> ONE (HIDDEN, C2*L4) x (C2*L4, BB) matmul ----
    p2s = jnp.concatenate([p2[:, m * BB:(m + 1) * BB] for m in range(L4)], axis=0)
    hfc = jnp.maximum(_dot(wfc1_ref[...], p2s) + bfc1_ref[...], 0.0)  # (HIDDEN, BB)
    # TODO(synk): nn.Dropout(0.25) is identity in eval mode; training RNG mask not implemented.

    # ---- fc2 (lane-dense (NUM_CLASSES, BB) store) ----
    out_ref[...] = _dot(wfc2_ref[...], hfc) + bfc2_ref[...]           # (NUM_CLASSES, BB)


def _prepare_params(params):
    """One-time host-side prep: BN fold + phase-stacked conv weights + fc reorder."""
    (c1w, c1b, g1, be1, m1, v1,
     c2w, c2b, g2, be2, m2, v2,
     fc1w, fc1b, fc2w, fc2b) = [jnp.asarray(p, jnp.float32) for p in params]

    s1 = g1 / jnp.sqrt(v1 + EPS)
    t1 = be1 + (c1b - m1) * s1
    s2 = g2 / jnp.sqrt(v2 + EPS)
    t2 = be2 + (c2b - m2) * s2
    w1f = c1w * s1[:, None, None]            # (C1, C_IN, K1)  BN scale folded
    w2f = c2w * s2[:, None, None]            # (C2, C1, K2)

    # conv1 stacked phase weights: output phase s, tap k reads input phase
    # j = (s+k) % 4 at block offset d = (s+k) // 4.
    A = jnp.zeros((2, 4 * C1, 4 * C_IN), jnp.float32)
    for s in range(4):
        for k in range(K1):
            j, d = (s + k) % 4, (s + k) // 4
            A = A.at[d, s * C1:(s + 1) * C1, j * C_IN:(j + 1) * C_IN].set(w1f[:, :, k])
    T1 = jnp.tile(t1, 4).reshape(4 * C1, 1)

    # conv2 stacked phase weights: output rows 0:C2 = even positions, C2:2*C2 = odd;
    # input rows 0:C1 = pooled-even phase, C1:2*C1 = pooled-odd phase;
    # slice offset d reads pool1 index m + d - 1 (d=0/2 hit the zero pad blocks).
    V = jnp.zeros((3, 2 * C2, 2 * C1), jnp.float32)
    V = V.at[0, 0:C2, C1:2 * C1].set(w2f[:, :, 0])          # even: pool1[2m-1]
    V = V.at[1, 0:C2, 0:C1].set(w2f[:, :, 1])               # even: pool1[2m]
    V = V.at[1, 0:C2, C1:2 * C1].set(w2f[:, :, 2])          # even: pool1[2m+1]
    V = V.at[1, C2:2 * C2, 0:C1].set(w2f[:, :, 0])          # odd:  pool1[2m]
    V = V.at[1, C2:2 * C2, C1:2 * C1].set(w2f[:, :, 1])     # odd:  pool1[2m+1]
    V = V.at[2, C2:2 * C2, 0:C1].set(w2f[:, :, 2])          # odd:  pool1[2m+2]
    T2 = jnp.tile(t2, 2).reshape(2 * C2, 1)

    # fc1 weight reordered to the kernel's (position m, channel c) contraction order
    wfc1 = fc1w.reshape(HIDDEN, C2, L4).transpose(0, 2, 1).reshape(HIDDEN, C2 * L4)
    return (A, T1, V, T2, wfc1, fc1b.reshape(HIDDEN, 1),
            fc2w, fc2b.reshape(NUM_CLASSES, 1))


def _forward_impl(x, A, T1, V, T2, wfc1, bfc1, wfc2, bfc2):
    # PyTorch heuristic: if dim 1 is not the channel dim, input is (B, L, C).
    if x.shape[1] != C_IN:
        x = jnp.transpose(x, (0, 2, 1))
    x = x.astype(jnp.float32)
    B = x.shape[0]
    nb = pl.cdiv(B, BB)
    Bp = nb * BB

    # Input relayout (fused under jit): pad batch to a BB multiple, add the conv1 halo
    # (2 each side), split positions into 4 phases and fold the batch into the lane
    # axis as the minor index:
    #   xphase[i, j*C_IN + c, q*BB + b] = x_padded[i*BB + b, c, 4q + j]  (pos 4q+j-2)
    if Bp != B:
        x = jnp.pad(x, ((0, Bp - B), (0, 0), (0, 0)))
    xpad = jnp.pad(x, ((0, 0), (0, 0), (2, 2)))                  # (Bp, C_IN, 4*NPH)
    xr = xpad.reshape(nb, BB, C_IN, NPH, 4)
    xr = jnp.transpose(xr, (0, 4, 2, 3, 1))                      # (nb, 4, C_IN, NPH, BB)
    xphase = xr.reshape(nb, 4 * C_IN, NPH * BB)

    out = pl.pallas_call(
        fused_cnn_kernel,
        out_shape=jax.ShapeDtypeStruct((NUM_CLASSES, Bp), jnp.float32),
        grid_spec=pltpu.PrefetchScalarGridSpec(
            num_scalar_prefetch=0,
            grid=(nb,),
            in_specs=[
                pl.BlockSpec((1, 4 * C_IN, NPH * BB), lambda i: (i, 0, 0)),
                pl.BlockSpec((2, 4 * C1, 4 * C_IN), lambda i: (0, 0, 0)),
                pl.BlockSpec((4 * C1, 1), lambda i: (0, 0)),
                pl.BlockSpec((3, 2 * C2, 2 * C1), lambda i: (0, 0, 0)),
                pl.BlockSpec((2 * C2, 1), lambda i: (0, 0)),
                pl.BlockSpec((HIDDEN, C2 * L4), lambda i: (0, 0)),
                pl.BlockSpec((HIDDEN, 1), lambda i: (0, 0)),
                pl.BlockSpec((NUM_CLASSES, HIDDEN), lambda i: (0, 0)),
                pl.BlockSpec((NUM_CLASSES, 1), lambda i: (0, 0)),
            ],
            out_specs=pl.BlockSpec((NUM_CLASSES, BB), lambda i: (0, i)),
        ),
        compiler_params=pltpu.CompilerParams(dimension_semantics=("parallel",)),
    )(xphase, A, T1, V, T2, wfc1, bfc1, wfc2, bfc2)

    return out.T[:B]                                             # (B, NUM_CLASSES)


def make_simple_cnn(params):
    """Prep parameters once, return a jitted forward(x)."""
    prepped = _prepare_params(params)

    @jax.jit
    def forward(x):
        return _forward_impl(x, *prepped)

    return forward


def simple_cnn_forward(x, params):
    """Convenience one-shot wrapper (prefer make_simple_cnn for repeated calls)."""
    return make_simple_cnn(params)(x)


def reference_forward(x, params):
    """Pure-JAX reference (inference-mode BN, dropout identity)."""
    (conv1_w, conv1_b, g1, be1, m1, v1,
     conv2_w, conv2_b, g2, be2, m2, v2,
     fc1_w, fc1_b, fc2_w, fc2_b) = params
    if x.shape[1] != C_IN:
        x = jnp.transpose(x, (0, 2, 1))

    def conv_bn_relu(h, w, b, g, be, m, v, pad):
        y = jax.lax.conv_general_dilated(
            h, w, window_strides=(1,), padding=[(pad, pad)],
            dimension_numbers=('NCH', 'OIH', 'NCH'),
            precision=jax.lax.Precision.HIGHEST)
        y = y + b[None, :, None]
        y = (y - m[None, :, None]) / jnp.sqrt(v[None, :, None] + EPS)
        y = y * g[None, :, None] + be[None, :, None]
        return jnp.maximum(y, 0.0)

    h = conv_bn_relu(x, conv1_w, conv1_b, g1, be1, m1, v1, 2)
    h = h.reshape(h.shape[0], h.shape[1], -1, 2).max(-1)
    h = conv_bn_relu(h, conv2_w, conv2_b, g2, be2, m2, v2, 1)
    h = h.reshape(h.shape[0], h.shape[1], -1, 2).max(-1)
    h = h.reshape(h.shape[0], -1)
    h = jnp.maximum(h @ fc1_w.T + fc1_b, 0.0)
    return h @ fc2_w.T + fc2_b


if __name__ == "__main__":
    ks = jax.random.split(jax.random.PRNGKey(0), 20)
    conv1_w = 0.2 * jax.random.normal(ks[0], (C1, C_IN, K1), jnp.float32)
    conv1_b = 0.1 * jax.random.normal(ks[1], (C1,), jnp.float32)
    g1 = 1.0 + 0.1 * jax.random.normal(ks[2], (C1,), jnp.float32)
    be1 = 0.1 * jax.random.normal(ks[3], (C1,), jnp.float32)
    m1 = 0.1 * jax.random.normal(ks[4], (C1,), jnp.float32)
    v1 = 1.0 + 0.1 * jnp.abs(jax.random.normal(ks[5], (C1,), jnp.float32))
    conv2_w = 0.2 * jax.random.normal(ks[6], (C2, C1, K2), jnp.float32)
    conv2_b = 0.1 * jax.random.normal(ks[7], (C2,), jnp.float32)
    g2 = 1.0 + 0.1 * jax.random.normal(ks[8], (C2,), jnp.float32)
    be2 = 0.1 * jax.random.normal(ks[9], (C2,), jnp.float32)
    m2 = 0.1 * jax.random.normal(ks[10], (C2,), jnp.float32)
    v2 = 1.0 + 0.1 * jnp.abs(jax.random.normal(ks[11], (C2,), jnp.float32))
    fc1_w = 0.05 * jax.random.normal(ks[12], (HIDDEN, C2 * L4), jnp.float32)
    fc1_b = 0.1 * jax.random.normal(ks[13], (HIDDEN,), jnp.float32)
    fc2_w = 0.1 * jax.random.normal(ks[14], (NUM_CLASSES, HIDDEN), jnp.float32)
    fc2_b = 0.1 * jax.random.normal(ks[15], (NUM_CLASSES,), jnp.float32)
    params = (conv1_w, conv1_b, g1, be1, m1, v1,
              conv2_w, conv2_b, g2, be2, m2, v2,
              fc1_w, fc1_b, fc2_w, fc2_b)

    fwd = make_simple_cnn(params)

    # single-block path (B <= BB)
    B = 16
    x = jax.random.normal(ks[16], (B, C_IN, L), jnp.float32)     # NCL like PyTorch
    out = jax.block_until_ready(fwd(x))
    ref = reference_forward(x, params)
    assert out.shape == (B, NUM_CLASSES)
    err = float(jnp.max(jnp.abs(out - ref)))
    if not jnp.allclose(out, ref, atol=1e-2, rtol=1e-2):
        raise AssertionError(f"kernel/reference mismatch (B={B}): max abs err {err}")

    # multi-block grid path (nb = 2)
    B2 = 160
    x2 = jax.random.normal(ks[17], (B2, C_IN, L), jnp.float32)
    out2 = jax.block_until_ready(fwd(x2))
    ref2 = reference_forward(x2, params)
    assert out2.shape == (B2, NUM_CLASSES)
    err2 = float(jnp.max(jnp.abs(out2 - ref2)))
    if not jnp.allclose(out2, ref2, atol=1e-2, rtol=1e-2):
        raise AssertionError(f"kernel/reference mismatch (B={B2}): max abs err {err2}")

    print("KERNEL_OK")
</pallas_src>

<mosaic_0001>
module attributes {stable_mosaic.version = 11 : i64} {
  func.func @fused_cnn_kernel(%arg0: i32, %arg1: memref<1x24x2688xf32, #tpu.memory_space<vmem>>, %arg2: memref<2x64x24xf32, #tpu.memory_space<vmem>>, %arg3: memref<64x1xf32, #tpu.memory_space<vmem>>, %arg4: memref<3x64x32xf32, #tpu.memory_space<vmem>>, %arg5: memref<64x1xf32, #tpu.memory_space<vmem>>, %arg6: memref<128x640xf32, #tpu.memory_space<vmem>>, %arg7: memref<128x1xf32, #tpu.memory_space<vmem>>, %arg8: memref<8x128xf32, #tpu.memory_space<vmem>>, %arg9: memref<8x1xf32, #tpu.memory_space<vmem>>, %arg10: memref<8x128xf32, #tpu.memory_space<vmem>>) attributes {dimension_semantics = [#tpu.dimension_semantics<parallel>], iteration_bounds = array<i64: 1>, scalar_prefetch = 0 : i64, scratch_operands = 0 : i64, tpu.core_type = #tpu.core_type<tc>, window_params = [{transform_indices = @transform_0, window_bounds = array<i64: 1, 24, 2688>}, {pipeline_mode = #tpu.pipeline_mode<synchronous>, transform_indices = @transform_1, window_bounds = array<i64: 2, 64, 24>}, {pipeline_mode = #tpu.pipeline_mode<synchronous>, transform_indices = @transform_2, window_bounds = array<i64: 64, 1>}, {pipeline_mode = #tpu.pipeline_mode<synchronous>, transform_indices = @transform_3, window_bounds = array<i64: 3, 64, 32>}, {pipeline_mode = #tpu.pipeline_mode<synchronous>, transform_indices = @transform_4, window_bounds = array<i64: 64, 1>}, {pipeline_mode = #tpu.pipeline_mode<synchronous>, transform_indices = @transform_5, window_bounds = array<i64: 128, 640>}, {pipeline_mode = #tpu.pipeline_mode<synchronous>, transform_indices = @transform_6, window_bounds = array<i64: 128, 1>}, {pipeline_mode = #tpu.pipeline_mode<synchronous>, transform_indices = @transform_7, window_bounds = array<i64: 8, 128>}, {pipeline_mode = #tpu.pipeline_mode<synchronous>, transform_indices = @transform_8, window_bounds = array<i64: 8, 1>}, {transform_indices = @transform_9, window_bounds = array<i64: 8, 128>}]} {
    %c0 = arith.constant 0 : index
    %c0_0 = arith.constant 0 : index
    %c0_1 = arith.constant 0 : index
    %0 = vector.load %arg1[%c0, %c0_0, %c0_1] : memref<1x24x2688xf32, #tpu.memory_space<vmem>>, vector<1x24x2688xf32>
    %1 = vector.shape_cast %0 : vector<1x24x2688xf32> to vector<24x2688xf32>
    %c0_2 = arith.constant 0 : index
    %c0_3 = arith.constant 0 : index
    %c0_4 = arith.constant 0 : index
    %2 = vector.load %arg2[%c0_2, %c0_3, %c0_4] : memref<2x64x24xf32, #tpu.memory_space<vmem>>, vector<1x64x24xf32>
    %3 = vector.shape_cast %2 : vector<1x64x24xf32> to vector<64x24xf32>
    %4 = vector.extract_strided_slice %1 {offsets = [0, 0], sizes = [24, 2560], strides = [1, 1]} : vector<24x2688xf32> to vector<24x2560xf32>
    %cst = arith.constant dense<0.000000e+00> : vector<64x2560xf32>
    %5 = tpu.matmul %3, %4, %cst {dimension_numbers = #tpu.dot_dimension_numbers<[1], [0], [0], [1], [0, 0, 1, 1], [], []>} : vector<64x24xf32>, vector<24x2560xf32>, vector<64x2560xf32> -> vector<64x2560xf32>
    %c1 = arith.constant 1 : index
    %c0_5 = arith.constant 0 : index
    %c0_6 = arith.constant 0 : index
    %6 = vector.load %arg2[%c1, %c0_5, %c0_6] : memref<2x64x24xf32, #tpu.memory_space<vmem>>, vector<1x64x24xf32>
    %7 = vector.shape_cast %6 : vector<1x64x24xf32> to vector<64x24xf32>
    %8 = vector.extract_strided_slice %1 {offsets = [0, 128], sizes = [24, 2560], strides = [1, 1]} : vector<24x2688xf32> to vector<24x2560xf32>
    %cst_7 = arith.constant dense<0.000000e+00> : vector<64x2560xf32>
    %9 = tpu.matmul %7, %8, %cst_7 {dimension_numbers = #tpu.dot_dimension_numbers<[1], [0], [0], [1], [0, 0, 1, 1], [], []>} : vector<64x24xf32>, vector<24x2560xf32>, vector<64x2560xf32> -> vector<64x2560xf32>
    %10 = arith.addf %5, %9 : vector<64x2560xf32>
    %c0_8 = arith.constant 0 : index
    %c0_9 = arith.constant 0 : index
    %11 = vector.load %arg3[%c0_8, %c0_9] : memref<64x1xf32, #tpu.memory_space<vmem>>, vector<64x1xf32>
    %12 = vector.broadcast %11 : vector<64x1xf32> to vector<64x2560xf32>
    %13 = arith.addf %10, %12 : vector<64x2560xf32>
    %cst_10 = arith.constant 0.000000e+00 : f32
    %14 = vector.broadcast %cst_10 : f32 to vector<64x2560xf32>
    %15 = arith.maximumf %13, %14 : vector<64x2560xf32>
    %16 = vector.extract_strided_slice %15 {offsets = [0, 0], sizes = [16, 2560], strides = [1, 1]} : vector<64x2560xf32> to vector<16x2560xf32>
    %17 = vector.extract_strided_slice %15 {offsets = [16, 0], sizes = [16, 2560], strides = [1, 1]} : vector<64x2560xf32> to vector<16x2560xf32>
    %18 = arith.maximumf %16, %17 : vector<16x2560xf32>
    %19 = vector.extract_strided_slice %15 {offsets = [32, 0], sizes = [16, 2560], strides = [1, 1]} : vector<64x2560xf32> to vector<16x2560xf32>
    %20 = vector.extract_strided_slice %15 {offsets = [48, 0], sizes = [16, 2560], strides = [1, 1]} : vector<64x2560xf32> to vector<16x2560xf32>
    %21 = arith.maximumf %19, %20 : vector<16x2560xf32>
    %cst_11 = arith.constant 0.000000e+00 : f32
    %22 = vector.broadcast %cst_11 : f32 to vector<32x128xf32>
    %23 = tpu.concatenate %18, %21 in 0 : vector<16x2560xf32>, vector<16x2560xf32> -> vector<32x2560xf32>
    %24 = tpu.concatenate %22, %23, %22 in 1 : vector<32x128xf32>, vector<32x2560xf32>, vector<32x128xf32> -> vector<32x2816xf32>
    %c0_12 = arith.constant 0 : index
    %c0_13 = arith.constant 0 : index
    %c0_14 = arith.constant 0 : index
    %25 = vector.load %arg4[%c0_12, %c0_13, %c0_14] : memref<3x64x32xf32, #tpu.memory_space<vmem>>, vector<1x64x32xf32>
    %26 = vector.shape_cast %25 : vector<1x64x32xf32> to vector<64x32xf32>
    %27 = vector.extract_strided_slice %24 {offsets = [0, 0], sizes = [32, 2560], strides = [1, 1]} : vector<32x2816xf32> to vector<32x2560xf32>
    %cst_15 = arith.constant dense<0.000000e+00> : vector<64x2560xf32>
    %28 = tpu.matmul %26, %27, %cst_15 {dimension_numbers = #tpu.dot_dimension_numbers<[1], [0], [0], [1], [0, 0, 1, 1], [], []>} : vector<64x32xf32>, vector<32x2560xf32>, vector<64x2560xf32> -> vector<64x2560xf32>
    %c1_16 = arith.constant 1 : index
    %c0_17 = arith.constant 0 : index
    %c0_18 = arith.constant 0 : index
    %29 = vector.load %arg4[%c1_16, %c0_17, %c0_18] : memref<3x64x32xf32, #tpu.memory_space<vmem>>, vector<1x64x32xf32>
    %30 = vector.shape_cast %29 : vector<1x64x32xf32> to vector<64x32xf32>
    %31 = vector.extract_strided_slice %24 {offsets = [0, 128], sizes = [32, 2560], strides = [1, 1]} : vector<32x2816xf32> to vector<32x2560xf32>
    %cst_19 = arith.constant dense<0.000000e+00> : vector<64x2560xf32>
    %32 = tpu.matmul %30, %31, %cst_19 {dimension_numbers = #tpu.dot_dimension_numbers<[1], [0], [0], [1], [0, 0, 1, 1], [], []>} : vector<64x32xf32>, vector<32x2560xf32>, vector<64x2560xf32> -> vector<64x2560xf32>
    %33 = arith.addf %28, %32 : vector<64x2560xf32>
    %c2 = arith.constant 2 : index
    %c0_20 = arith.constant 0 : index
    %c0_21 = arith.constant 0 : index
    %34 = vector.load %arg4[%c2, %c0_20, %c0_21] : memref<3x64x32xf32, #tpu.memory_space<vmem>>, vector<1x64x32xf32>
    %35 = vector.shape_cast %34 : vector<1x64x32xf32> to vector<64x32xf32>
    %36 = vector.extract_strided_slice %24 {offsets = [0, 256], sizes = [32, 2560], strides = [1, 1]} : vector<32x2816xf32> to vector<32x2560xf32>
    %cst_22 = arith.constant dense<0.000000e+00> : vector<64x2560xf32>
    %37 = tpu.matmul %35, %36, %cst_22 {dimension_numbers = #tpu.dot_dimension_numbers<[1], [0], [0], [1], [0, 0, 1, 1], [], []>} : vector<64x32xf32>, vector<32x2560xf32>, vector<64x2560xf32> -> vector<64x2560xf32>
    %38 = arith.addf %33, %37 : vector<64x2560xf32>
    %c0_23 = arith.constant 0 : index
    %c0_24 = arith.constant 0 : index
    %39 = vector.load %arg5[%c0_23, %c0_24] : memref<64x1xf32, #tpu.memory_space<vmem>>, vector<64x1xf32>
    %40 = vector.broadcast %39 : vector<64x1xf32> to vector<64x2560xf32>
    %41 = arith.addf %38, %40 : vector<64x2560xf32>
    %cst_25 = arith.constant 0.000000e+00 : f32
    %42 = vector.broadcast %cst_25 : f32 to vector<64x2560xf32>
    %43 = arith.maximumf %41, %42 : vector<64x2560xf32>
    %44 = vector.extract_strided_slice %43 {offsets = [0, 0], sizes = [32, 2560], strides = [1, 1]} : vector<64x2560xf32> to vector<32x2560xf32>
    %45 = vector.extract_strided_slice %43 {offsets = [32, 0], sizes = [32, 2560], strides = [1, 1]} : vector<64x2560xf32> to vector<32x2560xf32>
    %46 = arith.maximumf %44, %45 : vector<32x2560xf32>
    %47 = vector.extract_strided_slice %46 {offsets = [0, 0], sizes = [32, 128], strides = [1, 1]} : vector<32x2560xf32> to vector<32x128xf32>
    %48 = vector.extract_strided_slice %46 {offsets = [0, 128], sizes = [32, 128], strides = [1, 1]} : vector<32x2560xf32> to vector<32x128xf32>
    %49 = vector.extract_strided_slice %46 {offsets = [0, 256], sizes = [32, 128], strides = [1, 1]} : vector<32x2560xf32> to vector<32x128xf32>
    %50 = vector.extract_strided_slice %46 {offsets = [0, 384], sizes = [32, 128], strides = [1, 1]} : vector<32x2560xf32> to vector<32x128xf32>
    %51 = vector.extract_strided_slice %46 {offsets = [0, 512], sizes = [32, 128], strides = [1, 1]} : vector<32x2560xf32> to vector<32x128xf32>
    %52 = vector.extract_strided_slice %46 {offsets = [0, 640], sizes = [32, 128], strides = [1, 1]} : vector<32x2560xf32> to vector<32x128xf32>
    %53 = vector.extract_strided_slice %46 {offsets = [0, 768], sizes = [32, 128], strides = [1, 1]} : vector<32x2560xf32> to vector<32x128xf32>
    %54 = vector.extract_strided_slice %46 {offsets = [0, 896], sizes = [32, 128], strides = [1, 1]} : vector<32x2560xf32> to vector<32x128xf32>
    %55 = vector.extract_strided_slice %46 {offsets = [0, 1024], sizes = [32, 128], strides = [1, 1]} : vector<32x2560xf32> to vector<32x128xf32>
    %56 = vector.extract_strided_slice %46 {offsets = [0, 1152], sizes = [32, 128], strides = [1, 1]} : vector<32x2560xf32> to vector<32x128xf32>
    %57 = vector.extract_strided_slice %46 {offsets = [0, 1280], sizes = [32, 128], strides = [1, 1]} : vector<32x2560xf32> to vector<32x128xf32>
    %58 = vector.extract_strided_slice %46 {offsets = [0, 1408], sizes = [32, 128], strides = [1, 1]} : vector<32x2560xf32> to vector<32x128xf32>
    %59 = vector.extract_strided_slice %46 {offsets = [0, 1536], sizes = [32, 128], strides = [1, 1]} : vector<32x2560xf32> to vector<32x128xf32>
    %60 = vector.extract_strided_slice %46 {offsets = [0, 1664], sizes = [32, 128], strides = [1, 1]} : vector<32x2560xf32> to vector<32x128xf32>
    %61 = vector.extract_strided_slice %46 {offsets = [0, 1792], sizes = [32, 128], strides = [1, 1]} : vector<32x2560xf32> to vector<32x128xf32>
    %62 = vector.extract_strided_slice %46 {offsets = [0, 1920], sizes = [32, 128], strides = [1, 1]} : vector<32x2560xf32> to vector<32x128xf32>
    %63 = vector.extract_strided_slice %46 {offsets = [0, 2048], sizes = [32, 128], strides = [1, 1]} : vector<32x2560xf32> to vector<32x128xf32>
    %64 = vector.extract_strided_slice %46 {offsets = [0, 2176], sizes = [32, 128], strides = [1, 1]} : vector<32x2560xf32> to vector<32x128xf32>
    %65 = vector.extract_strided_slice %46 {offsets = [0, 2304], sizes = [32, 128], strides = [1, 1]} : vector<32x2560xf32> to vector<32x128xf32>
    %66 = vector.extract_strided_slice %46 {offsets = [0, 2432], sizes = [32, 128], strides = [1, 1]} : vector<32x2560xf32> to vector<32x128xf32>
    %67 = tpu.concatenate %47, %48, %49, %50, %51, %52, %53, %54, %55, %56, %57, %58, %59, %60, %61, %62 in 0 : vector<32x128xf32>, vector<32x128xf32>, vector<32x128xf32>, vector<32x128xf32>, vector<32x128xf32>, vector<32x128xf32>, vector<32x128xf32>, vector<32x128xf32>, vector<32x128xf32>, vector<32x128xf32>, vector<32x128xf32>, vector<32x128xf32>, vector<32x128xf32>, vector<32x128xf32>, vector<32x128xf32>, vector<32x128xf32> -> vector<512x128xf32>
    %68 = tpu.concatenate %63, %64, %65, %66 in 0 : vector<32x128xf32>, vector<32x128xf32>, vector<32x128xf32>, vector<32x128xf32> -> vector<128x128xf32>
    %69 = tpu.concatenate %67, %68 in 0 : vector<512x128xf32>, vector<128x128xf32> -> vector<640x128xf32>
    %c0_26 = arith.constant 0 : index
    %c0_27 = arith.constant 0 : index
    %70 = vector.load %arg6[%c0_26, %c0_27] : memref<128x640xf32, #tpu.memory_space<vmem>>, vector<128x640xf32>
    %cst_28 = arith.constant dense<0.000000e+00> : vector<128x128xf32>
    %71 = tpu.matmul %70, %69, %cst_28 {dimension_numbers = #tpu.dot_dimension_numbers<[1], [0], [0], [1], [0, 0, 1, 1], [], []>} : vector<128x640xf32>, vector<640x128xf32>, vector<128x128xf32> -> vector<128x128xf32>
    %c0_29 = arith.constant 0 : index
    %c0_30 = arith.constant 0 : index
    %72 = vector.load %arg7[%c0_29, %c0_30] : memref<128x1xf32, #tpu.memory_space<vmem>>, vector<128x1xf32>
    %73 = vector.broadcast %72 : vector<128x1xf32> to vector<128x128xf32>
    %74 = arith.addf %71, %73 : vector<128x128xf32>
    %cst_31 = arith.constant 0.000000e+00 : f32
    %75 = vector.broadcast %cst_31 : f32 to vector<128x128xf32>
    %76 = arith.maximumf %74, %75 : vector<128x128xf32>
    %c0_32 = arith.constant 0 : index
    %c0_33 = arith.constant 0 : index
    %77 = vector.load %arg8[%c0_32, %c0_33] : memref<8x128xf32, #tpu.memory_space<vmem>>, vector<8x128xf32>
    %cst_34 = arith.constant dense<0.000000e+00> : vector<8x128xf32>
    %78 = tpu.matmul %77, %76, %cst_34 {dimension_numbers = #tpu.dot_dimension_numbers<[1], [0], [0], [1], [0, 0, 1, 1], [], []>} : vector<8x128xf32>, vector<128x128xf32>, vector<8x128xf32> -> vector<8x128xf32>
    %c0_35 = arith.constant 0 : index
    %c0_36 = arith.constant 0 : index
    %79 = vector.load %arg9[%c0_35, %c0_36] : memref<8x1xf32, #tpu.memory_space<vmem>>, vector<8x1xf32>
    %80 = vector.broadcast %79 : vector<8x1xf32> to vector<8x128xf32>
    %81 = arith.addf %78, %80 : vector<8x128xf32>
    %c0_37 = arith.constant 0 : index
    %c0_38 = arith.constant 0 : index
    %82 = vector.load %arg10[%c0_37, %c0_38] : memref<8x128xf32, #tpu.memory_space<vmem>>, vector<8x128xf32>
    tpu.vector_store %arg10[%c0_37, %c0_38], %81 {strides = array<i32>} : memref<8x128xf32, #tpu.memory_space<vmem>>, vector<8x128xf32>,
    return
  }
  func.func @transform_0(%arg0: i32) -> (i32, i32, i32) {
    %c0_i32 = arith.constant 0 : i32
    %c0_i32_0 = arith.constant 0 : i32
    %c0_i32_1 = arith.constant 0 : i32
    return %arg0, %c0_i32, %c0_i32_0 : i32, i32, i32
  }
  func.func @transform_1(%arg0: i32) -> (i32, i32, i32) {
    %c0_i32 = arith.constant 0 : i32
    %c0_i32_0 = arith.constant 0 : i32
    %c0_i32_1 = arith.constant 0 : i32
    %c0_i32_2 = arith.constant 0 : i32
    return %c0_i32, %c0_i32_0, %c0_i32_1 : i32, i32, i32
  }
  func.func @transform_2(%arg0: i32) -> (i32, i32) {
    %c0_i32 = arith.constant 0 : i32
    %c0_i32_0 = arith.constant 0 : i32
    %c0_i32_1 = arith.constant 0 : i32
    return %c0_i32, %c0_i32_0 : i32, i32
  }
  func.func @transform_3(%arg0: i32) -> (i32, i32, i32) {
    %c0_i32 = arith.constant 0 : i32
    %c0_i32_0 = arith.constant 0 : i32
    %c0_i32_1 = arith.constant 0 : i32
    %c0_i32_2 = arith.constant 0 : i32
    return %c0_i32, %c0_i32_0, %c0_i32_1 : i32, i32, i32
  }
  func.func @transform_4(%arg0: i32) -> (i32, i32) {
    %c0_i32 = arith.constant 0 : i32
    %c0_i32_0 = arith.constant 0 : i32
    %c0_i32_1 = arith.constant 0 : i32
    return %c0_i32, %c0_i32_0 : i32, i32
  }
  func.func @transform_5(%arg0: i32) -> (i32, i32) {
    %c0_i32 = arith.constant 0 : i32
    %c0_i32_0 = arith.constant 0 : i32
    %c0_i32_1 = arith.constant 0 : i32
    return %c0_i32, %c0_i32_0 : i32, i32
  }
  func.func @transform_6(%arg0: i32) -> (i32, i32) {
    %c0_i32 = arith.constant 0 : i32
    %c0_i32_0 = arith.constant 0 : i32
    %c0_i32_1 = arith.constant 0 : i32
    return %c0_i32, %c0_i32_0 : i32, i32
  }
  func.func @transform_7(%arg0: i32) -> (i32, i32) {
    %c0_i32 = arith.constant 0 : i32
    %c0_i32_0 = arith.constant 0 : i32
    %c0_i32_1 = arith.constant 0 : i32
    return %c0_i32, %c0_i32_0 : i32, i32
  }
  func.func @transform_8(%arg0: i32) -> (i32, i32) {
    %c0_i32 = arith.constant 0 : i32
    %c0_i32_0 = arith.constant 0 : i32
    %c0_i32_1 = arith.constant 0 : i32
    return %c0_i32, %c0_i32_0 : i32, i32
  }
  func.func @transform_9(%arg0: i32) -> (i32, i32) {
    %c0_i32 = arith.constant 0 : i32
    %c0_i32_0 = arith.constant 0 : i32
    return %c0_i32, %arg0 : i32, i32
  }
}

</mosaic_0001>

<llo_original>
// kernel: forward.1
$region0: #{forward.1}
  #allocation0 [shape = 'u32[]', space=smem, size = 0x4, offset = 0x4, fixed_abs, tag = 'smem constant byte address 0x4 - core index']
  #allocation1 [shape = 'u32[144,128]{1,0:T(1,128)}', space=vmem, size = 0x12000, scoped, tag = 'internal scratch']
  %s0 = inlined_call_operand.vmem [shape: f32[1,24,2688], index: 0, kind: input, shape index: {}]
  %s1 = inlined_call_operand.vmem [shape: f32[2,64,24], index: 1, kind: input, shape index: {}]
  %s2 = inlined_call_operand.vmem [shape: f32[64,1], index: 2, kind: input, shape index: {}]
  %s3 = inlined_call_operand.vmem [shape: f32[3,64,32], index: 3, kind: input, shape index: {}]
  %s4 = inlined_call_operand.vmem [shape: f32[64,1], index: 4, kind: input, shape index: {}]
  %s5 = inlined_call_operand.vmem [shape: f32[128,640], index: 5, kind: input, shape index: {}]
  %s6 = inlined_call_operand.vmem [shape: f32[128,1], index: 6, kind: input, shape index: {}]
  %s7 = inlined_call_operand.vmem [shape: f32[8,128], index: 7, kind: input, shape index: {}]
  %s8 = inlined_call_operand.vmem [shape: f32[8,1], index: 8, kind: input, shape index: {}]
  %s9 = inlined_call_operand.hbm [shape: f32[8,128], index: 9, kind: output, shape index: {}]
  %s10 = sld [smem:[#allocation0]]
  $region46: #{forward.1} parent=0
    _
  %s12 = ssub.s32 1, %s10
  %s13 = scalar_select 0, %s12, %s10
  $region1: #{forward.1} parent=0
    #allocation2 [shape = 'u8[4096]{0}', space=vmem, size = 0x1000, scoped, tag = 'output window, operand 0, single buffered']
    #allocation3 [shape = 's32[1]{0}', space=sflag, size = 0x4, scoped, tag = 'scoped memory for forward.1']
    %14 = vsyncpa [#allocation3], 0
    // Predicated region
    $region2: #{forward.1} parent=1 // pred_check
      _
    $region3: #{forward.1} parent=1 // pred_check_branch
      %16 = sbr.rel (0) target = $region5
    $region4: #{forward.1} parent=1 // pred_region
      _
    $region5: #{forward.1} parent=1 // pred_fallthru
      _
    // Predicated region
    $region6: #{forward.1} parent=1 // pred_check
      _
    $region7: #{forward.1} parent=1 // pred_check_branch
      %18 = sbr.rel (0) target = $region9
    $region8: #{forward.1} parent=1 // pred_region
      _
    $region9: #{forward.1} parent=1 // pred_fallthru
      _
    // Predicated region
    $region10: #{forward.1} parent=1 // pred_check
      _
    $region11: #{forward.1} parent=1 // pred_check_branch
      %20 = sbr.rel (0) target = $region13
    $region12: #{forward.1} parent=1 // pred_region
      _
    $region13: #{forward.1} parent=1 // pred_fallthru
      _
    // Predicated region
    $region14: #{forward.1} parent=1 // pred_check
      _
    $region15: #{forward.1} parent=1 // pred_check_branch
      %22 = sbr.rel (0) target = $region17
    $region16: #{forward.1} parent=1 // pred_region
      _
    $region17: #{forward.1} parent=1 // pred_fallthru
      _
    // Predicated region
    $region18: #{forward.1} parent=1 // pred_check
      _
    $region19: #{forward.1} parent=1 // pred_check_branch
      %24 = sbr.rel (0) target = $region21
    $region20: #{forward.1} parent=1 // pred_region
      _
    $region21: #{forward.1} parent=1 // pred_fallthru
      _
    // Predicated region
    $region22: #{forward.1} parent=1 // pred_check
      _
    $region23: #{forward.1} parent=1 // pred_check_branch
      %26 = sbr.rel (0) target = $region25
    $region24: #{forward.1} parent=1 // pred_region
      _
    $region25: #{forward.1} parent=1 // pred_fallthru
      _
    // Predicated region
    $region26: #{forward.1} parent=1 // pred_check
      _
    $region27: #{forward.1} parent=1 // pred_check_branch
      %28 = sbr.rel (0) target = $region29
    $region28: #{forward.1} parent=1 // pred_region
      _
    $region29: #{forward.1} parent=1 // pred_fallthru
      _
    // Predicated region
    $region30: #{forward.1} parent=1 // pred_check
      _
    $region31: #{forward.1} parent=1 // pred_check_branch
      %30 = sbr.rel (0) target = $region33
    $region32: #{forward.1} parent=1 // pred_region
      _
    $region33: #{forward.1} parent=1 // pred_fallthru
      _
    // Predicated region
    $region34: #{forward.1} parent=1 // pred_check
      _
    $region35: #{forward.1} parent=1 // pred_check_branch
      %32 = sbr.rel (0) target = $region37
    $region36: #{forward.1} parent=1 // pred_region
      _
    $region37: #{forward.1} parent=1 // pred_fallthru
      _
    %v33 = vld [vmem:[%s0] sm:$0xff]
    %v34 = vld [vmem:[%s0 + $0x8] sm:$0xff]
    %v35 = vld [vmem:[%s0 + $0x10] sm:$0xff]
    %v36 = vld [vmem:[%s0 + $0x18] sm:$0xff]
    %v37 = vld [vmem:[%s0 + $0x20] sm:$0xff]
    %v38 = vld [vmem:[%s0 + $0x28] sm:$0xff]
    %v39 = vld [vmem:[%s0 + $0x30] sm:$0xff]
    %v40 = vld [vmem:[%s0 + $0x38] sm:$0xff]
    %v41 = vld [vmem:[%s0 + $0x40] sm:$0xff]
    %v42 = vld [vmem:[%s0 + $0x48] sm:$0xff]
    %v43 = vld [vmem:[%s0 + $0x50] sm:$0xff]
    %v44 = vld [vmem:[%s0 + $0x58] sm:$0xff]
    %v45 = vld [vmem:[%s0 + $0x60] sm:$0xff]
    %v46 = vld [vmem:[%s0 + $0x68] sm:$0xff]
    %v47 = vld [vmem:[%s0 + $0x70] sm:$0xff]
    %v48 = vld [vmem:[%s0 + $0x78] sm:$0xff]
    %v49 = vld [vmem:[%s0 + $0x80] sm:$0xff]
    %v50 = vld [vmem:[%s0 + $0x88] sm:$0xff]
    %v51 = vld [vmem:[%s0 + $0x90] sm:$0xff]
    %v52 = vld [vmem:[%s0 + $0x98] sm:$0xff]
    %v53 = vld [vmem:[%s0 + $0xa0] sm:$0xff]
    %v54 = vld [vmem:[%s0 + $0xa8] sm:$0xff]
    %v55 = vld [vmem:[%s0 + $0xb0] sm:$0xff]
    %v56 = vld [vmem:[%s0 + $0xb8] sm:$0xff]
    %v57 = vld [vmem:[%s0 + $0xc0] sm:$0xff]
    %v58 = vld [vmem:[%s0 + $0xc8] sm:$0xff]
    %v59 = vld [vmem:[%s0 + $0xd0] sm:$0xff]
    %v60 = vld [vmem:[%s0 + $0xd8] sm:$0xff]
    %v61 = vld [vmem:[%s0 + $0xe0] sm:$0xff]
    %v62 = vld [vmem:[%s0 + $0xe8] sm:$0xff]
    %v63 = vld [vmem:[%s0 + $0xf0] sm:$0xff]
    %v64 = vld [vmem:[%s0 + $0xf8] sm:$0xff]
    %v65 = vld [vmem:[%s0 + $0x100] sm:$0xff]
    %v66 = vld [vmem:[%s0 + $0x108] sm:$0xff]
    %v67 = vld [vmem:[%s0 + $0x110] sm:$0xff]
    %v68 = vld [vmem:[%s0 + $0x118] sm:$0xff]
    %v69 = vld [vmem:[%s0 + $0x120] sm:$0xff]
    %v70 = vld [vmem:[%s0 + $0x128] sm:$0xff]
    %v71 = vld [vmem:[%s0 + $0x130] sm:$0xff]
    %v72 = vld [vmem:[%s0 + $0x138] sm:$0xff]
    %v73 = vld [vmem:[%s0 + $0x140] sm:$0xff]
    %v74 = vld [vmem:[%s0 + $0x148] sm:$0xff]
    %v75 = vld [vmem:[%s0 + $0x150] sm:$0xff]
    %v76 = vld [vmem:[%s0 + $0x158] sm:$0xff]
    %v77 = vld [vmem:[%s0 + $0x160] sm:$0xff]
    %v78 = vld [vmem:[%s0 + $0x168] sm:$0xff]
    %v79 = vld [vmem:[%s0 + $0x170] sm:$0xff]
    %v80 = vld [vmem:[%s0 + $0x178] sm:$0xff]
    %v81 = vld [vmem:[%s0 + $0x180] sm:$0xff]
    %v82 = vld [vmem:[%s0 + $0x188] sm:$0xff]
    %v83 = vld [vmem:[%s0 + $0x190] sm:$0xff]
    %v84 = vld [vmem:[%s0 + $0x198] sm:$0xff]
    %v85 = vld [vmem:[%s0 + $0x1a0] sm:$0xff]
    %v86 = vld [vmem:[%s0 + $0x1a8] sm:$0xff]
    %v87 = vld [vmem:[%s0 + $0x1b0] sm:$0xff]
    %v88 = vld [vmem:[%s0 + $0x1b8] sm:$0xff]
    %v89 = vld [vmem:[%s0 + $0x1c0] sm:$0xff]
    %v90 = vld [vmem:[%s0 + $0x1c8] sm:$0xff]
    %v91 = vld [vmem:[%s0 + $0x1d0] sm:$0xff]
    %v92 = vld [vmem:[%s0 + $0x1d8] sm:$0xff]
    %v93 = vld [vmem:[%s0 + $0x1e0] sm:$0xff]
    %v94 = vld [vmem:[%s0 + $0x1e8] sm:$0xff]
    %v95 = vld [vmem:[%s0 + $0x1f0] sm:$0xff]
    %v96 = vld [vmem:[%s1] sm:$0xff]
    %v97 = vld [vmem:[%s1 + $0x8] sm:$0xff]
    %v98 = vld [vmem:[%s1 + $0x10] sm:$0xff]
    %v99 = vld [vmem:[%s1 + $0x18] sm:$0xff]
    %v100 = vld [vmem:[%s1 + $0x20] sm:$0xff]
    %v101 = vld [vmem:[%s1 + $0x28] sm:$0xff]
    %v102 = vld [vmem:[%s1 + $0x30] sm:$0xff]
    %v103 = vld [vmem:[%s1 + $0x38] sm:$0xff]
    %s104 = scalar_lea.vmem %s1, 64
    %v105 = vld [vmem:[%s104] sm:$0xff]
    %v106 = vld [vmem:[%s104 + $0x8] sm:$0xff]
    %v107 = vld [vmem:[%s104 + $0x10] sm:$0xff]
    %v108 = vld [vmem:[%s104 + $0x18] sm:$0xff]
    %v109 = vld [vmem:[%s104 + $0x20] sm:$0xff]
    %v110 = vld [vmem:[%s104 + $0x28] sm:$0xff]
    %v111 = vld [vmem:[%s104 + $0x30] sm:$0xff]
    %v112 = vld [vmem:[%s104 + $0x38] sm:$0xff]
    %vm113 = vcmask 195584
    %v115 = vsel %vm113, %v105, 0
    %v118 = vsel %vm113, %v106, 0
    %v121 = vsel %vm113, %v107, 0
    %v124 = vsel %vm113, %v108, 0
    %v127 = vsel %vm113, %v109, 0
    %v130 = vsel %vm113, %v110, 0
    %v133 = vsel %vm113, %v111, 0
    %v136 = vsel %vm113, %v112, 0
    %138 = vmatprep.subr.mxu0 0.0
    %139 = vmatpush1.msra.mxu0 0.0
    %140 = vmatprep.subr.mxu0 0.0
    %141 = vmatpush1.msra.mxu0 0.0
    %142 = vmatprep.subr.mxu0 0.0
    %143 = vmatpush1.msra.mxu0 0.0
    %144 = vmatprep.subr.mxu0 0.0
    %145 = vmatpush1.msra.mxu0 0.0
    %146 = vmatprep.subr.mxu0 0.0
    %147 = vmatpush1.msra.mxu0 0.0
    %148 = vmatprep.subr.mxu0 0.0
    %149 = vmatpush1.msra.mxu0 0.0
    %150 = vmatprep.subr.mxu0 0.0
    %151 = vmatpush1.msra.mxu0 0.0
    %152 = vmatprep.subr.mxu0 0.0
    %153 = vmatpush1.msra.mxu0 0.0
    %154 = vmatprep.subr.mxu0 0.0
    %155 = vmatpush1.msra.mxu0 0.0
    %156 = vmatprep.subr.mxu0 0.0
    %157 = vmatpush1.msra.mxu0 0.0
    %158 = vmatprep.subr.mxu0 0.0
    %159 = vmatpush1.msra.mxu0 0.0
    %160 = vmatprep.subr.mxu0 0.0
    %161 = vmatpush1.msra.mxu0 0.0
    %162 = vmatprep.subr.mxu0 0.0
    %163 = vmatpush1.msra.mxu0 0.0
    %164 = vmatprep.subr.mxu0 %v77
    %165 = vmatpush1.msra.mxu0 %v76
    %166 = vmatprep.subr.mxu0 %v56
    %167 = vmatpush1.msra.mxu0 %v55
    %168 = vmatprep.subr.mxu0 %v35
    %169 = vmatpush1.msra.mxu0 %v34
    %170 = vmatprep.subr.mxu0 0.0
    %171 = vmatpush2.msra.mxu0 0.0
    %172 = vmatprep.subr.mxu0 0.0
    %173 = vmatpush2.msra.mxu0 0.0
    %174 = vmatprep.subr.mxu0 0.0
    %175 = vmatpush2.msra.mxu0 0.0
    %176 = vmatprep.subr.mxu0 0.0
    %177 = vmatpush2.msra.mxu0 0.0
    %178 = vmatprep.subr.mxu0 0.0
    %179 = vmatpush2.msra.mxu0 0.0
    %180 = vmatprep.subr.mxu0 0.0
    %181 = vmatpush2.msra.mxu0 0.0
    %182 = vmatprep.subr.mxu0 0.0
    %183 = vmatpush2.msra.mxu0 0.0
    %184 = vmatprep.subr.mxu0 0.0
    %185 = vmatpush2.msra.mxu0 0.0
    %186 = vmatprep.subr.mxu0 0.0
    %187 = vmatpush2.msra.mxu0 0.0
    %188 = vmatprep.subr.mxu0 0.0
    %189 = vmatpush2.msra.mxu0 0.0
    %190 = vmatprep.subr.mxu0 0.0
    %191 = vmatpush2.msra.mxu0 0.0
    %192 = vmatprep.subr.mxu0 0.0
    %193 = vmatpush2.msra.mxu0 0.0
    %194 = vmatprep.subr.mxu0 0.0
    %195 = vmatpush2.msra.mxu0 0.0
    %196 = vmatprep.subr.mxu0 0.0
    %197 = vmatpush2.msra.mxu0 0.0
    %198 = vmatprep.subr.mxu0 0.0
    %199 = vmatpush2.msra.mxu0 0.0
    %200 = vmatprep.subr.mxu0 0.0
    %201 = vmatpush2.msra.mxu0 0.0
    %202 = vmatprep.mubr.f32.mxu0 0.0
    %203 = vmatmul.mubr.f32.gmra.mxu0 %v115
    %v204 = vpop.f32.mrf.mxu0
    %v205 = vadd.f32 0.0, %v204
    %v206 = vpop.f32.mrf.mxu0
    %v207 = vadd.f32 0.0, %v206
    %208 = vmatprep.mubr.f32.mxu0 0.0
    %209 = vmatmul.mubr.f32.gmra.mxu0 %v118
    %v210 = vpop.f32.mrf.mxu0
    %v211 = vadd.f32 0.0, %v210
    %v212 = vpop.f32.mrf.mxu0
    %v213 = vadd.f32 0.0, %v212
    %214 = vmatprep.mubr.f32.mxu0 0.0
    %215 = vmatmul.mubr.f32.gmra.mxu0 %v121
    %v216 = vpop.f32.mrf.mxu0
    %v217 = vadd.f32 0.0, %v216
    %v218 = vpop.f32.mrf.mxu0
    %v219 = vadd.f32 0.0, %v218
    %220 = vmatprep.mubr.f32.mxu0 0.0
    %221 = vmatmul.mubr.f32.gmra.mxu0 %v124
    %v222 = vpop.f32.mrf.mxu0
    %v223 = vadd.f32 0.0, %v222
    %v224 = vpop.f32.mrf.mxu0
    %v225 = vadd.f32 0.0, %v224
    %226 = vmatprep.mubr.f32.mxu0 0.0
    %227 = vmatmul.mubr.f32.gmra.mxu0 %v127
    %v228 = vpop.f32.mrf.mxu0
    %v229 = vadd.f32 0.0, %v228
    %v230 = vpop.f32.mrf.mxu0
    %v231 = vadd.f32 0.0, %v230
    %232 = vmatprep.mubr.f32.mxu0 0.0
    %233 = vmatmul.mubr.f32.gmra.mxu0 %v130
    %v234 = vpop.f32.mrf.mxu0
    %v235 = vadd.f32 0.0, %v234
    %v236 = vpop.f32.mrf.mxu0
    %v237 = vadd.f32 0.0, %v236
    %238 = vmatprep.mubr.f32.mxu0 0.0
    %239 = vmatmul.mubr.f32.gmra.mxu0 %v133
    %v240 = vpop.f32.mrf.mxu0
    %v241 = vadd.f32 0.0, %v240
    %v242 = vpop.f32.mrf.mxu0
    %v243 = vadd.f32 0.0, %v242
    %244 = vmatprep.mubr.f32.mxu0 0.0
    %245 = vmatmul.mubr.f32.gmra.mxu0 %v136
    %v246 = vpop.f32.mrf.mxu0
    %v247 = vadd.f32 0.0, %v246
    %v248 = vpop.f32.mrf.mxu0
    %v249 = vadd.f32 0.0, %v248
    %250 = vdwg.mxu0
    %251 = vmatprep.subr.mxu0 0.0
    %252 = vmatpush1.msra.mxu0 0.0
    %253 = vmatprep.subr.mxu0 0.0
    %254 = vmatpush1.msra.mxu0 0.0
    %255 = vmatprep.subr.mxu0 0.0
    %256 = vmatpush1.msra.mxu0 0.0
    %257 = vmatprep.subr.mxu0 0.0
    %258 = vmatpush1.msra.mxu0 0.0
    %259 = vmatprep.subr.mxu0 0.0
    %260 = vmatpush1.msra.mxu0 0.0
    %261 = vmatprep.subr.mxu0 0.0
    %262 = vmatpush1.msra.mxu0 0.0
    %263 = vmatprep.subr.mxu0 0.0
    %264 = vmatpush1.msra.mxu0 0.0
    %265 = vmatprep.subr.mxu0 0.0
    %266 = vmatpush1.msra.mxu0 0.0
    %267 = vmatprep.subr.mxu0 0.0
    %268 = vmatpush1.msra.mxu0 0.0
    %269 = vmatprep.subr.mxu0 0.0
    %270 = vmatpush1.msra.mxu0 0.0
    %271 = vmatprep.subr.mxu0 0.0
    %272 = vmatpush1.msra.mxu0 0.0
    %273 = vmatprep.subr.mxu0 0.0
    %274 = vmatpush1.msra.mxu0 0.0
    %275 = vmatprep.subr.mxu0 0.0
    %276 = vmatpush1.msra.mxu0 0.0
    %277 = vmatprep.subr.mxu0 %v79
    %278 = vmatpush1.msra.mxu0 %v78
    %279 = vmatprep.subr.mxu0 %v58
    %280 = vmatpush1.msra.mxu0 %v57
    %281 = vmatprep.subr.mxu0 %v37
    %282 = vmatpush1.msra.mxu0 %v36
    %283 = vmatprep.subr.mxu0 0.0
    %284 = vmatpush2.msra.mxu0 0.0
    %285 = vmatprep.subr.mxu0 0.0
    %286 = vmatpush2.msra.mxu0 0.0
    %287 = vmatprep.subr.mxu0 0.0
    %288 = vmatpush2.msra.mxu0 0.0
    %289 = vmatprep.subr.mxu0 0.0
    %290 = vmatpush2.msra.mxu0 0.0
    %291 = vmatprep.subr.mxu0 0.0
    %292 = vmatpush2.msra.mxu0 0.0
    %293 = vmatprep.subr.mxu0 0.0
    %294 = vmatpush2.msra.mxu0 0.0
    %295 = vmatprep.subr.mxu0 0.0
    %296 = vmatpush2.msra.mxu0 0.0
    %297 = vmatprep.subr.mxu0 0.0
    %298 = vmatpush2.msra.mxu0 0.0
    %299 = vmatprep.subr.mxu0 0.0
    %300 = vmatpush2.msra.mxu0 0.0
    %301 = vmatprep.subr.mxu0 0.0
    %302 = vmatpush2.msra.mxu0 0.0
    %303 = vmatprep.subr.mxu0 0.0
    %304 = vmatpush2.msra.mxu0 0.0
    %305 = vmatprep.subr.mxu0 0.0
    %306 = vmatpush2.msra.mxu0 0.0
    %307 = vmatprep.subr.mxu0 0.0
    %308 = vmatpush2.msra.mxu0 0.0
    %309 = vmatprep.subr.mxu0 0.0
    %310 = vmatpush2.msra.mxu0 0.0
    %311 = vmatprep.subr.mxu0 0.0
    %312 = vmatpush2.msra.mxu0 0.0
    %313 = vmatprep.subr.mxu0 0.0
    %314 = vmatpush2.msra.mxu0 0.0
    %315 = vmatprep.mubr.f32.mxu0 0.0
    %316 = vmatmul.mubr.f32.gmra.mxu0 %v115
    %v317 = vpop.f32.mrf.mxu0
    %v318 = vadd.f32 0.0, %v317
    %v319 = vpop.f32.mrf.mxu0
    %v320 = vadd.f32 0.0, %v319
    %321 = vmatprep.mubr.f32.mxu0 0.0
    %322 = vmatmul.mubr.f32.gmra.mxu0 %v118
    %v323 = vpop.f32.mrf.mxu0
    %v324 = vadd.f32 0.0, %v323
    %v325 = vpop.f32.mrf.mxu0
    %v326 = vadd.f32 0.0, %v325
    %327 = vmatprep.mubr.f32.mxu0 0.0
    %328 = vmatmul.mubr.f32.gmra.mxu0 %v121
    %v329 = vpop.f32.mrf.mxu0
    %v330 = vadd.f32 0.0, %v329
    %v331 = vpop.f32.mrf.mxu0
    %v332 = vadd.f32 0.0, %v331
    %333 = vmatprep.mubr.f32.mxu0 0.0
    %334 = vmatmul.mubr.f32.gmra.mxu0 %v124
    %v335 = vpop.f32.mrf.mxu0
    %v336 = vadd.f32 0.0, %v335
    %v337 = vpop.f32.mrf.mxu0
    %v338 = vadd.f32 0.0, %v337
    %339 = vmatprep.mubr.f32.mxu0 0.0
    %340 = vmatmul.mubr.f32.gmra.mxu0 %v127
    %v341 = vpop.f32.mrf.mxu0
    %v342 = vadd.f32 0.0, %v341
    %v343 = vpop.f32.mrf.mxu0
    %v344 = vadd.f32 0.0, %v343
    %345 = vmatprep.mubr.f32.mxu0 0.0
    %346 = vmatmul.mubr.f32.gmra.mxu0 %v130
    %v347 = vpop.f32.mrf.mxu0
    %v348 = vadd.f32 0.0, %v347
    %v349 = vpop.f32.mrf.mxu0
    %v350 = vadd.f32 0.0, %v349
    %351 = vmatprep.mubr.f32.mxu0 0.0
    %352 = vmatmul.mubr.f32.gmra.mxu0 %v133
    %v353 = vpop.f32.mrf.mxu0
    %v354 = vadd.f32 0.0, %v353
    %v355 = vpop.f32.mrf.mxu0
    %v356 = vadd.f32 0.0, %v355
    %357 = vmatprep.mubr.f32.mxu0 0.0
    %358 = vmatmul.mubr.f32.gmra.mxu0 %v136
    %v359 = vpop.f32.mrf.mxu0
    %v360 = vadd.f32 0.0, %v359
    %v361 = vpop.f32.mrf.mxu0
    %v362 = vadd.f32 0.0, %v361
    %363 = vdwg.mxu0
    %364 = vmatprep.subr.mxu0 0.0
    %365 = vmatpush1.msra.mxu0 0.0
    %366 = vmatprep.subr.mxu0 0.0
    %367 = vmatpush1.msra.mxu0 0.0
    %368 = vmatprep.subr.mxu0 0.0
    %369 = vmatpush1.msra.mxu0 0.0
    %370 = vmatprep.subr.mxu0 0.0
    %371 = vmatpush1.msra.mxu0 0.0
    %372 = vmatprep.subr.mxu0 0.0
    %373 = vmatpush1.msra.mxu0 0.0
    %374 = vmatprep.subr.mxu0 0.0
    %375 = vmatpush1.msra.mxu0 0.0
    %376 = vmatprep.subr.mxu0 0.0
    %377 = vmatpush1.msra.mxu0 0.0
    %378 = vmatprep.subr.mxu0 0.0
    %379 = vmatpush1.msra.mxu0 0.0
    %380 = vmatprep.subr.mxu0 0.0
    %381 = vmatpush1.msra.mxu0 0.0
    %382 = vmatprep.subr.mxu0 0.0
    %383 = vmatpush1.msra.mxu0 0.0
    %384 = vmatprep.subr.mxu0 0.0
    %385 = vmatpush1.msra.mxu0 0.0
    %386 = vmatprep.subr.mxu0 0.0
    %387 = vmatpush1.msra.mxu0 0.0
    %388 = vmatprep.subr.mxu0 0.0
    %389 = vmatpush1.msra.mxu0 0.0
    %390 = vmatprep.subr.mxu0 %v81
    %391 = vmatpush1.msra.mxu0 %v80
    %392 = vmatprep.subr.mxu0 %v60
    %393 = vmatpush1.msra.mxu0 %v59
    %394 = vmatprep.subr.mxu0 %v39
    %395 = vmatpush1.msra.mxu0 %v38
    %396 = vmatprep.subr.mxu0 0.0
    %397 = vmatpush2.msra.mxu0 0.0
    %398 = vmatprep.subr.mxu0 0.0
    %399 = vmatpush2.msra.mxu0 0.0
    %400 = vmatprep.subr.mxu0 0.0
    %401 = vmatpush2.msra.mxu0 0.0
    %402 = vmatprep.subr.mxu0 0.0
    %403 = vmatpush2.msra.mxu0 0.0
    %404 = vmatprep.subr.mxu0 0.0
    %405 = vmatpush2.msra.mxu0 0.0
    %406 = vmatprep.subr.mxu0 0.0
    %407 = vmatpush2.msra.mxu0 0.0
    %408 = vmatprep.subr.mxu0 0.0
    %409 = vmatpush2.msra.mxu0 0.0
    %410 = vmatprep.subr.mxu0 0.0
    %411 = vmatpush2.msra.mxu0 0.0
    %412 = vmatprep.subr.mxu0 0.0
    %413 = vmatpush2.msra.mxu0 0.0
    %414 = vmatprep.subr.mxu0 0.0
    %415 = vmatpush2.msra.mxu0 0.0
    %416 = vmatprep.subr.mxu0 0.0
    %417 = vmatpush2.msra.mxu0 0.0
    %418 = vmatprep.subr.mxu0 0.0
    %419 = vmatpush2.msra.mxu0 0.0
    %420 = vmatprep.subr.mxu0 0.0
    %421 = vmatpush2.msra.mxu0 0.0
    %422 = vmatprep.subr.mxu0 0.0
    %423 = vmatpush2.msra.mxu0 0.0
    %424 = vmatprep.subr.mxu0 0.0
    %425 = vmatpush2.msra.mxu0 0.0
    %426 = vmatprep.subr.mxu0 0.0
    %427 = vmatpush2.msra.mxu0 0.0
    %428 = vmatprep.mubr.f32.mxu0 0.0
    %429 = vmatmul.mubr.f32.gmra.mxu0 %v115
    %v430 = vpop.f32.mrf.mxu0
    %v431 = vadd.f32 0.0, %v430
    %v432 = vpop.f32.mrf.mxu0
    %v433 = vadd.f32 0.0, %v432
    %434 = vmatprep.mubr.f32.mxu0 0.0
    %435 = vmatmul.mubr.f32.gmra.mxu0 %v118
    %v436 = vpop.f32.mrf.mxu0
    %v437 = vadd.f32 0.0, %v436
    %v438 = vpop.f32.mrf.mxu0
    %v439 = vadd.f32 0.0, %v438
    %440 = vmatprep.mubr.f32.mxu0 0.0
    %441 = vmatmul.mubr.f32.gmra.mxu0 %v121
    %v442 = vpop.f32.mrf.mxu0
    %v443 = vadd.f32 0.0, %v442
    %v444 = vpop.f32.mrf.mxu0
    %v445 = vadd.f32 0.0, %v444
    %446 = vmatprep.mubr.f32.mxu0 0.0
    %447 = vmatmul.mubr.f32.gmra.mxu0 %v124
    %v448 = vpop.f32.mrf.mxu0
    %v449 = vadd.f32 0.0, %v448
    %v450 = vpop.f32.mrf.mxu0
    %v451 = vadd.f32 0.0, %v450
    %452 = vmatprep.mubr.f32.mxu0 0.0
    %453 = vmatmul.mubr.f32.gmra.mxu0 %v127
    %v454 = vpop.f32.mrf.mxu0
    %v455 = vadd.f32 0.0, %v454
    %v456 = vpop.f32.mrf.mxu0
    %v457 = vadd.f32 0.0, %v456
    %458 = vmatprep.mubr.f32.mxu0 0.0
    %459 = vmatmul.mubr.f32.gmra.mxu0 %v130
    %v460 = vpop.f32.mrf.mxu0
    %v461 = vadd.f32 0.0, %v460
    %v462 = vpop.f32.mrf.mxu0
    %v463 = vadd.f32 0.0, %v462
    %464 = vmatprep.mubr.f32.mxu0 0.0
    %465 = vmatmul.mubr.f32.gmra.mxu0 %v133
    %v466 = vpop.f32.mrf.mxu0
    %v467 = vadd.f32 0.0, %v466
    %v468 = vpop.f32.mrf.mxu0
    %v469 = vadd.f32 0.0, %v468
    %470 = vmatprep.mubr.f32.mxu0 0.0
    %471 = vmatmul.mubr.f32.gmra.mxu0 %v136
    %v472 = vpop.f32.mrf.mxu0
    %v473 = vadd.f32 0.0, %v472
    %v474 = vpop.f32.mrf.mxu0
    %v475 = vadd.f32 0.0, %v474
    %476 = vdwg.mxu0
    %477 = vmatprep.subr.mxu0 0.0
    %478 = vmatpush1.msra.mxu0 0.0
    %479 = vmatprep.subr.mxu0 0.0
    %480 = vmatpush1.msra.mxu0 0.0
    %481 = vmatprep.subr.mxu0 0.0
    %482 = vmatpush1.msra.mxu0 0.0
    %483 = vmatprep.subr.mxu0 0.0
    %484 = vmatpush1.msra.mxu0 0.0
    %485 = vmatprep.subr.mxu0 0.0
    %486 = vmatpush1.msra.mxu0 0.0
    %487 = vmatprep.subr.mxu0 0.0
    %488 = vmatpush1.msra.mxu0 0.0
    %489 = vmatprep.subr.mxu0 0.0
    %490 = vmatpush1.msra.mxu0 0.0
    %491 = vmatprep.subr.mxu0 0.0
    %492 = vmatpush1.msra.mxu0 0.0
    %493 = vmatprep.subr.mxu0 0.0
    %494 = vmatpush1.msra.mxu0 0.0
    %495 = vmatprep.subr.mxu0 0.0
    %496 = vmatpush1.msra.mxu0 0.0
    %497 = vmatprep.subr.mxu0 0.0
    %498 = vmatpush1.msra.mxu0 0.0
    %499 = vmatprep.subr.mxu0 0.0
    %500 = vmatpush1.msra.mxu0 0.0
    %501 = vmatprep.subr.mxu0 0.0
    %502 = vmatpush1.msra.mxu0 0.0
    %503 = vmatprep.subr.mxu0 %v83
    %504 = vmatpush1.msra.mxu0 %v82
    %505 = vmatprep.subr.mxu0 %v62
    %506 = vmatpush1.msra.mxu0 %v61
    %507 = vmatprep.subr.mxu0 %v41
    %508 = vmatpush1.msra.mxu0 %v40
    %509 = vmatprep.subr.mxu0 0.0
    %510 = vmatpush2.msra.mxu0 0.0
    %511 = vmatprep.subr.mxu0 0.0
    %512 = vmatpush2.msra.mxu0 0.0
    %513 = vmatprep.subr.mxu0 0.0
    %514 = vmatpush2.msra.mxu0 0.0
    %515 = vmatprep.subr.mxu0 0.0
    %516 = vmatpush2.msra.mxu0 0.0
    %517 = vmatprep.subr.mxu0 0.0
    %518 = vmatpush2.msra.mxu0 0.0
    %519 = vmatprep.subr.mxu0 0.0
    %520 = vmatpush2.msra.mxu0 0.0
    %521 = vmatprep.subr.mxu0 0.0
    %522 = vmatpush2.msra.mxu0 0.0
    %523 = vmatprep.subr.mxu0 0.0
    %524 = vmatpush2.msra.mxu0 0.0
    %525 = vmatprep.subr.mxu0 0.0
    %526 = vmatpush2.msra.mxu0 0.0
    %527 = vmatprep.subr.mxu0 0.0
    %528 = vmatpush2.msra.mxu0 0.0
    %529 = vmatprep.subr.mxu0 0.0
    %530 = vmatpush2.msra.mxu0 0.0
    %531 = vmatprep.subr.mxu0 0.0
    %532 = vmatpush2.msra.mxu0 0.0
    %533 = vmatprep.subr.mxu0 0.0
    %534 = vmatpush2.msra.mxu0 0.0
    %535 = vmatprep.subr.mxu0 0.0
    %536 = vmatpush2.msra.mxu0 0.0
    %537 = vmatprep.subr.mxu0 0.0
    %538 = vmatpush2.msra.mxu0 0.0
    %539 = vmatprep.subr.mxu0 0.0
    %540 = vmatpush2.msra.mxu0 0.0
    %541 = vmatprep.mubr.f32.mxu0 0.0
    %542 = vmatmul.mubr.f32.gmra.mxu0 %v115
    %v543 = vpop.f32.mrf.mxu0
    %v544 = vadd.f32 0.0, %v543
    %v545 = vpop.f32.mrf.mxu0
    %v546 = vadd.f32 0.0, %v545
    %547 = vmatprep.mubr.f32.mxu0 0.0
    %548 = vmatmul.mubr.f32.gmra.mxu0 %v118
    %v549 = vpop.f32.mrf.mxu0
    %v550 = vadd.f32 0.0, %v549
    %v551 = vpop.f32.mrf.mxu0
    %v552 = vadd.f32 0.0, %v551
    %553 = vmatprep.mubr.f32.mxu0 0.0
    %554 = vmatmul.mubr.f32.gmra.mxu0 %v121
    %v555 = vpop.f32.mrf.mxu0
    %v556 = vadd.f32 0.0, %v555
    %v557 = vpop.f32.mrf.mxu0
    %v558 = vadd.f32 0.0, %v557
    %559 = vmatprep.mubr.f32.mxu0 0.0
    %560 = vmatmul.mubr.f32.gmra.mxu0 %v124
    %v561 = vpop.f32.mrf.mxu0
    %v562 = vadd.f32 0.0, %v561
    %v563 = vpop.f32.mrf.mxu0
    %v564 = vadd.f32 0.0, %v563
    %565 = vmatprep.mubr.f32.mxu0 0.0
    %566 = vmatmul.mubr.f32.gmra.mxu0 %v127
    %v567 = vpop.f32.mrf.mxu0
    %v568 = vadd.f32 0.0, %v567
    %v569 = vpop.f32.mrf.mxu0
    %v570 = vadd.f32 0.0, %v569
    %571 = vmatprep.mubr.f32.mxu0 0.0
    %572 = vmatmul.mubr.f32.gmra.mxu0 %v130
    %v573 = vpop.f32.mrf.mxu0
    %v574 = vadd.f32 0.0, %v573
    %v575 = vpop.f32.mrf.mxu0
    %v576 = vadd.f32 0.0, %v575
    %577 = vmatprep.mubr.f32.mxu0 0.0
    %578 = vmatmul.mubr.f32.gmra.mxu0 %v133
    %v579 = vpop.f32.mrf.mxu0
    %v580 = vadd.f32 0.0, %v579
    %v581 = vpop.f32.mrf.mxu0
    %v582 = vadd.f32 0.0, %v581
    %583 = vmatprep.mubr.f32.mxu0 0.0
    %584 = vmatmul.mubr.f32.gmra.mxu0 %v136
    %v585 = vpop.f32.mrf.mxu0
    %v586 = vadd.f32 0.0, %v585
    %v587 = vpop.f32.mrf.mxu0
    %v588 = vadd.f32 0.0, %v587
    %589 = vdwg.mxu0
    %590 = vmatprep.subr.mxu0 0.0
    %591 = vmatpush1.msra.mxu0 0.0
    %592 = vmatprep.subr.mxu0 0.0
    %593 = vmatpush1.msra.mxu0 0.0
    %594 = vmatprep.subr.mxu0 0.0
    %595 = vmatpush1.msra.mxu0 0.0
    %596 = vmatprep.subr.mxu0 0.0
    %597 = vmatpush1.msra.mxu0 0.0
    %598 = vmatprep.subr.mxu0 0.0
    %599 = vmatpush1.msra.mxu0 0.0
    %600 = vmatprep.subr.mxu0 0.0
    %601 = vmatpush1.msra.mxu0 0.0
    %602 = vmatprep.subr.mxu0 0.0
    %603 = vmatpush1.msra.mxu0 0.0
    %604 = vmatprep.subr.mxu0 0.0
    %605 = vmatpush1.msra.mxu0 0.0
    %606 = vmatprep.subr.mxu0 0.0
    %607 = vmatpush1.msra.mxu0 0.0
    %608 = vmatprep.subr.mxu0 0.0
    %609 = vmatpush1.msra.mxu0 0.0
    %610 = vmatprep.subr.mxu0 0.0
    %611 = vmatpush1.msra.mxu0 0.0
    %612 = vmatprep.subr.mxu0 0.0
    %613 = vmatpush1.msra.mxu0 0.0
    %614 = vmatprep.subr.mxu0 0.0
    %615 = vmatpush1.msra.mxu0 0.0
    %616 = vmatprep.subr.mxu0 %v85
    %617 = vmatpush1.msra.mxu0 %v84
    %618 = vmatprep.subr.mxu0 %v64
    %619 = vmatpush1.msra.mxu0 %v63
    %620 = vmatprep.subr.mxu0 %v43
    %621 = vmatpush1.msra.mxu0 %v42
    %622 = vmatprep.subr.mxu0 0.0
    %623 = vmatpush2.msra.mxu0 0.0
    %624 = vmatprep.subr.mxu0 0.0
    %625 = vmatpush2.msra.mxu0 0.0
    %626 = vmatprep.subr.mxu0 0.0
    %627 = vmatpush2.msra.mxu0 0.0
    %628 = vmatprep.subr.mxu0 0.0
    %629 = vmatpush2.msra.mxu0 0.0
    %630 = vmatprep.subr.mxu0 0.0
    %631 = vmatpush2.msra.mxu0 0.0
    %632 = vmatprep.subr.mxu0 0.0
    %633 = vmatpush2.msra.mxu0 0.0
    %634 = vmatprep.subr.mxu0 0.0
    %635 = vmatpush2.msra.mxu0 0.0
    %636 = vmatprep.subr.mxu0 0.0
    %637 = vmatpush2.msra.mxu0 0.0
    %638 = vmatprep.subr.mxu0 0.0
    %639 = vmatpush2.msra.mxu0 0.0
    %640 = vmatprep.subr.mxu0 0.0
    %641 = vmatpush2.msra.mxu0 0.0
    %642 = vmatprep.subr.mxu0 0.0
    %643 = vmatpush2.msra.mxu0 0.0
    %644 = vmatprep.subr.mxu0 0.0
    %645 = vmatpush2.msra.mxu0 0.0
    %646 = vmatprep.subr.mxu0 0.0
    %647 = vmatpush2.msra.mxu0 0.0
    %648 = vmatprep.subr.mxu0 0.0
    %649 = vmatpush2.msra.mxu0 0.0
    %650 = vmatprep.subr.mxu0 0.0
    %651 = vmatpush2.msra.mxu0 0.0
    %652 = vmatprep.subr.mxu0 0.0
    %653 = vmatpush2.msra.mxu0 0.0
    %654 = vmatprep.mubr.f32.mxu0 0.0
    %655 = vmatmul.mubr.f32.gmra.mxu0 %v115
    %v656 = vpop.f32.mrf.mxu0
    %v657 = vadd.f32 0.0, %v656
    %v658 = vpop.f32.mrf.mxu0
    %v659 = vadd.f32 0.0, %v658
    %660 = vmatprep.mubr.f32.mxu0 0.0
    %661 = vmatmul.mubr.f32.gmra.mxu0 %v118
    %v662 = vpop.f32.mrf.mxu0
    %v663 = vadd.f32 0.0, %v662
    %v664 = vpop.f32.mrf.mxu0
    %v665 = vadd.f32 0.0, %v664
    %666 = vmatprep.mubr.f32.mxu0 0.0
    %667 = vmatmul.mubr.f32.gmra.mxu0 %v121
    %v668 = vpop.f32.mrf.mxu0
    %v669 = vadd.f32 0.0, %v668
    %v670 = vpop.f32.mrf.mxu0
    %v671 = vadd.f32 0.0, %v670
    %672 = vmatprep.mubr.f32.mxu0 0.0
    %673 = vmatmul.mubr.f32.gmra.mxu0 %v124
    %v674 = vpop.f32.mrf.mxu0
    %v675 = vadd.f32 0.0, %v674
    %v676 = vpop.f32.mrf.mxu0
    %v677 = vadd.f32 0.0, %v676
    %678 = vmatprep.mubr.f32.mxu0 0.0
    %679 = vmatmul.mubr.f32.gmra.mxu0 %v127
    %v680 = vpop.f32.mrf.mxu0
    %v681 = vadd.f32 0.0, %v680
    %v682 = vpop.f32.mrf.mxu0
    %v683 = vadd.f32 0.0, %v682
    %684 = vmatprep.mubr.f32.mxu0 0.0
    %685 = vmatmul.mubr.f32.gmra.mxu0 %v130
    %v686 = vpop.f32.mrf.mxu0
    %v687 = vadd.f32 0.0, %v686
    %v688 = vpop.f32.mrf.mxu0
    %v689 = vadd.f32 0.0, %v688
    %690 = vmatprep.mubr.f32.mxu0 0.0
    %691 = vmatmul.mubr.f32.gmra.mxu0 %v133
    %v692 = vpop.f32.mrf.mxu0
    %v693 = vadd.f32 0.0, %v692
    %v694 = vpop.f32.mrf.mxu0
    %v695 = vadd.f32 0.0, %v694
    %696 = vmatprep.mubr.f32.mxu0 0.0
    %697 = vmatmul.mubr.f32.gmra.mxu0 %v136
    %v698 = vpop.f32.mrf.mxu0
    %v699 = vadd.f32 0.0, %v698
    %v700 = vpop.f32.mrf.mxu0
    %v701 = vadd.f32 0.0, %v700
    %702 = vdwg.mxu0
    %703 = vmatprep.subr.mxu0 0.0
    %704 = vmatpush1.msra.mxu0 0.0
    %705 = vmatprep.subr.mxu0 0.0
    %706 = vmatpush1.msra.mxu0 0.0
    %707 = vmatprep.subr.mxu0 0.0
    %708 = vmatpush1.msra.mxu0 0.0
    %709 = vmatprep.subr.mxu0 0.0
    %710 = vmatpush1.msra.mxu0 0.0
    %711 = vmatprep.subr.mxu0 0.0
    %712 = vmatpush1.msra.mxu0 0.0
    %713 = vmatprep.subr.mxu0 0.0
    %714 = vmatpush1.msra.mxu0 0.0
    %715 = vmatprep.subr.mxu0 0.0
    %716 = vmatpush1.msra.mxu0 0.0
    %717 = vmatprep.subr.mxu0 0.0
    %718 = vmatpush1.msra.mxu0 0.0
    %719 = vmatprep.subr.mxu0 0.0
    %720 = vmatpush1.msra.mxu0 0.0
    %721 = vmatprep.subr.mxu0 0.0
    %722 = vmatpush1.msra.mxu0 0.0
    %723 = vmatprep.subr.mxu0 0.0
    %724 = vmatpush1.msra.mxu0 0.0
    %725 = vmatprep.subr.mxu0 0.0
    %726 = vmatpush1.msra.mxu0 0.0
    %727 = vmatprep.subr.mxu0 0.0
    %728 = vmatpush1.msra.mxu0 0.0
    %729 = vmatprep.subr.mxu0 %v87
    %730 = vmatpush1.msra.mxu0 %v86
    %731 = vmatprep.subr.mxu0 %v66
    %732 = vmatpush1.msra.mxu0 %v65
    %733 = vmatprep.subr.mxu0 %v45
    %734 = vmatpush1.msra.mxu0 %v44
    %735 = vmatprep.subr.mxu0 0.0
    %736 = vmatpush2.msra.mxu0 0.0
    %737 = vmatprep.subr.mxu0 0.0
    %738 = vmatpush2.msra.mxu0 0.0
    %739 = vmatprep.subr.mxu0 0.0
    %740 = vmatpush2.msra.mxu0 0.0
    %741 = vmatprep.subr.mxu0 0.0
    %742 = vmatpush2.msra.mxu0 0.0
    %743 = vmatprep.subr.mxu0 0.0
    %744 = vmatpush2.msra.mxu0 0.0
    %745 = vmatprep.subr.mxu0 0.0
    %746 = vmatpush2.msra.mxu0 0.0
    %747 = vmatprep.subr.mxu0 0.0
    %748 = vmatpush2.msra.mxu0 0.0
    %749 = vmatprep.subr.mxu0 0.0
    %750 = vmatpush2.msra.mxu0 0.0
    %751 = vmatprep.subr.mxu0 0.0
    %752 = vmatpush2.msra.mxu0 0.0
    %753 = vmatprep.subr.mxu0 0.0
    %754 = vmatpush2.msra.mxu0 0.0
    %755 = vmatprep.subr.mxu0 0.0
    %756 = vmatpush2.msra.mxu0 0.0
    %757 = vmatprep.subr.mxu0 0.0
    %758 = vmatpush2.msra.mxu0 0.0
    %759 = vmatprep.subr.mxu0 0.0
    %760 = vmatpush2.msra.mxu0 0.0
    %761 = vmatprep.subr.mxu0 0.0
    %762 = vmatpush2.msra.mxu0 0.0
    %763 = vmatprep.subr.mxu0 0.0
    %764 = vmatpush2.msra.mxu0 0.0
    %765 = vmatprep.subr.mxu0 0.0
    %766 = vmatpush2.msra.mxu0 0.0
    %767 = vmatprep.mubr.f32.mxu0 0.0
    %768 = vmatmul.mubr.f32.gmra.mxu0 %v115
    %v769 = vpop.f32.mrf.mxu0
    %v770 = vadd.f32 0.0, %v769
    %v771 = vpop.f32.mrf.mxu0
    %v772 = vadd.f32 0.0, %v771
    %773 = vmatprep.mubr.f32.mxu0 0.0
    %774 = vmatmul.mubr.f32.gmra.mxu0 %v118
    %v775 = vpop.f32.mrf.mxu0
    %v776 = vadd.f32 0.0, %v775
    %v777 = vpop.f32.mrf.mxu0
    %v778 = vadd.f32 0.0, %v777
    %779 = vmatprep.mubr.f32.mxu0 0.0
    %780 = vmatmul.mubr.f32.gmra.mxu0 %v121
    %v781 = vpop.f32.mrf.mxu0
    %v782 = vadd.f32 0.0, %v781
    %v783 = vpop.f32.mrf.mxu0
    %v784 = vadd.f32 0.0, %v783
    %785 = vmatprep.mubr.f32.mxu0 0.0
    %786 = vmatmul.mubr.f32.gmra.mxu0 %v124
    %v787 = vpop.f32.mrf.mxu0
    %v788 = vadd.f32 0.0, %v787
    %v789 = vpop.f32.mrf.mxu0
    %v790 = vadd.f32 0.0, %v789
    %791 = vmatprep.mubr.f32.mxu0 0.0
    %792 = vmatmul.mubr.f32.gmra.mxu0 %v127
    %v793 = vpop.f32.mrf.mxu0
    %v794 = vadd.f32 0.0, %v793
    %v795 = vpop.f32.mrf.mxu0
    %v796 = vadd.f32 0.0, %v795
    %797 = vmatprep.mubr.f32.mxu0 0.0
    %798 = vmatmul.mubr.f32.gmra.mxu0 %v130
    %v799 = vpop.f32.mrf.mxu0
    %v800 = vadd.f32 0.0, %v799
    %v801 = vpop.f32.mrf.mxu0
    %v802 = vadd.f32 0.0, %v801
    %803 = vmatprep.mubr.f32.mxu0 0.0
    %804 = vmatmul.mubr.f32.gmra.mxu0 %v133
    %v805 = vpop.f32.mrf.mxu0
    %v806 = vadd.f32 0.0, %v805
    %v807 = vpop.f32.mrf.mxu0
    %v808 = vadd.f32 0.0, %v807
    %809 = vmatprep.mubr.f32.mxu0 0.0
    %810 = vmatmul.mubr.f32.gmra.mxu0 %v136
    %v811 = vpop.f32.mrf.mxu0
    %v812 = vadd.f32 0.0, %v811
    %v813 = vpop.f32.mrf.mxu0
    %v814 = vadd.f32 0.0, %v813
    %815 = vdwg.mxu0
    %816 = vmatprep.subr.mxu0 0.0
    %817 = vmatpush1.msra.mxu0 0.0
    %818 = vmatprep.subr.mxu0 0.0
    %819 = vmatpush1.msra.mxu0 0.0
    %820 = vmatprep.subr.mxu0 0.0
    %821 = vmatpush1.msra.mxu0 0.0
    %822 = vmatprep.subr.mxu0 0.0
    %823 = vmatpush1.msra.mxu0 0.0
    %824 = vmatprep.subr.mxu0 0.0
    %825 = vmatpush1.msra.mxu0 0.0
    %826 = vmatprep.subr.mxu0 0.0
    %827 = vmatpush1.msra.mxu0 0.0
    %828 = vmatprep.subr.mxu0 0.0
    %829 = vmatpush1.msra.mxu0 0.0
    %830 = vmatprep.subr.mxu0 0.0
    %831 = vmatpush1.msra.mxu0 0.0
    %832 = vmatprep.subr.mxu0 0.0
    %833 = vmatpush1.msra.mxu0 0.0
    %834 = vmatprep.subr.mxu0 0.0
    %835 = vmatpush1.msra.mxu0 0.0
    %836 = vmatprep.subr.mxu0 0.0
    %837 = vmatpush1.msra.mxu0 0.0
    %838 = vmatprep.subr.mxu0 0.0
    %839 = vmatpush1.msra.mxu0 0.0
    %840 = vmatprep.subr.mxu0 0.0
    %841 = vmatpush1.msra.mxu0 0.0
    %842 = vmatprep.subr.mxu0 %v89
    %843 = vmatpush1.msra.mxu0 %v88
    %844 = vmatprep.subr.mxu0 %v68
    %845 = vmatpush1.msra.mxu0 %v67
    %846 = vmatprep.subr.mxu0 %v47
    %847 = vmatpush1.msra.mxu0 %v46
    %848 = vmatprep.subr.mxu0 0.0
    %849 = vmatpush2.msra.mxu0 0.0
    %850 = vmatprep.subr.mxu0 0.0
    %851 = vmatpush2.msra.mxu0 0.0
    %852 = vmatprep.subr.mxu0 0.0
    %853 = vmatpush2.msra.mxu0 0.0
    %854 = vmatprep.subr.mxu0 0.0
    %855 = vmatpush2.msra.mxu0 0.0
    %856 = vmatprep.subr.mxu0 0.0
    %857 = vmatpush2.msra.mxu0 0.0
    %858 = vmatprep.subr.mxu0 0.0
    %859 = vmatpush2.msra.mxu0 0.0
    %860 = vmatprep.subr.mxu0 0.0
    %861 = vmatpush2.msra.mxu0 0.0
    %862 = vmatprep.subr.mxu0 0.0
    %863 = vmatpush2.msra.mxu0 0.0
    %864 = vmatprep.subr.mxu0 0.0
    %865 = vmatpush2.msra.mxu0 0.0
    %866 = vmatprep.subr.mxu0 0.0
    %867 = vmatpush2.msra.mxu0 0.0
    %868 = vmatprep.subr.mxu0 0.0
    %869 = vmatpush2.msra.mxu0 0.0
    %870 = vmatprep.subr.mxu0 0.0
    %871 = vmatpush2.msra.mxu0 0.0
    %872 = vmatprep.subr.mxu0 0.0
    %873 = vmatpush2.msra.mxu0 0.0
    %874 = vmatprep.subr.mxu0 0.0
    %875 = vmatpush2.msra.mxu0 0.0
    %876 = vmatprep.subr.mxu0 0.0
    %877 = vmatpush2.msra.mxu0 0.0
    %878 = vmatprep.subr.mxu0 0.0
    %879 = vmatpush2.msra.mxu0 0.0
    %880 = vmatprep.mubr.f32.mxu0 0.0
    %881 = vmatmul.mubr.f32.gmra.mxu0 %v115
    %v882 = vpop.f32.mrf.mxu0
    %v883 = vadd.f32 0.0, %v882
    %v884 = vpop.f32.mrf.mxu0
    %v885 = vadd.f32 0.0, %v884
    %886 = vmatprep.mubr.f32.mxu0 0.0
    %887 = vmatmul.mubr.f32.gmra.mxu0 %v118
    %v888 = vpop.f32.mrf.mxu0
    %v889 = vadd.f32 0.0, %v888
    %v890 = vpop.f32.mrf.mxu0
    %v891 = vadd.f32 0.0, %v890
    %892 = vmatprep.mubr.f32.mxu0 0.0
    %893 = vmatmul.mubr.f32.gmra.mxu0 %v121
    %v894 = vpop.f32.mrf.mxu0
    %v895 = vadd.f32 0.0, %v894
    %v896 = vpop.f32.mrf.mxu0
    %v897 = vadd.f32 0.0, %v896
    %898 = vmatprep.mubr.f32.mxu0 0.0
    %899 = vmatmul.mubr.f32.gmra.mxu0 %v124
    %v900 = vpop.f32.mrf.mxu0
    %v901 = vadd.f32 0.0, %v900
    %v902 = vpop.f32.mrf.mxu0
    %v903 = vadd.f32 0.0, %v902
    %904 = vmatprep.mubr.f32.mxu0 0.0
    %905 = vmatmul.mubr.f32.gmra.mxu0 %v127
    %v906 = vpop.f32.mrf.mxu0
    %v907 = vadd.f32 0.0, %v906
    %v908 = vpop.f32.mrf.mxu0
    %v909 = vadd.f32 0.0, %v908
    %910 = vmatprep.mubr.f32.mxu0 0.0
    %911 = vmatmul.mubr.f32.gmra.mxu0 %v130
    %v912 = vpop.f32.mrf.mxu0
    %v913 = vadd.f32 0.0, %v912
    %v914 = vpop.f32.mrf.mxu0
    %v915 = vadd.f32 0.0, %v914
    %916 = vmatprep.mubr.f32.mxu0 0.0
    %917 = vmatmul.mubr.f32.gmra.mxu0 %v133
    %v918 = vpop.f32.mrf.mxu0
    %v919 = vadd.f32 0.0, %v918
    %v920 = vpop.f32.mrf.mxu0
    %v921 = vadd.f32 0.0, %v920
    %922 = vmatprep.mubr.f32.mxu0 0.0
    %923 = vmatmul.mubr.f32.gmra.mxu0 %v136
    %v924 = vpop.f32.mrf.mxu0
    %v925 = vadd.f32 0.0, %v924
    %v926 = vpop.f32.mrf.mxu0
    %v927 = vadd.f32 0.0, %v926
    %928 = vdwg.mxu0
    %929 = vmatprep.subr.mxu0 0.0
    %930 = vmatpush1.msra.mxu0 0.0
    %931 = vmatprep.subr.mxu0 0.0
    %932 = vmatpush1.msra.mxu0 0.0
    %933 = vmatprep.subr.mxu0 0.0
    %934 = vmatpush1.msra.mxu0 0.0
    %935 = vmatprep.subr.mxu0 0.0
    %936 = vmatpush1.msra.mxu0 0.0
    %937 = vmatprep.subr.mxu0 0.0
    %938 = vmatpush1.msra.mxu0 0.0
    %939 = vmatprep.subr.mxu0 0.0
    %940 = vmatpush1.msra.mxu0 0.0
    %941 = vmatprep.subr.mxu0 0.0
    %942 = vmatpush1.msra.mxu0 0.0
    %943 = vmatprep.subr.mxu0 0.0
    %944 = vmatpush1.msra.mxu0 0.0
    %945 = vmatprep.subr.mxu0 0.0
    %946 = vmatpush1.msra.mxu0 0.0
    %947 = vmatprep.subr.mxu0 0.0
    %948 = vmatpush1.msra.mxu0 0.0
    %949 = vmatprep.subr.mxu0 0.0
    %950 = vmatpush1.msra.mxu0 0.0
    %951 = vmatprep.subr.mxu0 0.0
    %952 = vmatpush1.msra.mxu0 0.0
    %953 = vmatprep.subr.mxu0 0.0
    %954 = vmatpush1.msra.mxu0 0.0
    %955 = vmatprep.subr.mxu0 %v91
    %956 = vmatpush1.msra.mxu0 %v90
    %957 = vmatprep.subr.mxu0 %v70
    %958 = vmatpush1.msra.mxu0 %v69
    %959 = vmatprep.subr.mxu0 %v49
    %960 = vmatpush1.msra.mxu0 %v48
    %961 = vmatprep.subr.mxu0 0.0
    %962 = vmatpush2.msra.mxu0 0.0
    %963 = vmatprep.subr.mxu0 0.0
    %964 = vmatpush2.msra.mxu0 0.0
    %965 = vmatprep.subr.mxu0 0.0
    %966 = vmatpush2.msra.mxu0 0.0
    %967 = vmatprep.subr.mxu0 0.0
    %968 = vmatpush2.msra.mxu0 0.0
    %969 = vmatprep.subr.mxu0 0.0
    %970 = vmatpush2.msra.mxu0 0.0
    %971 = vmatprep.subr.mxu0 0.0
    %972 = vmatpush2.msra.mxu0 0.0
    %973 = vmatprep.subr.mxu0 0.0
    %974 = vmatpush2.msra.mxu0 0.0
    %975 = vmatprep.subr.mxu0 0.0
    %976 = vmatpush2.msra.mxu0 0.0
    %977 = vmatprep.subr.mxu0 0.0
    %978 = vmatpush2.msra.mxu0 0.0
    %979 = vmatprep.subr.mxu0 0.0
    %980 = vmatpush2.msra.mxu0 0.0
    %981 = vmatprep.subr.mxu0 0.0
    %982 = vmatpush2.msra.mxu0 0.0
    %983 = vmatprep.subr.mxu0 0.0
    %984 = vmatpush2.msra.mxu0 0.0
    %985 = vmatprep.subr.mxu0 0.0
    %986 = vmatpush2.msra.mxu0 0.0
    %987 = vmatprep.subr.mxu0 0.0
    %988 = vmatpush2.msra.mxu0 0.0
    %989 = vmatprep.subr.mxu0 0.0
    %990 = vmatpush2.msra.mxu0 0.0
    %991 = vmatprep.subr.mxu0 0.0
    %992 = vmatpush2.msra.mxu0 0.0
    %993 = vmatprep.mubr.f32.mxu0 0.0
    %994 = vmatmul.mubr.f32.gmra.mxu0 %v115
    %v995 = vpop.f32.mrf.mxu0
    %v996 = vadd.f32 0.0, %v995
    %v997 = vpop.f32.mrf.mxu0
    %v998 = vadd.f32 0.0, %v997
    %999 = vmatprep.mubr.f32.mxu0 0.0
    %1000 = vmatmul.mubr.f32.gmra.mxu0 %v118
    %v1001 = vpop.f32.mrf.mxu0
    %v1002 = vadd.f32 0.0, %v1001
    %v1003 = vpop.f32.mrf.mxu0
    %v1004 = vadd.f32 0.0, %v1003
    %1005 = vmatprep.mubr.f32.mxu0 0.0
    %1006 = vmatmul.mubr.f32.gmra.mxu0 %v121
    %v1007 = vpop.f32.mrf.mxu0
    %v1008 = vadd.f32 0.0, %v1007
    %v1009 = vpop.f32.mrf.mxu0
    %v1010 = vadd.f32 0.0, %v1009
    %1011 = vmatprep.mubr.f32.mxu0 0.0
    %1012 = vmatmul.mubr.f32.gmra.mxu0 %v124
    %v1013 = vpop.f32.mrf.mxu0
    %v1014 = vadd.f32 0.0, %v1013
    %v1015 = vpop.f32.mrf.mxu0
    %v1016 = vadd.f32 0.0, %v1015
    %1017 = vmatprep.mubr.f32.mxu0 0.0
    %1018 = vmatmul.mubr.f32.gmra.mxu0 %v127
    %v1019 = vpop.f32.mrf.mxu0
    %v1020 = vadd.f32 0.0, %v1019
    %v1021 = vpop.f32.mrf.mxu0
    %v1022 = vadd.f32 0.0, %v1021
    %1023 = vmatprep.mubr.f32.mxu0 0.0
    %1024 = vmatmul.mubr.f32.gmra.mxu0 %v130
    %v1025 = vpop.f32.mrf.mxu0
    %v1026 = vadd.f32 0.0, %v1025
    %v1027 = vpop.f32.mrf.mxu0
    %v1028 = vadd.f32 0.0, %v1027
    %1029 = vmatprep.mubr.f32.mxu0 0.0
    %1030 = vmatmul.mubr.f32.gmra.mxu0 %v133
    %v1031 = vpop.f32.mrf.mxu0
    %v1032 = vadd.f32 0.0, %v1031
    %v1033 = vpop.f32.mrf.mxu0
    %v1034 = vadd.f32 0.0, %v1033
    %1035 = vmatprep.mubr.f32.mxu0 0.0
    %1036 = vmatmul.mubr.f32.gmra.mxu0 %v136
    %v1037 = vpop.f32.mrf.mxu0
    %v1038 = vadd.f32 0.0, %v1037
    %v1039 = vpop.f32.mrf.mxu0
    %v1040 = vadd.f32 0.0, %v1039
    %1041 = vdwg.mxu0
    %1042 = vmatprep.subr.mxu0 0.0
    %1043 = vmatpush1.msra.mxu0 0.0
    %1044 = vmatprep.subr.mxu0 0.0
    %1045 = vmatpush1.msra.mxu0 0.0
    %1046 = vmatprep.subr.mxu0 0.0
    %1047 = vmatpush1.msra.mxu0 0.0
    %1048 = vmatprep.subr.mxu0 0.0
    %1049 = vmatpush1.msra.mxu0 0.0
    %1050 = vmatprep.subr.mxu0 0.0
    %1051 = vmatpush1.msra.mxu0 0.0
    %1052 = vmatprep.subr.mxu0 0.0
    %1053 = vmatpush1.msra.mxu0 0.0
    %1054 = vmatprep.subr.mxu0 0.0
    %1055 = vmatpush1.msra.mxu0 0.0
    %1056 = vmatprep.subr.mxu0 0.0
    %1057 = vmatpush1.msra.mxu0 0.0
    %1058 = vmatprep.subr.mxu0 0.0
    %1059 = vmatpush1.msra.mxu0 0.0
    %1060 = vmatprep.subr.mxu0 0.0
    %1061 = vmatpush1.msra.mxu0 0.0
    %1062 = vmatprep.subr.mxu0 0.0
    %1063 = vmatpush1.msra.mxu0 0.0
    %1064 = vmatprep.subr.mxu0 0.0
    %1065 = vmatpush1.msra.mxu0 0.0
    %1066 = vmatprep.subr.mxu0 0.0
    %1067 = vmatpush1.msra.mxu0 0.0
    %1068 = vmatprep.subr.mxu0 %v93
    %1069 = vmatpush1.msra.mxu0 %v92
    %1070 = vmatprep.subr.mxu0 %v72
    %1071 = vmatpush1.msra.mxu0 %v71
    %1072 = vmatprep.subr.mxu0 %v51
    %1073 = vmatpush1.msra.mxu0 %v50
    %1074 = vmatprep.subr.mxu0 0.0
    %1075 = vmatpush2.msra.mxu0 0.0
    %1076 = vmatprep.subr.mxu0 0.0
    %1077 = vmatpush2.msra.mxu0 0.0
    %1078 = vmatprep.subr.mxu0 0.0
    %1079 = vmatpush2.msra.mxu0 0.0
    %1080 = vmatprep.subr.mxu0 0.0
    %1081 = vmatpush2.msra.mxu0 0.0
    %1082 = vmatprep.subr.mxu0 0.0
    %1083 = vmatpush2.msra.mxu0 0.0
    %1084 = vmatprep.subr.mxu0 0.0
    %1085 = vmatpush2.msra.mxu0 0.0
    %1086 = vmatprep.subr.mxu0 0.0
    %1087 = vmatpush2.msra.mxu0 0.0
    %1088 = vmatprep.subr.mxu0 0.0
    %1089 = vmatpush2.msra.mxu0 0.0
    %1090 = vmatprep.subr.mxu0 0.0
    %1091 = vmatpush2.msra.mxu0 0.0
    %1092 = vmatprep.subr.mxu0 0.0
    %1093 = vmatpush2.msra.mxu0 0.0
    %1094 = vmatprep.subr.mxu0 0.0
    %1095 = vmatpush2.msra.mxu0 0.0
    %1096 = vmatprep.subr.mxu0 0.0
    %1097 = vmatpush2.msra.mxu0 0.0
    %1098 = vmatprep.subr.mxu0 0.0
    %1099 = vmatpush2.msra.mxu0 0.0
    %1100 = vmatprep.subr.mxu0 0.0
    %1101 = vmatpush2.msra.mxu0 0.0
    %1102 = vmatprep.subr.mxu0 0.0
    %1103 = vmatpush2.msra.mxu0 0.0
    %1104 = vmatprep.subr.mxu0 0.0
    %1105 = vmatpush2.msra.mxu0 0.0
    %1106 = vmatprep.mubr.f32.mxu0 0.0
    %1107 = vmatmul.mubr.f32.gmra.mxu0 %v115
    %v1108 = vpop.f32.mrf.mxu0
    %v1109 = vadd.f32 0.0, %v1108
    %v1110 = vpop.f32.mrf.mxu0
    %v1111 = vadd.f32 0.0, %v1110
    %1112 = vmatprep.mubr.f32.mxu0 0.0
    %1113 = vmatmul.mubr.f32.gmra.mxu0 %v118
    %v1114 = vpop.f32.mrf.mxu0
    %v1115 = vadd.f32 0.0, %v1114
    %v1116 = vpop.f32.mrf.mxu0
    %v1117 = vadd.f32 0.0, %v1116
    %1118 = vmatprep.mubr.f32.mxu0 0.0
    %1119 = vmatmul.mubr.f32.gmra.mxu0 %v121
    %v1120 = vpop.f32.mrf.mxu0
    %v1121 = vadd.f32 0.0, %v1120
    %v1122 = vpop.f32.mrf.mxu0
    %v1123 = vadd.f32 0.0, %v1122
    %1124 = vmatprep.mubr.f32.mxu0 0.0
    %1125 = vmatmul.mubr.f32.gmra.mxu0 %v124
    %v1126 = vpop.f32.mrf.mxu0
    %v1127 = vadd.f32 0.0, %v1126
    %v1128 = vpop.f32.mrf.mxu0
    %v1129 = vadd.f32 0.0, %v1128
    %1130 = vmatprep.mubr.f32.mxu0 0.0
    %1131 = vmatmul.mubr.f32.gmra.mxu0 %v127
    %v1132 = vpop.f32.mrf.mxu0
    %v1133 = vadd.f32 0.0, %v1132
    %v1134 = vpop.f32.mrf.mxu0
    %v1135 = vadd.f32 0.0, %v1134
    %1136 = vmatprep.mubr.f32.mxu0 0.0
    %1137 = vmatmul.mubr.f32.gmra.mxu0 %v130
    %v1138 = vpop.f32.mrf.mxu0
    %v1139 = vadd.f32 0.0, %v1138
    %v1140 = vpop.f32.mrf.mxu0
    %v1141 = vadd.f32 0.0, %v1140
    %1142 = vmatprep.mubr.f32.mxu0 0.0
    %1143 = vmatmul.mubr.f32.gmra.mxu0 %v133
    %v1144 = vpop.f32.mrf.mxu0
    %v1145 = vadd.f32 0.0, %v1144
    %v1146 = vpop.f32.mrf.mxu0
    %v1147 = vadd.f32 0.0, %v1146
    %1148 = vmatprep.mubr.f32.mxu0 0.0
    %1149 = vmatmul.mubr.f32.gmra.mxu0 %v136
    %v1150 = vpop.f32.mrf.mxu0
    %v1151 = vadd.f32 0.0, %v1150
    %v1152 = vpop.f32.mrf.mxu0
    %v1153 = vadd.f32 0.0, %v1152
    %1154 = vdwg.mxu0
    %1155 = vmatprep.subr.mxu0 0.0
    %1156 = vmatpush1.msra.mxu0 0.0
    %1157 = vmatprep.subr.mxu0 0.0
    %1158 = vmatpush1.msra.mxu0 0.0
    %1159 = vmatprep.subr.mxu0 0.0
    %1160 = vmatpush1.msra.mxu0 0.0
    %1161 = vmatprep.subr.mxu0 0.0
    %1162 = vmatpush1.msra.mxu0 0.0
    %1163 = vmatprep.subr.mxu0 0.0
    %1164 = vmatpush1.msra.mxu0 0.0
    %1165 = vmatprep.subr.mxu0 0.0
    %1166 = vmatpush1.msra.mxu0 0.0
    %1167 = vmatprep.subr.mxu0 0.0
    %1168 = vmatpush1.msra.mxu0 0.0
    %1169 = vmatprep.subr.mxu0 0.0
    %1170 = vmatpush1.msra.mxu0 0.0
    %1171 = vmatprep.subr.mxu0 0.0
    %1172 = vmatpush1.msra.mxu0 0.0
    %1173 = vmatprep.subr.mxu0 0.0
    %1174 = vmatpush1.msra.mxu0 0.0
    %1175 = vmatprep.subr.mxu0 0.0
    %1176 = vmatpush1.msra.mxu0 0.0
    %1177 = vmatprep.subr.mxu0 0.0
    %1178 = vmatpush1.msra.mxu0 0.0
    %1179 = vmatprep.subr.mxu0 0.0
    %1180 = vmatpush1.msra.mxu0 0.0
    %1181 = vmatprep.subr.mxu0 %v95
    %1182 = vmatpush1.msra.mxu0 %v94
    %1183 = vmatprep.subr.mxu0 %v74
    %1184 = vmatpush1.msra.mxu0 %v73
    %1185 = vmatprep.subr.mxu0 %v53
    %1186 = vmatpush1.msra.mxu0 %v52
    %1187 = vmatprep.subr.mxu0 0.0
    %1188 = vmatpush2.msra.mxu0 0.0
    %1189 = vmatprep.subr.mxu0 0.0
    %1190 = vmatpush2.msra.mxu0 0.0
    %1191 = vmatprep.subr.mxu0 0.0
    %1192 = vmatpush2.msra.mxu0 0.0
    %1193 = vmatprep.subr.mxu0 0.0
    %1194 = vmatpush2.msra.mxu0 0.0
    %1195 = vmatprep.subr.mxu0 0.0
    %1196 = vmatpush2.msra.mxu0 0.0
    %1197 = vmatprep.subr.mxu0 0.0
    %1198 = vmatpush2.msra.mxu0 0.0
    %1199 = vmatprep.subr.mxu0 0.0
    %1200 = vmatpush2.msra.mxu0 0.0
    %1201 = vmatprep.subr.mxu0 0.0
    %1202 = vmatpush2.msra.mxu0 0.0
    %1203 = vmatprep.subr.mxu0 0.0
    %1204 = vmatpush2.msra.mxu0 0.0
    %1205 = vmatprep.subr.mxu0 0.0
    %1206 = vmatpush2.msra.mxu0 0.0
    %1207 = vmatprep.subr.mxu0 0.0
    %1208 = vmatpush2.msra.mxu0 0.0
    %1209 = vmatprep.subr.mxu0 0.0
    %1210 = vmatpush2.msra.mxu0 0.0
    %1211 = vmatprep.subr.mxu0 0.0
    %1212 = vmatpush2.msra.mxu0 0.0
    %1213 = vmatprep.subr.mxu0 0.0
    %1214 = vmatpush2.msra.mxu0 0.0
    %1215 = vmatprep.subr.mxu0 0.0
    %1216 = vmatpush2.msra.mxu0 0.0
    %1217 = vmatprep.subr.mxu0 0.0
    %1218 = vmatpush2.msra.mxu0 0.0
    %1219 = vmatprep.mubr.f32.mxu0 0.0
    %1220 = vmatmul.mubr.f32.gmra.mxu0 %v115
    %v1221 = vpop.f32.mrf.mxu0
    %v1222 = vadd.f32 0.0, %v1221
    %v1223 = vpop.f32.mrf.mxu0
    %v1224 = vadd.f32 0.0, %v1223
    %1225 = vmatprep.mubr.f32.mxu0 0.0
    %1226 = vmatmul.mubr.f32.gmra.mxu0 %v118
    %v1227 = vpop.f32.mrf.mxu0
    %v1228 = vadd.f32 0.0, %v1227
    %v1229 = vpop.f32.mrf.mxu0
    %v1230 = vadd.f32 0.0, %v1229
    %1231 = vmatprep.mubr.f32.mxu0 0.0
    %1232 = vmatmul.mubr.f32.gmra.mxu0 %v121
    %v1233 = vpop.f32.mrf.mxu0
    %v1234 = vadd.f32 0.0, %v1233
    %v1235 = vpop.f32.mrf.mxu0
    %v1236 = vadd.f32 0.0, %v1235
    %1237 = vmatprep.mubr.f32.mxu0 0.0
    %1238 = vmatmul.mubr.f32.gmra.mxu0 %v124
    %v1239 = vpop.f32.mrf.mxu0
    %v1240 = vadd.f32 0.0, %v1239
    %v1241 = vpop.f32.mrf.mxu0
    %v1242 = vadd.f32 0.0, %v1241
    %1243 = vmatprep.mubr.f32.mxu0 0.0
    %1244 = vmatmul.mubr.f32.gmra.mxu0 %v127
    %v1245 = vpop.f32.mrf.mxu0
    %v1246 = vadd.f32 0.0, %v1245
    %v1247 = vpop.f32.mrf.mxu0
    %v1248 = vadd.f32 0.0, %v1247
    %1249 = vmatprep.mubr.f32.mxu0 0.0
    %1250 = vmatmul.mubr.f32.gmra.mxu0 %v130
    %v1251 = vpop.f32.mrf.mxu0
    %v1252 = vadd.f32 0.0, %v1251
    %v1253 = vpop.f32.mrf.mxu0
    %v1254 = vadd.f32 0.0, %v1253
    %1255 = vmatprep.mubr.f32.mxu0 0.0
    %1256 = vmatmul.mubr.f32.gmra.mxu0 %v133
    %v1257 = vpop.f32.mrf.mxu0
    %v1258 = vadd.f32 0.0, %v1257
    %v1259 = vpop.f32.mrf.mxu0
    %v1260 = vadd.f32 0.0, %v1259
    %1261 = vmatprep.mubr.f32.mxu0 0.0
    %1262 = vmatmul.mubr.f32.gmra.mxu0 %v136
    %v1263 = vpop.f32.mrf.mxu0
    %v1264 = vadd.f32 0.0, %v1263
    %v1265 = vpop.f32.mrf.mxu0
    %v1266 = vadd.f32 0.0, %v1265
    %1267 = vdwg.mxu0
    %v1269 = vsel %vm113, %v96, 0
    %v1272 = vsel %vm113, %v97, 0
    %v1275 = vsel %vm113, %v98, 0
    %v1278 = vsel %vm113, %v99, 0
    %v1281 = vsel %vm113, %v100, 0
    %v1284 = vsel %vm113, %v101, 0
    %v1287 = vsel %vm113, %v102, 0
    %v1290 = vsel %vm113, %v103, 0
    %1292 = vmatprep.subr.mxu0 0.0
    %1293 = vmatpush1.msra.mxu0 0.0
    %1294 = vmatprep.subr.mxu0 0.0
    %1295 = vmatpush1.msra.mxu0 0.0
    %1296 = vmatprep.subr.mxu0 0.0
    %1297 = vmatpush1.msra.mxu0 0.0
    %1298 = vmatprep.subr.mxu0 0.0
    %1299 = vmatpush1.msra.mxu0 0.0
    %1300 = vmatprep.subr.mxu0 0.0
    %1301 = vmatpush1.msra.mxu0 0.0
    %1302 = vmatprep.subr.mxu0 0.0
    %1303 = vmatpush1.msra.mxu0 0.0
    %1304 = vmatprep.subr.mxu0 0.0
    %1305 = vmatpush1.msra.mxu0 0.0
    %1306 = vmatprep.subr.mxu0 0.0
    %1307 = vmatpush1.msra.mxu0 0.0
    %1308 = vmatprep.subr.mxu0 0.0
    %1309 = vmatpush1.msra.mxu0 0.0
    %1310 = vmatprep.subr.mxu0 0.0
    %1311 = vmatpush1.msra.mxu0 0.0
    %1312 = vmatprep.subr.mxu0 0.0
    %1313 = vmatpush1.msra.mxu0 0.0
    %1314 = vmatprep.subr.mxu0 0.0
    %1315 = vmatpush1.msra.mxu0 0.0
    %1316 = vmatprep.subr.mxu0 0.0
    %1317 = vmatpush1.msra.mxu0 0.0
    %1318 = vmatprep.subr.mxu0 %v76
    %1319 = vmatpush1.msra.mxu0 %v75
    %1320 = vmatprep.subr.mxu0 %v55
    %1321 = vmatpush1.msra.mxu0 %v54
    %1322 = vmatprep.subr.mxu0 %v34
    %1323 = vmatpush1.msra.mxu0 %v33
    %1324 = vmatprep.subr.mxu0 0.0
    %1325 = vmatpush2.msra.mxu0 0.0
    %1326 = vmatprep.subr.mxu0 0.0
    %1327 = vmatpush2.msra.mxu0 0.0
    %1328 = vmatprep.subr.mxu0 0.0
    %1329 = vmatpush2.msra.mxu0 0.0
    %1330 = vmatprep.subr.mxu0 0.0
    %1331 = vmatpush2.msra.mxu0 0.0
    %1332 = vmatprep.subr.mxu0 0.0
    %1333 = vmatpush2.msra.mxu0 0.0
    %1334 = vmatprep.subr.mxu0 0.0
    %1335 = vmatpush2.msra.mxu0 0.0
    %1336 = vmatprep.subr.mxu0 0.0
    %1337 = vmatpush2.msra.mxu0 0.0
    %1338 = vmatprep.subr.mxu0 0.0
    %1339 = vmatpush2.msra.mxu0 0.0
    %1340 = vmatprep.subr.mxu0 0.0
    %1341 = vmatpush2.msra.mxu0 0.0
    %1342 = vmatprep.subr.mxu0 0.0
    %1343 = vmatpush2.msra.mxu0 0.0
    %1344 = vmatprep.subr.mxu0 0.0
    %1345 = vmatpush2.msra.mxu0 0.0
    %1346 = vmatprep.subr.mxu0 0.0
    %1347 = vmatpush2.msra.mxu0 0.0
    %1348 = vmatprep.subr.mxu0 0.0
    %1349 = vmatpush2.msra.mxu0 0.0
    %1350 = vmatprep.subr.mxu0 0.0
    %1351 = vmatpush2.msra.mxu0 0.0
    %1352 = vmatprep.subr.mxu0 0.0
    %1353 = vmatpush2.msra.mxu0 0.0
    %1354 = vmatprep.subr.mxu0 0.0
    %1355 = vmatpush2.msra.mxu0 0.0
    %1356 = vmatprep.mubr.f32.mxu0 0.0
    %1357 = vmatmul.mubr.f32.gmra.mxu0 %v1269
    %v1358 = vpop.f32.mrf.mxu0
    %v1359 = vadd.f32 %v205, %v1358
    %v1360 = vpop.f32.mrf.mxu0
    %v1361 = vadd.f32 %v207, %v1360
    %1362 = vmatprep.mubr.f32.mxu0 0.0
    %1363 = vmatmul.mubr.f32.gmra.mxu0 %v1272
    %v1364 = vpop.f32.mrf.mxu0
    %v1365 = vadd.f32 %v211, %v1364
    %v1366 = vpop.f32.mrf.mxu0
    %v1367 = vadd.f32 %v213, %v1366
    %1368 = vmatprep.mubr.f32.mxu0 0.0
    %1369 = vmatmul.mubr.f32.gmra.mxu0 %v1275
    %v1370 = vpop.f32.mrf.mxu0
    %v1371 = vadd.f32 %v217, %v1370
    %v1372 = vpop.f32.mrf.mxu0
    %v1373 = vadd.f32 %v219, %v1372
    %1374 = vmatprep.mubr.f32.mxu0 0.0
    %1375 = vmatmul.mubr.f32.gmra.mxu0 %v1278
    %v1376 = vpop.f32.mrf.mxu0
    %v1377 = vadd.f32 %v223, %v1376
    %v1378 = vpop.f32.mrf.mxu0
    %v1379 = vadd.f32 %v225, %v1378
    %1380 = vmatprep.mubr.f32.mxu0 0.0
    %1381 = vmatmul.mubr.f32.gmra.mxu0 %v1281
    %v1382 = vpop.f32.mrf.mxu0
    %v1383 = vadd.f32 %v229, %v1382
    %v1384 = vpop.f32.mrf.mxu0
    %v1385 = vadd.f32 %v231, %v1384
    %1386 = vmatprep.mubr.f32.mxu0 0.0
    %1387 = vmatmul.mubr.f32.gmra.mxu0 %v1284
    %v1388 = vpop.f32.mrf.mxu0
    %v1389 = vadd.f32 %v235, %v1388
    %v1390 = vpop.f32.mrf.mxu0
    %v1391 = vadd.f32 %v237, %v1390
    %1392 = vmatprep.mubr.f32.mxu0 0.0
    %1393 = vmatmul.mubr.f32.gmra.mxu0 %v1287
    %v1394 = vpop.f32.mrf.mxu0
    %v1395 = vadd.f32 %v241, %v1394
    %v1396 = vpop.f32.mrf.mxu0
    %v1397 = vadd.f32 %v243, %v1396
    %1398 = vmatprep.mubr.f32.mxu0 0.0
    %1399 = vmatmul.mubr.f32.gmra.mxu0 %v1290
    %v1400 = vpop.f32.mrf.mxu0
    %v1401 = vadd.f32 %v247, %v1400
    %v1402 = vpop.f32.mrf.mxu0
    %v1403 = vadd.f32 %v249, %v1402
    %1404 = vdwg.mxu0
    %1405 = vmatprep.subr.mxu0 0.0
    %1406 = vmatpush1.msra.mxu0 0.0
    %1407 = vmatprep.subr.mxu0 0.0
    %1408 = vmatpush1.msra.mxu0 0.0
    %1409 = vmatprep.subr.mxu0 0.0
    %1410 = vmatpush1.msra.mxu0 0.0
    %1411 = vmatprep.subr.mxu0 0.0
    %1412 = vmatpush1.msra.mxu0 0.0
    %1413 = vmatprep.subr.mxu0 0.0
    %1414 = vmatpush1.msra.mxu0 0.0
    %1415 = vmatprep.subr.mxu0 0.0
    %1416 = vmatpush1.msra.mxu0 0.0
    %1417 = vmatprep.subr.mxu0 0.0
    %1418 = vmatpush1.msra.mxu0 0.0
    %1419 = vmatprep.subr.mxu0 0.0
    %1420 = vmatpush1.msra.mxu0 0.0
    %1421 = vmatprep.subr.mxu0 0.0
    %1422 = vmatpush1.msra.mxu0 0.0
    %1423 = vmatprep.subr.mxu0 0.0
    %1424 = vmatpush1.msra.mxu0 0.0
    %1425 = vmatprep.subr.mxu0 0.0
    %1426 = vmatpush1.msra.mxu0 0.0
    %1427 = vmatprep.subr.mxu0 0.0
    %1428 = vmatpush1.msra.mxu0 0.0
    %1429 = vmatprep.subr.mxu0 0.0
    %1430 = vmatpush1.msra.mxu0 0.0
    %1431 = vmatprep.subr.mxu0 %v78
    %1432 = vmatpush1.msra.mxu0 %v77
    %1433 = vmatprep.subr.mxu0 %v57
    %1434 = vmatpush1.msra.mxu0 %v56
    %1435 = vmatprep.subr.mxu0 %v36
    %1436 = vmatpush1.msra.mxu0 %v35
    %1437 = vmatprep.subr.mxu0 0.0
    %1438 = vmatpush2.msra.mxu0 0.0
    %1439 = vmatprep.subr.mxu0 0.0
    %1440 = vmatpush2.msra.mxu0 0.0
    %1441 = vmatprep.subr.mxu0 0.0
    %1442 = vmatpush2.msra.mxu0 0.0
    %1443 = vmatprep.subr.mxu0 0.0
    %1444 = vmatpush2.msra.mxu0 0.0
    %1445 = vmatprep.subr.mxu0 0.0
    %1446 = vmatpush2.msra.mxu0 0.0
    %1447 = vmatprep.subr.mxu0 0.0
    %1448 = vmatpush2.msra.mxu0 0.0
    %1449 = vmatprep.subr.mxu0 0.0
    %1450 = vmatpush2.msra.mxu0 0.0
    %1451 = vmatprep.subr.mxu0 0.0
    %1452 = vmatpush2.msra.mxu0 0.0
    %1453 = vmatprep.subr.mxu0 0.0
    %1454 = vmatpush2.msra.mxu0 0.0
    %1455 = vmatprep.subr.mxu0 0.0
    %1456 = vmatpush2.msra.mxu0 0.0
    %1457 = vmatprep.subr.mxu0 0.0
    %1458 = vmatpush2.msra.mxu0 0.0
    %1459 = vmatprep.subr.mxu0 0.0
    %1460 = vmatpush2.msra.mxu0 0.0
    %1461 = vmatprep.subr.mxu0 0.0
    %1462 = vmatpush2.msra.mxu0 0.0
    %1463 = vmatprep.subr.mxu0 0.0
    %1464 = vmatpush2.msra.mxu0 0.0
    %1465 = vmatprep.subr.mxu0 0.0
    %1466 = vmatpush2.msra.mxu0 0.0
    %1467 = vmatprep.subr.mxu0 0.0
    %1468 = vmatpush2.msra.mxu0 0.0
    %1469 = vmatprep.mubr.f32.mxu0 0.0
    %1470 = vmatmul.mubr.f32.gmra.mxu0 %v1269
    %v1471 = vpop.f32.mrf.mxu0
    %v1472 = vadd.f32 %v318, %v1471
    %v1473 = vpop.f32.mrf.mxu0
    %v1474 = vadd.f32 %v320, %v1473
    %1475 = vmatprep.mubr.f32.mxu0 0.0
    %1476 = vmatmul.mubr.f32.gmra.mxu0 %v1272
    %v1477 = vpop.f32.mrf.mxu0
    %v1478 = vadd.f32 %v324, %v1477
    %v1479 = vpop.f32.mrf.mxu0
    %v1480 = vadd.f32 %v326, %v1479
    %1481 = vmatprep.mubr.f32.mxu0 0.0
    %1482 = vmatmul.mubr.f32.gmra.mxu0 %v1275
    %v1483 = vpop.f32.mrf.mxu0
    %v1484 = vadd.f32 %v330, %v1483
    %v1485 = vpop.f32.mrf.mxu0
    %v1486 = vadd.f32 %v332, %v1485
    %1487 = vmatprep.mubr.f32.mxu0 0.0
    %1488 = vmatmul.mubr.f32.gmra.mxu0 %v1278
    %v1489 = vpop.f32.mrf.mxu0
    %v1490 = vadd.f32 %v336, %v1489
    %v1491 = vpop.f32.mrf.mxu0
    %v1492 = vadd.f32 %v338, %v1491
    %1493 = vmatprep.mubr.f32.mxu0 0.0
    %1494 = vmatmul.mubr.f32.gmra.mxu0 %v1281
    %v1495 = vpop.f32.mrf.mxu0
    %v1496 = vadd.f32 %v342, %v1495
    %v1497 = vpop.f32.mrf.mxu0
    %v1498 = vadd.f32 %v344, %v1497
    %1499 = vmatprep.mubr.f32.mxu0 0.0
    %1500 = vmatmul.mubr.f32.gmra.mxu0 %v1284
    %v1501 = vpop.f32.mrf.mxu0
    %v1502 = vadd.f32 %v348, %v1501
    %v1503 = vpop.f32.mrf.mxu0
    %v1504 = vadd.f32 %v350, %v1503
    %1505 = vmatprep.mubr.f32.mxu0 0.0
    %1506 = vmatmul.mubr.f32.gmra.mxu0 %v1287
    %v1507 = vpop.f32.mrf.mxu0
    %v1508 = vadd.f32 %v354, %v1507
    %v1509 = vpop.f32.mrf.mxu0
    %v1510 = vadd.f32 %v356, %v1509
    %1511 = vmatprep.mubr.f32.mxu0 0.0
    %1512 = vmatmul.mubr.f32.gmra.mxu0 %v1290
    %v1513 = vpop.f32.mrf.mxu0
    %v1514 = vadd.f32 %v360, %v1513
    %v1515 = vpop.f32.mrf.mxu0
    %v1516 = vadd.f32 %v362, %v1515
    %1517 = vdwg.mxu0
    %1518 = vmatprep.subr.mxu0 0.0
    %1519 = vmatpush1.msra.mxu0 0.0
    %1520 = vmatprep.subr.mxu0 0.0
    %1521 = vmatpush1.msra.mxu0 0.0
    %1522 = vmatprep.subr.mxu0 0.0
    %1523 = vmatpush1.msra.mxu0 0.0
    %1524 = vmatprep.subr.mxu0 0.0
    %1525 = vmatpush1.msra.mxu0 0.0
    %1526 = vmatprep.subr.mxu0 0.0
    %1527 = vmatpush1.msra.mxu0 0.0
    %1528 = vmatprep.subr.mxu0 0.0
    %1529 = vmatpush1.msra.mxu0 0.0
    %1530 = vmatprep.subr.mxu0 0.0
    %1531 = vmatpush1.msra.mxu0 0.0
    %1532 = vmatprep.subr.mxu0 0.0
    %1533 = vmatpush1.msra.mxu0 0.0
    %1534 = vmatprep.subr.mxu0 0.0
    %1535 = vmatpush1.msra.mxu0 0.0
    %1536 = vmatprep.subr.mxu0 0.0
    %1537 = vmatpush1.msra.mxu0 0.0
    %1538 = vmatprep.subr.mxu0 0.0
    %1539 = vmatpush1.msra.mxu0 0.0
    %1540 = vmatprep.subr.mxu0 0.0
    %1541 = vmatpush1.msra.mxu0 0.0
    %1542 = vmatprep.subr.mxu0 0.0
    %1543 = vmatpush1.msra.mxu0 0.0
    %1544 = vmatprep.subr.mxu0 %v80
    %1545 = vmatpush1.msra.mxu0 %v79
    %1546 = vmatprep.subr.mxu0 %v59
    %1547 = vmatpush1.msra.mxu0 %v58
    %1548 = vmatprep.subr.mxu0 %v38
    %1549 = vmatpush1.msra.mxu0 %v37
    %1550 = vmatprep.subr.mxu0 0.0
    %1551 = vmatpush2.msra.mxu0 0.0
    %1552 = vmatprep.subr.mxu0 0.0
    %1553 = vmatpush2.msra.mxu0 0.0
    %1554 = vmatprep.subr.mxu0 0.0
    %1555 = vmatpush2.msra.mxu0 0.0
    %1556 = vmatprep.subr.mxu0 0.0
    %1557 = vmatpush2.msra.mxu0 0.0
    %1558 = vmatprep.subr.mxu0 0.0
    %1559 = vmatpush2.msra.mxu0 0.0
    %1560 = vmatprep.subr.mxu0 0.0
    %1561 = vmatpush2.msra.mxu0 0.0
    %1562 = vmatprep.subr.mxu0 0.0
    %1563 = vmatpush2.msra.mxu0 0.0
    %1564 = vmatprep.subr.mxu0 0.0
    %1565 = vmatpush2.msra.mxu0 0.0
    %1566 = vmatprep.subr.mxu0 0.0
    %1567 = vmatpush2.msra.mxu0 0.0
    %1568 = vmatprep.subr.mxu0 0.0
    %1569 = vmatpush2.msra.mxu0 0.0
    %1570 = vmatprep.subr.mxu0 0.0
    %1571 = vmatpush2.msra.mxu0 0.0
    %1572 = vmatprep.subr.mxu0 0.0
    %1573 = vmatpush2.msra.mxu0 0.0
    %1574 = vmatprep.subr.mxu0 0.0
    %1575 = vmatpush2.msra.mxu0 0.0
    %1576 = vmatprep.subr.mxu0 0.0
    %1577 = vmatpush2.msra.mxu0 0.0
    %1578 = vmatprep.subr.mxu0 0.0
    %1579 = vmatpush2.msra.mxu0 0.0
    %1580 = vmatprep.subr.mxu0 0.0
    %1581 = vmatpush2.msra.mxu0 0.0
    %1582 = vmatprep.mubr.f32.mxu0 0.0
    %1583 = vmatmul.mubr.f32.gmra.mxu0 %v1269
    %v1584 = vpop.f32.mrf.mxu0
    %v1585 = vadd.f32 %v431, %v1584
    %v1586 = vpop.f32.mrf.mxu0
    %v1587 = vadd.f32 %v433, %v1586
    %1588 = vmatprep.mubr.f32.mxu0 0.0
    %1589 = vmatmul.mubr.f32.gmra.mxu0 %v1272
    %v1590 = vpop.f32.mrf.mxu0
    %v1591 = vadd.f32 %v437, %v1590
    %v1592 = vpop.f32.mrf.mxu0
    %v1593 = vadd.f32 %v439, %v1592
    %1594 = vmatprep.mubr.f32.mxu0 0.0
    %1595 = vmatmul.mubr.f32.gmra.mxu0 %v1275
    %v1596 = vpop.f32.mrf.mxu0
    %v1597 = vadd.f32 %v443, %v1596
    %v1598 = vpop.f32.mrf.mxu0
    %v1599 = vadd.f32 %v445, %v1598
    %1600 = vmatprep.mubr.f32.mxu0 0.0
    %1601 = vmatmul.mubr.f32.gmra.mxu0 %v1278
    %v1602 = vpop.f32.mrf.mxu0
    %v1603 = vadd.f32 %v449, %v1602
    %v1604 = vpop.f32.mrf.mxu0
    %v1605 = vadd.f32 %v451, %v1604
    %1606 = vmatprep.mubr.f32.mxu0 0.0
    %1607 = vmatmul.mubr.f32.gmra.mxu0 %v1281
    %v1608 = vpop.f32.mrf.mxu0
    %v1609 = vadd.f32 %v455, %v1608
    %v1610 = vpop.f32.mrf.mxu0
    %v1611 = vadd.f32 %v457, %v1610
    %1612 = vmatprep.mubr.f32.mxu0 0.0
    %1613 = vmatmul.mubr.f32.gmra.mxu0 %v1284
    %v1614 = vpop.f32.mrf.mxu0
    %v1615 = vadd.f32 %v461, %v1614
    %v1616 = vpop.f32.mrf.mxu0
    %v1617 = vadd.f32 %v463, %v1616
    %1618 = vmatprep.mubr.f32.mxu0 0.0
    %1619 = vmatmul.mubr.f32.gmra.mxu0 %v1287
    %v1620 = vpop.f32.mrf.mxu0
    %v1621 = vadd.f32 %v467, %v1620
    %v1622 = vpop.f32.mrf.mxu0
    %v1623 = vadd.f32 %v469, %v1622
    %1624 = vmatprep.mubr.f32.mxu0 0.0
    %1625 = vmatmul.mubr.f32.gmra.mxu0 %v1290
    %v1626 = vpop.f32.mrf.mxu0
    %v1627 = vadd.f32 %v473, %v1626
    %v1628 = vpop.f32.mrf.mxu0
    %v1629 = vadd.f32 %v475, %v1628
    %1630 = vdwg.mxu0
    %1631 = vmatprep.subr.mxu0 0.0
    %1632 = vmatpush1.msra.mxu0 0.0
    %1633 = vmatprep.subr.mxu0 0.0
    %1634 = vmatpush1.msra.mxu0 0.0
    %1635 = vmatprep.subr.mxu0 0.0
    %1636 = vmatpush1.msra.mxu0 0.0
    %1637 = vmatprep.subr.mxu0 0.0
    %1638 = vmatpush1.msra.mxu0 0.0
    %1639 = vmatprep.subr.mxu0 0.0
    %1640 = vmatpush1.msra.mxu0 0.0
    %1641 = vmatprep.subr.mxu0 0.0
    %1642 = vmatpush1.msra.mxu0 0.0
    %1643 = vmatprep.subr.mxu0 0.0
    %1644 = vmatpush1.msra.mxu0 0.0
    %1645 = vmatprep.subr.mxu0 0.0
    %1646 = vmatpush1.msra.mxu0 0.0
    %1647 = vmatprep.subr.mxu0 0.0
    %1648 = vmatpush1.msra.mxu0 0.0
    %1649 = vmatprep.subr.mxu0 0.0
    %1650 = vmatpush1.msra.mxu0 0.0
    %1651 = vmatprep.subr.mxu0 0.0
    %1652 = vmatpush1.msra.mxu0 0.0
    %1653 = vmatprep.subr.mxu0 0.0
    %1654 = vmatpush1.msra.mxu0 0.0
    %1655 = vmatprep.subr.mxu0 0.0
    %1656 = vmatpush1.msra.mxu0 0.0
    %1657 = vmatprep.subr.mxu0 %v82
    %1658 = vmatpush1.msra.mxu0 %v81
    %1659 = vmatprep.subr.mxu0 %v61
    %1660 = vmatpush1.msra.mxu0 %v60
    %1661 = vmatprep.subr.mxu0 %v40
    %1662 = vmatpush1.msra.mxu0 %v39
    %1663 = vmatprep.subr.mxu0 0.0
    %1664 = vmatpush2.msra.mxu0 0.0
    %1665 = vmatprep.subr.mxu0 0.0
    %1666 = vmatpush2.msra.mxu0 0.0
    %1667 = vmatprep.subr.mxu0 0.0
    %1668 = vmatpush2.msra.mxu0 0.0
    %1669 = vmatprep.subr.mxu0 0.0
    %1670 = vmatpush2.msra.mxu0 0.0
    %1671 = vmatprep.subr.mxu0 0.0
    %1672 = vmatpush2.msra.mxu0 0.0
    %1673 = vmatprep.subr.mxu0 0.0
    %1674 = vmatpush2.msra.mxu0 0.0
    %1675 = vmatprep.subr.mxu0 0.0
    %1676 = vmatpush2.msra.mxu0 0.0
    %1677 = vmatprep.subr.mxu0 0.0
    %1678 = vmatpush2.msra.mxu0 0.0
    %1679 = vmatprep.subr.mxu0 0.0
    %1680 = vmatpush2.msra.mxu0 0.0
    %1681 = vmatprep.subr.mxu0 0.0
    %1682 = vmatpush2.msra.mxu0 0.0
    %1683 = vmatprep.subr.mxu0 0.0
    %1684 = vmatpush2.msra.mxu0 0.0
    %1685 = vmatprep.subr.mxu0 0.0
    %1686 = vmatpush2.msra.mxu0 0.0
    %1687 = vmatprep.subr.mxu0 0.0
    %1688 = vmatpush2.msra.mxu0 0.0
    %1689 = vmatprep.subr.mxu0 0.0
    %1690 = vmatpush2.msra.mxu0 0.0
    %1691 = vmatprep.subr.mxu0 0.0
    %1692 = vmatpush2.msra.mxu0 0.0
    %1693 = vmatprep.subr.mxu0 0.0
    %1694 = vmatpush2.msra.mxu0 0.0
    %1695 = vmatprep.mubr.f32.mxu0 0.0
    %1696 = vmatmul.mubr.f32.gmra.mxu0 %v1269
    %v1697 = vpop.f32.mrf.mxu0
    %v1698 = vadd.f32 %v544, %v1697
    %v1699 = vpop.f32.mrf.mxu0
    %v1700 = vadd.f32 %v546, %v1699
    %1701 = vmatprep.mubr.f32.mxu0 0.0
    %1702 = vmatmul.mubr.f32.gmra.mxu0 %v1272
    %v1703 = vpop.f32.mrf.mxu0
    %v1704 = vadd.f32 %v550, %v1703
    %v1705 = vpop.f32.mrf.mxu0
    %v1706 = vadd.f32 %v552, %v1705
    %1707 = vmatprep.mubr.f32.mxu0 0.0
    %1708 = vmatmul.mubr.f32.gmra.mxu0 %v1275
    %v1709 = vpop.f32.mrf.mxu0
    %v1710 = vadd.f32 %v556, %v1709
    %v1711 = vpop.f32.mrf.mxu0
    %v1712 = vadd.f32 %v558, %v1711
    %1713 = vmatprep.mubr.f32.mxu0 0.0
    %1714 = vmatmul.mubr.f32.gmra.mxu0 %v1278
    %v1715 = vpop.f32.mrf.mxu0
    %v1716 = vadd.f32 %v562, %v1715
    %v1717 = vpop.f32.mrf.mxu0
    %v1718 = vadd.f32 %v564, %v1717
    %1719 = vmatprep.mubr.f32.mxu0 0.0
    %1720 = vmatmul.mubr.f32.gmra.mxu0 %v1281
    %v1721 = vpop.f32.mrf.mxu0
    %v1722 = vadd.f32 %v568, %v1721
    %v1723 = vpop.f32.mrf.mxu0
    %v1724 = vadd.f32 %v570, %v1723
    %1725 = vmatprep.mubr.f32.mxu0 0.0
    %1726 = vmatmul.mubr.f32.gmra.mxu0 %v1284
    %v1727 = vpop.f32.mrf.mxu0
    %v1728 = vadd.f32 %v574, %v1727
    %v1729 = vpop.f32.mrf.mxu0
    %v1730 = vadd.f32 %v576, %v1729
    %1731 = vmatprep.mubr.f32.mxu0 0.0
    %1732 = vmatmul.mubr.f32.gmra.mxu0 %v1287
    %v1733 = vpop.f32.mrf.mxu0
    %v1734 = vadd.f32 %v580, %v1733
    %v1735 = vpop.f32.mrf.mxu0
    %v1736 = vadd.f32 %v582, %v1735
    %1737 = vmatprep.mubr.f32.mxu0 0.0
    %1738 = vmatmul.mubr.f32.gmra.mxu0 %v1290
    %v1739 = vpop.f32.mrf.mxu0
    %v1740 = vadd.f32 %v586, %v1739
    %v1741 = vpop.f32.mrf.mxu0
    %v1742 = vadd.f32 %v588, %v1741
    %1743 = vdwg.mxu0
    %1744 = vmatprep.subr.mxu0 0.0
    %1745 = vmatpush1.msra.mxu0 0.0
    %1746 = vmatprep.subr.mxu0 0.0
    %1747 = vmatpush1.msra.mxu0 0.0
    %1748 = vmatprep.subr.mxu0 0.0
    %1749 = vmatpush1.msra.mxu0 0.0
    %1750 = vmatprep.subr.mxu0 0.0
    %1751 = vmatpush1.msra.mxu0 0.0
    %1752 = vmatprep.subr.mxu0 0.0
    %1753 = vmatpush1.msra.mxu0 0.0
    %1754 = vmatprep.subr.mxu0 0.0
    %1755 = vmatpush1.msra.mxu0 0.0
    %1756 = vmatprep.subr.mxu0 0.0
    %1757 = vmatpush1.msra.mxu0 0.0
    %1758 = vmatprep.subr.mxu0 0.0
    %1759 = vmatpush1.msra.mxu0 0.0
    %1760 = vmatprep.subr.mxu0 0.0
    %1761 = vmatpush1.msra.mxu0 0.0
    %1762 = vmatprep.subr.mxu0 0.0
    %1763 = vmatpush1.msra.mxu0 0.0
    %1764 = vmatprep.subr.mxu0 0.0
    %1765 = vmatpush1.msra.mxu0 0.0
    %1766 = vmatprep.subr.mxu0 0.0
    %1767 = vmatpush1.msra.mxu0 0.0
    %1768 = vmatprep.subr.mxu0 0.0
    %1769 = vmatpush1.msra.mxu0 0.0
    %1770 = vmatprep.subr.mxu0 %v84
    %1771 = vmatpush1.msra.mxu0 %v83
    %1772 = vmatprep.subr.mxu0 %v63
    %1773 = vmatpush1.msra.mxu0 %v62
    %1774 = vmatprep.subr.mxu0 %v42
    %1775 = vmatpush1.msra.mxu0 %v41
    %1776 = vmatprep.subr.mxu0 0.0
    %1777 = vmatpush2.msra.mxu0 0.0
    %1778 = vmatprep.subr.mxu0 0.0
    %1779 = vmatpush2.msra.mxu0 0.0
    %1780 = vmatprep.subr.mxu0 0.0
    %1781 = vmatpush2.msra.mxu0 0.0
    %1782 = vmatprep.subr.mxu0 0.0
    %1783 = vmatpush2.msra.mxu0 0.0
    %1784 = vmatprep.subr.mxu0 0.0
    %1785 = vmatpush2.msra.mxu0 0.0
    %1786 = vmatprep.subr.mxu0 0.0
    %1787 = vmatpush2.msra.mxu0 0.0
    %1788 = vmatprep.subr.mxu0 0.0
    %1789 = vmatpush2.msra.mxu0 0.0
    %1790 = vmatprep.subr.mxu0 0.0
    %1791 = vmatpush2.msra.mxu0 0.0
    %1792 = vmatprep.subr.mxu0 0.0
    %1793 = vmatpush2.msra.mxu0 0.0
    %1794 = vmatprep.subr.mxu0 0.0
    %1795 = vmatpush2.msra.mxu0 0.0
    %1796 = vmatprep.subr.mxu0 0.0
    %1797 = vmatpush2.msra.mxu0 0.0
    %1798 = vmatprep.subr.mxu0 0.0
    %1799 = vmatpush2.msra.mxu0 0.0
    %1800 = vmatprep.subr.mxu0 0.0
    %1801 = vmatpush2.msra.mxu0 0.0
    %1802 = vmatprep.subr.mxu0 0.0
    %1803 = vmatpush2.msra.mxu0 0.0
    %1804 = vmatprep.subr.mxu0 0.0
    %1805 = vmatpush2.msra.mxu0 0.0
    %1806 = vmatprep.subr.mxu0 0.0
    %1807 = vmatpush2.msra.mxu0 0.0
    %1808 = vmatprep.mubr.f32.mxu0 0.0
    %1809 = vmatmul.mubr.f32.gmra.mxu0 %v1269
    %v1810 = vpop.f32.mrf.mxu0
    %v1811 = vadd.f32 %v657, %v1810
    %v1812 = vpop.f32.mrf.mxu0
    %v1813 = vadd.f32 %v659, %v1812
    %1814 = vmatprep.mubr.f32.mxu0 0.0
    %1815 = vmatmul.mubr.f32.gmra.mxu0 %v1272
    %v1816 = vpop.f32.mrf.mxu0
    %v1817 = vadd.f32 %v663, %v1816
    %v1818 = vpop.f32.mrf.mxu0
    %v1819 = vadd.f32 %v665, %v1818
    %1820 = vmatprep.mubr.f32.mxu0 0.0
    %1821 = vmatmul.mubr.f32.gmra.mxu0 %v1275
    %v1822 = vpop.f32.mrf.mxu0
    %v1823 = vadd.f32 %v669, %v1822
    %v1824 = vpop.f32.mrf.mxu0
    %v1825 = vadd.f32 %v671, %v1824
    %1826 = vmatprep.mubr.f32.mxu0 0.0
    %1827 = vmatmul.mubr.f32.gmra.mxu0 %v1278
    %v1828 = vpop.f32.mrf.mxu0
    %v1829 = vadd.f32 %v675, %v1828
    %v1830 = vpop.f32.mrf.mxu0
    %v1831 = vadd.f32 %v677, %v1830
    %1832 = vmatprep.mubr.f32.mxu0 0.0
    %1833 = vmatmul.mubr.f32.gmra.mxu0 %v1281
    %v1834 = vpop.f32.mrf.mxu0
    %v1835 = vadd.f32 %v681, %v1834
    %v1836 = vpop.f32.mrf.mxu0
    %v1837 = vadd.f32 %v683, %v1836
    %1838 = vmatprep.mubr.f32.mxu0 0.0
    %1839 = vmatmul.mubr.f32.gmra.mxu0 %v1284
    %v1840 = vpop.f32.mrf.mxu0
    %v1841 = vadd.f32 %v687, %v1840
    %v1842 = vpop.f32.mrf.mxu0
    %v1843 = vadd.f32 %v689, %v1842
    %1844 = vmatprep.mubr.f32.mxu0 0.0
    %1845 = vmatmul.mubr.f32.gmra.mxu0 %v1287
    %v1846 = vpop.f32.mrf.mxu0
    %v1847 = vadd.f32 %v693, %v1846
    %v1848 = vpop.f32.mrf.mxu0
    %v1849 = vadd.f32 %v695, %v1848
    %1850 = vmatprep.mubr.f32.mxu0 0.0
    %1851 = vmatmul.mubr.f32.gmra.mxu0 %v1290
    %v1852 = vpop.f32.mrf.mxu0
    %v1853 = vadd.f32 %v699, %v1852
    %v1854 = vpop.f32.mrf.mxu0
    %v1855 = vadd.f32 %v701, %v1854
    %1856 = vdwg.mxu0
    %1857 = vmatprep.subr.mxu0 0.0
    %1858 = vmatpush1.msra.mxu0 0.0
    %1859 = vmatprep.subr.mxu0 0.0
    %1860 = vmatpush1.msra.mxu0 0.0
    %1861 = vmatprep.subr.mxu0 0.0
    %1862 = vmatpush1.msra.mxu0 0.0
    %1863 = vmatprep.subr.mxu0 0.0
    %1864 = vmatpush1.msra.mxu0 0.0
    %1865 = vmatprep.subr.mxu0 0.0
    %1866 = vmatpush1.msra.mxu0 0.0
    %1867 = vmatprep.subr.mxu0 0.0
    %1868 = vmatpush1.msra.mxu0 0.0
    %1869 = vmatprep.subr.mxu0 0.0
    %1870 = vmatpush1.msra.mxu0 0.0
    %1871 = vmatprep.subr.mxu0 0.0
    %1872 = vmatpush1.msra.mxu0 0.0
    %1873 = vmatprep.subr.mxu0 0.0
    %1874 = vmatpush1.msra.mxu0 0.0
    %1875 = vmatprep.subr.mxu0 0.0
    %1876 = vmatpush1.msra.mxu0 0.0
    %1877 = vmatprep.subr.mxu0 0.0
    %1878 = vmatpush1.msra.mxu0 0.0
    %1879 = vmatprep.subr.mxu0 0.0
    %1880 = vmatpush1.msra.mxu0 0.0
    %1881 = vmatprep.subr.mxu0 0.0
    %1882 = vmatpush1.msra.mxu0 0.0
    %1883 = vmatprep.subr.mxu0 %v86
    %1884 = vmatpush1.msra.mxu0 %v85
    %1885 = vmatprep.subr.mxu0 %v65
    %1886 = vmatpush1.msra.mxu0 %v64
    %1887 = vmatprep.subr.mxu0 %v44
    %1888 = vmatpush1.msra.mxu0 %v43
    %1889 = vmatprep.subr.mxu0 0.0
    %1890 = vmatpush2.msra.mxu0 0.0
    %1891 = vmatprep.subr.mxu0 0.0
    %1892 = vmatpush2.msra.mxu0 0.0
    %1893 = vmatprep.subr.mxu0 0.0
    %1894 = vmatpush2.msra.mxu0 0.0
    %1895 = vmatprep.subr.mxu0 0.0
    %1896 = vmatpush2.msra.mxu0 0.0
    %1897 = vmatprep.subr.mxu0 0.0
    %1898 = vmatpush2.msra.mxu0 0.0
    %1899 = vmatprep.subr.mxu0 0.0
    %1900 = vmatpush2.msra.mxu0 0.0
    %1901 = vmatprep.subr.mxu0 0.0
    %1902 = vmatpush2.msra.mxu0 0.0
    %1903 = vmatprep.subr.mxu0 0.0
    %1904 = vmatpush2.msra.mxu0 0.0
    %1905 = vmatprep.subr.mxu0 0.0
    %1906 = vmatpush2.msra.mxu0 0.0
    %1907 = vmatprep.subr.mxu0 0.0
    %1908 = vmatpush2.msra.mxu0 0.0
    %1909 = vmatprep.subr.mxu0 0.0
    %1910 = vmatpush2.msra.mxu0 0.0
    %1911 = vmatprep.subr.mxu0 0.0
    %1912 = vmatpush2.msra.mxu0 0.0
    %1913 = vmatprep.subr.mxu0 0.0
    %1914 = vmatpush2.msra.mxu0 0.0
    %1915 = vmatprep.subr.mxu0 0.0
    %1916 = vmatpush2.msra.mxu0 0.0
    %1917 = vmatprep.subr.mxu0 0.0
    %1918 = vmatpush2.msra.mxu0 0.0
    %1919 = vmatprep.subr.mxu0 0.0
    %1920 = vmatpush2.msra.mxu0 0.0
    %1921 = vmatprep.mubr.f32.mxu0 0.0
    %1922 = vmatmul.mubr.f32.gmra.mxu0 %v1269
    %v1923 = vpop.f32.mrf.mxu0
    %v1924 = vadd.f32 %v770, %v1923
    %v1925 = vpop.f32.mrf.mxu0
    %v1926 = vadd.f32 %v772, %v1925
    %1927 = vmatprep.mubr.f32.mxu0 0.0
    %1928 = vmatmul.mubr.f32.gmra.mxu0 %v1272
    %v1929 = vpop.f32.mrf.mxu0
    %v1930 = vadd.f32 %v776, %v1929
    %v1931 = vpop.f32.mrf.mxu0
    %v1932 = vadd.f32 %v778, %v1931
    %1933 = vmatprep.mubr.f32.mxu0 0.0
    %1934 = vmatmul.mubr.f32.gmra.mxu0 %v1275
    %v1935 = vpop.f32.mrf.mxu0
    %v1936 = vadd.f32 %v782, %v1935
    %v1937 = vpop.f32.mrf.mxu0
    %v1938 = vadd.f32 %v784, %v1937
    %1939 = vmatprep.mubr.f32.mxu0 0.0
    %1940 = vmatmul.mubr.f32.gmra.mxu0 %v1278
    %v1941 = vpop.f32.mrf.mxu0
    %v1942 = vadd.f32 %v788, %v1941
    %v1943 = vpop.f32.mrf.mxu0
    %v1944 = vadd.f32 %v790, %v1943
    %1945 = vmatprep.mubr.f32.mxu0 0.0
    %1946 = vmatmul.mubr.f32.gmra.mxu0 %v1281
    %v1947 = vpop.f32.mrf.mxu0
    %v1948 = vadd.f32 %v794, %v1947
    %v1949 = vpop.f32.mrf.mxu0
    %v1950 = vadd.f32 %v796, %v1949
    %1951 = vmatprep.mubr.f32.mxu0 0.0
    %1952 = vmatmul.mubr.f32.gmra.mxu0 %v1284
    %v1953 = vpop.f32.mrf.mxu0
    %v1954 = vadd.f32 %v800, %v1953
    %v1955 = vpop.f32.mrf.mxu0
    %v1956 = vadd.f32 %v802, %v1955
    %1957 = vmatprep.mubr.f32.mxu0 0.0
    %1958 = vmatmul.mubr.f32.gmra.mxu0 %v1287
    %v1959 = vpop.f32.mrf.mxu0
    %v1960 = vadd.f32 %v806, %v1959
    %v1961 = vpop.f32.mrf.mxu0
    %v1962 = vadd.f32 %v808, %v1961
    %1963 = vmatprep.mubr.f32.mxu0 0.0
    %1964 = vmatmul.mubr.f32.gmra.mxu0 %v1290
    %v1965 = vpop.f32.mrf.mxu0
    %v1966 = vadd.f32 %v812, %v1965
    %v1967 = vpop.f32.mrf.mxu0
    %v1968 = vadd.f32 %v814, %v1967
    %1969 = vdwg.mxu0
    %1970 = vmatprep.subr.mxu0 0.0
    %1971 = vmatpush1.msra.mxu0 0.0
    %1972 = vmatprep.subr.mxu0 0.0
    %1973 = vmatpush1.msra.mxu0 0.0
    %1974 = vmatprep.subr.mxu0 0.0
    %1975 = vmatpush1.msra.mxu0 0.0
    %1976 = vmatprep.subr.mxu0 0.0
    %1977 = vmatpush1.msra.mxu0 0.0
    %1978 = vmatprep.subr.mxu0 0.0
    %1979 = vmatpush1.msra.mxu0 0.0
    %1980 = vmatprep.subr.mxu0 0.0
    %1981 = vmatpush1.msra.mxu0 0.0
    %1982 = vmatprep.subr.mxu0 0.0
    %1983 = vmatpush1.msra.mxu0 0.0
    %1984 = vmatprep.subr.mxu0 0.0
    %1985 = vmatpush1.msra.mxu0 0.0
    %1986 = vmatprep.subr.mxu0 0.0
    %1987 = vmatpush1.msra.mxu0 0.0
    %1988 = vmatprep.subr.mxu0 0.0
    %1989 = vmatpush1.msra.mxu0 0.0
    %1990 = vmatprep.subr.mxu0 0.0
    %1991 = vmatpush1.msra.mxu0 0.0
    %1992 = vmatprep.subr.mxu0 0.0
    %1993 = vmatpush1.msra.mxu0 0.0
    %1994 = vmatprep.subr.mxu0 0.0
    %1995 = vmatpush1.msra.mxu0 0.0
    %1996 = vmatprep.subr.mxu0 %v88
    %1997 = vmatpush1.msra.mxu0 %v87
    %1998 = vmatprep.subr.mxu0 %v67
    %1999 = vmatpush1.msra.mxu0 %v66
    %2000 = vmatprep.subr.mxu0 %v46
    %2001 = vmatpush1.msra.mxu0 %v45
    %2002 = vmatprep.subr.mxu0 0.0
    %2003 = vmatpush2.msra.mxu0 0.0
    %2004 = vmatprep.subr.mxu0 0.0
    %2005 = vmatpush2.msra.mxu0 0.0
    %2006 = vmatprep.subr.mxu0 0.0
    %2007 = vmatpush2.msra.mxu0 0.0
    %2008 = vmatprep.subr.mxu0 0.0
    %2009 = vmatpush2.msra.mxu0 0.0
    %2010 = vmatprep.subr.mxu0 0.0
    %2011 = vmatpush2.msra.mxu0 0.0
    %2012 = vmatprep.subr.mxu0 0.0
    %2013 = vmatpush2.msra.mxu0 0.0
    %2014 = vmatprep.subr.mxu0 0.0
    %2015 = vmatpush2.msra.mxu0 0.0
    %2016 = vmatprep.subr.mxu0 0.0
    %2017 = vmatpush2.msra.mxu0 0.0
    %2018 = vmatprep.subr.mxu0 0.0
    %2019 = vmatpush2.msra.mxu0 0.0
    %2020 = vmatprep.subr.mxu0 0.0
    %2021 = vmatpush2.msra.mxu0 0.0
    %2022 = vmatprep.subr.mxu0 0.0
    %2023 = vmatpush2.msra.mxu0 0.0
    %2024 = vmatprep.subr.mxu0 0.0
    %2025 = vmatpush2.msra.mxu0 0.0
    %2026 = vmatprep.subr.mxu0 0.0
    %2027 = vmatpush2.msra.mxu0 0.0
    %2028 = vmatprep.subr.mxu0 0.0
    %2029 = vmatpush2.msra.mxu0 0.0
    %2030 = vmatprep.subr.mxu0 0.0
    %2031 = vmatpush2.msra.mxu0 0.0
    %2032 = vmatprep.subr.mxu0 0.0
    %2033 = vmatpush2.msra.mxu0 0.0
    %2034 = vmatprep.mubr.f32.mxu0 0.0
    %2035 = vmatmul.mubr.f32.gmra.mxu0 %v1269
    %v2036 = vpop.f32.mrf.mxu0
    %v2037 = vadd.f32 %v883, %v2036
    %v2038 = vpop.f32.mrf.mxu0
    %v2039 = vadd.f32 %v885, %v2038
    %2040 = vmatprep.mubr.f32.mxu0 0.0
    %2041 = vmatmul.mubr.f32.gmra.mxu0 %v1272
    %v2042 = vpop.f32.mrf.mxu0
    %v2043 = vadd.f32 %v889, %v2042
    %v2044 = vpop.f32.mrf.mxu0
    %v2045 = vadd.f32 %v891, %v2044
    %2046 = vmatprep.mubr.f32.mxu0 0.0
    %2047 = vmatmul.mubr.f32.gmra.mxu0 %v1275
    %v2048 = vpop.f32.mrf.mxu0
    %v2049 = vadd.f32 %v895, %v2048
    %v2050 = vpop.f32.mrf.mxu0
    %v2051 = vadd.f32 %v897, %v2050
    %2052 = vmatprep.mubr.f32.mxu0 0.0
    %2053 = vmatmul.mubr.f32.gmra.mxu0 %v1278
    %v2054 = vpop.f32.mrf.mxu0
    %v2055 = vadd.f32 %v901, %v2054
    %v2056 = vpop.f32.mrf.mxu0
    %v2057 = vadd.f32 %v903, %v2056
    %2058 = vmatprep.mubr.f32.mxu0 0.0
    %2059 = vmatmul.mubr.f32.gmra.mxu0 %v1281
    %v2060 = vpop.f32.mrf.mxu0
    %v2061 = vadd.f32 %v907, %v2060
    %v2062 = vpop.f32.mrf.mxu0
    %v2063 = vadd.f32 %v909, %v2062
    %2064 = vmatprep.mubr.f32.mxu0 0.0
    %2065 = vmatmul.mubr.f32.gmra.mxu0 %v1284
    %v2066 = vpop.f32.mrf.mxu0
    %v2067 = vadd.f32 %v913, %v2066
    %v2068 = vpop.f32.mrf.mxu0
    %v2069 = vadd.f32 %v915, %v2068
    %2070 = vmatprep.mubr.f32.mxu0 0.0
    %2071 = vmatmul.mubr.f32.gmra.mxu0 %v1287
    %v2072 = vpop.f32.mrf.mxu0
    %v2073 = vadd.f32 %v919, %v2072
    %v2074 = vpop.f32.mrf.mxu0
    %v2075 = vadd.f32 %v921, %v2074
    %2076 = vmatprep.mubr.f32.mxu0 0.0
    %2077 = vmatmul.mubr.f32.gmra.mxu0 %v1290
    %v2078 = vpop.f32.mrf.mxu0
    %v2079 = vadd.f32 %v925, %v2078
    %v2080 = vpop.f32.mrf.mxu0
    %v2081 = vadd.f32 %v927, %v2080
    %2082 = vdwg.mxu0
    %2083 = vmatprep.subr.mxu0 0.0
    %2084 = vmatpush1.msra.mxu0 0.0
    %2085 = vmatprep.subr.mxu0 0.0
    %2086 = vmatpush1.msra.mxu0 0.0
    %2087 = vmatprep.subr.mxu0 0.0
    %2088 = vmatpush1.msra.mxu0 0.0
    %2089 = vmatprep.subr.mxu0 0.0
    %2090 = vmatpush1.msra.mxu0 0.0
    %2091 = vmatprep.subr.mxu0 0.0
    %2092 = vmatpush1.msra.mxu0 0.0
    %2093 = vmatprep.subr.mxu0 0.0
    %2094 = vmatpush1.msra.mxu0 0.0
    %2095 = vmatprep.subr.mxu0 0.0
    %2096 = vmatpush1.msra.mxu0 0.0
    %2097 = vmatprep.subr.mxu0 0.0
    %2098 = vmatpush1.msra.mxu0 0.0
    %2099 = vmatprep.subr.mxu0 0.0
    %2100 = vmatpush1.msra.mxu0 0.0
    %2101 = vmatprep.subr.mxu0 0.0
    %2102 = vmatpush1.msra.mxu0 0.0
    %2103 = vmatprep.subr.mxu0 0.0
    %2104 = vmatpush1.msra.mxu0 0.0
    %2105 = vmatprep.subr.mxu0 0.0
    %2106 = vmatpush1.msra.mxu0 0.0
    %2107 = vmatprep.subr.mxu0 0.0
    %2108 = vmatpush1.msra.mxu0 0.0
    %2109 = vmatprep.subr.mxu0 %v90
    %2110 = vmatpush1.msra.mxu0 %v89
    %2111 = vmatprep.subr.mxu0 %v69
    %2112 = vmatpush1.msra.mxu0 %v68
    %2113 = vmatprep.subr.mxu0 %v48
    %2114 = vmatpush1.msra.mxu0 %v47
    %2115 = vmatprep.subr.mxu0 0.0
    %2116 = vmatpush2.msra.mxu0 0.0
    %2117 = vmatprep.subr.mxu0 0.0
    %2118 = vmatpush2.msra.mxu0 0.0
    %2119 = vmatprep.subr.mxu0 0.0
    %2120 = vmatpush2.msra.mxu0 0.0
    %2121 = vmatprep.subr.mxu0 0.0
    %2122 = vmatpush2.msra.mxu0 0.0
    %2123 = vmatprep.subr.mxu0 0.0
    %2124 = vmatpush2.msra.mxu0 0.0
    %2125 = vmatprep.subr.mxu0 0.0
    %2126 = vmatpush2.msra.mxu0 0.0
    %2127 = vmatprep.subr.mxu0 0.0
    %2128 = vmatpush2.msra.mxu0 0.0
    %2129 = vmatprep.subr.mxu0 0.0
    %2130 = vmatpush2.msra.mxu0 0.0
    %2131 = vmatprep.subr.mxu0 0.0
    %2132 = vmatpush2.msra.mxu0 0.0
    %2133 = vmatprep.subr.mxu0 0.0
    %2134 = vmatpush2.msra.mxu0 0.0
    %2135 = vmatprep.subr.mxu0 0.0
    %2136 = vmatpush2.msra.mxu0 0.0
    %2137 = vmatprep.subr.mxu0 0.0
    %2138 = vmatpush2.msra.mxu0 0.0
    %2139 = vmatprep.subr.mxu0 0.0
    %2140 = vmatpush2.msra.mxu0 0.0
    %2141 = vmatprep.subr.mxu0 0.0
    %2142 = vmatpush2.msra.mxu0 0.0
    %2143 = vmatprep.subr.mxu0 0.0
    %2144 = vmatpush2.msra.mxu0 0.0
    %2145 = vmatprep.subr.mxu0 0.0
    %2146 = vmatpush2.msra.mxu0 0.0
    %2147 = vmatprep.mubr.f32.mxu0 0.0
    %2148 = vmatmul.mubr.f32.gmra.mxu0 %v1269
    %v2149 = vpop.f32.mrf.mxu0
    %v2150 = vadd.f32 %v996, %v2149
    %v2151 = vpop.f32.mrf.mxu0
    %v2152 = vadd.f32 %v998, %v2151
    %2153 = vmatprep.mubr.f32.mxu0 0.0
    %2154 = vmatmul.mubr.f32.gmra.mxu0 %v1272
    %v2155 = vpop.f32.mrf.mxu0
    %v2156 = vadd.f32 %v1002, %v2155
    %v2157 = vpop.f32.mrf.mxu0
    %v2158 = vadd.f32 %v1004, %v2157
    %2159 = vmatprep.mubr.f32.mxu0 0.0
    %2160 = vmatmul.mubr.f32.gmra.mxu0 %v1275
    %v2161 = vpop.f32.mrf.mxu0
    %v2162 = vadd.f32 %v1008, %v2161
    %v2163 = vpop.f32.mrf.mxu0
    %v2164 = vadd.f32 %v1010, %v2163
    %2165 = vmatprep.mubr.f32.mxu0 0.0
    %2166 = vmatmul.mubr.f32.gmra.mxu0 %v1278
    %v2167 = vpop.f32.mrf.mxu0
    %v2168 = vadd.f32 %v1014, %v2167
    %v2169 = vpop.f32.mrf.mxu0
    %v2170 = vadd.f32 %v1016, %v2169
    %2171 = vmatprep.mubr.f32.mxu0 0.0
    %2172 = vmatmul.mubr.f32.gmra.mxu0 %v1281
    %v2173 = vpop.f32.mrf.mxu0
    %v2174 = vadd.f32 %v1020, %v2173
    %v2175 = vpop.f32.mrf.mxu0
    %v2176 = vadd.f32 %v1022, %v2175
    %2177 = vmatprep.mubr.f32.mxu0 0.0
    %2178 = vmatmul.mubr.f32.gmra.mxu0 %v1284
    %v2179 = vpop.f32.mrf.mxu0
    %v2180 = vadd.f32 %v1026, %v2179
    %v2181 = vpop.f32.mrf.mxu0
    %v2182 = vadd.f32 %v1028, %v2181
    %2183 = vmatprep.mubr.f32.mxu0 0.0
    %2184 = vmatmul.mubr.f32.gmra.mxu0 %v1287
    %v2185 = vpop.f32.mrf.mxu0
    %v2186 = vadd.f32 %v1032, %v2185
    %v2187 = vpop.f32.mrf.mxu0
    %v2188 = vadd.f32 %v1034, %v2187
    %2189 = vmatprep.mubr.f32.mxu0 0.0
    %2190 = vmatmul.mubr.f32.gmra.mxu0 %v1290
    %v2191 = vpop.f32.mrf.mxu0
    %v2192 = vadd.f32 %v1038, %v2191
    %v2193 = vpop.f32.mrf.mxu0
    %v2194 = vadd.f32 %v1040, %v2193
    %2195 = vdwg.mxu0
    %2196 = vmatprep.subr.mxu0 0.0
    %2197 = vmatpush1.msra.mxu0 0.0
    %2198 = vmatprep.subr.mxu0 0.0
    %2199 = vmatpush1.msra.mxu0 0.0
    %2200 = vmatprep.subr.mxu0 0.0
    %2201 = vmatpush1.msra.mxu0 0.0
    %2202 = vmatprep.subr.mxu0 0.0
    %2203 = vmatpush1.msra.mxu0 0.0
    %2204 = vmatprep.subr.mxu0 0.0
    %2205 = vmatpush1.msra.mxu0 0.0
    %2206 = vmatprep.subr.mxu0 0.0
    %2207 = vmatpush1.msra.mxu0 0.0
    %2208 = vmatprep.subr.mxu0 0.0
    %2209 = vmatpush1.msra.mxu0 0.0
    %2210 = vmatprep.subr.mxu0 0.0
    %2211 = vmatpush1.msra.mxu0 0.0
    %2212 = vmatprep.subr.mxu0 0.0
    %2213 = vmatpush1.msra.mxu0 0.0
    %2214 = vmatprep.subr.mxu0 0.0
    %2215 = vmatpush1.msra.mxu0 0.0
    %2216 = vmatprep.subr.mxu0 0.0
    %2217 = vmatpush1.msra.mxu0 0.0
    %2218 = vmatprep.subr.mxu0 0.0
    %2219 = vmatpush1.msra.mxu0 0.0
    %2220 = vmatprep.subr.mxu0 0.0
    %2221 = vmatpush1.msra.mxu0 0.0
    %2222 = vmatprep.subr.mxu0 %v92
    %2223 = vmatpush1.msra.mxu0 %v91
    %2224 = vmatprep.subr.mxu0 %v71
    %2225 = vmatpush1.msra.mxu0 %v70
    %2226 = vmatprep.subr.mxu0 %v50
    %2227 = vmatpush1.msra.mxu0 %v49
    %2228 = vmatprep.subr.mxu0 0.0
    %2229 = vmatpush2.msra.mxu0 0.0
    %2230 = vmatprep.subr.mxu0 0.0
    %2231 = vmatpush2.msra.mxu0 0.0
    %2232 = vmatprep.subr.mxu0 0.0
    %2233 = vmatpush2.msra.mxu0 0.0
    %2234 = vmatprep.subr.mxu0 0.0
    %2235 = vmatpush2.msra.mxu0 0.0
    %2236 = vmatprep.subr.mxu0 0.0
    %2237 = vmatpush2.msra.mxu0 0.0
    %2238 = vmatprep.subr.mxu0 0.0
    %2239 = vmatpush2.msra.mxu0 0.0
    %2240 = vmatprep.subr.mxu0 0.0
    %2241 = vmatpush2.msra.mxu0 0.0
    %2242 = vmatprep.subr.mxu0 0.0
    %2243 = vmatpush2.msra.mxu0 0.0
    %2244 = vmatprep.subr.mxu0 0.0
    %2245 = vmatpush2.msra.mxu0 0.0
    %2246 = vmatprep.subr.mxu0 0.0
    %2247 = vmatpush2.msra.mxu0 0.0
    %2248 = vmatprep.subr.mxu0 0.0
    %2249 = vmatpush2.msra.mxu0 0.0
    %2250 = vmatprep.subr.mxu0 0.0
    %2251 = vmatpush2.msra.mxu0 0.0
    %2252 = vmatprep.subr.mxu0 0.0
    %2253 = vmatpush2.msra.mxu0 0.0
    %2254 = vmatprep.subr.mxu0 0.0
    %2255 = vmatpush2.msra.mxu0 0.0
    %2256 = vmatprep.subr.mxu0 0.0
    %2257 = vmatpush2.msra.mxu0 0.0
    %2258 = vmatprep.subr.mxu0 0.0
    %2259 = vmatpush2.msra.mxu0 0.0
    %2260 = vmatprep.mubr.f32.mxu0 0.0
    %2261 = vmatmul.mubr.f32.gmra.mxu0 %v1269
    %v2262 = vpop.f32.mrf.mxu0
    %v2263 = vadd.f32 %v1109, %v2262
    %v2264 = vpop.f32.mrf.mxu0
    %v2265 = vadd.f32 %v1111, %v2264
    %2266 = vmatprep.mubr.f32.mxu0 0.0
    %2267 = vmatmul.mubr.f32.gmra.mxu0 %v1272
    %v2268 = vpop.f32.mrf.mxu0
    %v2269 = vadd.f32 %v1115, %v2268
    %v2270 = vpop.f32.mrf.mxu0
    %v2271 = vadd.f32 %v1117, %v2270
    %2272 = vmatprep.mubr.f32.mxu0 0.0
    %2273 = vmatmul.mubr.f32.gmra.mxu0 %v1275
    %v2274 = vpop.f32.mrf.mxu0
    %v2275 = vadd.f32 %v1121, %v2274
    %v2276 = vpop.f32.mrf.mxu0
    %v2277 = vadd.f32 %v1123, %v2276
    %2278 = vmatprep.mubr.f32.mxu0 0.0
    %2279 = vmatmul.mubr.f32.gmra.mxu0 %v1278
    %v2280 = vpop.f32.mrf.mxu0
    %v2281 = vadd.f32 %v1127, %v2280
    %v2282 = vpop.f32.mrf.mxu0
    %v2283 = vadd.f32 %v1129, %v2282
    %2284 = vmatprep.mubr.f32.mxu0 0.0
    %2285 = vmatmul.mubr.f32.gmra.mxu0 %v1281
    %v2286 = vpop.f32.mrf.mxu0
    %v2287 = vadd.f32 %v1133, %v2286
    %v2288 = vpop.f32.mrf.mxu0
    %v2289 = vadd.f32 %v1135, %v2288
    %2290 = vmatprep.mubr.f32.mxu0 0.0
    %2291 = vmatmul.mubr.f32.gmra.mxu0 %v1284
    %v2292 = vpop.f32.mrf.mxu0
    %v2293 = vadd.f32 %v1139, %v2292
    %v2294 = vpop.f32.mrf.mxu0
    %v2295 = vadd.f32 %v1141, %v2294
    %2296 = vmatprep.mubr.f32.mxu0 0.0
    %2297 = vmatmul.mubr.f32.gmra.mxu0 %v1287
    %v2298 = vpop.f32.mrf.mxu0
    %v2299 = vadd.f32 %v1145, %v2298
    %v2300 = vpop.f32.mrf.mxu0
    %v2301 = vadd.f32 %v1147, %v2300
    %2302 = vmatprep.mubr.f32.mxu0 0.0
    %2303 = vmatmul.mubr.f32.gmra.mxu0 %v1290
    %v2304 = vpop.f32.mrf.mxu0
    %v2305 = vadd.f32 %v1151, %v2304
    %v2306 = vpop.f32.mrf.mxu0
    %v2307 = vadd.f32 %v1153, %v2306
    %2308 = vdwg.mxu0
    %2309 = vmatprep.subr.mxu0 0.0
    %2310 = vmatpush1.msra.mxu0 0.0
    %2311 = vmatprep.subr.mxu0 0.0
    %2312 = vmatpush1.msra.mxu0 0.0
    %2313 = vmatprep.subr.mxu0 0.0
    %2314 = vmatpush1.msra.mxu0 0.0
    %2315 = vmatprep.subr.mxu0 0.0
    %2316 = vmatpush1.msra.mxu0 0.0
    %2317 = vmatprep.subr.mxu0 0.0
    %2318 = vmatpush1.msra.mxu0 0.0
    %2319 = vmatprep.subr.mxu0 0.0
    %2320 = vmatpush1.msra.mxu0 0.0
    %2321 = vmatprep.subr.mxu0 0.0
    %2322 = vmatpush1.msra.mxu0 0.0
    %2323 = vmatprep.subr.mxu0 0.0
    %2324 = vmatpush1.msra.mxu0 0.0
    %2325 = vmatprep.subr.mxu0 0.0
    %2326 = vmatpush1.msra.mxu0 0.0
    %2327 = vmatprep.subr.mxu0 0.0
    %2328 = vmatpush1.msra.mxu0 0.0
    %2329 = vmatprep.subr.mxu0 0.0
    %2330 = vmatpush1.msra.mxu0 0.0
    %2331 = vmatprep.subr.mxu0 0.0
    %2332 = vmatpush1.msra.mxu0 0.0
    %2333 = vmatprep.subr.mxu0 0.0
    %2334 = vmatpush1.msra.mxu0 0.0
    %2335 = vmatprep.subr.mxu0 %v94
    %2336 = vmatpush1.msra.mxu0 %v93
    %2337 = vmatprep.subr.mxu0 %v73
    %2338 = vmatpush1.msra.mxu0 %v72
    %2339 = vmatprep.subr.mxu0 %v52
    %2340 = vmatpush1.msra.mxu0 %v51
    %2341 = vmatprep.subr.mxu0 0.0
    %2342 = vmatpush2.msra.mxu0 0.0
    %2343 = vmatprep.subr.mxu0 0.0
    %2344 = vmatpush2.msra.mxu0 0.0
    %2345 = vmatprep.subr.mxu0 0.0
    %2346 = vmatpush2.msra.mxu0 0.0
    %2347 = vmatprep.subr.mxu0 0.0
    %2348 = vmatpush2.msra.mxu0 0.0
    %2349 = vmatprep.subr.mxu0 0.0
    %2350 = vmatpush2.msra.mxu0 0.0
    %2351 = vmatprep.subr.mxu0 0.0
    %2352 = vmatpush2.msra.mxu0 0.0
    %2353 = vmatprep.subr.mxu0 0.0
    %2354 = vmatpush2.msra.mxu0 0.0
    %2355 = vmatprep.subr.mxu0 0.0
    %2356 = vmatpush2.msra.mxu0 0.0
    %2357 = vmatprep.subr.mxu0 0.0
    %2358 = vmatpush2.msra.mxu0 0.0
    %2359 = vmatprep.subr.mxu0 0.0
    %2360 = vmatpush2.msra.mxu0 0.0
    %2361 = vmatprep.subr.mxu0 0.0
    %2362 = vmatpush2.msra.mxu0 0.0
    %2363 = vmatprep.subr.mxu0 0.0
    %2364 = vmatpush2.msra.mxu0 0.0
    %2365 = vmatprep.subr.mxu0 0.0
    %2366 = vmatpush2.msra.mxu0 0.0
    %2367 = vmatprep.subr.mxu0 0.0
    %2368 = vmatpush2.msra.mxu0 0.0
    %2369 = vmatprep.subr.mxu0 0.0
    %2370 = vmatpush2.msra.mxu0 0.0
    %2371 = vmatprep.subr.mxu0 0.0
    %2372 = vmatpush2.msra.mxu0 0.0
    %2373 = vmatprep.mubr.f32.mxu0 0.0
    %2374 = vmatmul.mubr.f32.gmra.mxu0 %v1269
    %v2375 = vpop.f32.mrf.mxu0
    %v2376 = vadd.f32 %v1222, %v2375
    %v2377 = vpop.f32.mrf.mxu0
    %v2378 = vadd.f32 %v1224, %v2377
    %2379 = vmatprep.mubr.f32.mxu0 0.0
    %2380 = vmatmul.mubr.f32.gmra.mxu0 %v1272
    %v2381 = vpop.f32.mrf.mxu0
    %v2382 = vadd.f32 %v1228, %v2381
    %v2383 = vpop.f32.mrf.mxu0
    %v2384 = vadd.f32 %v1230, %v2383
    %2385 = vmatprep.mubr.f32.mxu0 0.0
    %2386 = vmatmul.mubr.f32.gmra.mxu0 %v1275
    %v2387 = vpop.f32.mrf.mxu0
    %v2388 = vadd.f32 %v1234, %v2387
    %v2389 = vpop.f32.mrf.mxu0
    %v2390 = vadd.f32 %v1236, %v2389
    %2391 = vmatprep.mubr.f32.mxu0 0.0
    %2392 = vmatmul.mubr.f32.gmra.mxu0 %v1278
    %v2393 = vpop.f32.mrf.mxu0
    %v2394 = vadd.f32 %v1240, %v2393
    %v2395 = vpop.f32.mrf.mxu0
    %v2396 = vadd.f32 %v1242, %v2395
    %2397 = vmatprep.mubr.f32.mxu0 0.0
    %2398 = vmatmul.mubr.f32.gmra.mxu0 %v1281
    %v2399 = vpop.f32.mrf.mxu0
    %v2400 = vadd.f32 %v1246, %v2399
    %v2401 = vpop.f32.mrf.mxu0
    %v2402 = vadd.f32 %v1248, %v2401
    %2403 = vmatprep.mubr.f32.mxu0 0.0
    %2404 = vmatmul.mubr.f32.gmra.mxu0 %v1284
    %v2405 = vpop.f32.mrf.mxu0
    %v2406 = vadd.f32 %v1252, %v2405
    %v2407 = vpop.f32.mrf.mxu0
    %v2408 = vadd.f32 %v1254, %v2407
    %2409 = vmatprep.mubr.f32.mxu0 0.0
    %2410 = vmatmul.mubr.f32.gmra.mxu0 %v1287
    %v2411 = vpop.f32.mrf.mxu0
    %v2412 = vadd.f32 %v1258, %v2411
    %v2413 = vpop.f32.mrf.mxu0
    %v2414 = vadd.f32 %v1260, %v2413
    %2415 = vmatprep.mubr.f32.mxu0 0.0
    %2416 = vmatmul.mubr.f32.gmra.mxu0 %v1290
    %v2417 = vpop.f32.mrf.mxu0
    %v2418 = vadd.f32 %v1264, %v2417
    %v2419 = vpop.f32.mrf.mxu0
    %v2420 = vadd.f32 %v1266, %v2419
    %2421 = vdwg.mxu0
    %v2422 = vld [vmem:[%s2] sm:$0xff]
    %v2423 = vld [vmem:[%s2 + $0x8] sm:$0xff]
    %v2424 = vld [vmem:[%s2 + $0x10] sm:$0xff]
    %v2425 = vld [vmem:[%s2 + $0x18] sm:$0xff]
    %v2426 = vld [vmem:[%s2 + $0x20] sm:$0xff]
    %v2427 = vld [vmem:[%s2 + $0x28] sm:$0xff]
    %v2428 = vld [vmem:[%s2 + $0x30] sm:$0xff]
    %v2429 = vld [vmem:[%s2 + $0x38] sm:$0xff]
    %2431 = vset.pattern.permute.xlu0 0
    %2432 = vperm.xlu0 %2431, %v2422
    %v2433 = vpop.permute.xlu0 %2432
    %2436 = vset.pattern.permute.xlu0 0
    %2437 = vperm.xlu0 %2436, %v2423
    %v2438 = vpop.permute.xlu0 %2437
    %2441 = vset.pattern.permute.xlu0 0
    %2442 = vperm.xlu0 %2441, %v2424
    %v2443 = vpop.permute.xlu0 %2442
    %2446 = vset.pattern.permute.xlu0 0
    %2447 = vperm.xlu0 %2446, %v2425
    %v2448 = vpop.permute.xlu0 %2447
    %2451 = vset.pattern.permute.xlu0 0
    %2452 = vperm.xlu0 %2451, %v2426
    %v2453 = vpop.permute.xlu0 %2452
    %2456 = vset.pattern.permute.xlu0 0
    %2457 = vperm.xlu0 %2456, %v2427
    %v2458 = vpop.permute.xlu0 %2457
    %2461 = vset.pattern.permute.xlu0 0
    %2462 = vperm.xlu0 %2461, %v2428
    %v2463 = vpop.permute.xlu0 %2462
    %2466 = vset.pattern.permute.xlu0 0
    %2467 = vperm.xlu0 %2466, %v2429
    %v2468 = vpop.permute.xlu0 %2467
    %v2470 = vadd.f32 %v1359, %v2433
    %v2471 = vadd.f32 %v1361, %v2433
    %v2472 = vadd.f32 %v1472, %v2433
    %v2473 = vadd.f32 %v1474, %v2433
    %v2474 = vadd.f32 %v1585, %v2433
    %v2475 = vadd.f32 %v1587, %v2433
    %v2476 = vadd.f32 %v1698, %v2433
    %v2477 = vadd.f32 %v1700, %v2433
    %v2478 = vadd.f32 %v1811, %v2433
    %v2479 = vadd.f32 %v1813, %v2433
    %v2480 = vadd.f32 %v1924, %v2433
    %v2481 = vadd.f32 %v1926, %v2433
    %v2482 = vadd.f32 %v2037, %v2433
    %v2483 = vadd.f32 %v2039, %v2433
    %v2484 = vadd.f32 %v2150, %v2433
    %v2485 = vadd.f32 %v2152, %v2433
    %v2486 = vadd.f32 %v2263, %v2433
    %v2487 = vadd.f32 %v2265, %v2433
    %v2488 = vadd.f32 %v2376, %v2433
    %v2489 = vadd.f32 %v2378, %v2433
    %v2490 = vadd.f32 %v1365, %v2438
    %v2491 = vadd.f32 %v1367, %v2438
    %v2492 = vadd.f32 %v1478, %v2438
    %v2493 = vadd.f32 %v1480, %v2438
    %v2494 = vadd.f32 %v1591, %v2438
    %v2495 = vadd.f32 %v1593, %v2438
    %v2496 = vadd.f32 %v1704, %v2438
    %v2497 = vadd.f32 %v1706, %v2438
    %v2498 = vadd.f32 %v1817, %v2438
    %v2499 = vadd.f32 %v1819, %v2438
    %v2500 = vadd.f32 %v1930, %v2438
    %v2501 = vadd.f32 %v1932, %v2438
    %v2502 = vadd.f32 %v2043, %v2438
    %v2503 = vadd.f32 %v2045, %v2438
    %v2504 = vadd.f32 %v2156, %v2438
    %v2505 = vadd.f32 %v2158, %v2438
    %v2506 = vadd.f32 %v2269, %v2438
    %v2507 = vadd.f32 %v2271, %v2438
    %v2508 = vadd.f32 %v2382, %v2438
    %v2509 = vadd.f32 %v2384, %v2438
    %v2510 = vadd.f32 %v1371, %v2443
    %v2511 = vadd.f32 %v1373, %v2443
    %v2512 = vadd.f32 %v1484, %v2443
    %v2513 = vadd.f32 %v1486, %v2443
    %v2514 = vadd.f32 %v1597, %v2443
    %v2515 = vadd.f32 %v1599, %v2443
    %v2516 = vadd.f32 %v1710, %v2443
    %v2517 = vadd.f32 %v1712, %v2443
    %v2518 = vadd.f32 %v1823, %v2443
    %v2519 = vadd.f32 %v1825, %v2443
    %v2520 = vadd.f32 %v1936, %v2443
    %v2521 = vadd.f32 %v1938, %v2443
    %v2522 = vadd.f32 %v2049, %v2443
    %v2523 = vadd.f32 %v2051, %v2443
    %v2524 = vadd.f32 %v2162, %v2443
    %v2525 = vadd.f32 %v2164, %v2443
    %v2526 = vadd.f32 %v2275, %v2443
    %v2527 = vadd.f32 %v2277, %v2443
    %v2528 = vadd.f32 %v2388, %v2443
    %v2529 = vadd.f32 %v2390, %v2443
    %v2530 = vadd.f32 %v1377, %v2448
    %v2531 = vadd.f32 %v1379, %v2448
    %v2532 = vadd.f32 %v1490, %v2448
    %v2533 = vadd.f32 %v1492, %v2448
    %v2534 = vadd.f32 %v1603, %v2448
    %v2535 = vadd.f32 %v1605, %v2448
    %v2536 = vadd.f32 %v1716, %v2448
    %v2537 = vadd.f32 %v1718, %v2448
    %v2538 = vadd.f32 %v1829, %v2448
    %v2539 = vadd.f32 %v1831, %v2448
    %v2540 = vadd.f32 %v1942, %v2448
    %v2541 = vadd.f32 %v1944, %v2448
    %v2542 = vadd.f32 %v2055, %v2448
    %v2543 = vadd.f32 %v2057, %v2448
    %v2544 = vadd.f32 %v2168, %v2448
    %v2545 = vadd.f32 %v2170, %v2448
    %v2546 = vadd.f32 %v2281, %v2448
    %v2547 = vadd.f32 %v2283, %v2448
    %v2548 = vadd.f32 %v2394, %v2448
    %v2549 = vadd.f32 %v2396, %v2448
    %v2550 = vadd.f32 %v1383, %v2453
    %v2551 = vadd.f32 %v1385, %v2453
    %v2552 = vadd.f32 %v1496, %v2453
    %v2553 = vadd.f32 %v1498, %v2453
    %v2554 = vadd.f32 %v1609, %v2453
    %v2555 = vadd.f32 %v1611, %v2453
    %v2556 = vadd.f32 %v1722, %v2453
    %v2557 = vadd.f32 %v1724, %v2453
    %v2558 = vadd.f32 %v1835, %v2453
    %v2559 = vadd.f32 %v1837, %v2453
    %v2560 = vadd.f32 %v1948, %v2453
    %v2561 = vadd.f32 %v1950, %v2453
    %v2562 = vadd.f32 %v2061, %v2453
    %v2563 = vadd.f32 %v2063, %v2453
    %v2564 = vadd.f32 %v2174, %v2453
    %v2565 = vadd.f32 %v2176, %v2453
    %v2566 = vadd.f32 %v2287, %v2453
    %v2567 = vadd.f32 %v2289, %v2453
    %v2568 = vadd.f32 %v2400, %v2453
    %v2569 = vadd.f32 %v2402, %v2453
    %v2570 = vadd.f32 %v1389, %v2458
    %v2571 = vadd.f32 %v1391, %v2458
    %v2572 = vadd.f32 %v1502, %v2458
    %v2573 = vadd.f32 %v1504, %v2458
    %v2574 = vadd.f32 %v1615, %v2458
    %v2575 = vadd.f32 %v1617, %v2458
    %v2576 = vadd.f32 %v1728, %v2458
    %v2577 = vadd.f32 %v1730, %v2458
    %v2578 = vadd.f32 %v1841, %v2458
    %v2579 = vadd.f32 %v1843, %v2458
    %v2580 = vadd.f32 %v1954, %v2458
    %v2581 = vadd.f32 %v1956, %v2458
    %v2582 = vadd.f32 %v2067, %v2458
    %v2583 = vadd.f32 %v2069, %v2458
    %v2584 = vadd.f32 %v2180, %v2458
    %v2585 = vadd.f32 %v2182, %v2458
    %v2586 = vadd.f32 %v2293, %v2458
    %v2587 = vadd.f32 %v2295, %v2458
    %v2588 = vadd.f32 %v2406, %v2458
    %v2589 = vadd.f32 %v2408, %v2458
    %v2590 = vadd.f32 %v1395, %v2463
    %v2591 = vadd.f32 %v1397, %v2463
    %v2592 = vadd.f32 %v1508, %v2463
    %v2593 = vadd.f32 %v1510, %v2463
    %v2594 = vadd.f32 %v1621, %v2463
    %v2595 = vadd.f32 %v1623, %v2463
    %v2596 = vadd.f32 %v1734, %v2463
    %v2597 = vadd.f32 %v1736, %v2463
    %v2598 = vadd.f32 %v1847, %v2463
    %v2599 = vadd.f32 %v1849, %v2463
    %v2600 = vadd.f32 %v1960, %v2463
    %v2601 = vadd.f32 %v1962, %v2463
    %v2602 = vadd.f32 %v2073, %v2463
    %v2603 = vadd.f32 %v2075, %v2463
    %v2604 = vadd.f32 %v2186, %v2463
    %v2605 = vadd.f32 %v2188, %v2463
    %v2606 = vadd.f32 %v2299, %v2463
    %v2607 = vadd.f32 %v2301, %v2463
    %v2608 = vadd.f32 %v2412, %v2463
    %v2609 = vadd.f32 %v2414, %v2463
    %v2610 = vadd.f32 %v1401, %v2468
    %v2611 = vadd.f32 %v1403, %v2468
    %v2612 = vadd.f32 %v1514, %v2468
    %v2613 = vadd.f32 %v1516, %v2468
    %v2614 = vadd.f32 %v1627, %v2468
    %v2615 = vadd.f32 %v1629, %v2468
    %v2616 = vadd.f32 %v1740, %v2468
    %v2617 = vadd.f32 %v1742, %v2468
    %v2618 = vadd.f32 %v1853, %v2468
    %v2619 = vadd.f32 %v1855, %v2468
    %v2620 = vadd.f32 %v1966, %v2468
    %v2621 = vadd.f32 %v1968, %v2468
    %v2622 = vadd.f32 %v2079, %v2468
    %v2623 = vadd.f32 %v2081, %v2468
    %v2624 = vadd.f32 %v2192, %v2468
    %v2625 = vadd.f32 %v2194, %v2468
    %v2626 = vadd.f32 %v2305, %v2468
    %v2627 = vadd.f32 %v2307, %v2468
    %v2628 = vadd.f32 %v2418, %v2468
    %v2629 = vadd.f32 %v2420, %v2468
    %v2630 = vmax.f32 %v2470, 0.0
    %v2631 = vmax.f32 %v2471, 0.0
    %v2632 = vmax.f32 %v2472, 0.0
    %v2633 = vmax.f32 %v2473, 0.0
    %v2634 = vmax.f32 %v2474, 0.0
    %v2635 = vmax.f32 %v2475, 0.0
    %v2636 = vmax.f32 %v2476, 0.0
    %v2637 = vmax.f32 %v2477, 0.0
    %v2638 = vmax.f32 %v2478, 0.0
    %v2639 = vmax.f32 %v2479, 0.0
    %v2640 = vmax.f32 %v2480, 0.0
    %v2641 = vmax.f32 %v2481, 0.0
    %v2642 = vmax.f32 %v2482, 0.0
    %v2643 = vmax.f32 %v2483, 0.0
    %v2644 = vmax.f32 %v2484, 0.0
    %v2645 = vmax.f32 %v2485, 0.0
    %v2646 = vmax.f32 %v2486, 0.0
    %v2647 = vmax.f32 %v2487, 0.0
    %v2648 = vmax.f32 %v2488, 0.0
    %v2649 = vmax.f32 %v2489, 0.0
    %v2650 = vmax.f32 %v2490, 0.0
    %v2651 = vmax.f32 %v2491, 0.0
    %v2652 = vmax.f32 %v2492, 0.0
    %v2653 = vmax.f32 %v2493, 0.0
    %v2654 = vmax.f32 %v2494, 0.0
    %v2655 = vmax.f32 %v2495, 0.0
    %v2656 = vmax.f32 %v2496, 0.0
    %v2657 = vmax.f32 %v2497, 0.0
    %v2658 = vmax.f32 %v2498, 0.0
    %v2659 = vmax.f32 %v2499, 0.0
    %v2660 = vmax.f32 %v2500, 0.0
    %v2661 = vmax.f32 %v2501, 0.0
    %v2662 = vmax.f32 %v2502, 0.0
    %v2663 = vmax.f32 %v2503, 0.0
    %v2664 = vmax.f32 %v2504, 0.0
    %v2665 = vmax.f32 %v2505, 0.0
    %v2666 = vmax.f32 %v2506, 0.0
    %v2667 = vmax.f32 %v2507, 0.0
    %v2668 = vmax.f32 %v2508, 0.0
    %v2669 = vmax.f32 %v2509, 0.0
    %v2670 = vmax.f32 %v2510, 0.0
    %v2671 = vmax.f32 %v2511, 0.0
    %v2672 = vmax.f32 %v2512, 0.0
    %v2673 = vmax.f32 %v2513, 0.0
    %v2674 = vmax.f32 %v2514, 0.0
    %v2675 = vmax.f32 %v2515, 0.0
    %v2676 = vmax.f32 %v2516, 0.0
    %v2677 = vmax.f32 %v2517, 0.0
    %v2678 = vmax.f32 %v2518, 0.0
    %v2679 = vmax.f32 %v2519, 0.0
    %v2680 = vmax.f32 %v2520, 0.0
    %v2681 = vmax.f32 %v2521, 0.0
    %v2682 = vmax.f32 %v2522, 0.0
    %v2683 = vmax.f32 %v2523, 0.0
    %v2684 = vmax.f32 %v2524, 0.0
    %v2685 = vmax.f32 %v2525, 0.0
    %v2686 = vmax.f32 %v2526, 0.0
    %v2687 = vmax.f32 %v2527, 0.0
    %v2688 = vmax.f32 %v2528, 0.0
    %v2689 = vmax.f32 %v2529, 0.0
    %v2690 = vmax.f32 %v2530, 0.0
    %v2691 = vmax.f32 %v2531, 0.0
    %v2692 = vmax.f32 %v2532, 0.0
    %v2693 = vmax.f32 %v2533, 0.0
    %v2694 = vmax.f32 %v2534, 0.0
    %v2695 = vmax.f32 %v2535, 0.0
    %v2696 = vmax.f32 %v2536, 0.0
    %v2697 = vmax.f32 %v2537, 0.0
    %v2698 = vmax.f32 %v2538, 0.0
    %v2699 = vmax.f32 %v2539, 0.0
    %v2700 = vmax.f32 %v2540, 0.0
    %v2701 = vmax.f32 %v2541, 0.0
    %v2702 = vmax.f32 %v2542, 0.0
    %v2703 = vmax.f32 %v2543, 0.0
    %v2704 = vmax.f32 %v2544, 0.0
    %v2705 = vmax.f32 %v2545, 0.0
    %v2706 = vmax.f32 %v2546, 0.0
    %v2707 = vmax.f32 %v2547, 0.0
    %v2708 = vmax.f32 %v2548, 0.0
    %v2709 = vmax.f32 %v2549, 0.0
    %v2710 = vmax.f32 %v2550, 0.0
    %v2711 = vmax.f32 %v2551, 0.0
    %v2712 = vmax.f32 %v2552, 0.0
    %v2713 = vmax.f32 %v2553, 0.0
    %v2714 = vmax.f32 %v2554, 0.0
    %v2715 = vmax.f32 %v2555, 0.0
    %v2716 = vmax.f32 %v2556, 0.0
    %v2717 = vmax.f32 %v2557, 0.0
    %v2718 = vmax.f32 %v2558, 0.0
    %v2719 = vmax.f32 %v2559, 0.0
    %v2720 = vmax.f32 %v2560, 0.0
    %v2721 = vmax.f32 %v2561, 0.0
    %v2722 = vmax.f32 %v2562, 0.0
    %v2723 = vmax.f32 %v2563, 0.0
    %v2724 = vmax.f32 %v2564, 0.0
    %v2725 = vmax.f32 %v2565, 0.0
    %v2726 = vmax.f32 %v2566, 0.0
    %v2727 = vmax.f32 %v2567, 0.0
    %v2728 = vmax.f32 %v2568, 0.0
    %v2729 = vmax.f32 %v2569, 0.0
    %v2730 = vmax.f32 %v2570, 0.0
    %v2731 = vmax.f32 %v2571, 0.0
    %v2732 = vmax.f32 %v2572, 0.0
    %v2733 = vmax.f32 %v2573, 0.0
    %v2734 = vmax.f32 %v2574, 0.0
    %v2735 = vmax.f32 %v2575, 0.0
    %v2736 = vmax.f32 %v2576, 0.0
    %v2737 = vmax.f32 %v2577, 0.0
    %v2738 = vmax.f32 %v2578, 0.0
    %v2739 = vmax.f32 %v2579, 0.0
    %v2740 = vmax.f32 %v2580, 0.0
    %v2741 = vmax.f32 %v2581, 0.0
    %v2742 = vmax.f32 %v2582, 0.0
    %v2743 = vmax.f32 %v2583, 0.0
    %v2744 = vmax.f32 %v2584, 0.0
    %v2745 = vmax.f32 %v2585, 0.0
    %v2746 = vmax.f32 %v2586, 0.0
    %v2747 = vmax.f32 %v2587, 0.0
    %v2748 = vmax.f32 %v2588, 0.0
    %v2749 = vmax.f32 %v2589, 0.0
    %v2750 = vmax.f32 %v2590, 0.0
    %v2751 = vmax.f32 %v2591, 0.0
    %v2752 = vmax.f32 %v2592, 0.0
    %v2753 = vmax.f32 %v2593, 0.0
    %v2754 = vmax.f32 %v2594, 0.0
    %v2755 = vmax.f32 %v2595, 0.0
    %v2756 = vmax.f32 %v2596, 0.0
    %v2757 = vmax.f32 %v2597, 0.0
    %v2758 = vmax.f32 %v2598, 0.0
    %v2759 = vmax.f32 %v2599, 0.0
    %v2760 = vmax.f32 %v2600, 0.0
    %v2761 = vmax.f32 %v2601, 0.0
    %v2762 = vmax.f32 %v2602, 0.0
    %v2763 = vmax.f32 %v2603, 0.0
    %v2764 = vmax.f32 %v2604, 0.0
    %v2765 = vmax.f32 %v2605, 0.0
    %v2766 = vmax.f32 %v2606, 0.0
    %v2767 = vmax.f32 %v2607, 0.0
    %v2768 = vmax.f32 %v2608, 0.0
    %v2769 = vmax.f32 %v2609, 0.0
    %v2770 = vmax.f32 %v2610, 0.0
    %v2771 = vmax.f32 %v2611, 0.0
    %v2772 = vmax.f32 %v2612, 0.0
    %v2773 = vmax.f32 %v2613, 0.0
    %v2774 = vmax.f32 %v2614, 0.0
    %v2775 = vmax.f32 %v2615, 0.0
    %v2776 = vmax.f32 %v2616, 0.0
    %v2777 = vmax.f32 %v2617, 0.0
    %v2778 = vmax.f32 %v2618, 0.0
    %v2779 = vmax.f32 %v2619, 0.0
    %v2780 = vmax.f32 %v2620, 0.0
    %v2781 = vmax.f32 %v2621, 0.0
    %v2782 = vmax.f32 %v2622, 0.0
    %v2783 = vmax.f32 %v2623, 0.0
    %v2784 = vmax.f32 %v2624, 0.0
    %v2785 = vmax.f32 %v2625, 0.0
    %v2786 = vmax.f32 %v2626, 0.0
    %v2787 = vmax.f32 %v2627, 0.0
    %v2788 = vmax.f32 %v2628, 0.0
    %v2789 = vmax.f32 %v2629, 0.0
    %v2790 = vmax.f32 %v2630, %v2670
    %v2791 = vmax.f32 %v2631, %v2671
    %v2792 = vmax.f32 %v2632, %v2672
    %v2793 = vmax.f32 %v2633, %v2673
    %v2794 = vmax.f32 %v2634, %v2674
    %v2795 = vmax.f32 %v2635, %v2675
    %v2796 = vmax.f32 %v2636, %v2676
    %v2797 = vmax.f32 %v2637, %v2677
    %v2798 = vmax.f32 %v2638, %v2678
    %v2799 = vmax.f32 %v2639, %v2679
    %v2800 = vmax.f32 %v2640, %v2680
    %v2801 = vmax.f32 %v2641, %v2681
    %v2802 = vmax.f32 %v2642, %v2682
    %v2803 = vmax.f32 %v2643, %v2683
    %v2804 = vmax.f32 %v2644, %v2684
    %v2805 = vmax.f32 %v2645, %v2685
    %v2806 = vmax.f32 %v2646, %v2686
    %v2807 = vmax.f32 %v2647, %v2687
    %v2808 = vmax.f32 %v2648, %v2688
    %v2809 = vmax.f32 %v2649, %v2689
    %v2810 = vmax.f32 %v2650, %v2690
    %v2811 = vmax.f32 %v2651, %v2691
    %v2812 = vmax.f32 %v2652, %v2692
    %v2813 = vmax.f32 %v2653, %v2693
    %v2814 = vmax.f32 %v2654, %v2694
    %v2815 = vmax.f32 %v2655, %v2695
    %v2816 = vmax.f32 %v2656, %v2696
    %v2817 = vmax.f32 %v2657, %v2697
    %v2818 = vmax.f32 %v2658, %v2698
    %v2819 = vmax.f32 %v2659, %v2699
    %v2820 = vmax.f32 %v2660, %v2700
    %v2821 = vmax.f32 %v2661, %v2701
    %v2822 = vmax.f32 %v2662, %v2702
    %v2823 = vmax.f32 %v2663, %v2703
    %v2824 = vmax.f32 %v2664, %v2704
    %v2825 = vmax.f32 %v2665, %v2705
    %v2826 = vmax.f32 %v2666, %v2706
    %v2827 = vmax.f32 %v2667, %v2707
    %v2828 = vmax.f32 %v2668, %v2708
    %v2829 = vmax.f32 %v2669, %v2709
    %v2830 = vmax.f32 %v2710, %v2750
    %v2831 = vmax.f32 %v2711, %v2751
    %v2832 = vmax.f32 %v2712, %v2752
    %v2833 = vmax.f32 %v2713, %v2753
    %v2834 = vmax.f32 %v2714, %v2754
    %v2835 = vmax.f32 %v2715, %v2755
    %v2836 = vmax.f32 %v2716, %v2756
    %v2837 = vmax.f32 %v2717, %v2757
    %v2838 = vmax.f32 %v2718, %v2758
    %v2839 = vmax.f32 %v2719, %v2759
    %v2840 = vmax.f32 %v2720, %v2760
    %v2841 = vmax.f32 %v2721, %v2761
    %v2842 = vmax.f32 %v2722, %v2762
    %v2843 = vmax.f32 %v2723, %v2763
    %v2844 = vmax.f32 %v2724, %v2764
    %v2845 = vmax.f32 %v2725, %v2765
    %v2846 = vmax.f32 %v2726, %v2766
    %v2847 = vmax.f32 %v2727, %v2767
    %v2848 = vmax.f32 %v2728, %v2768
    %v2849 = vmax.f32 %v2729, %v2769
    %v2850 = vmax.f32 %v2730, %v2770
    %v2851 = vmax.f32 %v2731, %v2771
    %v2852 = vmax.f32 %v2732, %v2772
    %v2853 = vmax.f32 %v2733, %v2773
    %v2854 = vmax.f32 %v2734, %v2774
    %v2855 = vmax.f32 %v2735, %v2775
    %v2856 = vmax.f32 %v2736, %v2776
    %v2857 = vmax.f32 %v2737, %v2777
    %v2858 = vmax.f32 %v2738, %v2778
    %v2859 = vmax.f32 %v2739, %v2779
    %v2860 = vmax.f32 %v2740, %v2780
    %v2861 = vmax.f32 %v2741, %v2781
    %v2862 = vmax.f32 %v2742, %v2782
    %v2863 = vmax.f32 %v2743, %v2783
    %v2864 = vmax.f32 %v2744, %v2784
    %v2865 = vmax.f32 %v2745, %v2785
    %v2866 = vmax.f32 %v2746, %v2786
    %v2867 = vmax.f32 %v2747, %v2787
    %v2868 = vmax.f32 %v2748, %v2788
    %v2869 = vmax.f32 %v2749, %v2789
    %v2870 = vld [vmem:[%s3] sm:$0xff]
    %v2871 = vld [vmem:[%s3 + $0x8] sm:$0xff]
    %v2872 = vld [vmem:[%s3 + $0x10] sm:$0xff]
    %v2873 = vld [vmem:[%s3 + $0x18] sm:$0xff]
    %v2874 = vld [vmem:[%s3 + $0x20] sm:$0xff]
    %v2875 = vld [vmem:[%s3 + $0x28] sm:$0xff]
    %v2876 = vld [vmem:[%s3 + $0x30] sm:$0xff]
    %v2877 = vld [vmem:[%s3 + $0x38] sm:$0xff]
    %s2878 = scalar_lea.vmem %s3, 64
    %v2879 = vld [vmem:[%s2878] sm:$0xff]
    %v2880 = vld [vmem:[%s2878 + $0x8] sm:$0xff]
    %v2881 = vld [vmem:[%s2878 + $0x10] sm:$0xff]
    %v2882 = vld [vmem:[%s2878 + $0x18] sm:$0xff]
    %v2883 = vld [vmem:[%s2878 + $0x20] sm:$0xff]
    %v2884 = vld [vmem:[%s2878 + $0x28] sm:$0xff]
    %v2885 = vld [vmem:[%s2878 + $0x30] sm:$0xff]
    %v2886 = vld [vmem:[%s2878 + $0x38] sm:$0xff]
    %vm2887 = vcmask 261120
    %v2889 = vsel %vm2887, %v2879, 0
    %v2892 = vsel %vm2887, %v2880, 0
    %v2895 = vsel %vm2887, %v2881, 0
    %v2898 = vsel %vm2887, %v2882, 0
    %v2901 = vsel %vm2887, %v2883, 0
    %v2904 = vsel %vm2887, %v2884, 0
    %v2907 = vsel %vm2887, %v2885, 0
    %v2910 = vsel %vm2887, %v2886, 0
    %2912 = vmatprep.subr.mxu0 0.0
    %2913 = vmatpush1.msra.mxu0 0.0
    %2914 = vmatprep.subr.mxu0 0.0
    %2915 = vmatpush1.msra.mxu0 0.0
    %2916 = vmatprep.subr.mxu0 0.0
    %2917 = vmatpush1.msra.mxu0 0.0
    %2918 = vmatprep.subr.mxu0 0.0
    %2919 = vmatpush1.msra.mxu0 0.0
    %2920 = vmatprep.subr.mxu0 0.0
    %2921 = vmatpush1.msra.mxu0 0.0
    %2922 = vmatprep.subr.mxu0 0.0
    %2923 = vmatpush1.msra.mxu0 0.0
    %2924 = vmatprep.subr.mxu0 0.0
    %2925 = vmatpush1.msra.mxu0 0.0
    %2926 = vmatprep.subr.mxu0 0.0
    %2927 = vmatpush1.msra.mxu0 0.0
    %2928 = vmatprep.subr.mxu0 0.0
    %2929 = vmatpush1.msra.mxu0 0.0
    %2930 = vmatprep.subr.mxu0 0.0
    %2931 = vmatpush1.msra.mxu0 0.0
    %2932 = vmatprep.subr.mxu0 0.0
    %2933 = vmatpush1.msra.mxu0 0.0
    %2934 = vmatprep.subr.mxu0 0.0
    %2935 = vmatpush1.msra.mxu0 0.0
    %2936 = vmatprep.subr.mxu0 %v2851
    %2937 = vmatpush1.msra.mxu0 %v2850
    %2938 = vmatprep.subr.mxu0 %v2831
    %2939 = vmatpush1.msra.mxu0 %v2830
    %2940 = vmatprep.subr.mxu0 %v2811
    %2941 = vmatpush1.msra.mxu0 %v2810
    %2942 = vmatprep.subr.mxu0 %v2791
    %2943 = vmatpush1.msra.mxu0 %v2790
    %2944 = vmatprep.subr.mxu0 0.0
    %2945 = vmatpush2.msra.mxu0 0.0
    %2946 = vmatprep.subr.mxu0 0.0
    %2947 = vmatpush2.msra.mxu0 0.0
    %2948 = vmatprep.subr.mxu0 0.0
    %2949 = vmatpush2.msra.mxu0 0.0
    %2950 = vmatprep.subr.mxu0 0.0
    %2951 = vmatpush2.msra.mxu0 0.0
    %2952 = vmatprep.subr.mxu0 0.0
    %2953 = vmatpush2.msra.mxu0 0.0
    %2954 = vmatprep.subr.mxu0 0.0
    %2955 = vmatpush2.msra.mxu0 0.0
    %2956 = vmatprep.subr.mxu0 0.0
    %2957 = vmatpush2.msra.mxu0 0.0
    %2958 = vmatprep.subr.mxu0 0.0
    %2959 = vmatpush2.msra.mxu0 0.0
    %2960 = vmatprep.subr.mxu0 0.0
    %2961 = vmatpush2.msra.mxu0 0.0
    %2962 = vmatprep.subr.mxu0 0.0
    %2963 = vmatpush2.msra.mxu0 0.0
    %2964 = vmatprep.subr.mxu0 0.0
    %2965 = vmatpush2.msra.mxu0 0.0
    %2966 = vmatprep.subr.mxu0 0.0
    %2967 = vmatpush2.msra.mxu0 0.0
    %2968 = vmatprep.subr.mxu0 0.0
    %2969 = vmatpush2.msra.mxu0 0.0
    %2970 = vmatprep.subr.mxu0 0.0
    %2971 = vmatpush2.msra.mxu0 0.0
    %2972 = vmatprep.subr.mxu0 0.0
    %2973 = vmatpush2.msra.mxu0 0.0
    %2974 = vmatprep.subr.mxu0 0.0
    %2975 = vmatpush2.msra.mxu0 0.0
    %2976 = vmatprep.mubr.f32.mxu0 0.0
    %2977 = vmatmul.mubr.f32.gmra.mxu0 %v2889
    %v2978 = vpop.f32.mrf.mxu0
    %v2979 = vadd.f32 0.0, %v2978
    %v2980 = vpop.f32.mrf.mxu0
    %v2981 = vadd.f32 0.0, %v2980
    %2982 = vmatprep.mubr.f32.mxu0 0.0
    %2983 = vmatmul.mubr.f32.gmra.mxu0 %v2892
    %v2984 = vpop.f32.mrf.mxu0
    %v2985 = vadd.f32 0.0, %v2984
    %v2986 = vpop.f32.mrf.mxu0
    %v2987 = vadd.f32 0.0, %v2986
    %2988 = vmatprep.mubr.f32.mxu0 0.0
    %2989 = vmatmul.mubr.f32.gmra.mxu0 %v2895
    %v2990 = vpop.f32.mrf.mxu0
    %v2991 = vadd.f32 0.0, %v2990
    %v2992 = vpop.f32.mrf.mxu0
    %v2993 = vadd.f32 0.0, %v2992
    %2994 = vmatprep.mubr.f32.mxu0 0.0
    %2995 = vmatmul.mubr.f32.gmra.mxu0 %v2898
    %v2996 = vpop.f32.mrf.mxu0
    %v2997 = vadd.f32 0.0, %v2996
    %v2998 = vpop.f32.mrf.mxu0
    %v2999 = vadd.f32 0.0, %v2998
    %3000 = vmatprep.mubr.f32.mxu0 0.0
    %3001 = vmatmul.mubr.f32.gmra.mxu0 %v2901
    %v3002 = vpop.f32.mrf.mxu0
    %v3003 = vadd.f32 0.0, %v3002
    %v3004 = vpop.f32.mrf.mxu0
    %v3005 = vadd.f32 0.0, %v3004
    %3006 = vmatprep.mubr.f32.mxu0 0.0
    %3007 = vmatmul.mubr.f32.gmra.mxu0 %v2904
    %v3008 = vpop.f32.mrf.mxu0
    %v3009 = vadd.f32 0.0, %v3008
    %v3010 = vpop.f32.mrf.mxu0
    %v3011 = vadd.f32 0.0, %v3010
    %3012 = vmatprep.mubr.f32.mxu0 0.0
    %3013 = vmatmul.mubr.f32.gmra.mxu0 %v2907
    %v3014 = vpop.f32.mrf.mxu0
    %v3015 = vadd.f32 0.0, %v3014
    %v3016 = vpop.f32.mrf.mxu0
    %v3017 = vadd.f32 0.0, %v3016
    %3018 = vmatprep.mubr.f32.mxu0 0.0
    %3019 = vmatmul.mubr.f32.gmra.mxu0 %v2910
    %v3020 = vpop.f32.mrf.mxu0
    %v3021 = vadd.f32 0.0, %v3020
    %v3022 = vpop.f32.mrf.mxu0
    %v3023 = vadd.f32 0.0, %v3022
    %3024 = vdwg.mxu0
    %3025 = vmatprep.subr.mxu0 0.0
    %3026 = vmatpush1.msra.mxu0 0.0
    %3027 = vmatprep.subr.mxu0 0.0
    %3028 = vmatpush1.msra.mxu0 0.0
    %3029 = vmatprep.subr.mxu0 0.0
    %3030 = vmatpush1.msra.mxu0 0.0
    %3031 = vmatprep.subr.mxu0 0.0
    %3032 = vmatpush1.msra.mxu0 0.0
    %3033 = vmatprep.subr.mxu0 0.0
    %3034 = vmatpush1.msra.mxu0 0.0
    %3035 = vmatprep.subr.mxu0 0.0
    %3036 = vmatpush1.msra.mxu0 0.0
    %3037 = vmatprep.subr.mxu0 0.0
    %3038 = vmatpush1.msra.mxu0 0.0
    %3039 = vmatprep.subr.mxu0 0.0
    %3040 = vmatpush1.msra.mxu0 0.0
    %3041 = vmatprep.subr.mxu0 0.0
    %3042 = vmatpush1.msra.mxu0 0.0
    %3043 = vmatprep.subr.mxu0 0.0
    %3044 = vmatpush1.msra.mxu0 0.0
    %3045 = vmatprep.subr.mxu0 0.0
    %3046 = vmatpush1.msra.mxu0 0.0
    %3047 = vmatprep.subr.mxu0 0.0
    %3048 = vmatpush1.msra.mxu0 0.0
    %3049 = vmatprep.subr.mxu0 %v2853
    %3050 = vmatpush1.msra.mxu0 %v2852
    %3051 = vmatprep.subr.mxu0 %v2833
    %3052 = vmatpush1.msra.mxu0 %v2832
    %3053 = vmatprep.subr.mxu0 %v2813
    %3054 = vmatpush1.msra.mxu0 %v2812
    %3055 = vmatprep.subr.mxu0 %v2793
    %3056 = vmatpush1.msra.mxu0 %v2792
    %3057 = vmatprep.subr.mxu0 0.0
    %3058 = vmatpush2.msra.mxu0 0.0
    %3059 = vmatprep.subr.mxu0 0.0
    %3060 = vmatpush2.msra.mxu0 0.0
    %3061 = vmatprep.subr.mxu0 0.0
    %3062 = vmatpush2.msra.mxu0 0.0
    %3063 = vmatprep.subr.mxu0 0.0
    %3064 = vmatpush2.msra.mxu0 0.0
    %3065 = vmatprep.subr.mxu0 0.0
    %3066 = vmatpush2.msra.mxu0 0.0
    %3067 = vmatprep.subr.mxu0 0.0
    %3068 = vmatpush2.msra.mxu0 0.0
    %3069 = vmatprep.subr.mxu0 0.0
    %3070 = vmatpush2.msra.mxu0 0.0
    %3071 = vmatprep.subr.mxu0 0.0
    %3072 = vmatpush2.msra.mxu0 0.0
    %3073 = vmatprep.subr.mxu0 0.0
    %3074 = vmatpush2.msra.mxu0 0.0
    %3075 = vmatprep.subr.mxu0 0.0
    %3076 = vmatpush2.msra.mxu0 0.0
    %3077 = vmatprep.subr.mxu0 0.0
    %3078 = vmatpush2.msra.mxu0 0.0
    %3079 = vmatprep.subr.mxu0 0.0
    %3080 = vmatpush2.msra.mxu0 0.0
    %3081 = vmatprep.subr.mxu0 0.0
    %3082 = vmatpush2.msra.mxu0 0.0
    %3083 = vmatprep.subr.mxu0 0.0
    %3084 = vmatpush2.msra.mxu0 0.0
    %3085 = vmatprep.subr.mxu0 0.0
    %3086 = vmatpush2.msra.mxu0 0.0
    %3087 = vmatprep.subr.mxu0 0.0
    %3088 = vmatpush2.msra.mxu0 0.0
    %3089 = vmatprep.mubr.f32.mxu0 0.0
    %3090 = vmatmul.mubr.f32.gmra.mxu0 %v2889
    %v3091 = vpop.f32.mrf.mxu0
    %v3092 = vadd.f32 0.0, %v3091
    %v3093 = vpop.f32.mrf.mxu0
    %v3094 = vadd.f32 0.0, %v3093
    %3095 = vmatprep.mubr.f32.mxu0 0.0
    %3096 = vmatmul.mubr.f32.gmra.mxu0 %v2892
    %v3097 = vpop.f32.mrf.mxu0
    %v3098 = vadd.f32 0.0, %v3097
    %v3099 = vpop.f32.mrf.mxu0
    %v3100 = vadd.f32 0.0, %v3099
    %3101 = vmatprep.mubr.f32.mxu0 0.0
    %3102 = vmatmul.mubr.f32.gmra.mxu0 %v2895
    %v3103 = vpop.f32.mrf.mxu0
    %v3104 = vadd.f32 0.0, %v3103
    %v3105 = vpop.f32.mrf.mxu0
    %v3106 = vadd.f32 0.0, %v3105
    %3107 = vmatprep.mubr.f32.mxu0 0.0
    %3108 = vmatmul.mubr.f32.gmra.mxu0 %v2898
    %v3109 = vpop.f32.mrf.mxu0
    %v3110 = vadd.f32 0.0, %v3109
    %v3111 = vpop.f32.mrf.mxu0
    %v3112 = vadd.f32 0.0, %v3111
    %3113 = vmatprep.mubr.f32.mxu0 0.0
    %3114 = vmatmul.mubr.f32.gmra.mxu0 %v2901
    %v3115 = vpop.f32.mrf.mxu0
    %v3116 = vadd.f32 0.0, %v3115
    %v3117 = vpop.f32.mrf.mxu0
    %v3118 = vadd.f32 0.0, %v3117
    %3119 = vmatprep.mubr.f32.mxu0 0.0
    %3120 = vmatmul.mubr.f32.gmra.mxu0 %v2904
    %v3121 = vpop.f32.mrf.mxu0
    %v3122 = vadd.f32 0.0, %v3121
    %v3123 = vpop.f32.mrf.mxu0
    %v3124 = vadd.f32 0.0, %v3123
    %3125 = vmatprep.mubr.f32.mxu0 0.0
    %3126 = vmatmul.mubr.f32.gmra.mxu0 %v2907
    %v3127 = vpop.f32.mrf.mxu0
    %v3128 = vadd.f32 0.0, %v3127
    %v3129 = vpop.f32.mrf.mxu0
    %v3130 = vadd.f32 0.0, %v3129
    %3131 = vmatprep.mubr.f32.mxu0 0.0
    %3132 = vmatmul.mubr.f32.gmra.mxu0 %v2910
    %v3133 = vpop.f32.mrf.mxu0
    %v3134 = vadd.f32 0.0, %v3133
    %v3135 = vpop.f32.mrf.mxu0
    %v3136 = vadd.f32 0.0, %v3135
    %3137 = vdwg.mxu0
    %3138 = vmatprep.subr.mxu0 0.0
    %3139 = vmatpush1.msra.mxu0 0.0
    %3140 = vmatprep.subr.mxu0 0.0
    %3141 = vmatpush1.msra.mxu0 0.0
    %3142 = vmatprep.subr.mxu0 0.0
    %3143 = vmatpush1.msra.mxu0 0.0
    %3144 = vmatprep.subr.mxu0 0.0
    %3145 = vmatpush1.msra.mxu0 0.0
    %3146 = vmatprep.subr.mxu0 0.0
    %3147 = vmatpush1.msra.mxu0 0.0
    %3148 = vmatprep.subr.mxu0 0.0
    %3149 = vmatpush1.msra.mxu0 0.0
    %3150 = vmatprep.subr.mxu0 0.0
    %3151 = vmatpush1.msra.mxu0 0.0
    %3152 = vmatprep.subr.mxu0 0.0
    %3153 = vmatpush1.msra.mxu0 0.0
    %3154 = vmatprep.subr.mxu0 0.0
    %3155 = vmatpush1.msra.mxu0 0.0
    %3156 = vmatprep.subr.mxu0 0.0
    %3157 = vmatpush1.msra.mxu0 0.0
    %3158 = vmatprep.subr.mxu0 0.0
    %3159 = vmatpush1.msra.mxu0 0.0
    %3160 = vmatprep.subr.mxu0 0.0
    %3161 = vmatpush1.msra.mxu0 0.0
    %3162 = vmatprep.subr.mxu0 %v2855
    %3163 = vmatpush1.msra.mxu0 %v2854
    %3164 = vmatprep.subr.mxu0 %v2835
    %3165 = vmatpush1.msra.mxu0 %v2834
    %3166 = vmatprep.subr.mxu0 %v2815
    %3167 = vmatpush1.msra.mxu0 %v2814
    %3168 = vmatprep.subr.mxu0 %v2795
    %3169 = vmatpush1.msra.mxu0 %v2794
    %3170 = vmatprep.subr.mxu0 0.0
    %3171 = vmatpush2.msra.mxu0 0.0
    %3172 = vmatprep.subr.mxu0 0.0
    %3173 = vmatpush2.msra.mxu0 0.0
    %3174 = vmatprep.subr.mxu0 0.0
    %3175 = vmatpush2.msra.mxu0 0.0
    %3176 = vmatprep.subr.mxu0 0.0
    %3177 = vmatpush2.msra.mxu0 0.0
    %3178 = vmatprep.subr.mxu0 0.0
    %3179 = vmatpush2.msra.mxu0 0.0
    %3180 = vmatprep.subr.mxu0 0.0
    %3181 = vmatpush2.msra.mxu0 0.0
    %3182 = vmatprep.subr.mxu0 0.0
    %3183 = vmatpush2.msra.mxu0 0.0
    %3184 = vmatprep.subr.mxu0 0.0
    %3185 = vmatpush2.msra.mxu0 0.0
    %3186 = vmatprep.subr.mxu0 0.0
    %3187 = vmatpush2.msra.mxu0 0.0
    %3188 = vmatprep.subr.mxu0 0.0
    %3189 = vmatpush2.msra.mxu0 0.0
    %3190 = vmatprep.subr.mxu0 0.0
    %3191 = vmatpush2.msra.mxu0 0.0
    %3192 = vmatprep.subr.mxu0 0.0
    %3193 = vmatpush2.msra.mxu0 0.0
    %3194 = vmatprep.subr.mxu0 0.0
    %3195 = vmatpush2.msra.mxu0 0.0
    %3196 = vmatprep.subr.mxu0 0.0
    %3197 = vmatpush2.msra.mxu0 0.0
    %3198 = vmatprep.subr.mxu0 0.0
    %3199 = vmatpush2.msra.mxu0 0.0
    %3200 = vmatprep.subr.mxu0 0.0
    %3201 = vmatpush2.msra.mxu0 0.0
    %3202 = vmatprep.mubr.f32.mxu0 0.0
    %3203 = vmatmul.mubr.f32.gmra.mxu0 %v2889
    %v3204 = vpop.f32.mrf.mxu0
    %v3205 = vadd.f32 0.0, %v3204
    %v3206 = vpop.f32.mrf.mxu0
    %v3207 = vadd.f32 0.0, %v3206
    %3208 = vmatprep.mubr.f32.mxu0 0.0
    %3209 = vmatmul.mubr.f32.gmra.mxu0 %v2892
    %v3210 = vpop.f32.mrf.mxu0
    %v3211 = vadd.f32 0.0, %v3210
    %v3212 = vpop.f32.mrf.mxu0
    %v3213 = vadd.f32 0.0, %v3212
    %3214 = vmatprep.mubr.f32.mxu0 0.0
    %3215 = vmatmul.mubr.f32.gmra.mxu0 %v2895
    %v3216 = vpop.f32.mrf.mxu0
    %v3217 = vadd.f32 0.0, %v3216
    %v3218 = vpop.f32.mrf.mxu0
    %v3219 = vadd.f32 0.0, %v3218
    %3220 = vmatprep.mubr.f32.mxu0 0.0
    %3221 = vmatmul.mubr.f32.gmra.mxu0 %v2898
    %v3222 = vpop.f32.mrf.mxu0
    %v3223 = vadd.f32 0.0, %v3222
    %v3224 = vpop.f32.mrf.mxu0
    %v3225 = vadd.f32 0.0, %v3224
    %3226 = vmatprep.mubr.f32.mxu0 0.0
    %3227 = vmatmul.mubr.f32.gmra.mxu0 %v2901
    %v3228 = vpop.f32.mrf.mxu0
    %v3229 = vadd.f32 0.0, %v3228
    %v3230 = vpop.f32.mrf.mxu0
    %v3231 = vadd.f32 0.0, %v3230
    %3232 = vmatprep.mubr.f32.mxu0 0.0
    %3233 = vmatmul.mubr.f32.gmra.mxu0 %v2904
    %v3234 = vpop.f32.mrf.mxu0
    %v3235 = vadd.f32 0.0, %v3234
    %v3236 = vpop.f32.mrf.mxu0
    %v3237 = vadd.f32 0.0, %v3236
    %3238 = vmatprep.mubr.f32.mxu0 0.0
    %3239 = vmatmul.mubr.f32.gmra.mxu0 %v2907
    %v3240 = vpop.f32.mrf.mxu0
    %v3241 = vadd.f32 0.0, %v3240
    %v3242 = vpop.f32.mrf.mxu0
    %v3243 = vadd.f32 0.0, %v3242
    %3244 = vmatprep.mubr.f32.mxu0 0.0
    %3245 = vmatmul.mubr.f32.gmra.mxu0 %v2910
    %v3246 = vpop.f32.mrf.mxu0
    %v3247 = vadd.f32 0.0, %v3246
    %v3248 = vpop.f32.mrf.mxu0
    %v3249 = vadd.f32 0.0, %v3248
    %3250 = vdwg.mxu0
    %3251 = vmatprep.subr.mxu0 0.0
    %3252 = vmatpush1.msra.mxu0 0.0
    %3253 = vmatprep.subr.mxu0 0.0
    %3254 = vmatpush1.msra.mxu0 0.0
    %3255 = vmatprep.subr.mxu0 0.0
    %3256 = vmatpush1.msra.mxu0 0.0
    %3257 = vmatprep.subr.mxu0 0.0
    %3258 = vmatpush1.msra.mxu0 0.0
    %3259 = vmatprep.subr.mxu0 0.0
    %3260 = vmatpush1.msra.mxu0 0.0
    %3261 = vmatprep.subr.mxu0 0.0
    %3262 = vmatpush1.msra.mxu0 0.0
    %3263 = vmatprep.subr.mxu0 0.0
    %3264 = vmatpush1.msra.mxu0 0.0
    %3265 = vmatprep.subr.mxu0 0.0
    %3266 = vmatpush1.msra.mxu0 0.0
    %3267 = vmatprep.subr.mxu0 0.0
    %3268 = vmatpush1.msra.mxu0 0.0
    %3269 = vmatprep.subr.mxu0 0.0
    %3270 = vmatpush1.msra.mxu0 0.0
    %3271 = vmatprep.subr.mxu0 0.0
    %3272 = vmatpush1.msra.mxu0 0.0
    %3273 = vmatprep.subr.mxu0 0.0
    %3274 = vmatpush1.msra.mxu0 0.0
    %3275 = vmatprep.subr.mxu0 %v2857
    %3276 = vmatpush1.msra.mxu0 %v2856
    %3277 = vmatprep.subr.mxu0 %v2837
    %3278 = vmatpush1.msra.mxu0 %v2836
    %3279 = vmatprep.subr.mxu0 %v2817
    %3280 = vmatpush1.msra.mxu0 %v2816
    %3281 = vmatprep.subr.mxu0 %v2797
    %3282 = vmatpush1.msra.mxu0 %v2796
    %3283 = vmatprep.subr.mxu0 0.0
    %3284 = vmatpush2.msra.mxu0 0.0
    %3285 = vmatprep.subr.mxu0 0.0
    %3286 = vmatpush2.msra.mxu0 0.0
    %3287 = vmatprep.subr.mxu0 0.0
    %3288 = vmatpush2.msra.mxu0 0.0
    %3289 = vmatprep.subr.mxu0 0.0
    %3290 = vmatpush2.msra.mxu0 0.0
    %3291 = vmatprep.subr.mxu0 0.0
    %3292 = vmatpush2.msra.mxu0 0.0
    %3293 = vmatprep.subr.mxu0 0.0
    %3294 = vmatpush2.msra.mxu0 0.0
    %3295 = vmatprep.subr.mxu0 0.0
    %3296 = vmatpush2.msra.mxu0 0.0
    %3297 = vmatprep.subr.mxu0 0.0
    %3298 = vmatpush2.msra.mxu0 0.0
    %3299 = vmatprep.subr.mxu0 0.0
    %3300 = vmatpush2.msra.mxu0 0.0
    %3301 = vmatprep.subr.mxu0 0.0
    %3302 = vmatpush2.msra.mxu0 0.0
    %3303 = vmatprep.subr.mxu0 0.0
    %3304 = vmatpush2.msra.mxu0 0.0
    %3305 = vmatprep.subr.mxu0 0.0
    %3306 = vmatpush2.msra.mxu0 0.0
    %3307 = vmatprep.subr.mxu0 0.0
    %3308 = vmatpush2.msra.mxu0 0.0
    %3309 = vmatprep.subr.mxu0 0.0
    %3310 = vmatpush2.msra.mxu0 0.0
    %3311 = vmatprep.subr.mxu0 0.0
    %3312 = vmatpush2.msra.mxu0 0.0
    %3313 = vmatprep.subr.mxu0 0.0
    %3314 = vmatpush2.msra.mxu0 0.0
    %3315 = vmatprep.mubr.f32.mxu0 0.0
    %3316 = vmatmul.mubr.f32.gmra.mxu0 %v2889
    %v3317 = vpop.f32.mrf.mxu0
    %v3318 = vadd.f32 0.0, %v3317
    %v3319 = vpop.f32.mrf.mxu0
    %v3320 = vadd.f32 0.0, %v3319
    %3321 = vmatprep.mubr.f32.mxu0 0.0
    %3322 = vmatmul.mubr.f32.gmra.mxu0 %v2892
    %v3323 = vpop.f32.mrf.mxu0
    %v3324 = vadd.f32 0.0, %v3323
    %v3325 = vpop.f32.mrf.mxu0
    %v3326 = vadd.f32 0.0, %v3325
    %3327 = vmatprep.mubr.f32.mxu0 0.0
    %3328 = vmatmul.mubr.f32.gmra.mxu0 %v2895
    %v3329 = vpop.f32.mrf.mxu0
    %v3330 = vadd.f32 0.0, %v3329
    %v3331 = vpop.f32.mrf.mxu0
    %v3332 = vadd.f32 0.0, %v3331
    %3333 = vmatprep.mubr.f32.mxu0 0.0
    %3334 = vmatmul.mubr.f32.gmra.mxu0 %v2898
    %v3335 = vpop.f32.mrf.mxu0
    %v3336 = vadd.f32 0.0, %v3335
    %v3337 = vpop.f32.mrf.mxu0
    %v3338 = vadd.f32 0.0, %v3337
    %3339 = vmatprep.mubr.f32.mxu0 0.0
    %3340 = vmatmul.mubr.f32.gmra.mxu0 %v2901
    %v3341 = vpop.f32.mrf.mxu0
    %v3342 = vadd.f32 0.0, %v3341
    %v3343 = vpop.f32.mrf.mxu0
    %v3344 = vadd.f32 0.0, %v3343
    %3345 = vmatprep.mubr.f32.mxu0 0.0
    %3346 = vmatmul.mubr.f32.gmra.mxu0 %v2904
    %v3347 = vpop.f32.mrf.mxu0
    %v3348 = vadd.f32 0.0, %v3347
    %v3349 = vpop.f32.mrf.mxu0
    %v3350 = vadd.f32 0.0, %v3349
    %3351 = vmatprep.mubr.f32.mxu0 0.0
    %3352 = vmatmul.mubr.f32.gmra.mxu0 %v2907
    %v3353 = vpop.f32.mrf.mxu0
    %v3354 = vadd.f32 0.0, %v3353
    %v3355 = vpop.f32.mrf.mxu0
    %v3356 = vadd.f32 0.0, %v3355
    %3357 = vmatprep.mubr.f32.mxu0 0.0
    %3358 = vmatmul.mubr.f32.gmra.mxu0 %v2910
    %v3359 = vpop.f32.mrf.mxu0
    %v3360 = vadd.f32 0.0, %v3359
    %v3361 = vpop.f32.mrf.mxu0
    %v3362 = vadd.f32 0.0, %v3361
    %3363 = vdwg.mxu0
    %3364 = vmatprep.subr.mxu0 0.0
    %3365 = vmatpush1.msra.mxu0 0.0
    %3366 = vmatprep.subr.mxu0 0.0
    %3367 = vmatpush1.msra.mxu0 0.0
    %3368 = vmatprep.subr.mxu0 0.0
    %3369 = vmatpush1.msra.mxu0 0.0
    %3370 = vmatprep.subr.mxu0 0.0
    %3371 = vmatpush1.msra.mxu0 0.0
    %3372 = vmatprep.subr.mxu0 0.0
    %3373 = vmatpush1.msra.mxu0 0.0
    %3374 = vmatprep.subr.mxu0 0.0
    %3375 = vmatpush1.msra.mxu0 0.0
    %3376 = vmatprep.subr.mxu0 0.0
    %3377 = vmatpush1.msra.mxu0 0.0
    %3378 = vmatprep.subr.mxu0 0.0
    %3379 = vmatpush1.msra.mxu0 0.0
    %3380 = vmatprep.subr.mxu0 0.0
    %3381 = vmatpush1.msra.mxu0 0.0
    %3382 = vmatprep.subr.mxu0 0.0
    %3383 = vmatpush1.msra.mxu0 0.0
    %3384 = vmatprep.subr.mxu0 0.0
    %3385 = vmatpush1.msra.mxu0 0.0
    %3386 = vmatprep.subr.mxu0 0.0
    %3387 = vmatpush1.msra.mxu0 0.0
    %3388 = vmatprep.subr.mxu0 %v2859
    %3389 = vmatpush1.msra.mxu0 %v2858
    %3390 = vmatprep.subr.mxu0 %v2839
    %3391 = vmatpush1.msra.mxu0 %v2838
    %3392 = vmatprep.subr.mxu0 %v2819
    %3393 = vmatpush1.msra.mxu0 %v2818
    %3394 = vmatprep.subr.mxu0 %v2799
    %3395 = vmatpush1.msra.mxu0 %v2798
    %3396 = vmatprep.subr.mxu0 0.0
    %3397 = vmatpush2.msra.mxu0 0.0
    %3398 = vmatprep.subr.mxu0 0.0
    %3399 = vmatpush2.msra.mxu0 0.0
    %3400 = vmatprep.subr.mxu0 0.0
    %3401 = vmatpush2.msra.mxu0 0.0
    %3402 = vmatprep.subr.mxu0 0.0
    %3403 = vmatpush2.msra.mxu0 0.0
    %3404 = vmatprep.subr.mxu0 0.0
    %3405 = vmatpush2.msra.mxu0 0.0
    %3406 = vmatprep.subr.mxu0 0.0
    %3407 = vmatpush2.msra.mxu0 0.0
    %3408 = vmatprep.subr.mxu0 0.0
    %3409 = vmatpush2.msra.mxu0 0.0
    %3410 = vmatprep.subr.mxu0 0.0
    %3411 = vmatpush2.msra.mxu0 0.0
    %3412 = vmatprep.subr.mxu0 0.0
    %3413 = vmatpush2.msra.mxu0 0.0
    %3414 = vmatprep.subr.mxu0 0.0
    %3415 = vmatpush2.msra.mxu0 0.0
    %3416 = vmatprep.subr.mxu0 0.0
    %3417 = vmatpush2.msra.mxu0 0.0
    %3418 = vmatprep.subr.mxu0 0.0
    %3419 = vmatpush2.msra.mxu0 0.0
    %3420 = vmatprep.subr.mxu0 0.0
    %3421 = vmatpush2.msra.mxu0 0.0
    %3422 = vmatprep.subr.mxu0 0.0
    %3423 = vmatpush2.msra.mxu0 0.0
    %3424 = vmatprep.subr.mxu0 0.0
    %3425 = vmatpush2.msra.mxu0 0.0
    %3426 = vmatprep.subr.mxu0 0.0
    %3427 = vmatpush2.msra.mxu0 0.0
    %3428 = vmatprep.mubr.f32.mxu0 0.0
    %3429 = vmatmul.mubr.f32.gmra.mxu0 %v2889
    %v3430 = vpop.f32.mrf.mxu0
    %v3431 = vadd.f32 0.0, %v3430
    %v3432 = vpop.f32.mrf.mxu0
    %v3433 = vadd.f32 0.0, %v3432
    %3434 = vmatprep.mubr.f32.mxu0 0.0
    %3435 = vmatmul.mubr.f32.gmra.mxu0 %v2892
    %v3436 = vpop.f32.mrf.mxu0
    %v3437 = vadd.f32 0.0, %v3436
    %v3438 = vpop.f32.mrf.mxu0
    %v3439 = vadd.f32 0.0, %v3438
    %3440 = vmatprep.mubr.f32.mxu0 0.0
    %3441 = vmatmul.mubr.f32.gmra.mxu0 %v2895
    %v3442 = vpop.f32.mrf.mxu0
    %v3443 = vadd.f32 0.0, %v3442
    %v3444 = vpop.f32.mrf.mxu0
    %v3445 = vadd.f32 0.0, %v3444
    %3446 = vmatprep.mubr.f32.mxu0 0.0
    %3447 = vmatmul.mubr.f32.gmra.mxu0 %v2898
    %v3448 = vpop.f32.mrf.mxu0
    %v3449 = vadd.f32 0.0, %v3448
    %v3450 = vpop.f32.mrf.mxu0
    %v3451 = vadd.f32 0.0, %v3450
    %3452 = vmatprep.mubr.f32.mxu0 0.0
    %3453 = vmatmul.mubr.f32.gmra.mxu0 %v2901
    %v3454 = vpop.f32.mrf.mxu0
    %v3455 = vadd.f32 0.0, %v3454
    %v3456 = vpop.f32.mrf.mxu0
    %v3457 = vadd.f32 0.0, %v3456
    %3458 = vmatprep.mubr.f32.mxu0 0.0
    %3459 = vmatmul.mubr.f32.gmra.mxu0 %v2904
    %v3460 = vpop.f32.mrf.mxu0
    %v3461 = vadd.f32 0.0, %v3460
    %v3462 = vpop.f32.mrf.mxu0
    %v3463 = vadd.f32 0.0, %v3462
    %3464 = vmatprep.mubr.f32.mxu0 0.0
    %3465 = vmatmul.mubr.f32.gmra.mxu0 %v2907
    %v3466 = vpop.f32.mrf.mxu0
    %v3467 = vadd.f32 0.0, %v3466
    %v3468 = vpop.f32.mrf.mxu0
    %v3469 = vadd.f32 0.0, %v3468
    %3470 = vmatprep.mubr.f32.mxu0 0.0
    %3471 = vmatmul.mubr.f32.gmra.mxu0 %v2910
    %v3472 = vpop.f32.mrf.mxu0
    %v3473 = vadd.f32 0.0, %v3472
    %v3474 = vpop.f32.mrf.mxu0
    %v3475 = vadd.f32 0.0, %v3474
    %3476 = vdwg.mxu0
    %3477 = vmatprep.subr.mxu0 0.0
    %3478 = vmatpush1.msra.mxu0 0.0
    %3479 = vmatprep.subr.mxu0 0.0
    %3480 = vmatpush1.msra.mxu0 0.0
    %3481 = vmatprep.subr.mxu0 0.0
    %3482 = vmatpush1.msra.mxu0 0.0
    %3483 = vmatprep.subr.mxu0 0.0
    %3484 = vmatpush1.msra.mxu0 0.0
    %3485 = vmatprep.subr.mxu0 0.0
    %3486 = vmatpush1.msra.mxu0 0.0
    %3487 = vmatprep.subr.mxu0 0.0
    %3488 = vmatpush1.msra.mxu0 0.0
    %3489 = vmatprep.subr.mxu0 0.0
    %3490 = vmatpush1.msra.mxu0 0.0
    %3491 = vmatprep.subr.mxu0 0.0
    %3492 = vmatpush1.msra.mxu0 0.0
    %3493 = vmatprep.subr.mxu0 0.0
    %3494 = vmatpush1.msra.mxu0 0.0
    %3495 = vmatprep.subr.mxu0 0.0
    %3496 = vmatpush1.msra.mxu0 0.0
    %3497 = vmatprep.subr.mxu0 0.0
    %3498 = vmatpush1.msra.mxu0 0.0
    %3499 = vmatprep.subr.mxu0 0.0
    %3500 = vmatpush1.msra.mxu0 0.0
    %3501 = vmatprep.subr.mxu0 %v2861
    %3502 = vmatpush1.msra.mxu0 %v2860
    %3503 = vmatprep.subr.mxu0 %v2841
    %3504 = vmatpush1.msra.mxu0 %v2840
    %3505 = vmatprep.subr.mxu0 %v2821
    %3506 = vmatpush1.msra.mxu0 %v2820
    %3507 = vmatprep.subr.mxu0 %v2801
    %3508 = vmatpush1.msra.mxu0 %v2800
    %3509 = vmatprep.subr.mxu0 0.0
    %3510 = vmatpush2.msra.mxu0 0.0
    %3511 = vmatprep.subr.mxu0 0.0
    %3512 = vmatpush2.msra.mxu0 0.0
    %3513 = vmatprep.subr.mxu0 0.0
    %3514 = vmatpush2.msra.mxu0 0.0
    %3515 = vmatprep.subr.mxu0 0.0
    %3516 = vmatpush2.msra.mxu0 0.0
    %3517 = vmatprep.subr.mxu0 0.0
    %3518 = vmatpush2.msra.mxu0 0.0
    %3519 = vmatprep.subr.mxu0 0.0
    %3520 = vmatpush2.msra.mxu0 0.0
    %3521 = vmatprep.subr.mxu0 0.0
    %3522 = vmatpush2.msra.mxu0 0.0
    %3523 = vmatprep.subr.mxu0 0.0
    %3524 = vmatpush2.msra.mxu0 0.0
    %3525 = vmatprep.subr.mxu0 0.0
    %3526 = vmatpush2.msra.mxu0 0.0
    %3527 = vmatprep.subr.mxu0 0.0
    %3528 = vmatpush2.msra.mxu0 0.0
    %3529 = vmatprep.subr.mxu0 0.0
    %3530 = vmatpush2.msra.mxu0 0.0
    %3531 = vmatprep.subr.mxu0 0.0
    %3532 = vmatpush2.msra.mxu0 0.0
    %3533 = vmatprep.subr.mxu0 0.0
    %3534 = vmatpush2.msra.mxu0 0.0
    %3535 = vmatprep.subr.mxu0 0.0
    %3536 = vmatpush2.msra.mxu0 0.0
    %3537 = vmatprep.subr.mxu0 0.0
    %3538 = vmatpush2.msra.mxu0 0.0
    %3539 = vmatprep.subr.mxu0 0.0
    %3540 = vmatpush2.msra.mxu0 0.0
    %3541 = vmatprep.mubr.f32.mxu0 0.0
    %3542 = vmatmul.mubr.f32.gmra.mxu0 %v2889
    %v3543 = vpop.f32.mrf.mxu0
    %v3544 = vadd.f32 0.0, %v3543
    %v3545 = vpop.f32.mrf.mxu0
    %v3546 = vadd.f32 0.0, %v3545
    %3547 = vmatprep.mubr.f32.mxu0 0.0
    %3548 = vmatmul.mubr.f32.gmra.mxu0 %v2892
    %v3549 = vpop.f32.mrf.mxu0
    %v3550 = vadd.f32 0.0, %v3549
    %v3551 = vpop.f32.mrf.mxu0
    %v3552 = vadd.f32 0.0, %v3551
    %3553 = vmatprep.mubr.f32.mxu0 0.0
    %3554 = vmatmul.mubr.f32.gmra.mxu0 %v2895
    %v3555 = vpop.f32.mrf.mxu0
    %v3556 = vadd.f32 0.0, %v3555
    %v3557 = vpop.f32.mrf.mxu0
    %v3558 = vadd.f32 0.0, %v3557
    %3559 = vmatprep.mubr.f32.mxu0 0.0
    %3560 = vmatmul.mubr.f32.gmra.mxu0 %v2898
    %v3561 = vpop.f32.mrf.mxu0
    %v3562 = vadd.f32 0.0, %v3561
    %v3563 = vpop.f32.mrf.mxu0
    %v3564 = vadd.f32 0.0, %v3563
    %3565 = vmatprep.mubr.f32.mxu0 0.0
    %3566 = vmatmul.mubr.f32.gmra.mxu0 %v2901
    %v3567 = vpop.f32.mrf.mxu0
    %v3568 = vadd.f32 0.0, %v3567
    %v3569 = vpop.f32.mrf.mxu0
    %v3570 = vadd.f32 0.0, %v3569
    %3571 = vmatprep.mubr.f32.mxu0 0.0
    %3572 = vmatmul.mubr.f32.gmra.mxu0 %v2904
    %v3573 = vpop.f32.mrf.mxu0
    %v3574 = vadd.f32 0.0, %v3573
    %v3575 = vpop.f32.mrf.mxu0
    %v3576 = vadd.f32 0.0, %v3575
    %3577 = vmatprep.mubr.f32.mxu0 0.0
    %3578 = vmatmul.mubr.f32.gmra.mxu0 %v2907
    %v3579 = vpop.f32.mrf.mxu0
    %v3580 = vadd.f32 0.0, %v3579
    %v3581 = vpop.f32.mrf.mxu0
    %v3582 = vadd.f32 0.0, %v3581
    %3583 = vmatprep.mubr.f32.mxu0 0.0
    %3584 = vmatmul.mubr.f32.gmra.mxu0 %v2910
    %v3585 = vpop.f32.mrf.mxu0
    %v3586 = vadd.f32 0.0, %v3585
    %v3587 = vpop.f32.mrf.mxu0
    %v3588 = vadd.f32 0.0, %v3587
    %3589 = vdwg.mxu0
    %3590 = vmatprep.subr.mxu0 0.0
    %3591 = vmatpush1.msra.mxu0 0.0
    %3592 = vmatprep.subr.mxu0 0.0
    %3593 = vmatpush1.msra.mxu0 0.0
    %3594 = vmatprep.subr.mxu0 0.0
    %3595 = vmatpush1.msra.mxu0 0.0
    %3596 = vmatprep.subr.mxu0 0.0
    %3597 = vmatpush1.msra.mxu0 0.0
    %3598 = vmatprep.subr.mxu0 0.0
    %3599 = vmatpush1.msra.mxu0 0.0
    %3600 = vmatprep.subr.mxu0 0.0
    %3601 = vmatpush1.msra.mxu0 0.0
    %3602 = vmatprep.subr.mxu0 0.0
    %3603 = vmatpush1.msra.mxu0 0.0
    %3604 = vmatprep.subr.mxu0 0.0
    %3605 = vmatpush1.msra.mxu0 0.0
    %3606 = vmatprep.subr.mxu0 0.0
    %3607 = vmatpush1.msra.mxu0 0.0
    %3608 = vmatprep.subr.mxu0 0.0
    %3609 = vmatpush1.msra.mxu0 0.0
    %3610 = vmatprep.subr.mxu0 0.0
    %3611 = vmatpush1.msra.mxu0 0.0
    %3612 = vmatprep.subr.mxu0 0.0
    %3613 = vmatpush1.msra.mxu0 0.0
    %3614 = vmatprep.subr.mxu0 %v2863
    %3615 = vmatpush1.msra.mxu0 %v2862
    %3616 = vmatprep.subr.mxu0 %v2843
    %3617 = vmatpush1.msra.mxu0 %v2842
    %3618 = vmatprep.subr.mxu0 %v2823
    %3619 = vmatpush1.msra.mxu0 %v2822
    %3620 = vmatprep.subr.mxu0 %v2803
    %3621 = vmatpush1.msra.mxu0 %v2802
    %3622 = vmatprep.subr.mxu0 0.0
    %3623 = vmatpush2.msra.mxu0 0.0
    %3624 = vmatprep.subr.mxu0 0.0
    %3625 = vmatpush2.msra.mxu0 0.0
    %3626 = vmatprep.subr.mxu0 0.0
    %3627 = vmatpush2.msra.mxu0 0.0
    %3628 = vmatprep.subr.mxu0 0.0
    %3629 = vmatpush2.msra.mxu0 0.0
    %3630 = vmatprep.subr.mxu0 0.0
    %3631 = vmatpush2.msra.mxu0 0.0
    %3632 = vmatprep.subr.mxu0 0.0
    %3633 = vmatpush2.msra.mxu0 0.0
    %3634 = vmatprep.subr.mxu0 0.0
    %3635 = vmatpush2.msra.mxu0 0.0
    %3636 = vmatprep.subr.mxu0 0.0
    %3637 = vmatpush2.msra.mxu0 0.0
    %3638 = vmatprep.subr.mxu0 0.0
    %3639 = vmatpush2.msra.mxu0 0.0
    %3640 = vmatprep.subr.mxu0 0.0
    %3641 = vmatpush2.msra.mxu0 0.0
    %3642 = vmatprep.subr.mxu0 0.0
    %3643 = vmatpush2.msra.mxu0 0.0
    %3644 = vmatprep.subr.mxu0 0.0
    %3645 = vmatpush2.msra.mxu0 0.0
    %3646 = vmatprep.subr.mxu0 0.0
    %3647 = vmatpush2.msra.mxu0 0.0
    %3648 = vmatprep.subr.mxu0 0.0
    %3649 = vmatpush2.msra.mxu0 0.0
    %3650 = vmatprep.subr.mxu0 0.0
    %3651 = vmatpush2.msra.mxu0 0.0
    %3652 = vmatprep.subr.mxu0 0.0
    %3653 = vmatpush2.msra.mxu0 0.0
    %3654 = vmatprep.mubr.f32.mxu0 0.0
    %3655 = vmatmul.mubr.f32.gmra.mxu0 %v2889
    %v3656 = vpop.f32.mrf.mxu0
    %v3657 = vadd.f32 0.0, %v3656
    %v3658 = vpop.f32.mrf.mxu0
    %v3659 = vadd.f32 0.0, %v3658
    %3660 = vmatprep.mubr.f32.mxu0 0.0
    %3661 = vmatmul.mubr.f32.gmra.mxu0 %v2892
    %v3662 = vpop.f32.mrf.mxu0
    %v3663 = vadd.f32 0.0, %v3662
    %v3664 = vpop.f32.mrf.mxu0
    %v3665 = vadd.f32 0.0, %v3664
    %3666 = vmatprep.mubr.f32.mxu0 0.0
    %3667 = vmatmul.mubr.f32.gmra.mxu0 %v2895
    %v3668 = vpop.f32.mrf.mxu0
    %v3669 = vadd.f32 0.0, %v3668
    %v3670 = vpop.f32.mrf.mxu0
    %v3671 = vadd.f32 0.0, %v3670
    %3672 = vmatprep.mubr.f32.mxu0 0.0
    %3673 = vmatmul.mubr.f32.gmra.mxu0 %v2898
    %v3674 = vpop.f32.mrf.mxu0
    %v3675 = vadd.f32 0.0, %v3674
    %v3676 = vpop.f32.mrf.mxu0
    %v3677 = vadd.f32 0.0, %v3676
    %3678 = vmatprep.mubr.f32.mxu0 0.0
    %3679 = vmatmul.mubr.f32.gmra.mxu0 %v2901
    %v3680 = vpop.f32.mrf.mxu0
    %v3681 = vadd.f32 0.0, %v3680
    %v3682 = vpop.f32.mrf.mxu0
    %v3683 = vadd.f32 0.0, %v3682
    %3684 = vmatprep.mubr.f32.mxu0 0.0
    %3685 = vmatmul.mubr.f32.gmra.mxu0 %v2904
    %v3686 = vpop.f32.mrf.mxu0
    %v3687 = vadd.f32 0.0, %v3686
    %v3688 = vpop.f32.mrf.mxu0
    %v3689 = vadd.f32 0.0, %v3688
    %3690 = vmatprep.mubr.f32.mxu0 0.0
    %3691 = vmatmul.mubr.f32.gmra.mxu0 %v2907
    %v3692 = vpop.f32.mrf.mxu0
    %v3693 = vadd.f32 0.0, %v3692
    %v3694 = vpop.f32.mrf.mxu0
    %v3695 = vadd.f32 0.0, %v3694
    %3696 = vmatprep.mubr.f32.mxu0 0.0
    %3697 = vmatmul.mubr.f32.gmra.mxu0 %v2910
    %v3698 = vpop.f32.mrf.mxu0
    %v3699 = vadd.f32 0.0, %v3698
    %v3700 = vpop.f32.mrf.mxu0
    %v3701 = vadd.f32 0.0, %v3700
    %3702 = vdwg.mxu0
    %3703 = vmatprep.subr.mxu0 0.0
    %3704 = vmatpush1.msra.mxu0 0.0
    %3705 = vmatprep.subr.mxu0 0.0
    %3706 = vmatpush1.msra.mxu0 0.0
    %3707 = vmatprep.subr.mxu0 0.0
    %3708 = vmatpush1.msra.mxu0 0.0
    %3709 = vmatprep.subr.mxu0 0.0
    %3710 = vmatpush1.msra.mxu0 0.0
    %3711 = vmatprep.subr.mxu0 0.0
    %3712 = vmatpush1.msra.mxu0 0.0
    %3713 = vmatprep.subr.mxu0 0.0
    %3714 = vmatpush1.msra.mxu0 0.0
    %3715 = vmatprep.subr.mxu0 0.0
    %3716 = vmatpush1.msra.mxu0 0.0
    %3717 = vmatprep.subr.mxu0 0.0
    %3718 = vmatpush1.msra.mxu0 0.0
    %3719 = vmatprep.subr.mxu0 0.0
    %3720 = vmatpush1.msra.mxu0 0.0
    %3721 = vmatprep.subr.mxu0 0.0
    %3722 = vmatpush1.msra.mxu0 0.0
    %3723 = vmatprep.subr.mxu0 0.0
    %3724 = vmatpush1.msra.mxu0 0.0
    %3725 = vmatprep.subr.mxu0 0.0
    %3726 = vmatpush1.msra.mxu0 0.0
    %3727 = vmatprep.subr.mxu0 %v2865
    %3728 = vmatpush1.msra.mxu0 %v2864
    %3729 = vmatprep.subr.mxu0 %v2845
    %3730 = vmatpush1.msra.mxu0 %v2844
    %3731 = vmatprep.subr.mxu0 %v2825
    %3732 = vmatpush1.msra.mxu0 %v2824
    %3733 = vmatprep.subr.mxu0 %v2805
    %3734 = vmatpush1.msra.mxu0 %v2804
    %3735 = vmatprep.subr.mxu0 0.0
    %3736 = vmatpush2.msra.mxu0 0.0
    %3737 = vmatprep.subr.mxu0 0.0
    %3738 = vmatpush2.msra.mxu0 0.0
    %3739 = vmatprep.subr.mxu0 0.0
    %3740 = vmatpush2.msra.mxu0 0.0
    %3741 = vmatprep.subr.mxu0 0.0
    %3742 = vmatpush2.msra.mxu0 0.0
    %3743 = vmatprep.subr.mxu0 0.0
    %3744 = vmatpush2.msra.mxu0 0.0
    %3745 = vmatprep.subr.mxu0 0.0
    %3746 = vmatpush2.msra.mxu0 0.0
    %3747 = vmatprep.subr.mxu0 0.0
    %3748 = vmatpush2.msra.mxu0 0.0
    %3749 = vmatprep.subr.mxu0 0.0
    %3750 = vmatpush2.msra.mxu0 0.0
    %3751 = vmatprep.subr.mxu0 0.0
    %3752 = vmatpush2.msra.mxu0 0.0
    %3753 = vmatprep.subr.mxu0 0.0
    %3754 = vmatpush2.msra.mxu0 0.0
    %3755 = vmatprep.subr.mxu0 0.0
    %3756 = vmatpush2.msra.mxu0 0.0
    %3757 = vmatprep.subr.mxu0 0.0
    %3758 = vmatpush2.msra.mxu0 0.0
    %3759 = vmatprep.subr.mxu0 0.0
    %3760 = vmatpush2.msra.mxu0 0.0
    %3761 = vmatprep.subr.mxu0 0.0
    %3762 = vmatpush2.msra.mxu0 0.0
    %3763 = vmatprep.subr.mxu0 0.0
    %3764 = vmatpush2.msra.mxu0 0.0
    %3765 = vmatprep.subr.mxu0 0.0
    %3766 = vmatpush2.msra.mxu0 0.0
    %3767 = vmatprep.mubr.f32.mxu0 0.0
    %3768 = vmatmul.mubr.f32.gmra.mxu0 %v2889
    %v3769 = vpop.f32.mrf.mxu0
    %v3770 = vadd.f32 0.0, %v3769
    %v3771 = vpop.f32.mrf.mxu0
    %v3772 = vadd.f32 0.0, %v3771
    %3773 = vmatprep.mubr.f32.mxu0 0.0
    %3774 = vmatmul.mubr.f32.gmra.mxu0 %v2892
    %v3775 = vpop.f32.mrf.mxu0
    %v3776 = vadd.f32 0.0, %v3775
    %v3777 = vpop.f32.mrf.mxu0
    %v3778 = vadd.f32 0.0, %v3777
    %3779 = vmatprep.mubr.f32.mxu0 0.0
    %3780 = vmatmul.mubr.f32.gmra.mxu0 %v2895
    %v3781 = vpop.f32.mrf.mxu0
    %v3782 = vadd.f32 0.0, %v3781
    %v3783 = vpop.f32.mrf.mxu0
    %v3784 = vadd.f32 0.0, %v3783
    %3785 = vmatprep.mubr.f32.mxu0 0.0
    %3786 = vmatmul.mubr.f32.gmra.mxu0 %v2898
    %v3787 = vpop.f32.mrf.mxu0
    %v3788 = vadd.f32 0.0, %v3787
    %v3789 = vpop.f32.mrf.mxu0
    %v3790 = vadd.f32 0.0, %v3789
    %3791 = vmatprep.mubr.f32.mxu0 0.0
    %3792 = vmatmul.mubr.f32.gmra.mxu0 %v2901
    %v3793 = vpop.f32.mrf.mxu0
    %v3794 = vadd.f32 0.0, %v3793
    %v3795 = vpop.f32.mrf.mxu0
    %v3796 = vadd.f32 0.0, %v3795
    %3797 = vmatprep.mubr.f32.mxu0 0.0
    %3798 = vmatmul.mubr.f32.gmra.mxu0 %v2904
    %v3799 = vpop.f32.mrf.mxu0
    %v3800 = vadd.f32 0.0, %v3799
    %v3801 = vpop.f32.mrf.mxu0
    %v3802 = vadd.f32 0.0, %v3801
    %3803 = vmatprep.mubr.f32.mxu0 0.0
    %3804 = vmatmul.mubr.f32.gmra.mxu0 %v2907
    %v3805 = vpop.f32.mrf.mxu0
    %v3806 = vadd.f32 0.0, %v3805
    %v3807 = vpop.f32.mrf.mxu0
    %v3808 = vadd.f32 0.0, %v3807
    %3809 = vmatprep.mubr.f32.mxu0 0.0
    %3810 = vmatmul.mubr.f32.gmra.mxu0 %v2910
    %v3811 = vpop.f32.mrf.mxu0
    %v3812 = vadd.f32 0.0, %v3811
    %v3813 = vpop.f32.mrf.mxu0
    %v3814 = vadd.f32 0.0, %v3813
    %3815 = vdwg.mxu0
    %3816 = vmatprep.subr.mxu0 0.0
    %3817 = vmatpush1.msra.mxu0 0.0
    %3818 = vmatprep.subr.mxu0 0.0
    %3819 = vmatpush1.msra.mxu0 0.0
    %3820 = vmatprep.subr.mxu0 0.0
    %3821 = vmatpush1.msra.mxu0 0.0
    %3822 = vmatprep.subr.mxu0 0.0
    %3823 = vmatpush1.msra.mxu0 0.0
    %3824 = vmatprep.subr.mxu0 0.0
    %3825 = vmatpush1.msra.mxu0 0.0
    %3826 = vmatprep.subr.mxu0 0.0
    %3827 = vmatpush1.msra.mxu0 0.0
    %3828 = vmatprep.subr.mxu0 0.0
    %3829 = vmatpush1.msra.mxu0 0.0
    %3830 = vmatprep.subr.mxu0 0.0
    %3831 = vmatpush1.msra.mxu0 0.0
    %3832 = vmatprep.subr.mxu0 0.0
    %3833 = vmatpush1.msra.mxu0 0.0
    %3834 = vmatprep.subr.mxu0 0.0
    %3835 = vmatpush1.msra.mxu0 0.0
    %3836 = vmatprep.subr.mxu0 0.0
    %3837 = vmatpush1.msra.mxu0 0.0
    %3838 = vmatprep.subr.mxu0 0.0
    %3839 = vmatpush1.msra.mxu0 0.0
    %3840 = vmatprep.subr.mxu0 %v2867
    %3841 = vmatpush1.msra.mxu0 %v2866
    %3842 = vmatprep.subr.mxu0 %v2847
    %3843 = vmatpush1.msra.mxu0 %v2846
    %3844 = vmatprep.subr.mxu0 %v2827
    %3845 = vmatpush1.msra.mxu0 %v2826
    %3846 = vmatprep.subr.mxu0 %v2807
    %3847 = vmatpush1.msra.mxu0 %v2806
    %3848 = vmatprep.subr.mxu0 0.0
    %3849 = vmatpush2.msra.mxu0 0.0
    %3850 = vmatprep.subr.mxu0 0.0
    %3851 = vmatpush2.msra.mxu0 0.0
    %3852 = vmatprep.subr.mxu0 0.0
    %3853 = vmatpush2.msra.mxu0 0.0
    %3854 = vmatprep.subr.mxu0 0.0
    %3855 = vmatpush2.msra.mxu0 0.0
    %3856 = vmatprep.subr.mxu0 0.0
    %3857 = vmatpush2.msra.mxu0 0.0
    %3858 = vmatprep.subr.mxu0 0.0
    %3859 = vmatpush2.msra.mxu0 0.0
    %3860 = vmatprep.subr.mxu0 0.0
    %3861 = vmatpush2.msra.mxu0 0.0
    %3862 = vmatprep.subr.mxu0 0.0
    %3863 = vmatpush2.msra.mxu0 0.0
    %3864 = vmatprep.subr.mxu0 0.0
    %3865 = vmatpush2.msra.mxu0 0.0
    %3866 = vmatprep.subr.mxu0 0.0
    %3867 = vmatpush2.msra.mxu0 0.0
    %3868 = vmatprep.subr.mxu0 0.0
    %3869 = vmatpush2.msra.mxu0 0.0
    %3870 = vmatprep.subr.mxu0 0.0
    %3871 = vmatpush2.msra.mxu0 0.0
    %3872 = vmatprep.subr.mxu0 0.0
    %3873 = vmatpush2.msra.mxu0 0.0
    %3874 = vmatprep.subr.mxu0 0.0
    %3875 = vmatpush2.msra.mxu0 0.0
    %3876 = vmatprep.subr.mxu0 0.0
    %3877 = vmatpush2.msra.mxu0 0.0
    %3878 = vmatprep.subr.mxu0 0.0
    %3879 = vmatpush2.msra.mxu0 0.0
    %3880 = vmatprep.mubr.f32.mxu0 0.0
    %3881 = vmatmul.mubr.f32.gmra.mxu0 %v2889
    %v3882 = vpop.f32.mrf.mxu0
    %v3883 = vadd.f32 0.0, %v3882
    %v3884 = vpop.f32.mrf.mxu0
    %v3885 = vadd.f32 0.0, %v3884
    %3886 = vmatprep.mubr.f32.mxu0 0.0
    %3887 = vmatmul.mubr.f32.gmra.mxu0 %v2892
    %v3888 = vpop.f32.mrf.mxu0
    %v3889 = vadd.f32 0.0, %v3888
    %v3890 = vpop.f32.mrf.mxu0
    %v3891 = vadd.f32 0.0, %v3890
    %3892 = vmatprep.mubr.f32.mxu0 0.0
    %3893 = vmatmul.mubr.f32.gmra.mxu0 %v2895
    %v3894 = vpop.f32.mrf.mxu0
    %v3895 = vadd.f32 0.0, %v3894
    %v3896 = vpop.f32.mrf.mxu0
    %v3897 = vadd.f32 0.0, %v3896
    %3898 = vmatprep.mubr.f32.mxu0 0.0
    %3899 = vmatmul.mubr.f32.gmra.mxu0 %v2898
    %v3900 = vpop.f32.mrf.mxu0
    %v3901 = vadd.f32 0.0, %v3900
    %v3902 = vpop.f32.mrf.mxu0
    %v3903 = vadd.f32 0.0, %v3902
    %3904 = vmatprep.mubr.f32.mxu0 0.0
    %3905 = vmatmul.mubr.f32.gmra.mxu0 %v2901
    %v3906 = vpop.f32.mrf.mxu0
    %v3907 = vadd.f32 0.0, %v3906
    %v3908 = vpop.f32.mrf.mxu0
    %v3909 = vadd.f32 0.0, %v3908
    %3910 = vmatprep.mubr.f32.mxu0 0.0
    %3911 = vmatmul.mubr.f32.gmra.mxu0 %v2904
    %v3912 = vpop.f32.mrf.mxu0
    %v3913 = vadd.f32 0.0, %v3912
    %v3914 = vpop.f32.mrf.mxu0
    %v3915 = vadd.f32 0.0, %v3914
    %3916 = vmatprep.mubr.f32.mxu0 0.0
    %3917 = vmatmul.mubr.f32.gmra.mxu0 %v2907
    %v3918 = vpop.f32.mrf.mxu0
    %v3919 = vadd.f32 0.0, %v3918
    %v3920 = vpop.f32.mrf.mxu0
    %v3921 = vadd.f32 0.0, %v3920
    %3922 = vmatprep.mubr.f32.mxu0 0.0
    %3923 = vmatmul.mubr.f32.gmra.mxu0 %v2910
    %v3924 = vpop.f32.mrf.mxu0
    %v3925 = vadd.f32 0.0, %v3924
    %v3926 = vpop.f32.mrf.mxu0
    %v3927 = vadd.f32 0.0, %v3926
    %3928 = vdwg.mxu0
    %3929 = vmatprep.subr.mxu0 0.0
    %3930 = vmatpush1.msra.mxu0 0.0
    %3931 = vmatprep.subr.mxu0 0.0
    %3932 = vmatpush1.msra.mxu0 0.0
    %3933 = vmatprep.subr.mxu0 0.0
    %3934 = vmatpush1.msra.mxu0 0.0
    %3935 = vmatprep.subr.mxu0 0.0
    %3936 = vmatpush1.msra.mxu0 0.0
    %3937 = vmatprep.subr.mxu0 0.0
    %3938 = vmatpush1.msra.mxu0 0.0
    %3939 = vmatprep.subr.mxu0 0.0
    %3940 = vmatpush1.msra.mxu0 0.0
    %3941 = vmatprep.subr.mxu0 0.0
    %3942 = vmatpush1.msra.mxu0 0.0
    %3943 = vmatprep.subr.mxu0 0.0
    %3944 = vmatpush1.msra.mxu0 0.0
    %3945 = vmatprep.subr.mxu0 0.0
    %3946 = vmatpush1.msra.mxu0 0.0
    %3947 = vmatprep.subr.mxu0 0.0
    %3948 = vmatpush1.msra.mxu0 0.0
    %3949 = vmatprep.subr.mxu0 0.0
    %3950 = vmatpush1.msra.mxu0 0.0
    %3951 = vmatprep.subr.mxu0 0.0
    %3952 = vmatpush1.msra.mxu0 0.0
    %3953 = vmatprep.subr.mxu0 %v2869
    %3954 = vmatpush1.msra.mxu0 %v2868
    %3955 = vmatprep.subr.mxu0 %v2849
    %3956 = vmatpush1.msra.mxu0 %v2848
    %3957 = vmatprep.subr.mxu0 %v2829
    %3958 = vmatpush1.msra.mxu0 %v2828
    %3959 = vmatprep.subr.mxu0 %v2809
    %3960 = vmatpush1.msra.mxu0 %v2808
    %3961 = vmatprep.subr.mxu0 0.0
    %3962 = vmatpush2.msra.mxu0 0.0
    %3963 = vmatprep.subr.mxu0 0.0
    %3964 = vmatpush2.msra.mxu0 0.0
    %3965 = vmatprep.subr.mxu0 0.0
    %3966 = vmatpush2.msra.mxu0 0.0
    %3967 = vmatprep.subr.mxu0 0.0
    %3968 = vmatpush2.msra.mxu0 0.0
    %3969 = vmatprep.subr.mxu0 0.0
    %3970 = vmatpush2.msra.mxu0 0.0
    %3971 = vmatprep.subr.mxu0 0.0
    %3972 = vmatpush2.msra.mxu0 0.0
    %3973 = vmatprep.subr.mxu0 0.0
    %3974 = vmatpush2.msra.mxu0 0.0
    %3975 = vmatprep.subr.mxu0 0.0
    %3976 = vmatpush2.msra.mxu0 0.0
    %3977 = vmatprep.subr.mxu0 0.0
    %3978 = vmatpush2.msra.mxu0 0.0
    %3979 = vmatprep.subr.mxu0 0.0
    %3980 = vmatpush2.msra.mxu0 0.0
    %3981 = vmatprep.subr.mxu0 0.0
    %3982 = vmatpush2.msra.mxu0 0.0
    %3983 = vmatprep.subr.mxu0 0.0
    %3984 = vmatpush2.msra.mxu0 0.0
    %3985 = vmatprep.subr.mxu0 0.0
    %3986 = vmatpush2.msra.mxu0 0.0
    %3987 = vmatprep.subr.mxu0 0.0
    %3988 = vmatpush2.msra.mxu0 0.0
    %3989 = vmatprep.subr.mxu0 0.0
    %3990 = vmatpush2.msra.mxu0 0.0
    %3991 = vmatprep.subr.mxu0 0.0
    %3992 = vmatpush2.msra.mxu0 0.0
    %3993 = vmatprep.mubr.f32.mxu0 0.0
    %3994 = vmatmul.mubr.f32.gmra.mxu0 %v2889
    %v3995 = vpop.f32.mrf.mxu0
    %v3996 = vadd.f32 0.0, %v3995
    %v3997 = vpop.f32.mrf.mxu0
    %v3998 = vadd.f32 0.0, %v3997
    %3999 = vmatprep.mubr.f32.mxu0 0.0
    %4000 = vmatmul.mubr.f32.gmra.mxu0 %v2892
    %v4001 = vpop.f32.mrf.mxu0
    %v4002 = vadd.f32 0.0, %v4001
    %v4003 = vpop.f32.mrf.mxu0
    %v4004 = vadd.f32 0.0, %v4003
    %4005 = vmatprep.mubr.f32.mxu0 0.0
    %4006 = vmatmul.mubr.f32.gmra.mxu0 %v2895
    %v4007 = vpop.f32.mrf.mxu0
    %v4008 = vadd.f32 0.0, %v4007
    %v4009 = vpop.f32.mrf.mxu0
    %v4010 = vadd.f32 0.0, %v4009
    %4011 = vmatprep.mubr.f32.mxu0 0.0
    %4012 = vmatmul.mubr.f32.gmra.mxu0 %v2898
    %v4013 = vpop.f32.mrf.mxu0
    %v4014 = vadd.f32 0.0, %v4013
    %v4015 = vpop.f32.mrf.mxu0
    %v4016 = vadd.f32 0.0, %v4015
    %4017 = vmatprep.mubr.f32.mxu0 0.0
    %4018 = vmatmul.mubr.f32.gmra.mxu0 %v2901
    %v4019 = vpop.f32.mrf.mxu0
    %v4020 = vadd.f32 0.0, %v4019
    %v4021 = vpop.f32.mrf.mxu0
    %v4022 = vadd.f32 0.0, %v4021
    %4023 = vmatprep.mubr.f32.mxu0 0.0
    %4024 = vmatmul.mubr.f32.gmra.mxu0 %v2904
    %v4025 = vpop.f32.mrf.mxu0
    %v4026 = vadd.f32 0.0, %v4025
    %v4027 = vpop.f32.mrf.mxu0
    %v4028 = vadd.f32 0.0, %v4027
    %4029 = vmatprep.mubr.f32.mxu0 0.0
    %4030 = vmatmul.mubr.f32.gmra.mxu0 %v2907
    %v4031 = vpop.f32.mrf.mxu0
    %v4032 = vadd.f32 0.0, %v4031
    %v4033 = vpop.f32.mrf.mxu0
    %v4034 = vadd.f32 0.0, %v4033
    %4035 = vmatprep.mubr.f32.mxu0 0.0
    %4036 = vmatmul.mubr.f32.gmra.mxu0 %v2910
    %v4037 = vpop.f32.mrf.mxu0
    %v4038 = vadd.f32 0.0, %v4037
    %v4039 = vpop.f32.mrf.mxu0
    %v4040 = vadd.f32 0.0, %v4039
    %4041 = vdwg.mxu0
    %v4043 = vsel %vm2887, %v2870, 0
    %v4046 = vsel %vm2887, %v2871, 0
    %v4049 = vsel %vm2887, %v2872, 0
    %v4052 = vsel %vm2887, %v2873, 0
    %v4055 = vsel %vm2887, %v2874, 0
    %v4058 = vsel %vm2887, %v2875, 0
    %v4061 = vsel %vm2887, %v2876, 0
    %v4064 = vsel %vm2887, %v2877, 0
    %4066 = vmatprep.subr.mxu0 0.0
    %4067 = vmatpush1.msra.mxu0 0.0
    %4068 = vmatprep.subr.mxu0 0.0
    %4069 = vmatpush1.msra.mxu0 0.0
    %4070 = vmatprep.subr.mxu0 0.0
    %4071 = vmatpush1.msra.mxu0 0.0
    %4072 = vmatprep.subr.mxu0 0.0
    %4073 = vmatpush1.msra.mxu0 0.0
    %4074 = vmatprep.subr.mxu0 0.0
    %4075 = vmatpush1.msra.mxu0 0.0
    %4076 = vmatprep.subr.mxu0 0.0
    %4077 = vmatpush1.msra.mxu0 0.0
    %4078 = vmatprep.subr.mxu0 0.0
    %4079 = vmatpush1.msra.mxu0 0.0
    %4080 = vmatprep.subr.mxu0 0.0
    %4081 = vmatpush1.msra.mxu0 0.0
    %4082 = vmatprep.subr.mxu0 0.0
    %4083 = vmatpush1.msra.mxu0 0.0
    %4084 = vmatprep.subr.mxu0 0.0
    %4085 = vmatpush1.msra.mxu0 0.0
    %4086 = vmatprep.subr.mxu0 0.0
    %4087 = vmatpush1.msra.mxu0 0.0
    %4088 = vmatprep.subr.mxu0 0.0
    %4089 = vmatpush1.msra.mxu0 0.0
    %4090 = vmatprep.subr.mxu0 %v2850
    %4091 = vmatpush1.msra.mxu0 0.0
    %4092 = vmatprep.subr.mxu0 %v2830
    %4093 = vmatpush1.msra.mxu0 0.0
    %4094 = vmatprep.subr.mxu0 %v2810
    %4095 = vmatpush1.msra.mxu0 0.0
    %4096 = vmatprep.subr.mxu0 %v2790
    %4097 = vmatpush1.msra.mxu0 0.0
    %4098 = vmatprep.subr.mxu0 0.0
    %4099 = vmatpush2.msra.mxu0 0.0
    %4100 = vmatprep.subr.mxu0 0.0
    %4101 = vmatpush2.msra.mxu0 0.0
    %4102 = vmatprep.subr.mxu0 0.0
    %4103 = vmatpush2.msra.mxu0 0.0
    %4104 = vmatprep.subr.mxu0 0.0
    %4105 = vmatpush2.msra.mxu0 0.0
    %4106 = vmatprep.subr.mxu0 0.0
    %4107 = vmatpush2.msra.mxu0 0.0
    %4108 = vmatprep.subr.mxu0 0.0
    %4109 = vmatpush2.msra.mxu0 0.0
    %4110 = vmatprep.subr.mxu0 0.0
    %4111 = vmatpush2.msra.mxu0 0.0
    %4112 = vmatprep.subr.mxu0 0.0
    %4113 = vmatpush2.msra.mxu0 0.0
    %4114 = vmatprep.subr.mxu0 0.0
    %4115 = vmatpush2.msra.mxu0 0.0
    %4116 = vmatprep.subr.mxu0 0.0
    %4117 = vmatpush2.msra.mxu0 0.0
    %4118 = vmatprep.subr.mxu0 0.0
    %4119 = vmatpush2.msra.mxu0 0.0
    %4120 = vmatprep.subr.mxu0 0.0
    %4121 = vmatpush2.msra.mxu0 0.0
    %4122 = vmatprep.subr.mxu0 0.0
    %4123 = vmatpush2.msra.mxu0 0.0
    %4124 = vmatprep.subr.mxu0 0.0
    %4125 = vmatpush2.msra.mxu0 0.0
    %4126 = vmatprep.subr.mxu0 0.0
    %4127 = vmatpush2.msra.mxu0 0.0
    %4128 = vmatprep.subr.mxu0 0.0
    %4129 = vmatpush2.msra.mxu0 0.0
    %4130 = vmatprep.mubr.f32.mxu0 0.0
    %4131 = vmatmul.mubr.f32.gmra.mxu0 %v4043
    %v4132 = vpop.f32.mrf.mxu0
    %v4133 = vadd.f32 %v2979, %v4132
    %v4134 = vpop.f32.mrf.mxu0
    %v4135 = vadd.f32 %v2981, %v4134
    %4136 = vmatprep.mubr.f32.mxu0 0.0
    %4137 = vmatmul.mubr.f32.gmra.mxu0 %v4046
    %v4138 = vpop.f32.mrf.mxu0
    %v4139 = vadd.f32 %v2985, %v4138
    %v4140 = vpop.f32.mrf.mxu0
    %v4141 = vadd.f32 %v2987, %v4140
    %4142 = vmatprep.mubr.f32.mxu0 0.0
    %4143 = vmatmul.mubr.f32.gmra.mxu0 %v4049
    %v4144 = vpop.f32.mrf.mxu0
    %v4145 = vadd.f32 %v2991, %v4144
    %v4146 = vpop.f32.mrf.mxu0
    %v4147 = vadd.f32 %v2993, %v4146
    %4148 = vmatprep.mubr.f32.mxu0 0.0
    %4149 = vmatmul.mubr.f32.gmra.mxu0 %v4052
    %v4150 = vpop.f32.mrf.mxu0
    %v4151 = vadd.f32 %v2997, %v4150
    %v4152 = vpop.f32.mrf.mxu0
    %v4153 = vadd.f32 %v2999, %v4152
    %4154 = vmatprep.mubr.f32.mxu0 0.0
    %4155 = vmatmul.mubr.f32.gmra.mxu0 %v4055
    %v4156 = vpop.f32.mrf.mxu0
    %v4157 = vadd.f32 %v3003, %v4156
    %v4158 = vpop.f32.mrf.mxu0
    %v4159 = vadd.f32 %v3005, %v4158
    %4160 = vmatprep.mubr.f32.mxu0 0.0
    %4161 = vmatmul.mubr.f32.gmra.mxu0 %v4058
    %v4162 = vpop.f32.mrf.mxu0
    %v4163 = vadd.f32 %v3009, %v4162
    %v4164 = vpop.f32.mrf.mxu0
    %v4165 = vadd.f32 %v3011, %v4164
    %4166 = vmatprep.mubr.f32.mxu0 0.0
    %4167 = vmatmul.mubr.f32.gmra.mxu0 %v4061
    %v4168 = vpop.f32.mrf.mxu0
    %v4169 = vadd.f32 %v3015, %v4168
    %v4170 = vpop.f32.mrf.mxu0
    %v4171 = vadd.f32 %v3017, %v4170
    %4172 = vmatprep.mubr.f32.mxu0 0.0
    %4173 = vmatmul.mubr.f32.gmra.mxu0 %v4064
    %v4174 = vpop.f32.mrf.mxu0
    %v4175 = vadd.f32 %v3021, %v4174
    %v4176 = vpop.f32.mrf.mxu0
    %v4177 = vadd.f32 %v3023, %v4176
    %4178 = vdwg.mxu0
    %4179 = vmatprep.subr.mxu0 0.0
    %4180 = vmatpush1.msra.mxu0 0.0
    %4181 = vmatprep.subr.mxu0 0.0
    %4182 = vmatpush1.msra.mxu0 0.0
    %4183 = vmatprep.subr.mxu0 0.0
    %4184 = vmatpush1.msra.mxu0 0.0
    %4185 = vmatprep.subr.mxu0 0.0
    %4186 = vmatpush1.msra.mxu0 0.0
    %4187 = vmatprep.subr.mxu0 0.0
    %4188 = vmatpush1.msra.mxu0 0.0
    %4189 = vmatprep.subr.mxu0 0.0
    %4190 = vmatpush1.msra.mxu0 0.0
    %4191 = vmatprep.subr.mxu0 0.0
    %4192 = vmatpush1.msra.mxu0 0.0
    %4193 = vmatprep.subr.mxu0 0.0
    %4194 = vmatpush1.msra.mxu0 0.0
    %4195 = vmatprep.subr.mxu0 0.0
    %4196 = vmatpush1.msra.mxu0 0.0
    %4197 = vmatprep.subr.mxu0 0.0
    %4198 = vmatpush1.msra.mxu0 0.0
    %4199 = vmatprep.subr.mxu0 0.0
    %4200 = vmatpush1.msra.mxu0 0.0
    %4201 = vmatprep.subr.mxu0 0.0
    %4202 = vmatpush1.msra.mxu0 0.0
    %4203 = vmatprep.subr.mxu0 %v2852
    %4204 = vmatpush1.msra.mxu0 %v2851
    %4205 = vmatprep.subr.mxu0 %v2832
    %4206 = vmatpush1.msra.mxu0 %v2831
    %4207 = vmatprep.subr.mxu0 %v2812
    %4208 = vmatpush1.msra.mxu0 %v2811
    %4209 = vmatprep.subr.mxu0 %v2792
    %4210 = vmatpush1.msra.mxu0 %v2791
    %4211 = vmatprep.subr.mxu0 0.0
    %4212 = vmatpush2.msra.mxu0 0.0
    %4213 = vmatprep.subr.mxu0 0.0
    %4214 = vmatpush2.msra.mxu0 0.0
    %4215 = vmatprep.subr.mxu0 0.0
    %4216 = vmatpush2.msra.mxu0 0.0
    %4217 = vmatprep.subr.mxu0 0.0
    %4218 = vmatpush2.msra.mxu0 0.0
    %4219 = vmatprep.subr.mxu0 0.0
    %4220 = vmatpush2.msra.mxu0 0.0
    %4221 = vmatprep.subr.mxu0 0.0
    %4222 = vmatpush2.msra.mxu0 0.0
    %4223 = vmatprep.subr.mxu0 0.0
    %4224 = vmatpush2.msra.mxu0 0.0
    %4225 = vmatprep.subr.mxu0 0.0
    %4226 = vmatpush2.msra.mxu0 0.0
    %4227 = vmatprep.subr.mxu0 0.0
    %4228 = vmatpush2.msra.mxu0 0.0
    %4229 = vmatprep.subr.mxu0 0.0
    %4230 = vmatpush2.msra.mxu0 0.0
    %4231 = vmatprep.subr.mxu0 0.0
    %4232 = vmatpush2.msra.mxu0 0.0
    %4233 = vmatprep.subr.mxu0 0.0
    %4234 = vmatpush2.msra.mxu0 0.0
    %4235 = vmatprep.subr.mxu0 0.0
    %4236 = vmatpush2.msra.mxu0 0.0
    %4237 = vmatprep.subr.mxu0 0.0
    %4238 = vmatpush2.msra.mxu0 0.0
    %4239 = vmatprep.subr.mxu0 0.0
    %4240 = vmatpush2.msra.mxu0 0.0
    %4241 = vmatprep.subr.mxu0 0.0
    %4242 = vmatpush2.msra.mxu0 0.0
    %4243 = vmatprep.mubr.f32.mxu0 0.0
    %4244 = vmatmul.mubr.f32.gmra.mxu0 %v4043
    %v4245 = vpop.f32.mrf.mxu0
    %v4246 = vadd.f32 %v3092, %v4245
    %v4247 = vpop.f32.mrf.mxu0
    %v4248 = vadd.f32 %v3094, %v4247
    %4249 = vmatprep.mubr.f32.mxu0 0.0
    %4250 = vmatmul.mubr.f32.gmra.mxu0 %v4046
    %v4251 = vpop.f32.mrf.mxu0
    %v4252 = vadd.f32 %v3098, %v4251
    %v4253 = vpop.f32.mrf.mxu0
    %v4254 = vadd.f32 %v3100, %v4253
    %4255 = vmatprep.mubr.f32.mxu0 0.0
    %4256 = vmatmul.mubr.f32.gmra.mxu0 %v4049
    %v4257 = vpop.f32.mrf.mxu0
    %v4258 = vadd.f32 %v3104, %v4257
    %v4259 = vpop.f32.mrf.mxu0
    %v4260 = vadd.f32 %v3106, %v4259
    %4261 = vmatprep.mubr.f32.mxu0 0.0
    %4262 = vmatmul.mubr.f32.gmra.mxu0 %v4052
    %v4263 = vpop.f32.mrf.mxu0
    %v4264 = vadd.f32 %v3110, %v4263
    %v4265 = vpop.f32.mrf.mxu0
    %v4266 = vadd.f32 %v3112, %v4265
    %4267 = vmatprep.mubr.f32.mxu0 0.0
    %4268 = vmatmul.mubr.f32.gmra.mxu0 %v4055
    %v4269 = vpop.f32.mrf.mxu0
    %v4270 = vadd.f32 %v3116, %v4269
    %v4271 = vpop.f32.mrf.mxu0
    %v4272 = vadd.f32 %v3118, %v4271
    %4273 = vmatprep.mubr.f32.mxu0 0.0
    %4274 = vmatmul.mubr.f32.gmra.mxu0 %v4058
    %v4275 = vpop.f32.mrf.mxu0
    %v4276 = vadd.f32 %v3122, %v4275
    %v4277 = vpop.f32.mrf.mxu0
    %v4278 = vadd.f32 %v3124, %v4277
    %4279 = vmatprep.mubr.f32.mxu0 0.0
    %4280 = vmatmul.mubr.f32.gmra.mxu0 %v4061
    %v4281 = vpop.f32.mrf.mxu0
    %v4282 = vadd.f32 %v3128, %v4281
    %v4283 = vpop.f32.mrf.mxu0
    %v4284 = vadd.f32 %v3130, %v4283
    %4285 = vmatprep.mubr.f32.mxu0 0.0
    %4286 = vmatmul.mubr.f32.gmra.mxu0 %v4064
    %v4287 = vpop.f32.mrf.mxu0
    %v4288 = vadd.f32 %v3134, %v4287
    %v4289 = vpop.f32.mrf.mxu0
    %v4290 = vadd.f32 %v3136, %v4289
    %4291 = vdwg.mxu0
    %4292 = vmatprep.subr.mxu0 0.0
    %4293 = vmatpush1.msra.mxu0 0.0
    %4294 = vmatprep.subr.mxu0 0.0
    %4295 = vmatpush1.msra.mxu0 0.0
    %4296 = vmatprep.subr.mxu0 0.0
    %4297 = vmatpush1.msra.mxu0 0.0
    %4298 = vmatprep.subr.mxu0 0.0
    %4299 = vmatpush1.msra.mxu0 0.0
    %4300 = vmatprep.subr.mxu0 0.0
    %4301 = vmatpush1.msra.mxu0 0.0
    %4302 = vmatprep.subr.mxu0 0.0
    %4303 = vmatpush1.msra.mxu0 0.0
    %4304 = vmatprep.subr.mxu0 0.0
    %4305 = vmatpush1.msra.mxu0 0.0
    %4306 = vmatprep.subr.mxu0 0.0
    %4307 = vmatpush1.msra.mxu0 0.0
    %4308 = vmatprep.subr.mxu0 0.0
    %4309 = vmatpush1.msra.mxu0 0.0
    %4310 = vmatprep.subr.mxu0 0.0
    %4311 = vmatpush1.msra.mxu0 0.0
    %4312 = vmatprep.subr.mxu0 0.0
    %4313 = vmatpush1.msra.mxu0 0.0
    %4314 = vmatprep.subr.mxu0 0.0
    %4315 = vmatpush1.msra.mxu0 0.0
    %4316 = vmatprep.subr.mxu0 %v2854
    %4317 = vmatpush1.msra.mxu0 %v2853
    %4318 = vmatprep.subr.mxu0 %v2834
    %4319 = vmatpush1.msra.mxu0 %v2833
    %4320 = vmatprep.subr.mxu0 %v2814
    %4321 = vmatpush1.msra.mxu0 %v2813
    %4322 = vmatprep.subr.mxu0 %v2794
    %4323 = vmatpush1.msra.mxu0 %v2793
    %4324 = vmatprep.subr.mxu0 0.0
    %4325 = vmatpush2.msra.mxu0 0.0
    %4326 = vmatprep.subr.mxu0 0.0
    %4327 = vmatpush2.msra.mxu0 0.0
    %4328 = vmatprep.subr.mxu0 0.0
    %4329 = vmatpush2.msra.mxu0 0.0
    %4330 = vmatprep.subr.mxu0 0.0
    %4331 = vmatpush2.msra.mxu0 0.0
    %4332 = vmatprep.subr.mxu0 0.0
    %4333 = vmatpush2.msra.mxu0 0.0
    %4334 = vmatprep.subr.mxu0 0.0
    %4335 = vmatpush2.msra.mxu0 0.0
    %4336 = vmatprep.subr.mxu0 0.0
    %4337 = vmatpush2.msra.mxu0 0.0
    %4338 = vmatprep.subr.mxu0 0.0
    %4339 = vmatpush2.msra.mxu0 0.0
    %4340 = vmatprep.subr.mxu0 0.0
    %4341 = vmatpush2.msra.mxu0 0.0
    %4342 = vmatprep.subr.mxu0 0.0
    %4343 = vmatpush2.msra.mxu0 0.0
    %4344 = vmatprep.subr.mxu0 0.0
    %4345 = vmatpush2.msra.mxu0 0.0
    %4346 = vmatprep.subr.mxu0 0.0
    %4347 = vmatpush2.msra.mxu0 0.0
    %4348 = vmatprep.subr.mxu0 0.0
    %4349 = vmatpush2.msra.mxu0 0.0
    %4350 = vmatprep.subr.mxu0 0.0
    %4351 = vmatpush2.msra.mxu0 0.0
    %4352 = vmatprep.subr.mxu0 0.0
    %4353 = vmatpush2.msra.mxu0 0.0
    %4354 = vmatprep.subr.mxu0 0.0
    %4355 = vmatpush2.msra.mxu0 0.0
    %4356 = vmatprep.mubr.f32.mxu0 0.0
    %4357 = vmatmul.mubr.f32.gmra.mxu0 %v4043
    %v4358 = vpop.f32.mrf.mxu0
    %v4359 = vadd.f32 %v3205, %v4358
    %v4360 = vpop.f32.mrf.mxu0
    %v4361 = vadd.f32 %v3207, %v4360
    %4362 = vmatprep.mubr.f32.mxu0 0.0
    %4363 = vmatmul.mubr.f32.gmra.mxu0 %v4046
    %v4364 = vpop.f32.mrf.mxu0
    %v4365 = vadd.f32 %v3211, %v4364
    %v4366 = vpop.f32.mrf.mxu0
    %v4367 = vadd.f32 %v3213, %v4366
    %4368 = vmatprep.mubr.f32.mxu0 0.0
    %4369 = vmatmul.mubr.f32.gmra.mxu0 %v4049
    %v4370 = vpop.f32.mrf.mxu0
    %v4371 = vadd.f32 %v3217, %v4370
    %v4372 = vpop.f32.mrf.mxu0
    %v4373 = vadd.f32 %v3219, %v4372
    %4374 = vmatprep.mubr.f32.mxu0 0.0
    %4375 = vmatmul.mubr.f32.gmra.mxu0 %v4052
    %v4376 = vpop.f32.mrf.mxu0
    %v4377 = vadd.f32 %v3223, %v4376
    %v4378 = vpop.f32.mrf.mxu0
    %v4379 = vadd.f32 %v3225, %v4378
    %4380 = vmatprep.mubr.f32.mxu0 0.0
    %4381 = vmatmul.mubr.f32.gmra.mxu0 %v4055
    %v4382 = vpop.f32.mrf.mxu0
    %v4383 = vadd.f32 %v3229, %v4382
    %v4384 = vpop.f32.mrf.mxu0
    %v4385 = vadd.f32 %v3231, %v4384
    %4386 = vmatprep.mubr.f32.mxu0 0.0
    %4387 = vmatmul.mubr.f32.gmra.mxu0 %v4058
    %v4388 = vpop.f32.mrf.mxu0
    %v4389 = vadd.f32 %v3235, %v4388
    %v4390 = vpop.f32.mrf.mxu0
    %v4391 = vadd.f32 %v3237, %v4390
    %4392 = vmatprep.mubr.f32.mxu0 0.0
    %4393 = vmatmul.mubr.f32.gmra.mxu0 %v4061
    %v4394 = vpop.f32.mrf.mxu0
    %v4395 = vadd.f32 %v3241, %v4394
    %v4396 = vpop.f32.mrf.mxu0
    %v4397 = vadd.f32 %v3243, %v4396
    %4398 = vmatprep.mubr.f32.mxu0 0.0
    %4399 = vmatmul.mubr.f32.gmra.mxu0 %v4064
    %v4400 = vpop.f32.mrf.mxu0
    %v4401 = vadd.f32 %v3247, %v4400
    %v4402 = vpop.f32.mrf.mxu0
    %v4403 = vadd.f32 %v3249, %v4402
    %4404 = vdwg.mxu0
    %4405 = vmatprep.subr.mxu0 0.0
    %4406 = vmatpush1.msra.mxu0 0.0
    %4407 = vmatprep.subr.mxu0 0.0
    %4408 = vmatpush1.msra.mxu0 0.0
    %4409 = vmatprep.subr.mxu0 0.0
    %4410 = vmatpush1.msra.mxu0 0.0
    %4411 = vmatprep.subr.mxu0 0.0
    %4412 = vmatpush1.msra.mxu0 0.0
    %4413 = vmatprep.subr.mxu0 0.0
    %4414 = vmatpush1.msra.mxu0 0.0
    %4415 = vmatprep.subr.mxu0 0.0
    %4416 = vmatpush1.msra.mxu0 0.0
    %4417 = vmatprep.subr.mxu0 0.0
    %4418 = vmatpush1.msra.mxu0 0.0
    %4419 = vmatprep.subr.mxu0 0.0
    %4420 = vmatpush1.msra.mxu0 0.0
    %4421 = vmatprep.subr.mxu0 0.0
    %4422 = vmatpush1.msra.mxu0 0.0
    %4423 = vmatprep.subr.mxu0 0.0
    %4424 = vmatpush1.msra.mxu0 0.0
    %4425 = vmatprep.subr.mxu0 0.0
    %4426 = vmatpush1.msra.mxu0 0.0
    %4427 = vmatprep.subr.mxu0 0.0
    %4428 = vmatpush1.msra.mxu0 0.0
    %4429 = vmatprep.subr.mxu0 %v2856
    %4430 = vmatpush1.msra.mxu0 %v2855
    %4431 = vmatprep.subr.mxu0 %v2836
    %4432 = vmatpush1.msra.mxu0 %v2835
    %4433 = vmatprep.subr.mxu0 %v2816
    %4434 = vmatpush1.msra.mxu0 %v2815
    %4435 = vmatprep.subr.mxu0 %v2796
    %4436 = vmatpush1.msra.mxu0 %v2795
    %4437 = vmatprep.subr.mxu0 0.0
    %4438 = vmatpush2.msra.mxu0 0.0
    %4439 = vmatprep.subr.mxu0 0.0
    %4440 = vmatpush2.msra.mxu0 0.0
    %4441 = vmatprep.subr.mxu0 0.0
    %4442 = vmatpush2.msra.mxu0 0.0
    %4443 = vmatprep.subr.mxu0 0.0
    %4444 = vmatpush2.msra.mxu0 0.0
    %4445 = vmatprep.subr.mxu0 0.0
    %4446 = vmatpush2.msra.mxu0 0.0
    %4447 = vmatprep.subr.mxu0 0.0
    %4448 = vmatpush2.msra.mxu0 0.0
    %4449 = vmatprep.subr.mxu0 0.0
    %4450 = vmatpush2.msra.mxu0 0.0
    %4451 = vmatprep.subr.mxu0 0.0
    %4452 = vmatpush2.msra.mxu0 0.0
    %4453 = vmatprep.subr.mxu0 0.0
    %4454 = vmatpush2.msra.mxu0 0.0
    %4455 = vmatprep.subr.mxu0 0.0
    %4456 = vmatpush2.msra.mxu0 0.0
    %4457 = vmatprep.subr.mxu0 0.0
    %4458 = vmatpush2.msra.mxu0 0.0
    %4459 = vmatprep.subr.mxu0 0.0
    %4460 = vmatpush2.msra.mxu0 0.0
    %4461 = vmatprep.subr.mxu0 0.0
    %4462 = vmatpush2.msra.mxu0 0.0
    %4463 = vmatprep.subr.mxu0 0.0
    %4464 = vmatpush2.msra.mxu0 0.0
    %4465 = vmatprep.subr.mxu0 0.0
    %4466 = vmatpush2.msra.mxu0 0.0
    %4467 = vmatprep.subr.mxu0 0.0
    %4468 = vmatpush2.msra.mxu0 0.0
    %4469 = vmatprep.mubr.f32.mxu0 0.0
    %4470 = vmatmul.mubr.f32.gmra.mxu0 %v4043
    %v4471 = vpop.f32.mrf.mxu0
    %v4472 = vadd.f32 %v3318, %v4471
    %v4473 = vpop.f32.mrf.mxu0
    %v4474 = vadd.f32 %v3320, %v4473
    %4475 = vmatprep.mubr.f32.mxu0 0.0
    %4476 = vmatmul.mubr.f32.gmra.mxu0 %v4046
    %v4477 = vpop.f32.mrf.mxu0
    %v4478 = vadd.f32 %v3324, %v4477
    %v4479 = vpop.f32.mrf.mxu0
    %v4480 = vadd.f32 %v3326, %v4479
    %4481 = vmatprep.mubr.f32.mxu0 0.0
    %4482 = vmatmul.mubr.f32.gmra.mxu0 %v4049
    %v4483 = vpop.f32.mrf.mxu0
    %v4484 = vadd.f32 %v3330, %v4483
    %v4485 = vpop.f32.mrf.mxu0
    %v4486 = vadd.f32 %v3332, %v4485
    %4487 = vmatprep.mubr.f32.mxu0 0.0
    %4488 = vmatmul.mubr.f32.gmra.mxu0 %v4052
    %v4489 = vpop.f32.mrf.mxu0
    %v4490 = vadd.f32 %v3336, %v4489
    %v4491 = vpop.f32.mrf.mxu0
    %v4492 = vadd.f32 %v3338, %v4491
    %4493 = vmatprep.mubr.f32.mxu0 0.0
    %4494 = vmatmul.mubr.f32.gmra.mxu0 %v4055
    %v4495 = vpop.f32.mrf.mxu0
    %v4496 = vadd.f32 %v3342, %v4495
    %v4497 = vpop.f32.mrf.mxu0
    %v4498 = vadd.f32 %v3344, %v4497
    %4499 = vmatprep.mubr.f32.mxu0 0.0
    %4500 = vmatmul.mubr.f32.gmra.mxu0 %v4058
    %v4501 = vpop.f32.mrf.mxu0
    %v4502 = vadd.f32 %v3348, %v4501
    %v4503 = vpop.f32.mrf.mxu0
    %v4504 = vadd.f32 %v3350, %v4503
    %4505 = vmatprep.mubr.f32.mxu0 0.0
    %4506 = vmatmul.mubr.f32.gmra.mxu0 %v4061
    %v4507 = vpop.f32.mrf.mxu0
    %v4508 = vadd.f32 %v3354, %v4507
    %v4509 = vpop.f32.mrf.mxu0
    %v4510 = vadd.f32 %v3356, %v4509
    %4511 = vmatprep.mubr.f32.mxu0 0.0
    %4512 = vmatmul.mubr.f32.gmra.mxu0 %v4064
    %v4513 = vpop.f32.mrf.mxu0
    %v4514 = vadd.f32 %v3360, %v4513
    %v4515 = vpop.f32.mrf.mxu0
    %v4516 = vadd.f32 %v3362, %v4515
    %4517 = vdwg.mxu0
    %4518 = vmatprep.subr.mxu0 0.0
    %4519 = vmatpush1.msra.mxu0 0.0
    %4520 = vmatprep.subr.mxu0 0.0
    %4521 = vmatpush1.msra.mxu0 0.0
    %4522 = vmatprep.subr.mxu0 0.0
    %4523 = vmatpush1.msra.mxu0 0.0
    %4524 = vmatprep.subr.mxu0 0.0
    %4525 = vmatpush1.msra.mxu0 0.0
    %4526 = vmatprep.subr.mxu0 0.0
    %4527 = vmatpush1.msra.mxu0 0.0
    %4528 = vmatprep.subr.mxu0 0.0
    %4529 = vmatpush1.msra.mxu0 0.0
    %4530 = vmatprep.subr.mxu0 0.0
    %4531 = vmatpush1.msra.mxu0 0.0
    %4532 = vmatprep.subr.mxu0 0.0
    %4533 = vmatpush1.msra.mxu0 0.0
    %4534 = vmatprep.subr.mxu0 0.0
    %4535 = vmatpush1.msra.mxu0 0.0
    %4536 = vmatprep.subr.mxu0 0.0
    %4537 = vmatpush1.msra.mxu0 0.0
    %4538 = vmatprep.subr.mxu0 0.0
    %4539 = vmatpush1.msra.mxu0 0.0
    %4540 = vmatprep.subr.mxu0 0.0
    %4541 = vmatpush1.msra.mxu0 0.0
    %4542 = vmatprep.subr.mxu0 %v2858
    %4543 = vmatpush1.msra.mxu0 %v2857
    %4544 = vmatprep.subr.mxu0 %v2838
    %4545 = vmatpush1.msra.mxu0 %v2837
    %4546 = vmatprep.subr.mxu0 %v2818
    %4547 = vmatpush1.msra.mxu0 %v2817
    %4548 = vmatprep.subr.mxu0 %v2798
    %4549 = vmatpush1.msra.mxu0 %v2797
    %4550 = vmatprep.subr.mxu0 0.0
    %4551 = vmatpush2.msra.mxu0 0.0
    %4552 = vmatprep.subr.mxu0 0.0
    %4553 = vmatpush2.msra.mxu0 0.0
    %4554 = vmatprep.subr.mxu0 0.0
    %4555 = vmatpush2.msra.mxu0 0.0
    %4556 = vmatprep.subr.mxu0 0.0
    %4557 = vmatpush2.msra.mxu0 0.0
    %4558 = vmatprep.subr.mxu0 0.0
    %4559 = vmatpush2.msra.mxu0 0.0
    %4560 = vmatprep.subr.mxu0 0.0
    %4561 = vmatpush2.msra.mxu0 0.0
    %4562 = vmatprep.subr.mxu0 0.0
    %4563 = vmatpush2.msra.mxu0 0.0
    %4564 = vmatprep.subr.mxu0 0.0
    %4565 = vmatpush2.msra.mxu0 0.0
    %4566 = vmatprep.subr.mxu0 0.0
    %4567 = vmatpush2.msra.mxu0 0.0
    %4568 = vmatprep.subr.mxu0 0.0
    %4569 = vmatpush2.msra.mxu0 0.0
    %4570 = vmatprep.subr.mxu0 0.0
    %4571 = vmatpush2.msra.mxu0 0.0
    %4572 = vmatprep.subr.mxu0 0.0
    %4573 = vmatpush2.msra.mxu0 0.0
    %4574 = vmatprep.subr.mxu0 0.0
    %4575 = vmatpush2.msra.mxu0 0.0
    %4576 = vmatprep.subr.mxu0 0.0
    %4577 = vmatpush2.msra.mxu0 0.0
    %4578 = vmatprep.subr.mxu0 0.0
    %4579 = vmatpush2.msra.mxu0 0.0
    %4580 = vmatprep.subr.mxu0 0.0
    %4581 = vmatpush2.msra.mxu0 0.0
    %4582 = vmatprep.mubr.f32.mxu0 0.0
    %4583 = vmatmul.mubr.f32.gmra.mxu0 %v4043
    %v4584 = vpop.f32.mrf.mxu0
    %v4585 = vadd.f32 %v3431, %v4584
    %v4586 = vpop.f32.mrf.mxu0
    %v4587 = vadd.f32 %v3433, %v4586
    %4588 = vmatprep.mubr.f32.mxu0 0.0
    %4589 = vmatmul.mubr.f32.gmra.mxu0 %v4046
    %v4590 = vpop.f32.mrf.mxu0
    %v4591 = vadd.f32 %v3437, %v4590
    %v4592 = vpop.f32.mrf.mxu0
    %v4593 = vadd.f32 %v3439, %v4592
    %4594 = vmatprep.mubr.f32.mxu0 0.0
    %4595 = vmatmul.mubr.f32.gmra.mxu0 %v4049
    %v4596 = vpop.f32.mrf.mxu0
    %v4597 = vadd.f32 %v3443, %v4596
    %v4598 = vpop.f32.mrf.mxu0
    %v4599 = vadd.f32 %v3445, %v4598
    %4600 = vmatprep.mubr.f32.mxu0 0.0
    %4601 = vmatmul.mubr.f32.gmra.mxu0 %v4052
    %v4602 = vpop.f32.mrf.mxu0
    %v4603 = vadd.f32 %v3449, %v4602
    %v4604 = vpop.f32.mrf.mxu0
    %v4605 = vadd.f32 %v3451, %v4604
    %4606 = vmatprep.mubr.f32.mxu0 0.0
    %4607 = vmatmul.mubr.f32.gmra.mxu0 %v4055
    %v4608 = vpop.f32.mrf.mxu0
    %v4609 = vadd.f32 %v3455, %v4608
    %v4610 = vpop.f32.mrf.mxu0
    %v4611 = vadd.f32 %v3457, %v4610
    %4612 = vmatprep.mubr.f32.mxu0 0.0
    %4613 = vmatmul.mubr.f32.gmra.mxu0 %v4058
    %v4614 = vpop.f32.mrf.mxu0
    %v4615 = vadd.f32 %v3461, %v4614
    %v4616 = vpop.f32.mrf.mxu0
    %v4617 = vadd.f32 %v3463, %v4616
    %4618 = vmatprep.mubr.f32.mxu0 0.0
    %4619 = vmatmul.mubr.f32.gmra.mxu0 %v4061
    %v4620 = vpop.f32.mrf.mxu0
    %v4621 = vadd.f32 %v3467, %v4620
    %v4622 = vpop.f32.mrf.mxu0
    %v4623 = vadd.f32 %v3469, %v4622
    %4624 = vmatprep.mubr.f32.mxu0 0.0
    %4625 = vmatmul.mubr.f32.gmra.mxu0 %v4064
    %v4626 = vpop.f32.mrf.mxu0
    %v4627 = vadd.f32 %v3473, %v4626
    %v4628 = vpop.f32.mrf.mxu0
    %v4629 = vadd.f32 %v3475, %v4628
    %4630 = vdwg.mxu0
    %4631 = vmatprep.subr.mxu0 0.0
    %4632 = vmatpush1.msra.mxu0 0.0
    %4633 = vmatprep.subr.mxu0 0.0
    %4634 = vmatpush1.msra.mxu0 0.0
    %4635 = vmatprep.subr.mxu0 0.0
    %4636 = vmatpush1.msra.mxu0 0.0
    %4637 = vmatprep.subr.mxu0 0.0
    %4638 = vmatpush1.msra.mxu0 0.0
    %4639 = vmatprep.subr.mxu0 0.0
    %4640 = vmatpush1.msra.mxu0 0.0
    %4641 = vmatprep.subr.mxu0 0.0
    %4642 = vmatpush1.msra.mxu0 0.0
    %4643 = vmatprep.subr.mxu0 0.0
    %4644 = vmatpush1.msra.mxu0 0.0
    %4645 = vmatprep.subr.mxu0 0.0
    %4646 = vmatpush1.msra.mxu0 0.0
    %4647 = vmatprep.subr.mxu0 0.0
    %4648 = vmatpush1.msra.mxu0 0.0
    %4649 = vmatprep.subr.mxu0 0.0
    %4650 = vmatpush1.msra.mxu0 0.0
    %4651 = vmatprep.subr.mxu0 0.0
    %4652 = vmatpush1.msra.mxu0 0.0
    %4653 = vmatprep.subr.mxu0 0.0
    %4654 = vmatpush1.msra.mxu0 0.0
    %4655 = vmatprep.subr.mxu0 %v2860
    %4656 = vmatpush1.msra.mxu0 %v2859
    %4657 = vmatprep.subr.mxu0 %v2840
    %4658 = vmatpush1.msra.mxu0 %v2839
    %4659 = vmatprep.subr.mxu0 %v2820
    %4660 = vmatpush1.msra.mxu0 %v2819
    %4661 = vmatprep.subr.mxu0 %v2800
    %4662 = vmatpush1.msra.mxu0 %v2799
    %4663 = vmatprep.subr.mxu0 0.0
    %4664 = vmatpush2.msra.mxu0 0.0
    %4665 = vmatprep.subr.mxu0 0.0
    %4666 = vmatpush2.msra.mxu0 0.0
    %4667 = vmatprep.subr.mxu0 0.0
    %4668 = vmatpush2.msra.mxu0 0.0
    %4669 = vmatprep.subr.mxu0 0.0
    %4670 = vmatpush2.msra.mxu0 0.0
    %4671 = vmatprep.subr.mxu0 0.0
    %4672 = vmatpush2.msra.mxu0 0.0
    %4673 = vmatprep.subr.mxu0 0.0
    %4674 = vmatpush2.msra.mxu0 0.0
    %4675 = vmatprep.subr.mxu0 0.0
    %4676 = vmatpush2.msra.mxu0 0.0
    %4677 = vmatprep.subr.mxu0 0.0
    %4678 = vmatpush2.msra.mxu0 0.0
    %4679 = vmatprep.subr.mxu0 0.0
    %4680 = vmatpush2.msra.mxu0 0.0
    %4681 = vmatprep.subr.mxu0 0.0
    %4682 = vmatpush2.msra.mxu0 0.0
    %4683 = vmatprep.subr.mxu0 0.0
    %4684 = vmatpush2.msra.mxu0 0.0
    %4685 = vmatprep.subr.mxu0 0.0
    %4686 = vmatpush2.msra.mxu0 0.0
    %4687 = vmatprep.subr.mxu0 0.0
    %4688 = vmatpush2.msra.mxu0 0.0
    %4689 = vmatprep.subr.mxu0 0.0
    %4690 = vmatpush2.msra.mxu0 0.0
    %4691 = vmatprep.subr.mxu0 0.0
    %4692 = vmatpush2.msra.mxu0 0.0
    %4693 = vmatprep.subr.mxu0 0.0
    %4694 = vmatpush2.msra.mxu0 0.0
    %4695 = vmatprep.mubr.f32.mxu0 0.0
    %4696 = vmatmul.mubr.f32.gmra.mxu0 %v4043
    %v4697 = vpop.f32.mrf.mxu0
    %v4698 = vadd.f32 %v3544, %v4697
    %v4699 = vpop.f32.mrf.mxu0
    %v4700 = vadd.f32 %v3546, %v4699
    %4701 = vmatprep.mubr.f32.mxu0 0.0
    %4702 = vmatmul.mubr.f32.gmra.mxu0 %v4046
    %v4703 = vpop.f32.mrf.mxu0
    %v4704 = vadd.f32 %v3550, %v4703
    %v4705 = vpop.f32.mrf.mxu0
    %v4706 = vadd.f32 %v3552, %v4705
    %4707 = vmatprep.mubr.f32.mxu0 0.0
    %4708 = vmatmul.mubr.f32.gmra.mxu0 %v4049
    %v4709 = vpop.f32.mrf.mxu0
    %v4710 = vadd.f32 %v3556, %v4709
    %v4711 = vpop.f32.mrf.mxu0
    %v4712 = vadd.f32 %v3558, %v4711
    %4713 = vmatprep.mubr.f32.mxu0 0.0
    %4714 = vmatmul.mubr.f32.gmra.mxu0 %v4052
    %v4715 = vpop.f32.mrf.mxu0
    %v4716 = vadd.f32 %v3562, %v4715
    %v4717 = vpop.f32.mrf.mxu0
    %v4718 = vadd.f32 %v3564, %v4717
    %4719 = vmatprep.mubr.f32.mxu0 0.0
    %4720 = vmatmul.mubr.f32.gmra.mxu0 %v4055
    %v4721 = vpop.f32.mrf.mxu0
    %v4722 = vadd.f32 %v3568, %v4721
    %v4723 = vpop.f32.mrf.mxu0
    %v4724 = vadd.f32 %v3570, %v4723
    %4725 = vmatprep.mubr.f32.mxu0 0.0
    %4726 = vmatmul.mubr.f32.gmra.mxu0 %v4058
    %v4727 = vpop.f32.mrf.mxu0
    %v4728 = vadd.f32 %v3574, %v4727
    %v4729 = vpop.f32.mrf.mxu0
    %v4730 = vadd.f32 %v3576, %v4729
    %4731 = vmatprep.mubr.f32.mxu0 0.0
    %4732 = vmatmul.mubr.f32.gmra.mxu0 %v4061
    %v4733 = vpop.f32.mrf.mxu0
    %v4734 = vadd.f32 %v3580, %v4733
    %v4735 = vpop.f32.mrf.mxu0
    %v4736 = vadd.f32 %v3582, %v4735
    %4737 = vmatprep.mubr.f32.mxu0 0.0
    %4738 = vmatmul.mubr.f32.gmra.mxu0 %v4064
    %v4739 = vpop.f32.mrf.mxu0
    %v4740 = vadd.f32 %v3586, %v4739
    %v4741 = vpop.f32.mrf.mxu0
    %v4742 = vadd.f32 %v3588, %v4741
    %4743 = vdwg.mxu0
    %4744 = vmatprep.subr.mxu0 0.0
    %4745 = vmatpush1.msra.mxu0 0.0
    %4746 = vmatprep.subr.mxu0 0.0
    %4747 = vmatpush1.msra.mxu0 0.0
    %4748 = vmatprep.subr.mxu0 0.0
    %4749 = vmatpush1.msra.mxu0 0.0
    %4750 = vmatprep.subr.mxu0 0.0
    %4751 = vmatpush1.msra.mxu0 0.0
    %4752 = vmatprep.subr.mxu0 0.0
    %4753 = vmatpush1.msra.mxu0 0.0
    %4754 = vmatprep.subr.mxu0 0.0
    %4755 = vmatpush1.msra.mxu0 0.0
    %4756 = vmatprep.subr.mxu0 0.0
    %4757 = vmatpush1.msra.mxu0 0.0
    %4758 = vmatprep.subr.mxu0 0.0
    %4759 = vmatpush1.msra.mxu0 0.0
    %4760 = vmatprep.subr.mxu0 0.0
    %4761 = vmatpush1.msra.mxu0 0.0
    %4762 = vmatprep.subr.mxu0 0.0
    %4763 = vmatpush1.msra.mxu0 0.0
    %4764 = vmatprep.subr.mxu0 0.0
    %4765 = vmatpush1.msra.mxu0 0.0
    %4766 = vmatprep.subr.mxu0 0.0
    %4767 = vmatpush1.msra.mxu0 0.0
    %4768 = vmatprep.subr.mxu0 %v2862
    %4769 = vmatpush1.msra.mxu0 %v2861
    %4770 = vmatprep.subr.mxu0 %v2842
    %4771 = vmatpush1.msra.mxu0 %v2841
    %4772 = vmatprep.subr.mxu0 %v2822
    %4773 = vmatpush1.msra.mxu0 %v2821
    %4774 = vmatprep.subr.mxu0 %v2802
    %4775 = vmatpush1.msra.mxu0 %v2801
    %4776 = vmatprep.subr.mxu0 0.0
    %4777 = vmatpush2.msra.mxu0 0.0
    %4778 = vmatprep.subr.mxu0 0.0
    %4779 = vmatpush2.msra.mxu0 0.0
    %4780 = vmatprep.subr.mxu0 0.0
    %4781 = vmatpush2.msra.mxu0 0.0
    %4782 = vmatprep.subr.mxu0 0.0
    %4783 = vmatpush2.msra.mxu0 0.0
    %4784 = vmatprep.subr.mxu0 0.0
    %4785 = vmatpush2.msra.mxu0 0.0
    %4786 = vmatprep.subr.mxu0 0.0
    %4787 = vmatpush2.msra.mxu0 0.0
    %4788 = vmatprep.subr.mxu0 0.0
    %4789 = vmatpush2.msra.mxu0 0.0
    %4790 = vmatprep.subr.mxu0 0.0
    %4791 = vmatpush2.msra.mxu0 0.0
    %4792 = vmatprep.subr.mxu0 0.0
    %4793 = vmatpush2.msra.mxu0 0.0
    %4794 = vmatprep.subr.mxu0 0.0
    %4795 = vmatpush2.msra.mxu0 0.0
    %4796 = vmatprep.subr.mxu0 0.0
    %4797 = vmatpush2.msra.mxu0 0.0
    %4798 = vmatprep.subr.mxu0 0.0
    %4799 = vmatpush2.msra.mxu0 0.0
    %4800 = vmatprep.subr.mxu0 0.0
    %4801 = vmatpush2.msra.mxu0 0.0
    %4802 = vmatprep.subr.mxu0 0.0
    %4803 = vmatpush2.msra.mxu0 0.0
    %4804 = vmatprep.subr.mxu0 0.0
    %4805 = vmatpush2.msra.mxu0 0.0
    %4806 = vmatprep.subr.mxu0 0.0
    %4807 = vmatpush2.msra.mxu0 0.0
    %4808 = vmatprep.mubr.f32.mxu0 0.0
    %4809 = vmatmul.mubr.f32.gmra.mxu0 %v4043
    %v4810 = vpop.f32.mrf.mxu0
    %v4811 = vadd.f32 %v3657, %v4810
    %v4812 = vpop.f32.mrf.mxu0
    %v4813 = vadd.f32 %v3659, %v4812
    %4814 = vmatprep.mubr.f32.mxu0 0.0
    %4815 = vmatmul.mubr.f32.gmra.mxu0 %v4046
    %v4816 = vpop.f32.mrf.mxu0
    %v4817 = vadd.f32 %v3663, %v4816
    %v4818 = vpop.f32.mrf.mxu0
    %v4819 = vadd.f32 %v3665, %v4818
    %4820 = vmatprep.mubr.f32.mxu0 0.0
    %4821 = vmatmul.mubr.f32.gmra.mxu0 %v4049
    %v4822 = vpop.f32.mrf.mxu0
    %v4823 = vadd.f32 %v3669, %v4822
    %v4824 = vpop.f32.mrf.mxu0
    %v4825 = vadd.f32 %v3671, %v4824
    %4826 = vmatprep.mubr.f32.mxu0 0.0
    %4827 = vmatmul.mubr.f32.gmra.mxu0 %v4052
    %v4828 = vpop.f32.mrf.mxu0
    %v4829 = vadd.f32 %v3675, %v4828
    %v4830 = vpop.f32.mrf.mxu0
    %v4831 = vadd.f32 %v3677, %v4830
    %4832 = vmatprep.mubr.f32.mxu0 0.0
    %4833 = vmatmul.mubr.f32.gmra.mxu0 %v4055
    %v4834 = vpop.f32.mrf.mxu0
    %v4835 = vadd.f32 %v3681, %v4834
    %v4836 = vpop.f32.mrf.mxu0
    %v4837 = vadd.f32 %v3683, %v4836
    %4838 = vmatprep.mubr.f32.mxu0 0.0
    %4839 = vmatmul.mubr.f32.gmra.mxu0 %v4058
    %v4840 = vpop.f32.mrf.mxu0
    %v4841 = vadd.f32 %v3687, %v4840
    %v4842 = vpop.f32.mrf.mxu0
    %v4843 = vadd.f32 %v3689, %v4842
    %4844 = vmatprep.mubr.f32.mxu0 0.0
    %4845 = vmatmul.mubr.f32.gmra.mxu0 %v4061
    %v4846 = vpop.f32.mrf.mxu0
    %v4847 = vadd.f32 %v3693, %v4846
    %v4848 = vpop.f32.mrf.mxu0
    %v4849 = vadd.f32 %v3695, %v4848
    %4850 = vmatprep.mubr.f32.mxu0 0.0
    %4851 = vmatmul.mubr.f32.gmra.mxu0 %v4064
    %v4852 = vpop.f32.mrf.mxu0
    %v4853 = vadd.f32 %v3699, %v4852
    %v4854 = vpop.f32.mrf.mxu0
    %v4855 = vadd.f32 %v3701, %v4854
    %4856 = vdwg.mxu0
    %4857 = vmatprep.subr.mxu0 0.0
    %4858 = vmatpush1.msra.mxu0 0.0
    %4859 = vmatprep.subr.mxu0 0.0
    %4860 = vmatpush1.msra.mxu0 0.0
    %4861 = vmatprep.subr.mxu0 0.0
    %4862 = vmatpush1.msra.mxu0 0.0
    %4863 = vmatprep.subr.mxu0 0.0
    %4864 = vmatpush1.msra.mxu0 0.0
    %4865 = vmatprep.subr.mxu0 0.0
    %4866 = vmatpush1.msra.mxu0 0.0
    %4867 = vmatprep.subr.mxu0 0.0
    %4868 = vmatpush1.msra.mxu0 0.0
    %4869 = vmatprep.subr.mxu0 0.0
    %4870 = vmatpush1.msra.mxu0 0.0
    %4871 = vmatprep.subr.mxu0 0.0
    %4872 = vmatpush1.msra.mxu0 0.0
    %4873 = vmatprep.subr.mxu0 0.0
    %4874 = vmatpush1.msra.mxu0 0.0
    %4875 = vmatprep.subr.mxu0 0.0
    %4876 = vmatpush1.msra.mxu0 0.0
    %4877 = vmatprep.subr.mxu0 0.0
    %4878 = vmatpush1.msra.mxu0 0.0
    %4879 = vmatprep.subr.mxu0 0.0
    %4880 = vmatpush1.msra.mxu0 0.0
    %4881 = vmatprep.subr.mxu0 %v2864
    %4882 = vmatpush1.msra.mxu0 %v2863
    %4883 = vmatprep.subr.mxu0 %v2844
    %4884 = vmatpush1.msra.mxu0 %v2843
    %4885 = vmatprep.subr.mxu0 %v2824
    %4886 = vmatpush1.msra.mxu0 %v2823
    %4887 = vmatprep.subr.mxu0 %v2804
    %4888 = vmatpush1.msra.mxu0 %v2803
    %4889 = vmatprep.subr.mxu0 0.0
    %4890 = vmatpush2.msra.mxu0 0.0
    %4891 = vmatprep.subr.mxu0 0.0
    %4892 = vmatpush2.msra.mxu0 0.0
    %4893 = vmatprep.subr.mxu0 0.0
    %4894 = vmatpush2.msra.mxu0 0.0
    %4895 = vmatprep.subr.mxu0 0.0
    %4896 = vmatpush2.msra.mxu0 0.0
    %4897 = vmatprep.subr.mxu0 0.0
    %4898 = vmatpush2.msra.mxu0 0.0
    %4899 = vmatprep.subr.mxu0 0.0
    %4900 = vmatpush2.msra.mxu0 0.0
    %4901 = vmatprep.subr.mxu0 0.0
    %4902 = vmatpush2.msra.mxu0 0.0
    %4903 = vmatprep.subr.mxu0 0.0
    %4904 = vmatpush2.msra.mxu0 0.0
    %4905 = vmatprep.subr.mxu0 0.0
    %4906 = vmatpush2.msra.mxu0 0.0
    %4907 = vmatprep.subr.mxu0 0.0
    %4908 = vmatpush2.msra.mxu0 0.0
    %4909 = vmatprep.subr.mxu0 0.0
    %4910 = vmatpush2.msra.mxu0 0.0
    %4911 = vmatprep.subr.mxu0 0.0
    %4912 = vmatpush2.msra.mxu0 0.0
    %4913 = vmatprep.subr.mxu0 0.0
    %4914 = vmatpush2.msra.mxu0 0.0
    %4915 = vmatprep.subr.mxu0 0.0
    %4916 = vmatpush2.msra.mxu0 0.0
    %4917 = vmatprep.subr.mxu0 0.0
    %4918 = vmatpush2.msra.mxu0 0.0
    %4919 = vmatprep.subr.mxu0 0.0
    %4920 = vmatpush2.msra.mxu0 0.0
    %4921 = vmatprep.mubr.f32.mxu0 0.0
    %4922 = vmatmul.mubr.f32.gmra.mxu0 %v4043
    %v4923 = vpop.f32.mrf.mxu0
    %v4924 = vadd.f32 %v3770, %v4923
    %v4925 = vpop.f32.mrf.mxu0
    %v4926 = vadd.f32 %v3772, %v4925
    %4927 = vmatprep.mubr.f32.mxu0 0.0
    %4928 = vmatmul.mubr.f32.gmra.mxu0 %v4046
    %v4929 = vpop.f32.mrf.mxu0
    %v4930 = vadd.f32 %v3776, %v4929
    %v4931 = vpop.f32.mrf.mxu0
    %v4932 = vadd.f32 %v3778, %v4931
    %4933 = vmatprep.mubr.f32.mxu0 0.0
    %4934 = vmatmul.mubr.f32.gmra.mxu0 %v4049
    %v4935 = vpop.f32.mrf.mxu0
    %v4936 = vadd.f32 %v3782, %v4935
    %v4937 = vpop.f32.mrf.mxu0
    %v4938 = vadd.f32 %v3784, %v4937
    %4939 = vmatprep.mubr.f32.mxu0 0.0
    %4940 = vmatmul.mubr.f32.gmra.mxu0 %v4052
    %v4941 = vpop.f32.mrf.mxu0
    %v4942 = vadd.f32 %v3788, %v4941
    %v4943 = vpop.f32.mrf.mxu0
    %v4944 = vadd.f32 %v3790, %v4943
    %4945 = vmatprep.mubr.f32.mxu0 0.0
    %4946 = vmatmul.mubr.f32.gmra.mxu0 %v4055
    %v4947 = vpop.f32.mrf.mxu0
    %v4948 = vadd.f32 %v3794, %v4947
    %v4949 = vpop.f32.mrf.mxu0
    %v4950 = vadd.f32 %v3796, %v4949
    %4951 = vmatprep.mubr.f32.mxu0 0.0
    %4952 = vmatmul.mubr.f32.gmra.mxu0 %v4058
    %v4953 = vpop.f32.mrf.mxu0
    %v4954 = vadd.f32 %v3800, %v4953
    %v4955 = vpop.f32.mrf.mxu0
    %v4956 = vadd.f32 %v3802, %v4955
    %4957 = vmatprep.mubr.f32.mxu0 0.0
    %4958 = vmatmul.mubr.f32.gmra.mxu0 %v4061
    %v4959 = vpop.f32.mrf.mxu0
    %v4960 = vadd.f32 %v3806, %v4959
    %v4961 = vpop.f32.mrf.mxu0
    %v4962 = vadd.f32 %v3808, %v4961
    %4963 = vmatprep.mubr.f32.mxu0 0.0
    %4964 = vmatmul.mubr.f32.gmra.mxu0 %v4064
    %v4965 = vpop.f32.mrf.mxu0
    %v4966 = vadd.f32 %v3812, %v4965
    %v4967 = vpop.f32.mrf.mxu0
    %v4968 = vadd.f32 %v3814, %v4967
    %4969 = vdwg.mxu0
    %4970 = vmatprep.subr.mxu0 0.0
    %4971 = vmatpush1.msra.mxu0 0.0
    %4972 = vmatprep.subr.mxu0 0.0
    %4973 = vmatpush1.msra.mxu0 0.0
    %4974 = vmatprep.subr.mxu0 0.0
    %4975 = vmatpush1.msra.mxu0 0.0
    %4976 = vmatprep.subr.mxu0 0.0
    %4977 = vmatpush1.msra.mxu0 0.0
    %4978 = vmatprep.subr.mxu0 0.0
    %4979 = vmatpush1.msra.mxu0 0.0
    %4980 = vmatprep.subr.mxu0 0.0
    %4981 = vmatpush1.msra.mxu0 0.0
    %4982 = vmatprep.subr.mxu0 0.0
    %4983 = vmatpush1.msra.mxu0 0.0
    %4984 = vmatprep.subr.mxu0 0.0
    %4985 = vmatpush1.msra.mxu0 0.0
    %4986 = vmatprep.subr.mxu0 0.0
    %4987 = vmatpush1.msra.mxu0 0.0
    %4988 = vmatprep.subr.mxu0 0.0
    %4989 = vmatpush1.msra.mxu0 0.0
    %4990 = vmatprep.subr.mxu0 0.0
    %4991 = vmatpush1.msra.mxu0 0.0
    %4992 = vmatprep.subr.mxu0 0.0
    %4993 = vmatpush1.msra.mxu0 0.0
    %4994 = vmatprep.subr.mxu0 %v2866
    %4995 = vmatpush1.msra.mxu0 %v2865
    %4996 = vmatprep.subr.mxu0 %v2846
    %4997 = vmatpush1.msra.mxu0 %v2845
    %4998 = vmatprep.subr.mxu0 %v2826
    %4999 = vmatpush1.msra.mxu0 %v2825
    %5000 = vmatprep.subr.mxu0 %v2806
    %5001 = vmatpush1.msra.mxu0 %v2805
    %5002 = vmatprep.subr.mxu0 0.0
    %5003 = vmatpush2.msra.mxu0 0.0
    %5004 = vmatprep.subr.mxu0 0.0
    %5005 = vmatpush2.msra.mxu0 0.0
    %5006 = vmatprep.subr.mxu0 0.0
    %5007 = vmatpush2.msra.mxu0 0.0
    %5008 = vmatprep.subr.mxu0 0.0
    %5009 = vmatpush2.msra.mxu0 0.0
    %5010 = vmatprep.subr.mxu0 0.0
    %5011 = vmatpush2.msra.mxu0 0.0
    %5012 = vmatprep.subr.mxu0 0.0
    %5013 = vmatpush2.msra.mxu0 0.0
    %5014 = vmatprep.subr.mxu0 0.0
    %5015 = vmatpush2.msra.mxu0 0.0
    %5016 = vmatprep.subr.mxu0 0.0
    %5017 = vmatpush2.msra.mxu0 0.0
    %5018 = vmatprep.subr.mxu0 0.0
    %5019 = vmatpush2.msra.mxu0 0.0
    %5020 = vmatprep.subr.mxu0 0.0
    %5021 = vmatpush2.msra.mxu0 0.0
    %5022 = vmatprep.subr.mxu0 0.0
    %5023 = vmatpush2.msra.mxu0 0.0
    %5024 = vmatprep.subr.mxu0 0.0
    %5025 = vmatpush2.msra.mxu0 0.0
    %5026 = vmatprep.subr.mxu0 0.0
    %5027 = vmatpush2.msra.mxu0 0.0
    %5028 = vmatprep.subr.mxu0 0.0
    %5029 = vmatpush2.msra.mxu0 0.0
    %5030 = vmatprep.subr.mxu0 0.0
    %5031 = vmatpush2.msra.mxu0 0.0
    %5032 = vmatprep.subr.mxu0 0.0
    %5033 = vmatpush2.msra.mxu0 0.0
    %5034 = vmatprep.mubr.f32.mxu0 0.0
    %5035 = vmatmul.mubr.f32.gmra.mxu0 %v4043
    %v5036 = vpop.f32.mrf.mxu0
    %v5037 = vadd.f32 %v3883, %v5036
    %v5038 = vpop.f32.mrf.mxu0
    %v5039 = vadd.f32 %v3885, %v5038
    %5040 = vmatprep.mubr.f32.mxu0 0.0
    %5041 = vmatmul.mubr.f32.gmra.mxu0 %v4046
    %v5042 = vpop.f32.mrf.mxu0
    %v5043 = vadd.f32 %v3889, %v5042
    %v5044 = vpop.f32.mrf.mxu0
    %v5045 = vadd.f32 %v3891, %v5044
    %5046 = vmatprep.mubr.f32.mxu0 0.0
    %5047 = vmatmul.mubr.f32.gmra.mxu0 %v4049
    %v5048 = vpop.f32.mrf.mxu0
    %v5049 = vadd.f32 %v3895, %v5048
    %v5050 = vpop.f32.mrf.mxu0
    %v5051 = vadd.f32 %v3897, %v5050
    %5052 = vmatprep.mubr.f32.mxu0 0.0
    %5053 = vmatmul.mubr.f32.gmra.mxu0 %v4052
    %v5054 = vpop.f32.mrf.mxu0
    %v5055 = vadd.f32 %v3901, %v5054
    %v5056 = vpop.f32.mrf.mxu0
    %v5057 = vadd.f32 %v3903, %v5056
    %5058 = vmatprep.mubr.f32.mxu0 0.0
    %5059 = vmatmul.mubr.f32.gmra.mxu0 %v4055
    %v5060 = vpop.f32.mrf.mxu0
    %v5061 = vadd.f32 %v3907, %v5060
    %v5062 = vpop.f32.mrf.mxu0
    %v5063 = vadd.f32 %v3909, %v5062
    %5064 = vmatprep.mubr.f32.mxu0 0.0
    %5065 = vmatmul.mubr.f32.gmra.mxu0 %v4058
    %v5066 = vpop.f32.mrf.mxu0
    %v5067 = vadd.f32 %v3913, %v5066
    %v5068 = vpop.f32.mrf.mxu0
    %v5069 = vadd.f32 %v3915, %v5068
    %5070 = vmatprep.mubr.f32.mxu0 0.0
    %5071 = vmatmul.mubr.f32.gmra.mxu0 %v4061
    %v5072 = vpop.f32.mrf.mxu0
    %v5073 = vadd.f32 %v3919, %v5072
    %v5074 = vpop.f32.mrf.mxu0
    %v5075 = vadd.f32 %v3921, %v5074
    %5076 = vmatprep.mubr.f32.mxu0 0.0
    %5077 = vmatmul.mubr.f32.gmra.mxu0 %v4064
    %v5078 = vpop.f32.mrf.mxu0
    %v5079 = vadd.f32 %v3925, %v5078
    %v5080 = vpop.f32.mrf.mxu0
    %v5081 = vadd.f32 %v3927, %v5080
    %5082 = vdwg.mxu0
    %5083 = vmatprep.subr.mxu0 0.0
    %5084 = vmatpush1.msra.mxu0 0.0
    %5085 = vmatprep.subr.mxu0 0.0
    %5086 = vmatpush1.msra.mxu0 0.0
    %5087 = vmatprep.subr.mxu0 0.0
    %5088 = vmatpush1.msra.mxu0 0.0
    %5089 = vmatprep.subr.mxu0 0.0
    %5090 = vmatpush1.msra.mxu0 0.0
    %5091 = vmatprep.subr.mxu0 0.0
    %5092 = vmatpush1.msra.mxu0 0.0
    %5093 = vmatprep.subr.mxu0 0.0
    %5094 = vmatpush1.msra.mxu0 0.0
    %5095 = vmatprep.subr.mxu0 0.0
    %5096 = vmatpush1.msra.mxu0 0.0
    %5097 = vmatprep.subr.mxu0 0.0
    %5098 = vmatpush1.msra.mxu0 0.0
    %5099 = vmatprep.subr.mxu0 0.0
    %5100 = vmatpush1.msra.mxu0 0.0
    %5101 = vmatprep.subr.mxu0 0.0
    %5102 = vmatpush1.msra.mxu0 0.0
    %5103 = vmatprep.subr.mxu0 0.0
    %5104 = vmatpush1.msra.mxu0 0.0
    %5105 = vmatprep.subr.mxu0 0.0
    %5106 = vmatpush1.msra.mxu0 0.0
    %5107 = vmatprep.subr.mxu0 %v2868
    %5108 = vmatpush1.msra.mxu0 %v2867
    %5109 = vmatprep.subr.mxu0 %v2848
    %5110 = vmatpush1.msra.mxu0 %v2847
    %5111 = vmatprep.subr.mxu0 %v2828
    %5112 = vmatpush1.msra.mxu0 %v2827
    %5113 = vmatprep.subr.mxu0 %v2808
    %5114 = vmatpush1.msra.mxu0 %v2807
    %5115 = vmatprep.subr.mxu0 0.0
    %5116 = vmatpush2.msra.mxu0 0.0
    %5117 = vmatprep.subr.mxu0 0.0
    %5118 = vmatpush2.msra.mxu0 0.0
    %5119 = vmatprep.subr.mxu0 0.0
    %5120 = vmatpush2.msra.mxu0 0.0
    %5121 = vmatprep.subr.mxu0 0.0
    %5122 = vmatpush2.msra.mxu0 0.0
    %5123 = vmatprep.subr.mxu0 0.0
    %5124 = vmatpush2.msra.mxu0 0.0
    %5125 = vmatprep.subr.mxu0 0.0
    %5126 = vmatpush2.msra.mxu0 0.0
    %5127 = vmatprep.subr.mxu0 0.0
    %5128 = vmatpush2.msra.mxu0 0.0
    %5129 = vmatprep.subr.mxu0 0.0
    %5130 = vmatpush2.msra.mxu0 0.0
    %5131 = vmatprep.subr.mxu0 0.0
    %5132 = vmatpush2.msra.mxu0 0.0
    %5133 = vmatprep.subr.mxu0 0.0
    %5134 = vmatpush2.msra.mxu0 0.0
    %5135 = vmatprep.subr.mxu0 0.0
    %5136 = vmatpush2.msra.mxu0 0.0
    %5137 = vmatprep.subr.mxu0 0.0
    %5138 = vmatpush2.msra.mxu0 0.0
    %5139 = vmatprep.subr.mxu0 0.0
    %5140 = vmatpush2.msra.mxu0 0.0
    %5141 = vmatprep.subr.mxu0 0.0
    %5142 = vmatpush2.msra.mxu0 0.0
    %5143 = vmatprep.subr.mxu0 0.0
    %5144 = vmatpush2.msra.mxu0 0.0
    %5145 = vmatprep.subr.mxu0 0.0
    %5146 = vmatpush2.msra.mxu0 0.0
    %5147 = vmatprep.mubr.f32.mxu0 0.0
    %5148 = vmatmul.mubr.f32.gmra.mxu0 %v4043
    %v5149 = vpop.f32.mrf.mxu0
    %v5150 = vadd.f32 %v3996, %v5149
    %v5151 = vpop.f32.mrf.mxu0
    %v5152 = vadd.f32 %v3998, %v5151
    %5153 = vmatprep.mubr.f32.mxu0 0.0
    %5154 = vmatmul.mubr.f32.gmra.mxu0 %v4046
    %v5155 = vpop.f32.mrf.mxu0
    %v5156 = vadd.f32 %v4002, %v5155
    %v5157 = vpop.f32.mrf.mxu0
    %v5158 = vadd.f32 %v4004, %v5157
    %5159 = vmatprep.mubr.f32.mxu0 0.0
    %5160 = vmatmul.mubr.f32.gmra.mxu0 %v4049
    %v5161 = vpop.f32.mrf.mxu0
    %v5162 = vadd.f32 %v4008, %v5161
    %v5163 = vpop.f32.mrf.mxu0
    %v5164 = vadd.f32 %v4010, %v5163
    %5165 = vmatprep.mubr.f32.mxu0 0.0
    %5166 = vmatmul.mubr.f32.gmra.mxu0 %v4052
    %v5167 = vpop.f32.mrf.mxu0
    %v5168 = vadd.f32 %v4014, %v5167
    %v5169 = vpop.f32.mrf.mxu0
    %v5170 = vadd.f32 %v4016, %v5169
    %5171 = vmatprep.mubr.f32.mxu0 0.0
    %5172 = vmatmul.mubr.f32.gmra.mxu0 %v4055
    %v5173 = vpop.f32.mrf.mxu0
    %v5174 = vadd.f32 %v4020, %v5173
    %v5175 = vpop.f32.mrf.mxu0
    %v5176 = vadd.f32 %v4022, %v5175
    %5177 = vmatprep.mubr.f32.mxu0 0.0
    %5178 = vmatmul.mubr.f32.gmra.mxu0 %v4058
    %v5179 = vpop.f32.mrf.mxu0
    %v5180 = vadd.f32 %v4026, %v5179
    %v5181 = vpop.f32.mrf.mxu0
    %v5182 = vadd.f32 %v4028, %v5181
    %5183 = vmatprep.mubr.f32.mxu0 0.0
    %5184 = vmatmul.mubr.f32.gmra.mxu0 %v4061
    %v5185 = vpop.f32.mrf.mxu0
    %v5186 = vadd.f32 %v4032, %v5185
    %v5187 = vpop.f32.mrf.mxu0
    %v5188 = vadd.f32 %v4034, %v5187
    %5189 = vmatprep.mubr.f32.mxu0 0.0
    %5190 = vmatmul.mubr.f32.gmra.mxu0 %v4064
    %v5191 = vpop.f32.mrf.mxu0
    %v5192 = vadd.f32 %v4038, %v5191
    %v5193 = vpop.f32.mrf.mxu0
    %v5194 = vadd.f32 %v4040, %v5193
    %5195 = vdwg.mxu0
    %s5196 = scalar_lea.vmem %s3, 128
    %v5197 = vld [vmem:[%s5196] sm:$0xff]
    %v5198 = vld [vmem:[%s5196 + $0x8] sm:$0xff]
    %v5199 = vld [vmem:[%s5196 + $0x10] sm:$0xff]
    %v5200 = vld [vmem:[%s5196 + $0x18] sm:$0xff]
    %v5201 = vld [vmem:[%s5196 + $0x20] sm:$0xff]
    %v5202 = vld [vmem:[%s5196 + $0x28] sm:$0xff]
    %v5203 = vld [vmem:[%s5196 + $0x30] sm:$0xff]
    %v5204 = vld [vmem:[%s5196 + $0x38] sm:$0xff]
    %v5206 = vsel %vm2887, %v5197, 0
    %v5209 = vsel %vm2887, %v5198, 0
    %v5212 = vsel %vm2887, %v5199, 0
    %v5215 = vsel %vm2887, %v5200, 0
    %v5218 = vsel %vm2887, %v5201, 0
    %v5221 = vsel %vm2887, %v5202, 0
    %v5224 = vsel %vm2887, %v5203, 0
    %v5227 = vsel %vm2887, %v5204, 0
    %5229 = vmatprep.subr.mxu0 0.0
    %5230 = vmatpush1.msra.mxu0 0.0
    %5231 = vmatprep.subr.mxu0 0.0
    %5232 = vmatpush1.msra.mxu0 0.0
    %5233 = vmatprep.subr.mxu0 0.0
    %5234 = vmatpush1.msra.mxu0 0.0
    %5235 = vmatprep.subr.mxu0 0.0
    %5236 = vmatpush1.msra.mxu0 0.0
    %5237 = vmatprep.subr.mxu0 0.0
    %5238 = vmatpush1.msra.mxu0 0.0
    %5239 = vmatprep.subr.mxu0 0.0
    %5240 = vmatpush1.msra.mxu0 0.0
    %5241 = vmatprep.subr.mxu0 0.0
    %5242 = vmatpush1.msra.mxu0 0.0
    %5243 = vmatprep.subr.mxu0 0.0
    %5244 = vmatpush1.msra.mxu0 0.0
    %5245 = vmatprep.subr.mxu0 0.0
    %5246 = vmatpush1.msra.mxu0 0.0
    %5247 = vmatprep.subr.mxu0 0.0
    %5248 = vmatpush1.msra.mxu0 0.0
    %5249 = vmatprep.subr.mxu0 0.0
    %5250 = vmatpush1.msra.mxu0 0.0
    %5251 = vmatprep.subr.mxu0 0.0
    %5252 = vmatpush1.msra.mxu0 0.0
    %5253 = vmatprep.subr.mxu0 %v2852
    %5254 = vmatpush1.msra.mxu0 %v2851
    %5255 = vmatprep.subr.mxu0 %v2832
    %5256 = vmatpush1.msra.mxu0 %v2831
    %5257 = vmatprep.subr.mxu0 %v2812
    %5258 = vmatpush1.msra.mxu0 %v2811
    %5259 = vmatprep.subr.mxu0 %v2792
    %5260 = vmatpush1.msra.mxu0 %v2791
    %5261 = vmatprep.subr.mxu0 0.0
    %5262 = vmatpush2.msra.mxu0 0.0
    %5263 = vmatprep.subr.mxu0 0.0
    %5264 = vmatpush2.msra.mxu0 0.0
    %5265 = vmatprep.subr.mxu0 0.0
    %5266 = vmatpush2.msra.mxu0 0.0
    %5267 = vmatprep.subr.mxu0 0.0
    %5268 = vmatpush2.msra.mxu0 0.0
    %5269 = vmatprep.subr.mxu0 0.0
    %5270 = vmatpush2.msra.mxu0 0.0
    %5271 = vmatprep.subr.mxu0 0.0
    %5272 = vmatpush2.msra.mxu0 0.0
    %5273 = vmatprep.subr.mxu0 0.0
    %5274 = vmatpush2.msra.mxu0 0.0
    %5275 = vmatprep.subr.mxu0 0.0
    %5276 = vmatpush2.msra.mxu0 0.0
    %5277 = vmatprep.subr.mxu0 0.0
    %5278 = vmatpush2.msra.mxu0 0.0
    %5279 = vmatprep.subr.mxu0 0.0
    %5280 = vmatpush2.msra.mxu0 0.0
    %5281 = vmatprep.subr.mxu0 0.0
    %5282 = vmatpush2.msra.mxu0 0.0
    %5283 = vmatprep.subr.mxu0 0.0
    %5284 = vmatpush2.msra.mxu0 0.0
    %5285 = vmatprep.subr.mxu0 0.0
    %5286 = vmatpush2.msra.mxu0 0.0
    %5287 = vmatprep.subr.mxu0 0.0
    %5288 = vmatpush2.msra.mxu0 0.0
    %5289 = vmatprep.subr.mxu0 0.0
    %5290 = vmatpush2.msra.mxu0 0.0
    %5291 = vmatprep.subr.mxu0 0.0
    %5292 = vmatpush2.msra.mxu0 0.0
    %5293 = vmatprep.mubr.f32.mxu0 0.0
    %5294 = vmatmul.mubr.f32.gmra.mxu0 %v5206
    %v5295 = vpop.f32.mrf.mxu0
    %v5296 = vadd.f32 0.0, %v5295
    %v5297 = vpop.f32.mrf.mxu0
    %v5298 = vadd.f32 0.0, %v5297
    %5299 = vmatprep.mubr.f32.mxu0 0.0
    %5300 = vmatmul.mubr.f32.gmra.mxu0 %v5209
    %v5301 = vpop.f32.mrf.mxu0
    %v5302 = vadd.f32 0.0, %v5301
    %v5303 = vpop.f32.mrf.mxu0
    %v5304 = vadd.f32 0.0, %v5303
    %5305 = vmatprep.mubr.f32.mxu0 0.0
    %5306 = vmatmul.mubr.f32.gmra.mxu0 %v5212
    %v5307 = vpop.f32.mrf.mxu0
    %v5308 = vadd.f32 0.0, %v5307
    %v5309 = vpop.f32.mrf.mxu0
    %v5310 = vadd.f32 0.0, %v5309
    %5311 = vmatprep.mubr.f32.mxu0 0.0
    %5312 = vmatmul.mubr.f32.gmra.mxu0 %v5215
    %v5313 = vpop.f32.mrf.mxu0
    %v5314 = vadd.f32 0.0, %v5313
    %v5315 = vpop.f32.mrf.mxu0
    %v5316 = vadd.f32 0.0, %v5315
    %5317 = vmatprep.mubr.f32.mxu0 0.0
    %5318 = vmatmul.mubr.f32.gmra.mxu0 %v5218
    %v5319 = vpop.f32.mrf.mxu0
    %v5320 = vadd.f32 0.0, %v5319
    %v5321 = vpop.f32.mrf.mxu0
    %v5322 = vadd.f32 0.0, %v5321
    %5323 = vmatprep.mubr.f32.mxu0 0.0
    %5324 = vmatmul.mubr.f32.gmra.mxu0 %v5221
    %v5325 = vpop.f32.mrf.mxu0
    %v5326 = vadd.f32 0.0, %v5325
    %v5327 = vpop.f32.mrf.mxu0
    %v5328 = vadd.f32 0.0, %v5327
    %5329 = vmatprep.mubr.f32.mxu0 0.0
    %5330 = vmatmul.mubr.f32.gmra.mxu0 %v5224
    %v5331 = vpop.f32.mrf.mxu0
    %v5332 = vadd.f32 0.0, %v5331
    %v5333 = vpop.f32.mrf.mxu0
    %v5334 = vadd.f32 0.0, %v5333
    %5335 = vmatprep.mubr.f32.mxu0 0.0
    %5336 = vmatmul.mubr.f32.gmra.mxu0 %v5227
    %v5337 = vpop.f32.mrf.mxu0
    %v5338 = vadd.f32 0.0, %v5337
    %v5339 = vpop.f32.mrf.mxu0
    %v5340 = vadd.f32 0.0, %v5339
    %5341 = vdwg.mxu0
    %5342 = vmatprep.subr.mxu0 0.0
    %5343 = vmatpush1.msra.mxu0 0.0
    %5344 = vmatprep.subr.mxu0 0.0
    %5345 = vmatpush1.msra.mxu0 0.0
    %5346 = vmatprep.subr.mxu0 0.0
    %5347 = vmatpush1.msra.mxu0 0.0
    %5348 = vmatprep.subr.mxu0 0.0
    %5349 = vmatpush1.msra.mxu0 0.0
    %5350 = vmatprep.subr.mxu0 0.0
    %5351 = vmatpush1.msra.mxu0 0.0
    %5352 = vmatprep.subr.mxu0 0.0
    %5353 = vmatpush1.msra.mxu0 0.0
    %5354 = vmatprep.subr.mxu0 0.0
    %5355 = vmatpush1.msra.mxu0 0.0
    %5356 = vmatprep.subr.mxu0 0.0
    %5357 = vmatpush1.msra.mxu0 0.0
    %5358 = vmatprep.subr.mxu0 0.0
    %5359 = vmatpush1.msra.mxu0 0.0
    %5360 = vmatprep.subr.mxu0 0.0
    %5361 = vmatpush1.msra.mxu0 0.0
    %5362 = vmatprep.subr.mxu0 0.0
    %5363 = vmatpush1.msra.mxu0 0.0
    %5364 = vmatprep.subr.mxu0 0.0
    %5365 = vmatpush1.msra.mxu0 0.0
    %5366 = vmatprep.subr.mxu0 %v2854
    %5367 = vmatpush1.msra.mxu0 %v2853
    %5368 = vmatprep.subr.mxu0 %v2834
    %5369 = vmatpush1.msra.mxu0 %v2833
    %5370 = vmatprep.subr.mxu0 %v2814
    %5371 = vmatpush1.msra.mxu0 %v2813
    %5372 = vmatprep.subr.mxu0 %v2794
    %5373 = vmatpush1.msra.mxu0 %v2793
    %5374 = vmatprep.subr.mxu0 0.0
    %5375 = vmatpush2.msra.mxu0 0.0
    %5376 = vmatprep.subr.mxu0 0.0
    %5377 = vmatpush2.msra.mxu0 0.0
    %5378 = vmatprep.subr.mxu0 0.0
    %5379 = vmatpush2.msra.mxu0 0.0
    %5380 = vmatprep.subr.mxu0 0.0
    %5381 = vmatpush2.msra.mxu0 0.0
    %5382 = vmatprep.subr.mxu0 0.0
    %5383 = vmatpush2.msra.mxu0 0.0
    %5384 = vmatprep.subr.mxu0 0.0
    %5385 = vmatpush2.msra.mxu0 0.0
    %5386 = vmatprep.subr.mxu0 0.0
    %5387 = vmatpush2.msra.mxu0 0.0
    %5388 = vmatprep.subr.mxu0 0.0
    %5389 = vmatpush2.msra.mxu0 0.0
    %5390 = vmatprep.subr.mxu0 0.0
    %5391 = vmatpush2.msra.mxu0 0.0
    %5392 = vmatprep.subr.mxu0 0.0
    %5393 = vmatpush2.msra.mxu0 0.0
    %5394 = vmatprep.subr.mxu0 0.0
    %5395 = vmatpush2.msra.mxu0 0.0
    %5396 = vmatprep.subr.mxu0 0.0
    %5397 = vmatpush2.msra.mxu0 0.0
    %5398 = vmatprep.subr.mxu0 0.0
    %5399 = vmatpush2.msra.mxu0 0.0
    %5400 = vmatprep.subr.mxu0 0.0
    %5401 = vmatpush2.msra.mxu0 0.0
    %5402 = vmatprep.subr.mxu0 0.0
    %5403 = vmatpush2.msra.mxu0 0.0
    %5404 = vmatprep.subr.mxu0 0.0
    %5405 = vmatpush2.msra.mxu0 0.0
    %5406 = vmatprep.mubr.f32.mxu0 0.0
    %5407 = vmatmul.mubr.f32.gmra.mxu0 %v5206
    %v5408 = vpop.f32.mrf.mxu0
    %v5409 = vadd.f32 0.0, %v5408
    %v5410 = vpop.f32.mrf.mxu0
    %v5411 = vadd.f32 0.0, %v5410
    %5412 = vmatprep.mubr.f32.mxu0 0.0
    %5413 = vmatmul.mubr.f32.gmra.mxu0 %v5209
    %v5414 = vpop.f32.mrf.mxu0
    %v5415 = vadd.f32 0.0, %v5414
    %v5416 = vpop.f32.mrf.mxu0
    %v5417 = vadd.f32 0.0, %v5416
    %5418 = vmatprep.mubr.f32.mxu0 0.0
    %5419 = vmatmul.mubr.f32.gmra.mxu0 %v5212
    %v5420 = vpop.f32.mrf.mxu0
    %v5421 = vadd.f32 0.0, %v5420
    %v5422 = vpop.f32.mrf.mxu0
    %v5423 = vadd.f32 0.0, %v5422
    %5424 = vmatprep.mubr.f32.mxu0 0.0
    %5425 = vmatmul.mubr.f32.gmra.mxu0 %v5215
    %v5426 = vpop.f32.mrf.mxu0
    %v5427 = vadd.f32 0.0, %v5426
    %v5428 = vpop.f32.mrf.mxu0
    %v5429 = vadd.f32 0.0, %v5428
    %5430 = vmatprep.mubr.f32.mxu0 0.0
    %5431 = vmatmul.mubr.f32.gmra.mxu0 %v5218
    %v5432 = vpop.f32.mrf.mxu0
    %v5433 = vadd.f32 0.0, %v5432
    %v5434 = vpop.f32.mrf.mxu0
    %v5435 = vadd.f32 0.0, %v5434
    %5436 = vmatprep.mubr.f32.mxu0 0.0
    %5437 = vmatmul.mubr.f32.gmra.mxu0 %v5221
    %v5438 = vpop.f32.mrf.mxu0
    %v5439 = vadd.f32 0.0, %v5438
    %v5440 = vpop.f32.mrf.mxu0
    %v5441 = vadd.f32 0.0, %v5440
    %5442 = vmatprep.mubr.f32.mxu0 0.0
    %5443 = vmatmul.mubr.f32.gmra.mxu0 %v5224
    %v5444 = vpop.f32.mrf.mxu0
    %v5445 = vadd.f32 0.0, %v5444
    %v5446 = vpop.f32.mrf.mxu0
    %v5447 = vadd.f32 0.0, %v5446
    %5448 = vmatprep.mubr.f32.mxu0 0.0
    %5449 = vmatmul.mubr.f32.gmra.mxu0 %v5227
    %v5450 = vpop.f32.mrf.mxu0
    %v5451 = vadd.f32 0.0, %v5450
    %v5452 = vpop.f32.mrf.mxu0
    %v5453 = vadd.f32 0.0, %v5452
    %5454 = vdwg.mxu0
    %5455 = vmatprep.subr.mxu0 0.0
    %5456 = vmatpush1.msra.mxu0 0.0
    %5457 = vmatprep.subr.mxu0 0.0
    %5458 = vmatpush1.msra.mxu0 0.0
    %5459 = vmatprep.subr.mxu0 0.0
    %5460 = vmatpush1.msra.mxu0 0.0
    %5461 = vmatprep.subr.mxu0 0.0
    %5462 = vmatpush1.msra.mxu0 0.0
    %5463 = vmatprep.subr.mxu0 0.0
    %5464 = vmatpush1.msra.mxu0 0.0
    %5465 = vmatprep.subr.mxu0 0.0
    %5466 = vmatpush1.msra.mxu0 0.0
    %5467 = vmatprep.subr.mxu0 0.0
    %5468 = vmatpush1.msra.mxu0 0.0
    %5469 = vmatprep.subr.mxu0 0.0
    %5470 = vmatpush1.msra.mxu0 0.0
    %5471 = vmatprep.subr.mxu0 0.0
    %5472 = vmatpush1.msra.mxu0 0.0
    %5473 = vmatprep.subr.mxu0 0.0
    %5474 = vmatpush1.msra.mxu0 0.0
    %5475 = vmatprep.subr.mxu0 0.0
    %5476 = vmatpush1.msra.mxu0 0.0
    %5477 = vmatprep.subr.mxu0 0.0
    %5478 = vmatpush1.msra.mxu0 0.0
    %5479 = vmatprep.subr.mxu0 %v2856
    %5480 = vmatpush1.msra.mxu0 %v2855
    %5481 = vmatprep.subr.mxu0 %v2836
    %5482 = vmatpush1.msra.mxu0 %v2835
    %5483 = vmatprep.subr.mxu0 %v2816
    %5484 = vmatpush1.msra.mxu0 %v2815
    %5485 = vmatprep.subr.mxu0 %v2796
    %5486 = vmatpush1.msra.mxu0 %v2795
    %5487 = vmatprep.subr.mxu0 0.0
    %5488 = vmatpush2.msra.mxu0 0.0
    %5489 = vmatprep.subr.mxu0 0.0
    %5490 = vmatpush2.msra.mxu0 0.0
    %5491 = vmatprep.subr.mxu0 0.0
    %5492 = vmatpush2.msra.mxu0 0.0
    %5493 = vmatprep.subr.mxu0 0.0
    %5494 = vmatpush2.msra.mxu0 0.0
    %5495 = vmatprep.subr.mxu0 0.0
    %5496 = vmatpush2.msra.mxu0 0.0
    %5497 = vmatprep.subr.mxu0 0.0
    %5498 = vmatpush2.msra.mxu0 0.0
    %5499 = vmatprep.subr.mxu0 0.0
    %5500 = vmatpush2.msra.mxu0 0.0
    %5501 = vmatprep.subr.mxu0 0.0
    %5502 = vmatpush2.msra.mxu0 0.0
    %5503 = vmatprep.subr.mxu0 0.0
    %5504 = vmatpush2.msra.mxu0 0.0
    %5505 = vmatprep.subr.mxu0 0.0
    %5506 = vmatpush2.msra.mxu0 0.0
    %5507 = vmatprep.subr.mxu0 0.0
    %5508 = vmatpush2.msra.mxu0 0.0
    %5509 = vmatprep.subr.mxu0 0.0
    %5510 = vmatpush2.msra.mxu0 0.0
    %5511 = vmatprep.subr.mxu0 0.0
    %5512 = vmatpush2.msra.mxu0 0.0
    %5513 = vmatprep.subr.mxu0 0.0
    %5514 = vmatpush2.msra.mxu0 0.0
    %5515 = vmatprep.subr.mxu0 0.0
    %5516 = vmatpush2.msra.mxu0 0.0
    %5517 = vmatprep.subr.mxu0 0.0
    %5518 = vmatpush2.msra.mxu0 0.0
    %5519 = vmatprep.mubr.f32.mxu0 0.0
    %5520 = vmatmul.mubr.f32.gmra.mxu0 %v5206
    %v5521 = vpop.f32.mrf.mxu0
    %v5522 = vadd.f32 0.0, %v5521
    %v5523 = vpop.f32.mrf.mxu0
    %v5524 = vadd.f32 0.0, %v5523
    %5525 = vmatprep.mubr.f32.mxu0 0.0
    %5526 = vmatmul.mubr.f32.gmra.mxu0 %v5209
    %v5527 = vpop.f32.mrf.mxu0
    %v5528 = vadd.f32 0.0, %v5527
    %v5529 = vpop.f32.mrf.mxu0
    %v5530 = vadd.f32 0.0, %v5529
    %5531 = vmatprep.mubr.f32.mxu0 0.0
    %5532 = vmatmul.mubr.f32.gmra.mxu0 %v5212
    %v5533 = vpop.f32.mrf.mxu0
    %v5534 = vadd.f32 0.0, %v5533
    %v5535 = vpop.f32.mrf.mxu0
    %v5536 = vadd.f32 0.0, %v5535
    %5537 = vmatprep.mubr.f32.mxu0 0.0
    %5538 = vmatmul.mubr.f32.gmra.mxu0 %v5215
    %v5539 = vpop.f32.mrf.mxu0
    %v5540 = vadd.f32 0.0, %v5539
    %v5541 = vpop.f32.mrf.mxu0
    %v5542 = vadd.f32 0.0, %v5541
    %5543 = vmatprep.mubr.f32.mxu0 0.0
    %5544 = vmatmul.mubr.f32.gmra.mxu0 %v5218
    %v5545 = vpop.f32.mrf.mxu0
    %v5546 = vadd.f32 0.0, %v5545
    %v5547 = vpop.f32.mrf.mxu0
    %v5548 = vadd.f32 0.0, %v5547
    %5549 = vmatprep.mubr.f32.mxu0 0.0
    %5550 = vmatmul.mubr.f32.gmra.mxu0 %v5221
    %v5551 = vpop.f32.mrf.mxu0
    %v5552 = vadd.f32 0.0, %v5551
    %v5553 = vpop.f32.mrf.mxu0
    %v5554 = vadd.f32 0.0, %v5553
    %5555 = vmatprep.mubr.f32.mxu0 0.0
    %5556 = vmatmul.mubr.f32.gmra.mxu0 %v5224
    %v5557 = vpop.f32.mrf.mxu0
    %v5558 = vadd.f32 0.0, %v5557
    %v5559 = vpop.f32.mrf.mxu0
    %v5560 = vadd.f32 0.0, %v5559
    %5561 = vmatprep.mubr.f32.mxu0 0.0
    %5562 = vmatmul.mubr.f32.gmra.mxu0 %v5227
    %v5563 = vpop.f32.mrf.mxu0
    %v5564 = vadd.f32 0.0, %v5563
    %v5565 = vpop.f32.mrf.mxu0
    %v5566 = vadd.f32 0.0, %v5565
    %5567 = vdwg.mxu0
    %5568 = vmatprep.subr.mxu0 0.0
    %5569 = vmatpush1.msra.mxu0 0.0
    %5570 = vmatprep.subr.mxu0 0.0
    %5571 = vmatpush1.msra.mxu0 0.0
    %5572 = vmatprep.subr.mxu0 0.0
    %5573 = vmatpush1.msra.mxu0 0.0
    %5574 = vmatprep.subr.mxu0 0.0
    %5575 = vmatpush1.msra.mxu0 0.0
    %5576 = vmatprep.subr.mxu0 0.0
    %5577 = vmatpush1.msra.mxu0 0.0
    %5578 = vmatprep.subr.mxu0 0.0
    %5579 = vmatpush1.msra.mxu0 0.0
    %5580 = vmatprep.subr.mxu0 0.0
    %5581 = vmatpush1.msra.mxu0 0.0
    %5582 = vmatprep.subr.mxu0 0.0
    %5583 = vmatpush1.msra.mxu0 0.0
    %5584 = vmatprep.subr.mxu0 0.0
    %5585 = vmatpush1.msra.mxu0 0.0
    %5586 = vmatprep.subr.mxu0 0.0
    %5587 = vmatpush1.msra.mxu0 0.0
    %5588 = vmatprep.subr.mxu0 0.0
    %5589 = vmatpush1.msra.mxu0 0.0
    %5590 = vmatprep.subr.mxu0 0.0
    %5591 = vmatpush1.msra.mxu0 0.0
    %5592 = vmatprep.subr.mxu0 %v2858
    %5593 = vmatpush1.msra.mxu0 %v2857
    %5594 = vmatprep.subr.mxu0 %v2838
    %5595 = vmatpush1.msra.mxu0 %v2837
    %5596 = vmatprep.subr.mxu0 %v2818
    %5597 = vmatpush1.msra.mxu0 %v2817
    %5598 = vmatprep.subr.mxu0 %v2798
    %5599 = vmatpush1.msra.mxu0 %v2797
    %5600 = vmatprep.subr.mxu0 0.0
    %5601 = vmatpush2.msra.mxu0 0.0
    %5602 = vmatprep.subr.mxu0 0.0
    %5603 = vmatpush2.msra.mxu0 0.0
    %5604 = vmatprep.subr.mxu0 0.0
    %5605 = vmatpush2.msra.mxu0 0.0
    %5606 = vmatprep.subr.mxu0 0.0
    %5607 = vmatpush2.msra.mxu0 0.0
    %5608 = vmatprep.subr.mxu0 0.0
    %5609 = vmatpush2.msra.mxu0 0.0
    %5610 = vmatprep.subr.mxu0 0.0
    %5611 = vmatpush2.msra.mxu0 0.0
    %5612 = vmatprep.subr.mxu0 0.0
    %5613 = vmatpush2.msra.mxu0 0.0
    %5614 = vmatprep.subr.mxu0 0.0
    %5615 = vmatpush2.msra.mxu0 0.0
    %5616 = vmatprep.subr.mxu0 0.0
    %5617 = vmatpush2.msra.mxu0 0.0
    %5618 = vmatprep.subr.mxu0 0.0
    %5619 = vmatpush2.msra.mxu0 0.0
    %5620 = vmatprep.subr.mxu0 0.0
    %5621 = vmatpush2.msra.mxu0 0.0
    %5622 = vmatprep.subr.mxu0 0.0
    %5623 = vmatpush2.msra.mxu0 0.0
    %5624 = vmatprep.subr.mxu0 0.0
    %5625 = vmatpush2.msra.mxu0 0.0
    %5626 = vmatprep.subr.mxu0 0.0
    %5627 = vmatpush2.msra.mxu0 0.0
    %5628 = vmatprep.subr.mxu0 0.0
    %5629 = vmatpush2.msra.mxu0 0.0
    %5630 = vmatprep.subr.mxu0 0.0
    %5631 = vmatpush2.msra.mxu0 0.0
    %5632 = vmatprep.mubr.f32.mxu0 0.0
    %5633 = vmatmul.mubr.f32.gmra.mxu0 %v5206
    %v5634 = vpop.f32.mrf.mxu0
    %v5635 = vadd.f32 0.0, %v5634
    %v5636 = vpop.f32.mrf.mxu0
    %v5637 = vadd.f32 0.0, %v5636
    %5638 = vmatprep.mubr.f32.mxu0 0.0
    %5639 = vmatmul.mubr.f32.gmra.mxu0 %v5209
    %v5640 = vpop.f32.mrf.mxu0
    %v5641 = vadd.f32 0.0, %v5640
    %v5642 = vpop.f32.mrf.mxu0
    %v5643 = vadd.f32 0.0, %v5642
    %5644 = vmatprep.mubr.f32.mxu0 0.0
    %5645 = vmatmul.mubr.f32.gmra.mxu0 %v5212
    %v5646 = vpop.f32.mrf.mxu0
    %v5647 = vadd.f32 0.0, %v5646
    %v5648 = vpop.f32.mrf.mxu0
    %v5649 = vadd.f32 0.0, %v5648
    %5650 = vmatprep.mubr.f32.mxu0 0.0
    %5651 = vmatmul.mubr.f32.gmra.mxu0 %v5215
    %v5652 = vpop.f32.mrf.mxu0
    %v5653 = vadd.f32 0.0, %v5652
    %v5654 = vpop.f32.mrf.mxu0
    %v5655 = vadd.f32 0.0, %v5654
    %5656 = vmatprep.mubr.f32.mxu0 0.0
    %5657 = vmatmul.mubr.f32.gmra.mxu0 %v5218
    %v5658 = vpop.f32.mrf.mxu0
    %v5659 = vadd.f32 0.0, %v5658
    %v5660 = vpop.f32.mrf.mxu0
    %v5661 = vadd.f32 0.0, %v5660
    %5662 = vmatprep.mubr.f32.mxu0 0.0
    %5663 = vmatmul.mubr.f32.gmra.mxu0 %v5221
    %v5664 = vpop.f32.mrf.mxu0
    %v5665 = vadd.f32 0.0, %v5664
    %v5666 = vpop.f32.mrf.mxu0
    %v5667 = vadd.f32 0.0, %v5666
    %5668 = vmatprep.mubr.f32.mxu0 0.0
    %5669 = vmatmul.mubr.f32.gmra.mxu0 %v5224
    %v5670 = vpop.f32.mrf.mxu0
    %v5671 = vadd.f32 0.0, %v5670
    %v5672 = vpop.f32.mrf.mxu0
    %v5673 = vadd.f32 0.0, %v5672
    %5674 = vmatprep.mubr.f32.mxu0 0.0
    %5675 = vmatmul.mubr.f32.gmra.mxu0 %v5227
    %v5676 = vpop.f32.mrf.mxu0
    %v5677 = vadd.f32 0.0, %v5676
    %v5678 = vpop.f32.mrf.mxu0
    %v5679 = vadd.f32 0.0, %v5678
    %5680 = vdwg.mxu0
    %5681 = vmatprep.subr.mxu0 0.0
    %5682 = vmatpush1.msra.mxu0 0.0
    %5683 = vmatprep.subr.mxu0 0.0
    %5684 = vmatpush1.msra.mxu0 0.0
    %5685 = vmatprep.subr.mxu0 0.0
    %5686 = vmatpush1.msra.mxu0 0.0
    %5687 = vmatprep.subr.mxu0 0.0
    %5688 = vmatpush1.msra.mxu0 0.0
    %5689 = vmatprep.subr.mxu0 0.0
    %5690 = vmatpush1.msra.mxu0 0.0
    %5691 = vmatprep.subr.mxu0 0.0
    %5692 = vmatpush1.msra.mxu0 0.0
    %5693 = vmatprep.subr.mxu0 0.0
    %5694 = vmatpush1.msra.mxu0 0.0
    %5695 = vmatprep.subr.mxu0 0.0
    %5696 = vmatpush1.msra.mxu0 0.0
    %5697 = vmatprep.subr.mxu0 0.0
    %5698 = vmatpush1.msra.mxu0 0.0
    %5699 = vmatprep.subr.mxu0 0.0
    %5700 = vmatpush1.msra.mxu0 0.0
    %5701 = vmatprep.subr.mxu0 0.0
    %5702 = vmatpush1.msra.mxu0 0.0
    %5703 = vmatprep.subr.mxu0 0.0
    %5704 = vmatpush1.msra.mxu0 0.0
    %5705 = vmatprep.subr.mxu0 %v2860
    %5706 = vmatpush1.msra.mxu0 %v2859
    %5707 = vmatprep.subr.mxu0 %v2840
    %5708 = vmatpush1.msra.mxu0 %v2839
    %5709 = vmatprep.subr.mxu0 %v2820
    %5710 = vmatpush1.msra.mxu0 %v2819
    %5711 = vmatprep.subr.mxu0 %v2800
    %5712 = vmatpush1.msra.mxu0 %v2799
    %5713 = vmatprep.subr.mxu0 0.0
    %5714 = vmatpush2.msra.mxu0 0.0
    %5715 = vmatprep.subr.mxu0 0.0
    %5716 = vmatpush2.msra.mxu0 0.0
    %5717 = vmatprep.subr.mxu0 0.0
    %5718 = vmatpush2.msra.mxu0 0.0
    %5719 = vmatprep.subr.mxu0 0.0
    %5720 = vmatpush2.msra.mxu0 0.0
    %5721 = vmatprep.subr.mxu0 0.0
    %5722 = vmatpush2.msra.mxu0 0.0
    %5723 = vmatprep.subr.mxu0 0.0
    %5724 = vmatpush2.msra.mxu0 0.0
    %5725 = vmatprep.subr.mxu0 0.0
    %5726 = vmatpush2.msra.mxu0 0.0
    %5727 = vmatprep.subr.mxu0 0.0
    %5728 = vmatpush2.msra.mxu0 0.0
    %5729 = vmatprep.subr.mxu0 0.0
    %5730 = vmatpush2.msra.mxu0 0.0
    %5731 = vmatprep.subr.mxu0 0.0
    %5732 = vmatpush2.msra.mxu0 0.0
    %5733 = vmatprep.subr.mxu0 0.0
    %5734 = vmatpush2.msra.mxu0 0.0
    %5735 = vmatprep.subr.mxu0 0.0
    %5736 = vmatpush2.msra.mxu0 0.0
    %5737 = vmatprep.subr.mxu0 0.0
    %5738 = vmatpush2.msra.mxu0 0.0
    %5739 = vmatprep.subr.mxu0 0.0
    %5740 = vmatpush2.msra.mxu0 0.0
    %5741 = vmatprep.subr.mxu0 0.0
    %5742 = vmatpush2.msra.mxu0 0.0
    %5743 = vmatprep.subr.mxu0 0.0
    %5744 = vmatpush2.msra.mxu0 0.0
    %5745 = vmatprep.mubr.f32.mxu0 0.0
    %5746 = vmatmul.mubr.f32.gmra.mxu0 %v5206
    %v5747 = vpop.f32.mrf.mxu0
    %v5748 = vadd.f32 0.0, %v5747
    %v5749 = vpop.f32.mrf.mxu0
    %v5750 = vadd.f32 0.0, %v5749
    %5751 = vmatprep.mubr.f32.mxu0 0.0
    %5752 = vmatmul.mubr.f32.gmra.mxu0 %v5209
    %v5753 = vpop.f32.mrf.mxu0
    %v5754 = vadd.f32 0.0, %v5753
    %v5755 = vpop.f32.mrf.mxu0
    %v5756 = vadd.f32 0.0, %v5755
    %5757 = vmatprep.mubr.f32.mxu0 0.0
    %5758 = vmatmul.mubr.f32.gmra.mxu0 %v5212
    %v5759 = vpop.f32.mrf.mxu0
    %v5760 = vadd.f32 0.0, %v5759
    %v5761 = vpop.f32.mrf.mxu0
    %v5762 = vadd.f32 0.0, %v5761
    %5763 = vmatprep.mubr.f32.mxu0 0.0
    %5764 = vmatmul.mubr.f32.gmra.mxu0 %v5215
    %v5765 = vpop.f32.mrf.mxu0
    %v5766 = vadd.f32 0.0, %v5765
    %v5767 = vpop.f32.mrf.mxu0
    %v5768 = vadd.f32 0.0, %v5767
    %5769 = vmatprep.mubr.f32.mxu0 0.0
    %5770 = vmatmul.mubr.f32.gmra.mxu0 %v5218
    %v5771 = vpop.f32.mrf.mxu0
    %v5772 = vadd.f32 0.0, %v5771
    %v5773 = vpop.f32.mrf.mxu0
    %v5774 = vadd.f32 0.0, %v5773
    %5775 = vmatprep.mubr.f32.mxu0 0.0
    %5776 = vmatmul.mubr.f32.gmra.mxu0 %v5221
    %v5777 = vpop.f32.mrf.mxu0
    %v5778 = vadd.f32 0.0, %v5777
    %v5779 = vpop.f32.mrf.mxu0
    %v5780 = vadd.f32 0.0, %v5779
    %5781 = vmatprep.mubr.f32.mxu0 0.0
    %5782 = vmatmul.mubr.f32.gmra.mxu0 %v5224
    %v5783 = vpop.f32.mrf.mxu0
    %v5784 = vadd.f32 0.0, %v5783
    %v5785 = vpop.f32.mrf.mxu0
    %v5786 = vadd.f32 0.0, %v5785
    %5787 = vmatprep.mubr.f32.mxu0 0.0
    %5788 = vmatmul.mubr.f32.gmra.mxu0 %v5227
    %v5789 = vpop.f32.mrf.mxu0
    %v5790 = vadd.f32 0.0, %v5789
    %v5791 = vpop.f32.mrf.mxu0
    %v5792 = vadd.f32 0.0, %v5791
    %5793 = vdwg.mxu0
    %5794 = vmatprep.subr.mxu0 0.0
    %5795 = vmatpush1.msra.mxu0 0.0
    %5796 = vmatprep.subr.mxu0 0.0
    %5797 = vmatpush1.msra.mxu0 0.0
    %5798 = vmatprep.subr.mxu0 0.0
    %5799 = vmatpush1.msra.mxu0 0.0
    %5800 = vmatprep.subr.mxu0 0.0
    %5801 = vmatpush1.msra.mxu0 0.0
    %5802 = vmatprep.subr.mxu0 0.0
    %5803 = vmatpush1.msra.mxu0 0.0
    %5804 = vmatprep.subr.mxu0 0.0
    %5805 = vmatpush1.msra.mxu0 0.0
    %5806 = vmatprep.subr.mxu0 0.0
    %5807 = vmatpush1.msra.mxu0 0.0
    %5808 = vmatprep.subr.mxu0 0.0
    %5809 = vmatpush1.msra.mxu0 0.0
    %5810 = vmatprep.subr.mxu0 0.0
    %5811 = vmatpush1.msra.mxu0 0.0
    %5812 = vmatprep.subr.mxu0 0.0
    %5813 = vmatpush1.msra.mxu0 0.0
    %5814 = vmatprep.subr.mxu0 0.0
    %5815 = vmatpush1.msra.mxu0 0.0
    %5816 = vmatprep.subr.mxu0 0.0
    %5817 = vmatpush1.msra.mxu0 0.0
    %5818 = vmatprep.subr.mxu0 %v2862
    %5819 = vmatpush1.msra.mxu0 %v2861
    %5820 = vmatprep.subr.mxu0 %v2842
    %5821 = vmatpush1.msra.mxu0 %v2841
    %5822 = vmatprep.subr.mxu0 %v2822
    %5823 = vmatpush1.msra.mxu0 %v2821
    %5824 = vmatprep.subr.mxu0 %v2802
    %5825 = vmatpush1.msra.mxu0 %v2801
    %5826 = vmatprep.subr.mxu0 0.0
    %5827 = vmatpush2.msra.mxu0 0.0
    %5828 = vmatprep.subr.mxu0 0.0
    %5829 = vmatpush2.msra.mxu0 0.0
    %5830 = vmatprep.subr.mxu0 0.0
    %5831 = vmatpush2.msra.mxu0 0.0
    %5832 = vmatprep.subr.mxu0 0.0
    %5833 = vmatpush2.msra.mxu0 0.0
    %5834 = vmatprep.subr.mxu0 0.0
    %5835 = vmatpush2.msra.mxu0 0.0
    %5836 = vmatprep.subr.mxu0 0.0
    %5837 = vmatpush2.msra.mxu0 0.0
    %5838 = vmatprep.subr.mxu0 0.0
    %5839 = vmatpush2.msra.mxu0 0.0
    %5840 = vmatprep.subr.mxu0 0.0
    %5841 = vmatpush2.msra.mxu0 0.0
    %5842 = vmatprep.subr.mxu0 0.0
    %5843 = vmatpush2.msra.mxu0 0.0
    %5844 = vmatprep.subr.mxu0 0.0
    %5845 = vmatpush2.msra.mxu0 0.0
    %5846 = vmatprep.subr.mxu0 0.0
    %5847 = vmatpush2.msra.mxu0 0.0
    %5848 = vmatprep.subr.mxu0 0.0
    %5849 = vmatpush2.msra.mxu0 0.0
    %5850 = vmatprep.subr.mxu0 0.0
    %5851 = vmatpush2.msra.mxu0 0.0
    %5852 = vmatprep.subr.mxu0 0.0
    %5853 = vmatpush2.msra.mxu0 0.0
    %5854 = vmatprep.subr.mxu0 0.0
    %5855 = vmatpush2.msra.mxu0 0.0
    %5856 = vmatprep.subr.mxu0 0.0
    %5857 = vmatpush2.msra.mxu0 0.0
    %5858 = vmatprep.mubr.f32.mxu0 0.0
    %5859 = vmatmul.mubr.f32.gmra.mxu0 %v5206
    %v5860 = vpop.f32.mrf.mxu0
    %v5861 = vadd.f32 0.0, %v5860
    %v5862 = vpop.f32.mrf.mxu0
    %v5863 = vadd.f32 0.0, %v5862
    %5864 = vmatprep.mubr.f32.mxu0 0.0
    %5865 = vmatmul.mubr.f32.gmra.mxu0 %v5209
    %v5866 = vpop.f32.mrf.mxu0
    %v5867 = vadd.f32 0.0, %v5866
    %v5868 = vpop.f32.mrf.mxu0
    %v5869 = vadd.f32 0.0, %v5868
    %5870 = vmatprep.mubr.f32.mxu0 0.0
    %5871 = vmatmul.mubr.f32.gmra.mxu0 %v5212
    %v5872 = vpop.f32.mrf.mxu0
    %v5873 = vadd.f32 0.0, %v5872
    %v5874 = vpop.f32.mrf.mxu0
    %v5875 = vadd.f32 0.0, %v5874
    %5876 = vmatprep.mubr.f32.mxu0 0.0
    %5877 = vmatmul.mubr.f32.gmra.mxu0 %v5215
    %v5878 = vpop.f32.mrf.mxu0
    %v5879 = vadd.f32 0.0, %v5878
    %v5880 = vpop.f32.mrf.mxu0
    %v5881 = vadd.f32 0.0, %v5880
    %5882 = vmatprep.mubr.f32.mxu0 0.0
    %5883 = vmatmul.mubr.f32.gmra.mxu0 %v5218
    %v5884 = vpop.f32.mrf.mxu0
    %v5885 = vadd.f32 0.0, %v5884
    %v5886 = vpop.f32.mrf.mxu0
    %v5887 = vadd.f32 0.0, %v5886
    %5888 = vmatprep.mubr.f32.mxu0 0.0
    %5889 = vmatmul.mubr.f32.gmra.mxu0 %v5221
    %v5890 = vpop.f32.mrf.mxu0
    %v5891 = vadd.f32 0.0, %v5890
    %v5892 = vpop.f32.mrf.mxu0
    %v5893 = vadd.f32 0.0, %v5892
    %5894 = vmatprep.mubr.f32.mxu0 0.0
    %5895 = vmatmul.mubr.f32.gmra.mxu0 %v5224
    %v5896 = vpop.f32.mrf.mxu0
    %v5897 = vadd.f32 0.0, %v5896
    %v5898 = vpop.f32.mrf.mxu0
    %v5899 = vadd.f32 0.0, %v5898
    %5900 = vmatprep.mubr.f32.mxu0 0.0
    %5901 = vmatmul.mubr.f32.gmra.mxu0 %v5227
    %v5902 = vpop.f32.mrf.mxu0
    %v5903 = vadd.f32 0.0, %v5902
    %v5904 = vpop.f32.mrf.mxu0
    %v5905 = vadd.f32 0.0, %v5904
    %5906 = vdwg.mxu0
    %5907 = vmatprep.subr.mxu0 0.0
    %5908 = vmatpush1.msra.mxu0 0.0
    %5909 = vmatprep.subr.mxu0 0.0
    %5910 = vmatpush1.msra.mxu0 0.0
    %5911 = vmatprep.subr.mxu0 0.0
    %5912 = vmatpush1.msra.mxu0 0.0
    %5913 = vmatprep.subr.mxu0 0.0
    %5914 = vmatpush1.msra.mxu0 0.0
    %5915 = vmatprep.subr.mxu0 0.0
    %5916 = vmatpush1.msra.mxu0 0.0
    %5917 = vmatprep.subr.mxu0 0.0
    %5918 = vmatpush1.msra.mxu0 0.0
    %5919 = vmatprep.subr.mxu0 0.0
    %5920 = vmatpush1.msra.mxu0 0.0
    %5921 = vmatprep.subr.mxu0 0.0
    %5922 = vmatpush1.msra.mxu0 0.0
    %5923 = vmatprep.subr.mxu0 0.0
    %5924 = vmatpush1.msra.mxu0 0.0
    %5925 = vmatprep.subr.mxu0 0.0
    %5926 = vmatpush1.msra.mxu0 0.0
    %5927 = vmatprep.subr.mxu0 0.0
    %5928 = vmatpush1.msra.mxu0 0.0
    %5929 = vmatprep.subr.mxu0 0.0
    %5930 = vmatpush1.msra.mxu0 0.0
    %5931 = vmatprep.subr.mxu0 %v2864
    %5932 = vmatpush1.msra.mxu0 %v2863
    %5933 = vmatprep.subr.mxu0 %v2844
    %5934 = vmatpush1.msra.mxu0 %v2843
    %5935 = vmatprep.subr.mxu0 %v2824
    %5936 = vmatpush1.msra.mxu0 %v2823
    %5937 = vmatprep.subr.mxu0 %v2804
    %5938 = vmatpush1.msra.mxu0 %v2803
    %5939 = vmatprep.subr.mxu0 0.0
    %5940 = vmatpush2.msra.mxu0 0.0
    %5941 = vmatprep.subr.mxu0 0.0
    %5942 = vmatpush2.msra.mxu0 0.0
    %5943 = vmatprep.subr.mxu0 0.0
    %5944 = vmatpush2.msra.mxu0 0.0
    %5945 = vmatprep.subr.mxu0 0.0
    %5946 = vmatpush2.msra.mxu0 0.0
    %5947 = vmatprep.subr.mxu0 0.0
    %5948 = vmatpush2.msra.mxu0 0.0
    %5949 = vmatprep.subr.mxu0 0.0
    %5950 = vmatpush2.msra.mxu0 0.0
    %5951 = vmatprep.subr.mxu0 0.0
    %5952 = vmatpush2.msra.mxu0 0.0
    %5953 = vmatprep.subr.mxu0 0.0
    %5954 = vmatpush2.msra.mxu0 0.0
    %5955 = vmatprep.subr.mxu0 0.0
    %5956 = vmatpush2.msra.mxu0 0.0
    %5957 = vmatprep.subr.mxu0 0.0
    %5958 = vmatpush2.msra.mxu0 0.0
    %5959 = vmatprep.subr.mxu0 0.0
    %5960 = vmatpush2.msra.mxu0 0.0
    %5961 = vmatprep.subr.mxu0 0.0
    %5962 = vmatpush2.msra.mxu0 0.0
    %5963 = vmatprep.subr.mxu0 0.0
    %5964 = vmatpush2.msra.mxu0 0.0
    %5965 = vmatprep.subr.mxu0 0.0
    %5966 = vmatpush2.msra.mxu0 0.0
    %5967 = vmatprep.subr.mxu0 0.0
    %5968 = vmatpush2.msra.mxu0 0.0
    %5969 = vmatprep.subr.mxu0 0.0
    %5970 = vmatpush2.msra.mxu0 0.0
    %5971 = vmatprep.mubr.f32.mxu0 0.0
    %5972 = vmatmul.mubr.f32.gmra.mxu0 %v5206
    %v5973 = vpop.f32.mrf.mxu0
    %v5974 = vadd.f32 0.0, %v5973
    %v5975 = vpop.f32.mrf.mxu0
    %v5976 = vadd.f32 0.0, %v5975
    %5977 = vmatprep.mubr.f32.mxu0 0.0
    %5978 = vmatmul.mubr.f32.gmra.mxu0 %v5209
    %v5979 = vpop.f32.mrf.mxu0
    %v5980 = vadd.f32 0.0, %v5979
    %v5981 = vpop.f32.mrf.mxu0
    %v5982 = vadd.f32 0.0, %v5981
    %5983 = vmatprep.mubr.f32.mxu0 0.0
    %5984 = vmatmul.mubr.f32.gmra.mxu0 %v5212
    %v5985 = vpop.f32.mrf.mxu0
    %v5986 = vadd.f32 0.0, %v5985
    %v5987 = vpop.f32.mrf.mxu0
    %v5988 = vadd.f32 0.0, %v5987
    %5989 = vmatprep.mubr.f32.mxu0 0.0
    %5990 = vmatmul.mubr.f32.gmra.mxu0 %v5215
    %v5991 = vpop.f32.mrf.mxu0
    %v5992 = vadd.f32 0.0, %v5991
    %v5993 = vpop.f32.mrf.mxu0
    %v5994 = vadd.f32 0.0, %v5993
    %5995 = vmatprep.mubr.f32.mxu0 0.0
    %5996 = vmatmul.mubr.f32.gmra.mxu0 %v5218
    %v5997 = vpop.f32.mrf.mxu0
    %v5998 = vadd.f32 0.0, %v5997
    %v5999 = vpop.f32.mrf.mxu0
    %v6000 = vadd.f32 0.0, %v5999
    %6001 = vmatprep.mubr.f32.mxu0 0.0
    %6002 = vmatmul.mubr.f32.gmra.mxu0 %v5221
    %v6003 = vpop.f32.mrf.mxu0
    %v6004 = vadd.f32 0.0, %v6003
    %v6005 = vpop.f32.mrf.mxu0
    %v6006 = vadd.f32 0.0, %v6005
    %6007 = vmatprep.mubr.f32.mxu0 0.0
    %6008 = vmatmul.mubr.f32.gmra.mxu0 %v5224
    %v6009 = vpop.f32.mrf.mxu0
    %v6010 = vadd.f32 0.0, %v6009
    %v6011 = vpop.f32.mrf.mxu0
    %v6012 = vadd.f32 0.0, %v6011
    %6013 = vmatprep.mubr.f32.mxu0 0.0
    %6014 = vmatmul.mubr.f32.gmra.mxu0 %v5227
    %v6015 = vpop.f32.mrf.mxu0
    %v6016 = vadd.f32 0.0, %v6015
    %v6017 = vpop.f32.mrf.mxu0
    %v6018 = vadd.f32 0.0, %v6017
    %6019 = vdwg.mxu0
    %6020 = vmatprep.subr.mxu0 0.0
    %6021 = vmatpush1.msra.mxu0 0.0
    %6022 = vmatprep.subr.mxu0 0.0
    %6023 = vmatpush1.msra.mxu0 0.0
    %6024 = vmatprep.subr.mxu0 0.0
    %6025 = vmatpush1.msra.mxu0 0.0
    %6026 = vmatprep.subr.mxu0 0.0
    %6027 = vmatpush1.msra.mxu0 0.0
    %6028 = vmatprep.subr.mxu0 0.0
    %6029 = vmatpush1.msra.mxu0 0.0
    %6030 = vmatprep.subr.mxu0 0.0
    %6031 = vmatpush1.msra.mxu0 0.0
    %6032 = vmatprep.subr.mxu0 0.0
    %6033 = vmatpush1.msra.mxu0 0.0
    %6034 = vmatprep.subr.mxu0 0.0
    %6035 = vmatpush1.msra.mxu0 0.0
    %6036 = vmatprep.subr.mxu0 0.0
    %6037 = vmatpush1.msra.mxu0 0.0
    %6038 = vmatprep.subr.mxu0 0.0
    %6039 = vmatpush1.msra.mxu0 0.0
    %6040 = vmatprep.subr.mxu0 0.0
    %6041 = vmatpush1.msra.mxu0 0.0
    %6042 = vmatprep.subr.mxu0 0.0
    %6043 = vmatpush1.msra.mxu0 0.0
    %6044 = vmatprep.subr.mxu0 %v2866
    %6045 = vmatpush1.msra.mxu0 %v2865
    %6046 = vmatprep.subr.mxu0 %v2846
    %6047 = vmatpush1.msra.mxu0 %v2845
    %6048 = vmatprep.subr.mxu0 %v2826
    %6049 = vmatpush1.msra.mxu0 %v2825
    %6050 = vmatprep.subr.mxu0 %v2806
    %6051 = vmatpush1.msra.mxu0 %v2805
    %6052 = vmatprep.subr.mxu0 0.0
    %6053 = vmatpush2.msra.mxu0 0.0
    %6054 = vmatprep.subr.mxu0 0.0
    %6055 = vmatpush2.msra.mxu0 0.0
    %6056 = vmatprep.subr.mxu0 0.0
    %6057 = vmatpush2.msra.mxu0 0.0
    %6058 = vmatprep.subr.mxu0 0.0
    %6059 = vmatpush2.msra.mxu0 0.0
    %6060 = vmatprep.subr.mxu0 0.0
    %6061 = vmatpush2.msra.mxu0 0.0
    %6062 = vmatprep.subr.mxu0 0.0
    %6063 = vmatpush2.msra.mxu0 0.0
    %6064 = vmatprep.subr.mxu0 0.0
    %6065 = vmatpush2.msra.mxu0 0.0
    %6066 = vmatprep.subr.mxu0 0.0
    %6067 = vmatpush2.msra.mxu0 0.0
    %6068 = vmatprep.subr.mxu0 0.0
    %6069 = vmatpush2.msra.mxu0 0.0
    %6070 = vmatprep.subr.mxu0 0.0
    %6071 = vmatpush2.msra.mxu0 0.0
    %6072 = vmatprep.subr.mxu0 0.0
    %6073 = vmatpush2.msra.mxu0 0.0
    %6074 = vmatprep.subr.mxu0 0.0
    %6075 = vmatpush2.msra.mxu0 0.0
    %6076 = vmatprep.subr.mxu0 0.0
    %6077 = vmatpush2.msra.mxu0 0.0
    %6078 = vmatprep.subr.mxu0 0.0
    %6079 = vmatpush2.msra.mxu0 0.0
    %6080 = vmatprep.subr.mxu0 0.0
    %6081 = vmatpush2.msra.mxu0 0.0
    %6082 = vmatprep.subr.mxu0 0.0
    %6083 = vmatpush2.msra.mxu0 0.0
    %6084 = vmatprep.mubr.f32.mxu0 0.0
    %6085 = vmatmul.mubr.f32.gmra.mxu0 %v5206
    %v6086 = vpop.f32.mrf.mxu0
    %v6087 = vadd.f32 0.0, %v6086
    %v6088 = vpop.f32.mrf.mxu0
    %v6089 = vadd.f32 0.0, %v6088
    %6090 = vmatprep.mubr.f32.mxu0 0.0
    %6091 = vmatmul.mubr.f32.gmra.mxu0 %v5209
    %v6092 = vpop.f32.mrf.mxu0
    %v6093 = vadd.f32 0.0, %v6092
    %v6094 = vpop.f32.mrf.mxu0
    %v6095 = vadd.f32 0.0, %v6094
    %6096 = vmatprep.mubr.f32.mxu0 0.0
    %6097 = vmatmul.mubr.f32.gmra.mxu0 %v5212
    %v6098 = vpop.f32.mrf.mxu0
    %v6099 = vadd.f32 0.0, %v6098
    %v6100 = vpop.f32.mrf.mxu0
    %v6101 = vadd.f32 0.0, %v6100
    %6102 = vmatprep.mubr.f32.mxu0 0.0
    %6103 = vmatmul.mubr.f32.gmra.mxu0 %v5215
    %v6104 = vpop.f32.mrf.mxu0
    %v6105 = vadd.f32 0.0, %v6104
    %v6106 = vpop.f32.mrf.mxu0
    %v6107 = vadd.f32 0.0, %v6106
    %6108 = vmatprep.mubr.f32.mxu0 0.0
    %6109 = vmatmul.mubr.f32.gmra.mxu0 %v5218
    %v6110 = vpop.f32.mrf.mxu0
    %v6111 = vadd.f32 0.0, %v6110
    %v6112 = vpop.f32.mrf.mxu0
    %v6113 = vadd.f32 0.0, %v6112
    %6114 = vmatprep.mubr.f32.mxu0 0.0
    %6115 = vmatmul.mubr.f32.gmra.mxu0 %v5221
    %v6116 = vpop.f32.mrf.mxu0
    %v6117 = vadd.f32 0.0, %v6116
    %v6118 = vpop.f32.mrf.mxu0
    %v6119 = vadd.f32 0.0, %v6118
    %6120 = vmatprep.mubr.f32.mxu0 0.0
    %6121 = vmatmul.mubr.f32.gmra.mxu0 %v5224
    %v6122 = vpop.f32.mrf.mxu0
    %v6123 = vadd.f32 0.0, %v6122
    %v6124 = vpop.f32.mrf.mxu0
    %v6125 = vadd.f32 0.0, %v6124
    %6126 = vmatprep.mubr.f32.mxu0 0.0
    %6127 = vmatmul.mubr.f32.gmra.mxu0 %v5227
    %v6128 = vpop.f32.mrf.mxu0
    %v6129 = vadd.f32 0.0, %v6128
    %v6130 = vpop.f32.mrf.mxu0
    %v6131 = vadd.f32 0.0, %v6130
    %6132 = vdwg.mxu0
    %6133 = vmatprep.subr.mxu0 0.0
    %6134 = vmatpush1.msra.mxu0 0.0
    %6135 = vmatprep.subr.mxu0 0.0
    %6136 = vmatpush1.msra.mxu0 0.0
    %6137 = vmatprep.subr.mxu0 0.0
    %6138 = vmatpush1.msra.mxu0 0.0
    %6139 = vmatprep.subr.mxu0 0.0
    %6140 = vmatpush1.msra.mxu0 0.0
    %6141 = vmatprep.subr.mxu0 0.0
    %6142 = vmatpush1.msra.mxu0 0.0
    %6143 = vmatprep.subr.mxu0 0.0
    %6144 = vmatpush1.msra.mxu0 0.0
    %6145 = vmatprep.subr.mxu0 0.0
    %6146 = vmatpush1.msra.mxu0 0.0
    %6147 = vmatprep.subr.mxu0 0.0
    %6148 = vmatpush1.msra.mxu0 0.0
    %6149 = vmatprep.subr.mxu0 0.0
    %6150 = vmatpush1.msra.mxu0 0.0
    %6151 = vmatprep.subr.mxu0 0.0
    %6152 = vmatpush1.msra.mxu0 0.0
    %6153 = vmatprep.subr.mxu0 0.0
    %6154 = vmatpush1.msra.mxu0 0.0
    %6155 = vmatprep.subr.mxu0 0.0
    %6156 = vmatpush1.msra.mxu0 0.0
    %6157 = vmatprep.subr.mxu0 %v2868
    %6158 = vmatpush1.msra.mxu0 %v2867
    %6159 = vmatprep.subr.mxu0 %v2848
    %6160 = vmatpush1.msra.mxu0 %v2847
    %6161 = vmatprep.subr.mxu0 %v2828
    %6162 = vmatpush1.msra.mxu0 %v2827
    %6163 = vmatprep.subr.mxu0 %v2808
    %6164 = vmatpush1.msra.mxu0 %v2807
    %6165 = vmatprep.subr.mxu0 0.0
    %6166 = vmatpush2.msra.mxu0 0.0
    %6167 = vmatprep.subr.mxu0 0.0
    %6168 = vmatpush2.msra.mxu0 0.0
    %6169 = vmatprep.subr.mxu0 0.0
    %6170 = vmatpush2.msra.mxu0 0.0
    %6171 = vmatprep.subr.mxu0 0.0
    %6172 = vmatpush2.msra.mxu0 0.0
    %6173 = vmatprep.subr.mxu0 0.0
    %6174 = vmatpush2.msra.mxu0 0.0
    %6175 = vmatprep.subr.mxu0 0.0
    %6176 = vmatpush2.msra.mxu0 0.0
    %6177 = vmatprep.subr.mxu0 0.0
    %6178 = vmatpush2.msra.mxu0 0.0
    %6179 = vmatprep.subr.mxu0 0.0
    %6180 = vmatpush2.msra.mxu0 0.0
    %6181 = vmatprep.subr.mxu0 0.0
    %6182 = vmatpush2.msra.mxu0 0.0
    %6183 = vmatprep.subr.mxu0 0.0
    %6184 = vmatpush2.msra.mxu0 0.0
    %6185 = vmatprep.subr.mxu0 0.0
    %6186 = vmatpush2.msra.mxu0 0.0
    %6187 = vmatprep.subr.mxu0 0.0
    %6188 = vmatpush2.msra.mxu0 0.0
    %6189 = vmatprep.subr.mxu0 0.0
    %6190 = vmatpush2.msra.mxu0 0.0
    %6191 = vmatprep.subr.mxu0 0.0
    %6192 = vmatpush2.msra.mxu0 0.0
    %6193 = vmatprep.subr.mxu0 0.0
    %6194 = vmatpush2.msra.mxu0 0.0
    %6195 = vmatprep.subr.mxu0 0.0
    %6196 = vmatpush2.msra.mxu0 0.0
    %6197 = vmatprep.mubr.f32.mxu0 0.0
    %6198 = vmatmul.mubr.f32.gmra.mxu0 %v5206
    %v6199 = vpop.f32.mrf.mxu0
    %v6200 = vadd.f32 0.0, %v6199
    %v6201 = vpop.f32.mrf.mxu0
    %v6202 = vadd.f32 0.0, %v6201
    %6203 = vmatprep.mubr.f32.mxu0 0.0
    %6204 = vmatmul.mubr.f32.gmra.mxu0 %v5209
    %v6205 = vpop.f32.mrf.mxu0
    %v6206 = vadd.f32 0.0, %v6205
    %v6207 = vpop.f32.mrf.mxu0
    %v6208 = vadd.f32 0.0, %v6207
    %6209 = vmatprep.mubr.f32.mxu0 0.0
    %6210 = vmatmul.mubr.f32.gmra.mxu0 %v5212
    %v6211 = vpop.f32.mrf.mxu0
    %v6212 = vadd.f32 0.0, %v6211
    %v6213 = vpop.f32.mrf.mxu0
    %v6214 = vadd.f32 0.0, %v6213
    %6215 = vmatprep.mubr.f32.mxu0 0.0
    %6216 = vmatmul.mubr.f32.gmra.mxu0 %v5215
    %v6217 = vpop.f32.mrf.mxu0
    %v6218 = vadd.f32 0.0, %v6217
    %v6219 = vpop.f32.mrf.mxu0
    %v6220 = vadd.f32 0.0, %v6219
    %6221 = vmatprep.mubr.f32.mxu0 0.0
    %6222 = vmatmul.mubr.f32.gmra.mxu0 %v5218
    %v6223 = vpop.f32.mrf.mxu0
    %v6224 = vadd.f32 0.0, %v6223
    %v6225 = vpop.f32.mrf.mxu0
    %v6226 = vadd.f32 0.0, %v6225
    %6227 = vmatprep.mubr.f32.mxu0 0.0
    %6228 = vmatmul.mubr.f32.gmra.mxu0 %v5221
    %v6229 = vpop.f32.mrf.mxu0
    %v6230 = vadd.f32 0.0, %v6229
    %v6231 = vpop.f32.mrf.mxu0
    %v6232 = vadd.f32 0.0, %v6231
    %6233 = vmatprep.mubr.f32.mxu0 0.0
    %6234 = vmatmul.mubr.f32.gmra.mxu0 %v5224
    %v6235 = vpop.f32.mrf.mxu0
    %v6236 = vadd.f32 0.0, %v6235
    %v6237 = vpop.f32.mrf.mxu0
    %v6238 = vadd.f32 0.0, %v6237
    %6239 = vmatprep.mubr.f32.mxu0 0.0
    %6240 = vmatmul.mubr.f32.gmra.mxu0 %v5227
    %v6241 = vpop.f32.mrf.mxu0
    %v6242 = vadd.f32 0.0, %v6241
    %v6243 = vpop.f32.mrf.mxu0
    %v6244 = vadd.f32 0.0, %v6243
    %6245 = vdwg.mxu0
    %6246 = vmatprep.subr.mxu0 0.0
    %6247 = vmatpush1.msra.mxu0 0.0
    %6248 = vmatprep.subr.mxu0 0.0
    %6249 = vmatpush1.msra.mxu0 0.0
    %6250 = vmatprep.subr.mxu0 0.0
    %6251 = vmatpush1.msra.mxu0 0.0
    %6252 = vmatprep.subr.mxu0 0.0
    %6253 = vmatpush1.msra.mxu0 0.0
    %6254 = vmatprep.subr.mxu0 0.0
    %6255 = vmatpush1.msra.mxu0 0.0
    %6256 = vmatprep.subr.mxu0 0.0
    %6257 = vmatpush1.msra.mxu0 0.0
    %6258 = vmatprep.subr.mxu0 0.0
    %6259 = vmatpush1.msra.mxu0 0.0
    %6260 = vmatprep.subr.mxu0 0.0
    %6261 = vmatpush1.msra.mxu0 0.0
    %6262 = vmatprep.subr.mxu0 0.0
    %6263 = vmatpush1.msra.mxu0 0.0
    %6264 = vmatprep.subr.mxu0 0.0
    %6265 = vmatpush1.msra.mxu0 0.0
    %6266 = vmatprep.subr.mxu0 0.0
    %6267 = vmatpush1.msra.mxu0 0.0
    %6268 = vmatprep.subr.mxu0 0.0
    %6269 = vmatpush1.msra.mxu0 0.0
    %6270 = vmatprep.subr.mxu0 0.0
    %6271 = vmatpush1.msra.mxu0 %v2869
    %6272 = vmatprep.subr.mxu0 0.0
    %6273 = vmatpush1.msra.mxu0 %v2849
    %6274 = vmatprep.subr.mxu0 0.0
    %6275 = vmatpush1.msra.mxu0 %v2829
    %6276 = vmatprep.subr.mxu0 0.0
    %6277 = vmatpush1.msra.mxu0 %v2809
    %6278 = vmatprep.subr.mxu0 0.0
    %6279 = vmatpush2.msra.mxu0 0.0
    %6280 = vmatprep.subr.mxu0 0.0
    %6281 = vmatpush2.msra.mxu0 0.0
    %6282 = vmatprep.subr.mxu0 0.0
    %6283 = vmatpush2.msra.mxu0 0.0
    %6284 = vmatprep.subr.mxu0 0.0
    %6285 = vmatpush2.msra.mxu0 0.0
    %6286 = vmatprep.subr.mxu0 0.0
    %6287 = vmatpush2.msra.mxu0 0.0
    %6288 = vmatprep.subr.mxu0 0.0
    %6289 = vmatpush2.msra.mxu0 0.0
    %6290 = vmatprep.subr.mxu0 0.0
    %6291 = vmatpush2.msra.mxu0 0.0
    %6292 = vmatprep.subr.mxu0 0.0
    %6293 = vmatpush2.msra.mxu0 0.0
    %6294 = vmatprep.subr.mxu0 0.0
    %6295 = vmatpush2.msra.mxu0 0.0
    %6296 = vmatprep.subr.mxu0 0.0
    %6297 = vmatpush2.msra.mxu0 0.0
    %6298 = vmatprep.subr.mxu0 0.0
    %6299 = vmatpush2.msra.mxu0 0.0
    %6300 = vmatprep.subr.mxu0 0.0
    %6301 = vmatpush2.msra.mxu0 0.0
    %6302 = vmatprep.subr.mxu0 0.0
    %6303 = vmatpush2.msra.mxu0 0.0
    %6304 = vmatprep.subr.mxu0 0.0
    %6305 = vmatpush2.msra.mxu0 0.0
    %6306 = vmatprep.subr.mxu0 0.0
    %6307 = vmatpush2.msra.mxu0 0.0
    %6308 = vmatprep.subr.mxu0 0.0
    %6309 = vmatpush2.msra.mxu0 0.0
    %6310 = vmatprep.mubr.f32.mxu0 0.0
    %6311 = vmatmul.mubr.f32.gmra.mxu0 %v5206
    %v6312 = vpop.f32.mrf.mxu0
    %v6313 = vadd.f32 0.0, %v6312
    %v6314 = vpop.f32.mrf.mxu0
    %v6315 = vadd.f32 0.0, %v6314
    %6316 = vmatprep.mubr.f32.mxu0 0.0
    %6317 = vmatmul.mubr.f32.gmra.mxu0 %v5209
    %v6318 = vpop.f32.mrf.mxu0
    %v6319 = vadd.f32 0.0, %v6318
    %v6320 = vpop.f32.mrf.mxu0
    %v6321 = vadd.f32 0.0, %v6320
    %6322 = vmatprep.mubr.f32.mxu0 0.0
    %6323 = vmatmul.mubr.f32.gmra.mxu0 %v5212
    %v6324 = vpop.f32.mrf.mxu0
    %v6325 = vadd.f32 0.0, %v6324
    %v6326 = vpop.f32.mrf.mxu0
    %v6327 = vadd.f32 0.0, %v6326
    %6328 = vmatprep.mubr.f32.mxu0 0.0
    %6329 = vmatmul.mubr.f32.gmra.mxu0 %v5215
    %v6330 = vpop.f32.mrf.mxu0
    %v6331 = vadd.f32 0.0, %v6330
    %v6332 = vpop.f32.mrf.mxu0
    %v6333 = vadd.f32 0.0, %v6332
    %6334 = vmatprep.mubr.f32.mxu0 0.0
    %6335 = vmatmul.mubr.f32.gmra.mxu0 %v5218
    %v6336 = vpop.f32.mrf.mxu0
    %v6337 = vadd.f32 0.0, %v6336
    %v6338 = vpop.f32.mrf.mxu0
    %v6339 = vadd.f32 0.0, %v6338
    %6340 = vmatprep.mubr.f32.mxu0 0.0
    %6341 = vmatmul.mubr.f32.gmra.mxu0 %v5221
    %v6342 = vpop.f32.mrf.mxu0
    %v6343 = vadd.f32 0.0, %v6342
    %v6344 = vpop.f32.mrf.mxu0
    %v6345 = vadd.f32 0.0, %v6344
    %6346 = vmatprep.mubr.f32.mxu0 0.0
    %6347 = vmatmul.mubr.f32.gmra.mxu0 %v5224
    %v6348 = vpop.f32.mrf.mxu0
    %v6349 = vadd.f32 0.0, %v6348
    %v6350 = vpop.f32.mrf.mxu0
    %v6351 = vadd.f32 0.0, %v6350
    %6352 = vmatprep.mubr.f32.mxu0 0.0
    %6353 = vmatmul.mubr.f32.gmra.mxu0 %v5227
    %v6354 = vpop.f32.mrf.mxu0
    %v6355 = vadd.f32 0.0, %v6354
    %v6356 = vpop.f32.mrf.mxu0
    %v6357 = vadd.f32 0.0, %v6356
    %6358 = vdwg.mxu0
    %v6359 = vadd.f32 %v4133, %v5296
    %v6360 = vadd.f32 %v4135, %v5298
    %v6361 = vadd.f32 %v4246, %v5409
    %v6362 = vadd.f32 %v4248, %v5411
    %v6363 = vadd.f32 %v4359, %v5522
    %v6364 = vadd.f32 %v4361, %v5524
    %v6365 = vadd.f32 %v4472, %v5635
    %v6366 = vadd.f32 %v4474, %v5637
    %v6367 = vadd.f32 %v4585, %v5748
    %v6368 = vadd.f32 %v4587, %v5750
    %v6369 = vadd.f32 %v4698, %v5861
    %v6370 = vadd.f32 %v4700, %v5863
    %v6371 = vadd.f32 %v4811, %v5974
    %v6372 = vadd.f32 %v4813, %v5976
    %v6373 = vadd.f32 %v4924, %v6087
    %v6374 = vadd.f32 %v4926, %v6089
    %v6375 = vadd.f32 %v5037, %v6200
    %v6376 = vadd.f32 %v5039, %v6202
    %v6377 = vadd.f32 %v5150, %v6313
    %v6378 = vadd.f32 %v5152, %v6315
    %v6379 = vadd.f32 %v4139, %v5302
    %v6380 = vadd.f32 %v4141, %v5304
    %v6381 = vadd.f32 %v4252, %v5415
    %v6382 = vadd.f32 %v4254, %v5417
    %v6383 = vadd.f32 %v4365, %v5528
    %v6384 = vadd.f32 %v4367, %v5530
    %v6385 = vadd.f32 %v4478, %v5641
    %v6386 = vadd.f32 %v4480, %v5643
    %v6387 = vadd.f32 %v4591, %v5754
    %v6388 = vadd.f32 %v4593, %v5756
    %v6389 = vadd.f32 %v4704, %v5867
    %v6390 = vadd.f32 %v4706, %v5869
    %v6391 = vadd.f32 %v4817, %v5980
    %v6392 = vadd.f32 %v4819, %v5982
    %v6393 = vadd.f32 %v4930, %v6093
    %v6394 = vadd.f32 %v4932, %v6095
    %v6395 = vadd.f32 %v5043, %v6206
    %v6396 = vadd.f32 %v5045, %v6208
    %v6397 = vadd.f32 %v5156, %v6319
    %v6398 = vadd.f32 %v5158, %v6321
    %v6399 = vadd.f32 %v4145, %v5308
    %v6400 = vadd.f32 %v4147, %v5310
    %v6401 = vadd.f32 %v4258, %v5421
    %v6402 = vadd.f32 %v4260, %v5423
    %v6403 = vadd.f32 %v4371, %v5534
    %v6404 = vadd.f32 %v4373, %v5536
    %v6405 = vadd.f32 %v4484, %v5647
    %v6406 = vadd.f32 %v4486, %v5649
    %v6407 = vadd.f32 %v4597, %v5760
    %v6408 = vadd.f32 %v4599, %v5762
    %v6409 = vadd.f32 %v4710, %v5873
    %v6410 = vadd.f32 %v4712, %v5875
    %v6411 = vadd.f32 %v4823, %v5986
    %v6412 = vadd.f32 %v4825, %v5988
    %v6413 = vadd.f32 %v4936, %v6099
    %v6414 = vadd.f32 %v4938, %v6101
    %v6415 = vadd.f32 %v5049, %v6212
    %v6416 = vadd.f32 %v5051, %v6214
    %v6417 = vadd.f32 %v5162, %v6325
    %v6418 = vadd.f32 %v5164, %v6327
    %v6419 = vadd.f32 %v4151, %v5314
    %v6420 = vadd.f32 %v4153, %v5316
    %v6421 = vadd.f32 %v4264, %v5427
    %v6422 = vadd.f32 %v4266, %v5429
    %v6423 = vadd.f32 %v4377, %v5540
    %v6424 = vadd.f32 %v4379, %v5542
    %v6425 = vadd.f32 %v4490, %v5653
    %v6426 = vadd.f32 %v4492, %v5655
    %v6427 = vadd.f32 %v4603, %v5766
    %v6428 = vadd.f32 %v4605, %v5768
    %v6429 = vadd.f32 %v4716, %v5879
    %v6430 = vadd.f32 %v4718, %v5881
    %v6431 = vadd.f32 %v4829, %v5992
    %v6432 = vadd.f32 %v4831, %v5994
    %v6433 = vadd.f32 %v4942, %v6105
    %v6434 = vadd.f32 %v4944, %v6107
    %v6435 = vadd.f32 %v5055, %v6218
    %v6436 = vadd.f32 %v5057, %v6220
    %v6437 = vadd.f32 %v5168, %v6331
    %v6438 = vadd.f32 %v5170, %v6333
    %v6439 = vadd.f32 %v4157, %v5320
    %v6440 = vadd.f32 %v4159, %v5322
    %v6441 = vadd.f32 %v4270, %v5433
    %v6442 = vadd.f32 %v4272, %v5435
    %v6443 = vadd.f32 %v4383, %v5546
    %v6444 = vadd.f32 %v4385, %v5548
    %v6445 = vadd.f32 %v4496, %v5659
    %v6446 = vadd.f32 %v4498, %v5661
    %v6447 = vadd.f32 %v4609, %v5772
    %v6448 = vadd.f32 %v4611, %v5774
    %v6449 = vadd.f32 %v4722, %v5885
    %v6450 = vadd.f32 %v4724, %v5887
    %v6451 = vadd.f32 %v4835, %v5998
    %v6452 = vadd.f32 %v4837, %v6000
    %v6453 = vadd.f32 %v4948, %v6111
    %v6454 = vadd.f32 %v4950, %v6113
    %v6455 = vadd.f32 %v5061, %v6224
    %v6456 = vadd.f32 %v5063, %v6226
    %v6457 = vadd.f32 %v5174, %v6337
    %v6458 = vadd.f32 %v5176, %v6339
    %v6459 = vadd.f32 %v4163, %v5326
    %v6460 = vadd.f32 %v4165, %v5328
    %v6461 = vadd.f32 %v4276, %v5439
    %v6462 = vadd.f32 %v4278, %v5441
    %v6463 = vadd.f32 %v4389, %v5552
    %v6464 = vadd.f32 %v4391, %v5554
    %v6465 = vadd.f32 %v4502, %v5665
    %v6466 = vadd.f32 %v4504, %v5667
    %v6467 = vadd.f32 %v4615, %v5778
    %v6468 = vadd.f32 %v4617, %v5780
    %v6469 = vadd.f32 %v4728, %v5891
    %v6470 = vadd.f32 %v4730, %v5893
    %v6471 = vadd.f32 %v4841, %v6004
    %v6472 = vadd.f32 %v4843, %v6006
    %v6473 = vadd.f32 %v4954, %v6117
    %v6474 = vadd.f32 %v4956, %v6119
    %v6475 = vadd.f32 %v5067, %v6230
    %v6476 = vadd.f32 %v5069, %v6232
    %v6477 = vadd.f32 %v5180, %v6343
    %v6478 = vadd.f32 %v5182, %v6345
    %v6479 = vadd.f32 %v4169, %v5332
    %v6480 = vadd.f32 %v4171, %v5334
    %v6481 = vadd.f32 %v4282, %v5445
    %v6482 = vadd.f32 %v4284, %v5447
    %v6483 = vadd.f32 %v4395, %v5558
    %v6484 = vadd.f32 %v4397, %v5560
    %v6485 = vadd.f32 %v4508, %v5671
    %v6486 = vadd.f32 %v4510, %v5673
    %v6487 = vadd.f32 %v4621, %v5784
    %v6488 = vadd.f32 %v4623, %v5786
    %v6489 = vadd.f32 %v4734, %v5897
    %v6490 = vadd.f32 %v4736, %v5899
    %v6491 = vadd.f32 %v4847, %v6010
    %v6492 = vadd.f32 %v4849, %v6012
    %v6493 = vadd.f32 %v4960, %v6123
    %v6494 = vadd.f32 %v4962, %v6125
    %v6495 = vadd.f32 %v5073, %v6236
    %v6496 = vadd.f32 %v5075, %v6238
    %v6497 = vadd.f32 %v5186, %v6349
    %v6498 = vadd.f32 %v5188, %v6351
    %v6499 = vadd.f32 %v4175, %v5338
    %v6500 = vadd.f32 %v4177, %v5340
    %v6501 = vadd.f32 %v4288, %v5451
    %v6502 = vadd.f32 %v4290, %v5453
    %v6503 = vadd.f32 %v4401, %v5564
    %v6504 = vadd.f32 %v4403, %v5566
    %v6505 = vadd.f32 %v4514, %v5677
    %v6506 = vadd.f32 %v4516, %v5679
    %v6507 = vadd.f32 %v4627, %v5790
    %v6508 = vadd.f32 %v4629, %v5792
    %v6509 = vadd.f32 %v4740, %v5903
    %v6510 = vadd.f32 %v4742, %v5905
    %v6511 = vadd.f32 %v4853, %v6016
    %v6512 = vadd.f32 %v4855, %v6018
    %v6513 = vadd.f32 %v4966, %v6129
    %v6514 = vadd.f32 %v4968, %v6131
    %v6515 = vadd.f32 %v5079, %v6242
    %v6516 = vadd.f32 %v5081, %v6244
    %v6517 = vadd.f32 %v5192, %v6355
    %v6518 = vadd.f32 %v5194, %v6357
    %v6519 = vld [vmem:[%s4] sm:$0xff]
    %v6520 = vld [vmem:[%s4 + $0x8] sm:$0xff]
    %v6521 = vld [vmem:[%s4 + $0x10] sm:$0xff]
    %v6522 = vld [vmem:[%s4 + $0x18] sm:$0xff]
    %v6523 = vld [vmem:[%s4 + $0x20] sm:$0xff]
    %v6524 = vld [vmem:[%s4 + $0x28] sm:$0xff]
    %v6525 = vld [vmem:[%s4 + $0x30] sm:$0xff]
    %v6526 = vld [vmem:[%s4 + $0x38] sm:$0xff]
    %6528 = vset.pattern.permute.xlu0 0
    %6529 = vperm.xlu0 %6528, %v6519
    %v6530 = vpop.permute.xlu0 %6529
    %6533 = vset.pattern.permute.xlu0 0
    %6534 = vperm.xlu0 %6533, %v6520
    %v6535 = vpop.permute.xlu0 %6534
    %6538 = vset.pattern.permute.xlu0 0
    %6539 = vperm.xlu0 %6538, %v6521
    %v6540 = vpop.permute.xlu0 %6539
    %6543 = vset.pattern.permute.xlu0 0
    %6544 = vperm.xlu0 %6543, %v6522
    %v6545 = vpop.permute.xlu0 %6544
    %6548 = vset.pattern.permute.xlu0 0
    %6549 = vperm.xlu0 %6548, %v6523
    %v6550 = vpop.permute.xlu0 %6549
    %6553 = vset.pattern.permute.xlu0 0
    %6554 = vperm.xlu0 %6553, %v6524
    %v6555 = vpop.permute.xlu0 %6554
    %6558 = vset.pattern.permute.xlu0 0
    %6559 = vperm.xlu0 %6558, %v6525
    %v6560 = vpop.permute.xlu0 %6559
    %6563 = vset.pattern.permute.xlu0 0
    %6564 = vperm.xlu0 %6563, %v6526
    %v6565 = vpop.permute.xlu0 %6564
    %v6567 = vadd.f32 %v6359, %v6530
    %v6568 = vadd.f32 %v6360, %v6530
    %v6569 = vadd.f32 %v6361, %v6530
    %v6570 = vadd.f32 %v6362, %v6530
    %v6571 = vadd.f32 %v6363, %v6530
    %v6572 = vadd.f32 %v6364, %v6530
    %v6573 = vadd.f32 %v6365, %v6530
    %v6574 = vadd.f32 %v6366, %v6530
    %v6575 = vadd.f32 %v6367, %v6530
    %v6576 = vadd.f32 %v6368, %v6530
    %v6577 = vadd.f32 %v6369, %v6530
    %v6578 = vadd.f32 %v6370, %v6530
    %v6579 = vadd.f32 %v6371, %v6530
    %v6580 = vadd.f32 %v6372, %v6530
    %v6581 = vadd.f32 %v6373, %v6530
    %v6582 = vadd.f32 %v6374, %v6530
    %v6583 = vadd.f32 %v6375, %v6530
    %v6584 = vadd.f32 %v6376, %v6530
    %v6585 = vadd.f32 %v6377, %v6530
    %v6586 = vadd.f32 %v6378, %v6530
    %v6587 = vadd.f32 %v6379, %v6535
    %v6588 = vadd.f32 %v6380, %v6535
    %v6589 = vadd.f32 %v6381, %v6535
    %v6590 = vadd.f32 %v6382, %v6535
    %v6591 = vadd.f32 %v6383, %v6535
    %v6592 = vadd.f32 %v6384, %v6535
    %v6593 = vadd.f32 %v6385, %v6535
    %v6594 = vadd.f32 %v6386, %v6535
    %v6595 = vadd.f32 %v6387, %v6535
    %v6596 = vadd.f32 %v6388, %v6535
    %v6597 = vadd.f32 %v6389, %v6535
    %v6598 = vadd.f32 %v6390, %v6535
    %v6599 = vadd.f32 %v6391, %v6535
    %v6600 = vadd.f32 %v6392, %v6535
    %v6601 = vadd.f32 %v6393, %v6535
    %v6602 = vadd.f32 %v6394, %v6535
    %v6603 = vadd.f32 %v6395, %v6535
    %v6604 = vadd.f32 %v6396, %v6535
    %v6605 = vadd.f32 %v6397, %v6535
    %v6606 = vadd.f32 %v6398, %v6535
    %v6607 = vadd.f32 %v6399, %v6540
    %v6608 = vadd.f32 %v6400, %v6540
    %v6609 = vadd.f32 %v6401, %v6540
    %v6610 = vadd.f32 %v6402, %v6540
    %v6611 = vadd.f32 %v6403, %v6540
    %v6612 = vadd.f32 %v6404, %v6540
    %v6613 = vadd.f32 %v6405, %v6540
    %v6614 = vadd.f32 %v6406, %v6540
    %v6615 = vadd.f32 %v6407, %v6540
    %v6616 = vadd.f32 %v6408, %v6540
    %v6617 = vadd.f32 %v6409, %v6540
    %v6618 = vadd.f32 %v6410, %v6540
    %v6619 = vadd.f32 %v6411, %v6540
    %v6620 = vadd.f32 %v6412, %v6540
    %v6621 = vadd.f32 %v6413, %v6540
    %v6622 = vadd.f32 %v6414, %v6540
    %v6623 = vadd.f32 %v6415, %v6540
    %v6624 = vadd.f32 %v6416, %v6540
    %v6625 = vadd.f32 %v6417, %v6540
    %v6626 = vadd.f32 %v6418, %v6540
    %v6627 = vadd.f32 %v6419, %v6545
    %v6628 = vadd.f32 %v6420, %v6545
    %v6629 = vadd.f32 %v6421, %v6545
    %v6630 = vadd.f32 %v6422, %v6545
    %v6631 = vadd.f32 %v6423, %v6545
    %v6632 = vadd.f32 %v6424, %v6545
    %v6633 = vadd.f32 %v6425, %v6545
    %v6634 = vadd.f32 %v6426, %v6545
    %v6635 = vadd.f32 %v6427, %v6545
    %v6636 = vadd.f32 %v6428, %v6545
    %v6637 = vadd.f32 %v6429, %v6545
    %v6638 = vadd.f32 %v6430, %v6545
    %v6639 = vadd.f32 %v6431, %v6545
    %v6640 = vadd.f32 %v6432, %v6545
    %v6641 = vadd.f32 %v6433, %v6545
    %v6642 = vadd.f32 %v6434, %v6545
    %v6643 = vadd.f32 %v6435, %v6545
    %v6644 = vadd.f32 %v6436, %v6545
    %v6645 = vadd.f32 %v6437, %v6545
    %v6646 = vadd.f32 %v6438, %v6545
    %v6647 = vadd.f32 %v6439, %v6550
    %v6648 = vadd.f32 %v6440, %v6550
    %v6649 = vadd.f32 %v6441, %v6550
    %v6650 = vadd.f32 %v6442, %v6550
    %v6651 = vadd.f32 %v6443, %v6550
    %v6652 = vadd.f32 %v6444, %v6550
    %v6653 = vadd.f32 %v6445, %v6550
    %v6654 = vadd.f32 %v6446, %v6550
    %v6655 = vadd.f32 %v6447, %v6550
    %v6656 = vadd.f32 %v6448, %v6550
    %v6657 = vadd.f32 %v6449, %v6550
    %v6658 = vadd.f32 %v6450, %v6550
    %v6659 = vadd.f32 %v6451, %v6550
    %v6660 = vadd.f32 %v6452, %v6550
    %v6661 = vadd.f32 %v6453, %v6550
    %v6662 = vadd.f32 %v6454, %v6550
    %v6663 = vadd.f32 %v6455, %v6550
    %v6664 = vadd.f32 %v6456, %v6550
    %v6665 = vadd.f32 %v6457, %v6550
    %v6666 = vadd.f32 %v6458, %v6550
    %v6667 = vadd.f32 %v6459, %v6555
    %v6668 = vadd.f32 %v6460, %v6555
    %v6669 = vadd.f32 %v6461, %v6555
    %v6670 = vadd.f32 %v6462, %v6555
    %v6671 = vadd.f32 %v6463, %v6555
    %v6672 = vadd.f32 %v6464, %v6555
    %v6673 = vadd.f32 %v6465, %v6555
    %v6674 = vadd.f32 %v6466, %v6555
    %v6675 = vadd.f32 %v6467, %v6555
    %v6676 = vadd.f32 %v6468, %v6555
    %v6677 = vadd.f32 %v6469, %v6555
    %v6678 = vadd.f32 %v6470, %v6555
    %v6679 = vadd.f32 %v6471, %v6555
    %v6680 = vadd.f32 %v6472, %v6555
    %v6681 = vadd.f32 %v6473, %v6555
    %v6682 = vadd.f32 %v6474, %v6555
    %v6683 = vadd.f32 %v6475, %v6555
    %v6684 = vadd.f32 %v6476, %v6555
    %v6685 = vadd.f32 %v6477, %v6555
    %v6686 = vadd.f32 %v6478, %v6555
    %v6687 = vadd.f32 %v6479, %v6560
    %v6688 = vadd.f32 %v6480, %v6560
    %v6689 = vadd.f32 %v6481, %v6560
    %v6690 = vadd.f32 %v6482, %v6560
    %v6691 = vadd.f32 %v6483, %v6560
    %v6692 = vadd.f32 %v6484, %v6560
    %v6693 = vadd.f32 %v6485, %v6560
    %v6694 = vadd.f32 %v6486, %v6560
    %v6695 = vadd.f32 %v6487, %v6560
    %v6696 = vadd.f32 %v6488, %v6560
    %v6697 = vadd.f32 %v6489, %v6560
    %v6698 = vadd.f32 %v6490, %v6560
    %v6699 = vadd.f32 %v6491, %v6560
    %v6700 = vadd.f32 %v6492, %v6560
    %v6701 = vadd.f32 %v6493, %v6560
    %v6702 = vadd.f32 %v6494, %v6560
    %v6703 = vadd.f32 %v6495, %v6560
    %v6704 = vadd.f32 %v6496, %v6560
    %v6705 = vadd.f32 %v6497, %v6560
    %v6706 = vadd.f32 %v6498, %v6560
    %v6707 = vadd.f32 %v6499, %v6565
    %v6708 = vadd.f32 %v6500, %v6565
    %v6709 = vadd.f32 %v6501, %v6565
    %v6710 = vadd.f32 %v6502, %v6565
    %v6711 = vadd.f32 %v6503, %v6565
    %v6712 = vadd.f32 %v6504, %v6565
    %v6713 = vadd.f32 %v6505, %v6565
    %v6714 = vadd.f32 %v6506, %v6565
    %v6715 = vadd.f32 %v6507, %v6565
    %v6716 = vadd.f32 %v6508, %v6565
    %v6717 = vadd.f32 %v6509, %v6565
    %v6718 = vadd.f32 %v6510, %v6565
    %v6719 = vadd.f32 %v6511, %v6565
    %v6720 = vadd.f32 %v6512, %v6565
    %v6721 = vadd.f32 %v6513, %v6565
    %v6722 = vadd.f32 %v6514, %v6565
    %v6723 = vadd.f32 %v6515, %v6565
    %v6724 = vadd.f32 %v6516, %v6565
    %v6725 = vadd.f32 %v6517, %v6565
    %v6726 = vadd.f32 %v6518, %v6565
    %v6727 = vmax.f32 %v6567, 0.0
    %v6728 = vmax.f32 %v6568, 0.0
    %v6729 = vmax.f32 %v6569, 0.0
    %v6730 = vmax.f32 %v6570, 0.0
    %v6731 = vmax.f32 %v6571, 0.0
    %v6732 = vmax.f32 %v6572, 0.0
    %v6733 = vmax.f32 %v6573, 0.0
    %v6734 = vmax.f32 %v6574, 0.0
    %v6735 = vmax.f32 %v6575, 0.0
    %v6736 = vmax.f32 %v6576, 0.0
    %v6737 = vmax.f32 %v6577, 0.0
    %v6738 = vmax.f32 %v6578, 0.0
    %v6739 = vmax.f32 %v6579, 0.0
    %v6740 = vmax.f32 %v6580, 0.0
    %v6741 = vmax.f32 %v6581, 0.0
    %v6742 = vmax.f32 %v6582, 0.0
    %v6743 = vmax.f32 %v6583, 0.0
    %v6744 = vmax.f32 %v6584, 0.0
    %v6745 = vmax.f32 %v6585, 0.0
    %v6746 = vmax.f32 %v6586, 0.0
    %v6747 = vmax.f32 %v6587, 0.0
    %v6748 = vmax.f32 %v6588, 0.0
    %v6749 = vmax.f32 %v6589, 0.0
    %v6750 = vmax.f32 %v6590, 0.0
    %v6751 = vmax.f32 %v6591, 0.0
    %v6752 = vmax.f32 %v6592, 0.0
    %v6753 = vmax.f32 %v6593, 0.0
    %v6754 = vmax.f32 %v6594, 0.0
    %v6755 = vmax.f32 %v6595, 0.0
    %v6756 = vmax.f32 %v6596, 0.0
    %v6757 = vmax.f32 %v6597, 0.0
    %v6758 = vmax.f32 %v6598, 0.0
    %v6759 = vmax.f32 %v6599, 0.0
    %v6760 = vmax.f32 %v6600, 0.0
    %v6761 = vmax.f32 %v6601, 0.0
    %v6762 = vmax.f32 %v6602, 0.0
    %v6763 = vmax.f32 %v6603, 0.0
    %v6764 = vmax.f32 %v6604, 0.0
    %v6765 = vmax.f32 %v6605, 0.0
    %v6766 = vmax.f32 %v6606, 0.0
    %v6767 = vmax.f32 %v6607, 0.0
    %v6768 = vmax.f32 %v6608, 0.0
    %v6769 = vmax.f32 %v6609, 0.0
    %v6770 = vmax.f32 %v6610, 0.0
    %v6771 = vmax.f32 %v6611, 0.0
    %v6772 = vmax.f32 %v6612, 0.0
    %v6773 = vmax.f32 %v6613, 0.0
    %v6774 = vmax.f32 %v6614, 0.0
    %v6775 = vmax.f32 %v6615, 0.0
    %v6776 = vmax.f32 %v6616, 0.0
    %v6777 = vmax.f32 %v6617, 0.0
    %v6778 = vmax.f32 %v6618, 0.0
    %v6779 = vmax.f32 %v6619, 0.0
    %v6780 = vmax.f32 %v6620, 0.0
    %v6781 = vmax.f32 %v6621, 0.0
    %v6782 = vmax.f32 %v6622, 0.0
    %v6783 = vmax.f32 %v6623, 0.0
    %v6784 = vmax.f32 %v6624, 0.0
    %v6785 = vmax.f32 %v6625, 0.0
    %v6786 = vmax.f32 %v6626, 0.0
    %v6787 = vmax.f32 %v6627, 0.0
    %v6788 = vmax.f32 %v6628, 0.0
    %v6789 = vmax.f32 %v6629, 0.0
    %v6790 = vmax.f32 %v6630, 0.0
    %v6791 = vmax.f32 %v6631, 0.0
    %v6792 = vmax.f32 %v6632, 0.0
    %v6793 = vmax.f32 %v6633, 0.0
    %v6794 = vmax.f32 %v6634, 0.0
    %v6795 = vmax.f32 %v6635, 0.0
    %v6796 = vmax.f32 %v6636, 0.0
    %v6797 = vmax.f32 %v6637, 0.0
    %v6798 = vmax.f32 %v6638, 0.0
    %v6799 = vmax.f32 %v6639, 0.0
    %v6800 = vmax.f32 %v6640, 0.0
    %v6801 = vmax.f32 %v6641, 0.0
    %v6802 = vmax.f32 %v6642, 0.0
    %v6803 = vmax.f32 %v6643, 0.0
    %v6804 = vmax.f32 %v6644, 0.0
    %v6805 = vmax.f32 %v6645, 0.0
    %v6806 = vmax.f32 %v6646, 0.0
    %v6807 = vmax.f32 %v6647, 0.0
    %v6808 = vmax.f32 %v6648, 0.0
    %v6809 = vmax.f32 %v6649, 0.0
    %v6810 = vmax.f32 %v6650, 0.0
    %v6811 = vmax.f32 %v6651, 0.0
    %v6812 = vmax.f32 %v6652, 0.0
    %v6813 = vmax.f32 %v6653, 0.0
    %v6814 = vmax.f32 %v6654, 0.0
    %v6815 = vmax.f32 %v6655, 0.0
    %v6816 = vmax.f32 %v6656, 0.0
    %v6817 = vmax.f32 %v6657, 0.0
    %v6818 = vmax.f32 %v6658, 0.0
    %v6819 = vmax.f32 %v6659, 0.0
    %v6820 = vmax.f32 %v6660, 0.0
    %v6821 = vmax.f32 %v6661, 0.0
    %v6822 = vmax.f32 %v6662, 0.0
    %v6823 = vmax.f32 %v6663, 0.0
    %v6824 = vmax.f32 %v6664, 0.0
    %v6825 = vmax.f32 %v6665, 0.0
    %v6826 = vmax.f32 %v6666, 0.0
    %v6827 = vmax.f32 %v6667, 0.0
    %v6828 = vmax.f32 %v6668, 0.0
    %v6829 = vmax.f32 %v6669, 0.0
    %v6830 = vmax.f32 %v6670, 0.0
    %v6831 = vmax.f32 %v6671, 0.0
    %v6832 = vmax.f32 %v6672, 0.0
    %v6833 = vmax.f32 %v6673, 0.0
    %v6834 = vmax.f32 %v6674, 0.0
    %v6835 = vmax.f32 %v6675, 0.0
    %v6836 = vmax.f32 %v6676, 0.0
    %v6837 = vmax.f32 %v6677, 0.0
    %v6838 = vmax.f32 %v6678, 0.0
    %v6839 = vmax.f32 %v6679, 0.0
    %v6840 = vmax.f32 %v6680, 0.0
    %v6841 = vmax.f32 %v6681, 0.0
    %v6842 = vmax.f32 %v6682, 0.0
    %v6843 = vmax.f32 %v6683, 0.0
    %v6844 = vmax.f32 %v6684, 0.0
    %v6845 = vmax.f32 %v6685, 0.0
    %v6846 = vmax.f32 %v6686, 0.0
    %v6847 = vmax.f32 %v6687, 0.0
    %v6848 = vmax.f32 %v6688, 0.0
    %v6849 = vmax.f32 %v6689, 0.0
    %v6850 = vmax.f32 %v6690, 0.0
    %v6851 = vmax.f32 %v6691, 0.0
    %v6852 = vmax.f32 %v6692, 0.0
    %v6853 = vmax.f32 %v6693, 0.0
    %v6854 = vmax.f32 %v6694, 0.0
    %v6855 = vmax.f32 %v6695, 0.0
    %v6856 = vmax.f32 %v6696, 0.0
    %v6857 = vmax.f32 %v6697, 0.0
    %v6858 = vmax.f32 %v6698, 0.0
    %v6859 = vmax.f32 %v6699, 0.0
    %v6860 = vmax.f32 %v6700, 0.0
    %v6861 = vmax.f32 %v6701, 0.0
    %v6862 = vmax.f32 %v6702, 0.0
    %v6863 = vmax.f32 %v6703, 0.0
    %v6864 = vmax.f32 %v6704, 0.0
    %v6865 = vmax.f32 %v6705, 0.0
    %v6866 = vmax.f32 %v6706, 0.0
    %v6867 = vmax.f32 %v6707, 0.0
    %v6868 = vmax.f32 %v6708, 0.0
    %v6869 = vmax.f32 %v6709, 0.0
    %v6870 = vmax.f32 %v6710, 0.0
    %v6871 = vmax.f32 %v6711, 0.0
    %v6872 = vmax.f32 %v6712, 0.0
    %v6873 = vmax.f32 %v6713, 0.0
    %v6874 = vmax.f32 %v6714, 0.0
    %v6875 = vmax.f32 %v6715, 0.0
    %v6876 = vmax.f32 %v6716, 0.0
    %v6877 = vmax.f32 %v6717, 0.0
    %v6878 = vmax.f32 %v6718, 0.0
    %v6879 = vmax.f32 %v6719, 0.0
    %v6880 = vmax.f32 %v6720, 0.0
    %v6881 = vmax.f32 %v6721, 0.0
    %v6882 = vmax.f32 %v6722, 0.0
    %v6883 = vmax.f32 %v6723, 0.0
    %v6884 = vmax.f32 %v6724, 0.0
    %v6885 = vmax.f32 %v6725, 0.0
    %v6886 = vmax.f32 %v6726, 0.0
    %v6887 = vmax.f32 %v6727, %v6807
    %v6888 = vmax.f32 %v6728, %v6808
    %v6889 = vmax.f32 %v6729, %v6809
    %v6890 = vmax.f32 %v6730, %v6810
    %v6891 = vmax.f32 %v6731, %v6811
    %v6892 = vmax.f32 %v6732, %v6812
    %v6893 = vmax.f32 %v6733, %v6813
    %v6894 = vmax.f32 %v6734, %v6814
    %v6895 = vmax.f32 %v6735, %v6815
    %v6896 = vmax.f32 %v6736, %v6816
    %v6897 = vmax.f32 %v6737, %v6817
    %v6898 = vmax.f32 %v6738, %v6818
    %v6899 = vmax.f32 %v6739, %v6819
    %v6900 = vmax.f32 %v6740, %v6820
    %v6901 = vmax.f32 %v6741, %v6821
    %v6902 = vmax.f32 %v6742, %v6822
    %v6903 = vmax.f32 %v6743, %v6823
    %v6904 = vmax.f32 %v6744, %v6824
    %v6905 = vmax.f32 %v6745, %v6825
    %v6906 = vmax.f32 %v6746, %v6826
    %v6907 = vmax.f32 %v6747, %v6827
    %v6908 = vmax.f32 %v6748, %v6828
    %v6909 = vmax.f32 %v6749, %v6829
    %v6910 = vmax.f32 %v6750, %v6830
    %v6911 = vmax.f32 %v6751, %v6831
    %v6912 = vmax.f32 %v6752, %v6832
    %v6913 = vmax.f32 %v6753, %v6833
    %v6914 = vmax.f32 %v6754, %v6834
    %v6915 = vmax.f32 %v6755, %v6835
    %v6916 = vmax.f32 %v6756, %v6836
    %v6917 = vmax.f32 %v6757, %v6837
    %v6918 = vmax.f32 %v6758, %v6838
    %v6919 = vmax.f32 %v6759, %v6839
    %v6920 = vmax.f32 %v6760, %v6840
    %v6921 = vmax.f32 %v6761, %v6841
    %v6922 = vmax.f32 %v6762, %v6842
    %v6923 = vmax.f32 %v6763, %v6843
    %v6924 = vmax.f32 %v6764, %v6844
    %v6925 = vmax.f32 %v6765, %v6845
    %v6926 = vmax.f32 %v6766, %v6846
    %v6927 = vmax.f32 %v6767, %v6847
    %v6928 = vmax.f32 %v6768, %v6848
    %v6929 = vmax.f32 %v6769, %v6849
    %v6930 = vmax.f32 %v6770, %v6850
    %v6931 = vmax.f32 %v6771, %v6851
    %v6932 = vmax.f32 %v6772, %v6852
    %v6933 = vmax.f32 %v6773, %v6853
    %v6934 = vmax.f32 %v6774, %v6854
    %v6935 = vmax.f32 %v6775, %v6855
    %v6936 = vmax.f32 %v6776, %v6856
    %v6937 = vmax.f32 %v6777, %v6857
    %v6938 = vmax.f32 %v6778, %v6858
    %v6939 = vmax.f32 %v6779, %v6859
    %v6940 = vmax.f32 %v6780, %v6860
    %v6941 = vmax.f32 %v6781, %v6861
    %v6942 = vmax.f32 %v6782, %v6862
    %v6943 = vmax.f32 %v6783, %v6863
    %v6944 = vmax.f32 %v6784, %v6864
    %v6945 = vmax.f32 %v6785, %v6865
    %v6946 = vmax.f32 %v6786, %v6866
    %v6947 = vmax.f32 %v6787, %v6867
    %v6948 = vmax.f32 %v6788, %v6868
    %v6949 = vmax.f32 %v6789, %v6869
    %v6950 = vmax.f32 %v6790, %v6870
    %v6951 = vmax.f32 %v6791, %v6871
    %v6952 = vmax.f32 %v6792, %v6872
    %v6953 = vmax.f32 %v6793, %v6873
    %v6954 = vmax.f32 %v6794, %v6874
    %v6955 = vmax.f32 %v6795, %v6875
    %v6956 = vmax.f32 %v6796, %v6876
    %v6957 = vmax.f32 %v6797, %v6877
    %v6958 = vmax.f32 %v6798, %v6878
    %v6959 = vmax.f32 %v6799, %v6879
    %v6960 = vmax.f32 %v6800, %v6880
    %v6961 = vmax.f32 %v6801, %v6881
    %v6962 = vmax.f32 %v6802, %v6882
    %v6963 = vmax.f32 %v6803, %v6883
    %v6964 = vmax.f32 %v6804, %v6884
    %v6965 = vmax.f32 %v6805, %v6885
    %v6966 = vmax.f32 %v6806, %v6886
    %v6967 = vld [vmem:[%s5] sm:$0xff]
    %v6968 = vld [vmem:[%s5 + $0x8] sm:$0xff]
    %v6969 = vld [vmem:[%s5 + $0x10] sm:$0xff]
    %v6970 = vld [vmem:[%s5 + $0x18] sm:$0xff]
    %v6971 = vld [vmem:[%s5 + $0x20] sm:$0xff]
    %v6972 = vld [vmem:[%s5 + $0x28] sm:$0xff]
    %v6973 = vld [vmem:[%s5 + $0x30] sm:$0xff]
    %v6974 = vld [vmem:[%s5 + $0x38] sm:$0xff]
    %v6975 = vld [vmem:[%s5 + $0x40] sm:$0xff]
    %v6976 = vld [vmem:[%s5 + $0x48] sm:$0xff]
    %v6977 = vld [vmem:[%s5 + $0x50] sm:$0xff]
    %v6978 = vld [vmem:[%s5 + $0x58] sm:$0xff]
    %v6979 = vld [vmem:[%s5 + $0x60] sm:$0xff]
    %v6980 = vld [vmem:[%s5 + $0x68] sm:$0xff]
    %v6981 = vld [vmem:[%s5 + $0x70] sm:$0xff]
    %v6982 = vld [vmem:[%s5 + $0x78] sm:$0xff]
    %v6983 = vld [vmem:[%s5 + $0x80] sm:$0xff]
    %v6984 = vld [vmem:[%s5 + $0x88] sm:$0xff]
    %v6985 = vld [vmem:[%s5 + $0x90] sm:$0xff]
    %v6986 = vld [vmem:[%s5 + $0x98] sm:$0xff]
    %v6987 = vld [vmem:[%s5 + $0xa0] sm:$0xff]
    %v6988 = vld [vmem:[%s5 + $0xa8] sm:$0xff]
    %v6989 = vld [vmem:[%s5 + $0xb0] sm:$0xff]
    %v6990 = vld [vmem:[%s5 + $0xb8] sm:$0xff]
    %v6991 = vld [vmem:[%s5 + $0xc0] sm:$0xff]
    %v6992 = vld [vmem:[%s5 + $0xc8] sm:$0xff]
    %v6993 = vld [vmem:[%s5 + $0xd0] sm:$0xff]
    %v6994 = vld [vmem:[%s5 + $0xd8] sm:$0xff]
    %v6995 = vld [vmem:[%s5 + $0xe0] sm:$0xff]
    %v6996 = vld [vmem:[%s5 + $0xe8] sm:$0xff]
    %v6997 = vld [vmem:[%s5 + $0xf0] sm:$0xff]
    %v6998 = vld [vmem:[%s5 + $0xf8] sm:$0xff]
    %v6999 = vld [vmem:[%s5 + $0x100] sm:$0xff]
    %v7000 = vld [vmem:[%s5 + $0x108] sm:$0xff]
    %v7001 = vld [vmem:[%s5 + $0x110] sm:$0xff]
    %v7002 = vld [vmem:[%s5 + $0x118] sm:$0xff]
    %v7003 = vld [vmem:[%s5 + $0x120] sm:$0xff]
    %v7004 = vld [vmem:[%s5 + $0x128] sm:$0xff]
    %v7005 = vld [vmem:[%s5 + $0x130] sm:$0xff]
    %v7006 = vld [vmem:[%s5 + $0x138] sm:$0xff]
    %v7007 = vld [vmem:[%s5 + $0x140] sm:$0xff]
    %v7008 = vld [vmem:[%s5 + $0x148] sm:$0xff]
    %v7009 = vld [vmem:[%s5 + $0x150] sm:$0xff]
    %v7010 = vld [vmem:[%s5 + $0x158] sm:$0xff]
    %v7011 = vld [vmem:[%s5 + $0x160] sm:$0xff]
    %v7012 = vld [vmem:[%s5 + $0x168] sm:$0xff]
    %v7013 = vld [vmem:[%s5 + $0x170] sm:$0xff]
    %v7014 = vld [vmem:[%s5 + $0x178] sm:$0xff]
    %v7015 = vld [vmem:[%s5 + $0x180] sm:$0xff]
    %v7016 = vld [vmem:[%s5 + $0x188] sm:$0xff]
    %v7017 = vld [vmem:[%s5 + $0x190] sm:$0xff]
    %v7018 = vld [vmem:[%s5 + $0x198] sm:$0xff]
    %v7019 = vld [vmem:[%s5 + $0x1a0] sm:$0xff]
    %v7020 = vld [vmem:[%s5 + $0x1a8] sm:$0xff]
    %v7021 = vld [vmem:[%s5 + $0x1b0] sm:$0xff]
    %v7022 = vld [vmem:[%s5 + $0x1b8] sm:$0xff]
    %v7023 = vld [vmem:[%s5 + $0x1c0] sm:$0xff]
    %v7024 = vld [vmem:[%s5 + $0x1c8] sm:$0xff]
    %v7025 = vld [vmem:[%s5 + $0x1d0] sm:$0xff]
    %v7026 = vld [vmem:[%s5 + $0x1d8] sm:$0xff]
    %v7027 = vld [vmem:[%s5 + $0x1e0] sm:$0xff]
    %v7028 = vld [vmem:[%s5 + $0x1e8] sm:$0xff]
    %v7029 = vld [vmem:[%s5 + $0x1f0] sm:$0xff]
    %v7030 = vld [vmem:[%s5 + $0x1f8] sm:$0xff]
    %v7031 = vld [vmem:[%s5 + $0x200] sm:$0xff]
    %v7032 = vld [vmem:[%s5 + $0x208] sm:$0xff]
    %v7033 = vld [vmem:[%s5 + $0x210] sm:$0xff]
    %v7034 = vld [vmem:[%s5 + $0x218] sm:$0xff]
    %v7035 = vld [vmem:[%s5 + $0x220] sm:$0xff]
    %v7036 = vld [vmem:[%s5 + $0x228] sm:$0xff]
    %v7037 = vld [vmem:[%s5 + $0x230] sm:$0xff]
    %v7038 = vld [vmem:[%s5 + $0x238] sm:$0xff]
    %v7039 = vld [vmem:[%s5 + $0x240] sm:$0xff]
    %v7040 = vld [vmem:[%s5 + $0x248] sm:$0xff]
    %v7041 = vld [vmem:[%s5 + $0x250] sm:$0xff]
    %v7042 = vld [vmem:[%s5 + $0x258] sm:$0xff]
    %v7043 = vld [vmem:[%s5 + $0x260] sm:$0xff]
    %v7044 = vld [vmem:[%s5 + $0x268] sm:$0xff]
    %v7045 = vld [vmem:[%s5 + $0x270] sm:$0xff]
    %v7046 = vld [vmem:[%s5 + $0x278] sm:$0xff]
    %v7047 = vld [vmem:[%s6] sm:$0xff]
    %v7048 = vld [vmem:[%s6 + $0x8] sm:$0xff]
    %v7049 = vld [vmem:[%s6 + $0x10] sm:$0xff]
    %v7050 = vld [vmem:[%s6 + $0x18] sm:$0xff]
    %v7051 = vld [vmem:[%s6 + $0x20] sm:$0xff]
    %v7052 = vld [vmem:[%s6 + $0x28] sm:$0xff]
    %v7053 = vld [vmem:[%s6 + $0x30] sm:$0xff]
    %v7054 = vld [vmem:[%s6 + $0x38] sm:$0xff]
    %v7055 = vld [vmem:[%s6 + $0x40] sm:$0xff]
    %v7056 = vld [vmem:[%s6 + $0x48] sm:$0xff]
    %v7057 = vld [vmem:[%s6 + $0x50] sm:$0xff]
    %v7058 = vld [vmem:[%s6 + $0x58] sm:$0xff]
    %v7059 = vld [vmem:[%s6 + $0x60] sm:$0xff]
    %v7060 = vld [vmem:[%s6 + $0x68] sm:$0xff]
    %v7061 = vld [vmem:[%s6 + $0x70] sm:$0xff]
    %v7062 = vld [vmem:[%s6 + $0x78] sm:$0xff]
    %7064 = vset.pattern.permute.xlu0 0
    %7065 = vperm.xlu0 %7064, %v7047
    %v7066 = vpop.permute.xlu0 %7065
    %7069 = vset.pattern.permute.xlu0 0
    %7070 = vperm.xlu0 %7069, %v7048
    %v7071 = vpop.permute.xlu0 %7070
    %7074 = vset.pattern.permute.xlu0 0
    %7075 = vperm.xlu0 %7074, %v7049
    %v7076 = vpop.permute.xlu0 %7075
    %7079 = vset.pattern.permute.xlu0 0
    %7080 = vperm.xlu0 %7079, %v7050
    %v7081 = vpop.permute.xlu0 %7080
    %7084 = vset.pattern.permute.xlu0 0
    %7085 = vperm.xlu0 %7084, %v7051
    %v7086 = vpop.permute.xlu0 %7085
    %7089 = vset.pattern.permute.xlu0 0
    %7090 = vperm.xlu0 %7089, %v7052
    %v7091 = vpop.permute.xlu0 %7090
    %7094 = vset.pattern.permute.xlu0 0
    %7095 = vperm.xlu0 %7094, %v7053
    %v7096 = vpop.permute.xlu0 %7095
    %7099 = vset.pattern.permute.xlu0 0
    %7100 = vperm.xlu0 %7099, %v7054
    %v7101 = vpop.permute.xlu0 %7100
    %7104 = vset.pattern.permute.xlu0 0
    %7105 = vperm.xlu0 %7104, %v7055
    %v7106 = vpop.permute.xlu0 %7105
    %7109 = vset.pattern.permute.xlu0 0
    %7110 = vperm.xlu0 %7109, %v7056
    %v7111 = vpop.permute.xlu0 %7110
    %7114 = vset.pattern.permute.xlu0 0
    %7115 = vperm.xlu0 %7114, %v7057
    %v7116 = vpop.permute.xlu0 %7115
    %7119 = vset.pattern.permute.xlu0 0
    %7120 = vperm.xlu0 %7119, %v7058
    %v7121 = vpop.permute.xlu0 %7120
    %7124 = vset.pattern.permute.xlu0 0
    %7125 = vperm.xlu0 %7124, %v7059
    %v7126 = vpop.permute.xlu0 %7125
    %7129 = vset.pattern.permute.xlu0 0
    %7130 = vperm.xlu0 %7129, %v7060
    %v7131 = vpop.permute.xlu0 %7130
    %7134 = vset.pattern.permute.xlu0 0
    %7135 = vperm.xlu0 %7134, %v7061
    %v7136 = vpop.permute.xlu0 %7135
    %7139 = vset.pattern.permute.xlu0 0
    %7140 = vperm.xlu0 %7139, %v7062
    %v7141 = vpop.permute.xlu0 %7140
    %7143 = vmatprep.subr.mxu0 0.0
    %7144 = vmatpush1.msra.mxu0 %v6950
    %7145 = vmatprep.subr.mxu0 0.0
    %7146 = vmatpush1.msra.mxu0 %v6930
    %7147 = vmatprep.subr.mxu0 0.0
    %7148 = vmatpush1.msra.mxu0 %v6910
    %7149 = vmatprep.subr.mxu0 0.0
    %7150 = vmatpush1.msra.mxu0 %v6890
    %7151 = vmatprep.subr.mxu0 0.0
    %7152 = vmatpush1.msra.mxu0 %v6949
    %7153 = vmatprep.subr.mxu0 0.0
    %7154 = vmatpush1.msra.mxu0 %v6929
    %7155 = vmatprep.subr.mxu0 0.0
    %7156 = vmatpush1.msra.mxu0 %v6909
    %7157 = vmatprep.subr.mxu0 0.0
    %7158 = vmatpush1.msra.mxu0 %v6889
    %7159 = vmatprep.subr.mxu0 0.0
    %7160 = vmatpush1.msra.mxu0 %v6948
    %7161 = vmatprep.subr.mxu0 0.0
    %7162 = vmatpush1.msra.mxu0 %v6928
    %7163 = vmatprep.subr.mxu0 0.0
    %7164 = vmatpush1.msra.mxu0 %v6908
    %7165 = vmatprep.subr.mxu0 0.0
    %7166 = vmatpush1.msra.mxu0 %v6888
    %7167 = vmatprep.subr.mxu0 0.0
    %7168 = vmatpush1.msra.mxu0 %v6947
    %7169 = vmatprep.subr.mxu0 0.0
    %7170 = vmatpush1.msra.mxu0 %v6927
    %7171 = vmatprep.subr.mxu0 0.0
    %7172 = vmatpush1.msra.mxu0 %v6907
    %7173 = vmatprep.subr.mxu0 0.0
    %7174 = vmatpush1.msra.mxu0 %v6887
    %7175 = vmatprep.subr.mxu0 0.0
    %7176 = vmatpush2.msra.mxu0 %v6954
    %7177 = vmatprep.subr.mxu0 0.0
    %7178 = vmatpush2.msra.mxu0 %v6934
    %7179 = vmatprep.subr.mxu0 0.0
    %7180 = vmatpush2.msra.mxu0 %v6914
    %7181 = vmatprep.subr.mxu0 0.0
    %7182 = vmatpush2.msra.mxu0 %v6894
    %7183 = vmatprep.subr.mxu0 0.0
    %7184 = vmatpush2.msra.mxu0 %v6953
    %7185 = vmatprep.subr.mxu0 0.0
    %7186 = vmatpush2.msra.mxu0 %v6933
    %7187 = vmatprep.subr.mxu0 0.0
    %7188 = vmatpush2.msra.mxu0 %v6913
    %7189 = vmatprep.subr.mxu0 0.0
    %7190 = vmatpush2.msra.mxu0 %v6893
    %7191 = vmatprep.subr.mxu0 0.0
    %7192 = vmatpush2.msra.mxu0 %v6952
    %7193 = vmatprep.subr.mxu0 0.0
    %7194 = vmatpush2.msra.mxu0 %v6932
    %7195 = vmatprep.subr.mxu0 0.0
    %7196 = vmatpush2.msra.mxu0 %v6912
    %7197 = vmatprep.subr.mxu0 0.0
    %7198 = vmatpush2.msra.mxu0 %v6892
    %7199 = vmatprep.subr.mxu0 0.0
    %7200 = vmatpush2.msra.mxu0 %v6951
    %7201 = vmatprep.subr.mxu0 0.0
    %7202 = vmatpush2.msra.mxu0 %v6931
    %7203 = vmatprep.subr.mxu0 0.0
    %7204 = vmatpush2.msra.mxu0 %v6911
    %7205 = vmatprep.subr.mxu0 0.0
    %7206 = vmatpush2.msra.mxu0 %v6891
    %7207 = vmatprep.mubr.f32.mxu0 %v6968
    %7208 = vmatmul.mubr.f32.gmra.mxu0 %v6967
    %v7209 = vpop.f32.mrf.mxu0
    %v7210 = vadd.f32 %v7066, %v7209
    %v7211 = vpop.f32.mrf.mxu0
    %7212 = vmatprep.mubr.f32.mxu0 %v6973
    %7213 = vmatmul.mubr.f32.gmra.mxu0 %v6972
    %v7214 = vpop.f32.mrf.mxu0
    %v7215 = vadd.f32 %v7071, %v7214
    %v7216 = vpop.f32.mrf.mxu0
    %7217 = vmatprep.mubr.f32.mxu0 %v6978
    %7218 = vmatmul.mubr.f32.gmra.mxu0 %v6977
    %v7219 = vpop.f32.mrf.mxu0
    %v7220 = vadd.f32 %v7076, %v7219
    %v7221 = vpop.f32.mrf.mxu0
    %7222 = vmatprep.mubr.f32.mxu0 %v6983
    %7223 = vmatmul.mubr.f32.gmra.mxu0 %v6982
    %v7224 = vpop.f32.mrf.mxu0
    %v7225 = vadd.f32 %v7081, %v7224
    %v7226 = vpop.f32.mrf.mxu0
    %7227 = vmatprep.mubr.f32.mxu0 %v6988
    %7228 = vmatmul.mubr.f32.gmra.mxu0 %v6987
    %v7229 = vpop.f32.mrf.mxu0
    %v7230 = vadd.f32 %v7086, %v7229
    %v7231 = vpop.f32.mrf.mxu0
    %7232 = vmatprep.mubr.f32.mxu0 %v6993
    %7233 = vmatmul.mubr.f32.gmra.mxu0 %v6992
    %v7234 = vpop.f32.mrf.mxu0
    %v7235 = vadd.f32 %v7091, %v7234
    %v7236 = vpop.f32.mrf.mxu0
    %7237 = vmatprep.mubr.f32.mxu0 %v6998
    %7238 = vmatmul.mubr.f32.gmra.mxu0 %v6997
    %v7239 = vpop.f32.mrf.mxu0
    %v7240 = vadd.f32 %v7096, %v7239
    %v7241 = vpop.f32.mrf.mxu0
    %7242 = vmatprep.mubr.f32.mxu0 %v7003
    %7243 = vmatmul.mubr.f32.gmra.mxu0 %v7002
    %v7244 = vpop.f32.mrf.mxu0
    %v7245 = vadd.f32 %v7101, %v7244
    %v7246 = vpop.f32.mrf.mxu0
    %7247 = vmatprep.mubr.f32.mxu0 %v7008
    %7248 = vmatmul.mubr.f32.gmra.mxu0 %v7007
    %v7249 = vpop.f32.mrf.mxu0
    %v7250 = vadd.f32 %v7106, %v7249
    %v7251 = vpop.f32.mrf.mxu0
    %7252 = vmatprep.mubr.f32.mxu0 %v7013
    %7253 = vmatmul.mubr.f32.gmra.mxu0 %v7012
    %v7254 = vpop.f32.mrf.mxu0
    %v7255 = vadd.f32 %v7111, %v7254
    %v7256 = vpop.f32.mrf.mxu0
    %7257 = vmatprep.mubr.f32.mxu0 %v7018
    %7258 = vmatmul.mubr.f32.gmra.mxu0 %v7017
    %v7259 = vpop.f32.mrf.mxu0
    %v7260 = vadd.f32 %v7116, %v7259
    %v7261 = vpop.f32.mrf.mxu0
    %7262 = vmatprep.mubr.f32.mxu0 %v7023
    %7263 = vmatmul.mubr.f32.gmra.mxu0 %v7022
    %v7264 = vpop.f32.mrf.mxu0
    %v7265 = vadd.f32 %v7121, %v7264
    %v7266 = vpop.f32.mrf.mxu0
    %7267 = vmatprep.mubr.f32.mxu0 %v7028
    %7268 = vmatmul.mubr.f32.gmra.mxu0 %v7027
    %v7269 = vpop.f32.mrf.mxu0
    %v7270 = vadd.f32 %v7126, %v7269
    %v7271 = vpop.f32.mrf.mxu0
    %7272 = vmatprep.mubr.f32.mxu0 %v7033
    %7273 = vmatmul.mubr.f32.gmra.mxu0 %v7032
    %v7274 = vpop.f32.mrf.mxu0
    %v7275 = vadd.f32 %v7131, %v7274
    %v7276 = vpop.f32.mrf.mxu0
    %7277 = vmatprep.mubr.f32.mxu0 %v7038
    %7278 = vmatmul.mubr.f32.gmra.mxu0 %v7037
    %v7279 = vpop.f32.mrf.mxu0
    %v7280 = vadd.f32 %v7136, %v7279
    %v7281 = vpop.f32.mrf.mxu0
    %7282 = vmatprep.mubr.f32.mxu0 %v7043
    %7283 = vmatmul.mubr.f32.gmra.mxu0 %v7042
    %v7284 = vpop.f32.mrf.mxu0
    %v7285 = vadd.f32 %v7141, %v7284
    %v7286 = vpop.f32.mrf.mxu0
    %7287 = vdwg.mxu0
    %7288 = vmatprep.subr.mxu0 0.0
    %7289 = vmatpush1.msra.mxu0 %v6958
    %7290 = vmatprep.subr.mxu0 0.0
    %7291 = vmatpush1.msra.mxu0 %v6938
    %7292 = vmatprep.subr.mxu0 0.0
    %7293 = vmatpush1.msra.mxu0 %v6918
    %7294 = vmatprep.subr.mxu0 0.0
    %7295 = vmatpush1.msra.mxu0 %v6898
    %7296 = vmatprep.subr.mxu0 0.0
    %7297 = vmatpush1.msra.mxu0 %v6957
    %7298 = vmatprep.subr.mxu0 0.0
    %7299 = vmatpush1.msra.mxu0 %v6937
    %7300 = vmatprep.subr.mxu0 0.0
    %7301 = vmatpush1.msra.mxu0 %v6917
    %7302 = vmatprep.subr.mxu0 0.0
    %7303 = vmatpush1.msra.mxu0 %v6897
    %7304 = vmatprep.subr.mxu0 0.0
    %7305 = vmatpush1.msra.mxu0 %v6956
    %7306 = vmatprep.subr.mxu0 0.0
    %7307 = vmatpush1.msra.mxu0 %v6936
    %7308 = vmatprep.subr.mxu0 0.0
    %7309 = vmatpush1.msra.mxu0 %v6916
    %7310 = vmatprep.subr.mxu0 0.0
    %7311 = vmatpush1.msra.mxu0 %v6896
    %7312 = vmatprep.subr.mxu0 0.0
    %7313 = vmatpush1.msra.mxu0 %v6955
    %7314 = vmatprep.subr.mxu0 0.0
    %7315 = vmatpush1.msra.mxu0 %v6935
    %7316 = vmatprep.subr.mxu0 0.0
    %7317 = vmatpush1.msra.mxu0 %v6915
    %7318 = vmatprep.subr.mxu0 0.0
    %7319 = vmatpush1.msra.mxu0 %v6895
    %7320 = vmatprep.subr.mxu0 0.0
    %7321 = vmatpush2.msra.mxu0 %v6962
    %7322 = vmatprep.subr.mxu0 0.0
    %7323 = vmatpush2.msra.mxu0 %v6942
    %7324 = vmatprep.subr.mxu0 0.0
    %7325 = vmatpush2.msra.mxu0 %v6922
    %7326 = vmatprep.subr.mxu0 0.0
    %7327 = vmatpush2.msra.mxu0 %v6902
    %7328 = vmatprep.subr.mxu0 0.0
    %7329 = vmatpush2.msra.mxu0 %v6961
    %7330 = vmatprep.subr.mxu0 0.0
    %7331 = vmatpush2.msra.mxu0 %v6941
    %7332 = vmatprep.subr.mxu0 0.0
    %7333 = vmatpush2.msra.mxu0 %v6921
    %7334 = vmatprep.subr.mxu0 0.0
    %7335 = vmatpush2.msra.mxu0 %v6901
    %7336 = vmatprep.subr.mxu0 0.0
    %7337 = vmatpush2.msra.mxu0 %v6960
    %7338 = vmatprep.subr.mxu0 0.0
    %7339 = vmatpush2.msra.mxu0 %v6940
    %7340 = vmatprep.subr.mxu0 0.0
    %7341 = vmatpush2.msra.mxu0 %v6920
    %7342 = vmatprep.subr.mxu0 0.0
    %7343 = vmatpush2.msra.mxu0 %v6900
    %7344 = vmatprep.subr.mxu0 0.0
    %7345 = vmatpush2.msra.mxu0 %v6959
    %7346 = vmatprep.subr.mxu0 0.0
    %7347 = vmatpush2.msra.mxu0 %v6939
    %7348 = vmatprep.subr.mxu0 0.0
    %7349 = vmatpush2.msra.mxu0 %v6919
    %7350 = vmatprep.subr.mxu0 0.0
    %7351 = vmatpush2.msra.mxu0 %v6899
    %7352 = vmatprep.mubr.f32.mxu0 %v6970
    %7353 = vmatmul.mubr.f32.gmra.mxu0 %v6969
    %v7354 = vpop.f32.mrf.mxu0
    %v7355 = vadd.f32 %v7210, %v7354
    %v7356 = vpop.f32.mrf.mxu0
    %7357 = vmatprep.mubr.f32.mxu0 %v6975
    %7358 = vmatmul.mubr.f32.gmra.mxu0 %v6974
    %v7359 = vpop.f32.mrf.mxu0
    %v7360 = vadd.f32 %v7215, %v7359
    %v7361 = vpop.f32.mrf.mxu0
    %7362 = vmatprep.mubr.f32.mxu0 %v6980
    %7363 = vmatmul.mubr.f32.gmra.mxu0 %v6979
    %v7364 = vpop.f32.mrf.mxu0
    %v7365 = vadd.f32 %v7220, %v7364
    %v7366 = vpop.f32.mrf.mxu0
    %7367 = vmatprep.mubr.f32.mxu0 %v6985
    %7368 = vmatmul.mubr.f32.gmra.mxu0 %v6984
    %v7369 = vpop.f32.mrf.mxu0
    %v7370 = vadd.f32 %v7225, %v7369
    %v7371 = vpop.f32.mrf.mxu0
    %7372 = vmatprep.mubr.f32.mxu0 %v6990
    %7373 = vmatmul.mubr.f32.gmra.mxu0 %v6989
    %v7374 = vpop.f32.mrf.mxu0
    %v7375 = vadd.f32 %v7230, %v7374
    %v7376 = vpop.f32.mrf.mxu0
    %7377 = vmatprep.mubr.f32.mxu0 %v6995
    %7378 = vmatmul.mubr.f32.gmra.mxu0 %v6994
    %v7379 = vpop.f32.mrf.mxu0
    %v7380 = vadd.f32 %v7235, %v7379
    %v7381 = vpop.f32.mrf.mxu0
    %7382 = vmatprep.mubr.f32.mxu0 %v7000
    %7383 = vmatmul.mubr.f32.gmra.mxu0 %v6999
    %v7384 = vpop.f32.mrf.mxu0
    %v7385 = vadd.f32 %v7240, %v7384
    %v7386 = vpop.f32.mrf.mxu0
    %7387 = vmatprep.mubr.f32.mxu0 %v7005
    %7388 = vmatmul.mubr.f32.gmra.mxu0 %v7004
    %v7389 = vpop.f32.mrf.mxu0
    %v7390 = vadd.f32 %v7245, %v7389
    %v7391 = vpop.f32.mrf.mxu0
    %7392 = vmatprep.mubr.f32.mxu0 %v7010
    %7393 = vmatmul.mubr.f32.gmra.mxu0 %v7009
    %v7394 = vpop.f32.mrf.mxu0
    %v7395 = vadd.f32 %v7250, %v7394
    %v7396 = vpop.f32.mrf.mxu0
    %7397 = vmatprep.mubr.f32.mxu0 %v7015
    %7398 = vmatmul.mubr.f32.gmra.mxu0 %v7014
    %v7399 = vpop.f32.mrf.mxu0
    %v7400 = vadd.f32 %v7255, %v7399
    %v7401 = vpop.f32.mrf.mxu0
    %7402 = vmatprep.mubr.f32.mxu0 %v7020
    %7403 = vmatmul.mubr.f32.gmra.mxu0 %v7019
    %v7404 = vpop.f32.mrf.mxu0
    %v7405 = vadd.f32 %v7260, %v7404
    %v7406 = vpop.f32.mrf.mxu0
    %7407 = vmatprep.mubr.f32.mxu0 %v7025
    %7408 = vmatmul.mubr.f32.gmra.mxu0 %v7024
    %v7409 = vpop.f32.mrf.mxu0
    %v7410 = vadd.f32 %v7265, %v7409
    %v7411 = vpop.f32.mrf.mxu0
    %7412 = vmatprep.mubr.f32.mxu0 %v7030
    %7413 = vmatmul.mubr.f32.gmra.mxu0 %v7029
    %v7414 = vpop.f32.mrf.mxu0
    %v7415 = vadd.f32 %v7270, %v7414
    %v7416 = vpop.f32.mrf.mxu0
    %7417 = vmatprep.mubr.f32.mxu0 %v7035
    %7418 = vmatmul.mubr.f32.gmra.mxu0 %v7034
    %v7419 = vpop.f32.mrf.mxu0
    %v7420 = vadd.f32 %v7275, %v7419
    %v7421 = vpop.f32.mrf.mxu0
    %7422 = vmatprep.mubr.f32.mxu0 %v7040
    %7423 = vmatmul.mubr.f32.gmra.mxu0 %v7039
    %v7424 = vpop.f32.mrf.mxu0
    %v7425 = vadd.f32 %v7280, %v7424
    %v7426 = vpop.f32.mrf.mxu0
    %7427 = vmatprep.mubr.f32.mxu0 %v7045
    %7428 = vmatmul.mubr.f32.gmra.mxu0 %v7044
    %v7429 = vpop.f32.mrf.mxu0
    %v7430 = vadd.f32 %v7285, %v7429
    %v7431 = vpop.f32.mrf.mxu0
    %7432 = vdwg.mxu0
    %7433 = vmatprep.subr.mxu0 0.0
    %7434 = vmatpush1.msra.mxu0 %v6966
    %7435 = vmatprep.subr.mxu0 0.0
    %7436 = vmatpush1.msra.mxu0 %v6946
    %7437 = vmatprep.subr.mxu0 0.0
    %7438 = vmatpush1.msra.mxu0 %v6926
    %7439 = vmatprep.subr.mxu0 0.0
    %7440 = vmatpush1.msra.mxu0 %v6906
    %7441 = vmatprep.subr.mxu0 0.0
    %7442 = vmatpush1.msra.mxu0 %v6965
    %7443 = vmatprep.subr.mxu0 0.0
    %7444 = vmatpush1.msra.mxu0 %v6945
    %7445 = vmatprep.subr.mxu0 0.0
    %7446 = vmatpush1.msra.mxu0 %v6925
    %7447 = vmatprep.subr.mxu0 0.0
    %7448 = vmatpush1.msra.mxu0 %v6905
    %7449 = vmatprep.subr.mxu0 0.0
    %7450 = vmatpush1.msra.mxu0 %v6964
    %7451 = vmatprep.subr.mxu0 0.0
    %7452 = vmatpush1.msra.mxu0 %v6944
    %7453 = vmatprep.subr.mxu0 0.0
    %7454 = vmatpush1.msra.mxu0 %v6924
    %7455 = vmatprep.subr.mxu0 0.0
    %7456 = vmatpush1.msra.mxu0 %v6904
    %7457 = vmatprep.subr.mxu0 0.0
    %7458 = vmatpush1.msra.mxu0 %v6963
    %7459 = vmatprep.subr.mxu0 0.0
    %7460 = vmatpush1.msra.mxu0 %v6943
    %7461 = vmatprep.subr.mxu0 0.0
    %7462 = vmatpush1.msra.mxu0 %v6923
    %7463 = vmatprep.subr.mxu0 0.0
    %7464 = vmatpush1.msra.mxu0 %v6903
    %7465 = vmatprep.subr.mxu0 0.0
    %7466 = vmatpush2.msra.mxu0 0.0
    %7467 = vmatprep.subr.mxu0 0.0
    %7468 = vmatpush2.msra.mxu0 0.0
    %7469 = vmatprep.subr.mxu0 0.0
    %7470 = vmatpush2.msra.mxu0 0.0
    %7471 = vmatprep.subr.mxu0 0.0
    %7472 = vmatpush2.msra.mxu0 0.0
    %7473 = vmatprep.subr.mxu0 0.0
    %7474 = vmatpush2.msra.mxu0 0.0
    %7475 = vmatprep.subr.mxu0 0.0
    %7476 = vmatpush2.msra.mxu0 0.0
    %7477 = vmatprep.subr.mxu0 0.0
    %7478 = vmatpush2.msra.mxu0 0.0
    %7479 = vmatprep.subr.mxu0 0.0
    %7480 = vmatpush2.msra.mxu0 0.0
    %7481 = vmatprep.subr.mxu0 0.0
    %7482 = vmatpush2.msra.mxu0 0.0
    %7483 = vmatprep.subr.mxu0 0.0
    %7484 = vmatpush2.msra.mxu0 0.0
    %7485 = vmatprep.subr.mxu0 0.0
    %7486 = vmatpush2.msra.mxu0 0.0
    %7487 = vmatprep.subr.mxu0 0.0
    %7488 = vmatpush2.msra.mxu0 0.0
    %7489 = vmatprep.subr.mxu0 0.0
    %7490 = vmatpush2.msra.mxu0 0.0
    %7491 = vmatprep.subr.mxu0 0.0
    %7492 = vmatpush2.msra.mxu0 0.0
    %7493 = vmatprep.subr.mxu0 0.0
    %7494 = vmatpush2.msra.mxu0 0.0
    %7495 = vmatprep.subr.mxu0 0.0
    %7496 = vmatpush2.msra.mxu0 0.0
    %7497 = vmatprep.mubr.f32.mxu0 0.0
    %7498 = vmatmul.mubr.f32.gmra.mxu0 %v6971
    %v7499 = vpop.f32.mrf.mxu0
    %v7500 = vadd.f32 %v7355, %v7499
    %v7501 = vpop.f32.mrf.mxu0
    %7502 = vmatprep.mubr.f32.mxu0 0.0
    %7503 = vmatmul.mubr.f32.gmra.mxu0 %v6976
    %v7504 = vpop.f32.mrf.mxu0
    %v7505 = vadd.f32 %v7360, %v7504
    %v7506 = vpop.f32.mrf.mxu0
    %7507 = vmatprep.mubr.f32.mxu0 0.0
    %7508 = vmatmul.mubr.f32.gmra.mxu0 %v6981
    %v7509 = vpop.f32.mrf.mxu0
    %v7510 = vadd.f32 %v7365, %v7509
    %v7511 = vpop.f32.mrf.mxu0
    %7512 = vmatprep.mubr.f32.mxu0 0.0
    %7513 = vmatmul.mubr.f32.gmra.mxu0 %v6986
    %v7514 = vpop.f32.mrf.mxu0
    %v7515 = vadd.f32 %v7370, %v7514
    %v7516 = vpop.f32.mrf.mxu0
    %7517 = vmatprep.mubr.f32.mxu0 0.0
    %7518 = vmatmul.mubr.f32.gmra.mxu0 %v6991
    %v7519 = vpop.f32.mrf.mxu0
    %v7520 = vadd.f32 %v7375, %v7519
    %v7521 = vpop.f32.mrf.mxu0
    %7522 = vmatprep.mubr.f32.mxu0 0.0
    %7523 = vmatmul.mubr.f32.gmra.mxu0 %v6996
    %v7524 = vpop.f32.mrf.mxu0
    %v7525 = vadd.f32 %v7380, %v7524
    %v7526 = vpop.f32.mrf.mxu0
    %7527 = vmatprep.mubr.f32.mxu0 0.0
    %7528 = vmatmul.mubr.f32.gmra.mxu0 %v7001
    %v7529 = vpop.f32.mrf.mxu0
    %v7530 = vadd.f32 %v7385, %v7529
    %v7531 = vpop.f32.mrf.mxu0
    %7532 = vmatprep.mubr.f32.mxu0 0.0
    %7533 = vmatmul.mubr.f32.gmra.mxu0 %v7006
    %v7534 = vpop.f32.mrf.mxu0
    %v7535 = vadd.f32 %v7390, %v7534
    %v7536 = vpop.f32.mrf.mxu0
    %7537 = vmatprep.mubr.f32.mxu0 0.0
    %7538 = vmatmul.mubr.f32.gmra.mxu0 %v7011
    %v7539 = vpop.f32.mrf.mxu0
    %v7540 = vadd.f32 %v7395, %v7539
    %v7541 = vpop.f32.mrf.mxu0
    %7542 = vmatprep.mubr.f32.mxu0 0.0
    %7543 = vmatmul.mubr.f32.gmra.mxu0 %v7016
    %v7544 = vpop.f32.mrf.mxu0
    %v7545 = vadd.f32 %v7400, %v7544
    %v7546 = vpop.f32.mrf.mxu0
    %7547 = vmatprep.mubr.f32.mxu0 0.0
    %7548 = vmatmul.mubr.f32.gmra.mxu0 %v7021
    %v7549 = vpop.f32.mrf.mxu0
    %v7550 = vadd.f32 %v7405, %v7549
    %v7551 = vpop.f32.mrf.mxu0
    %7552 = vmatprep.mubr.f32.mxu0 0.0
    %7553 = vmatmul.mubr.f32.gmra.mxu0 %v7026
    %v7554 = vpop.f32.mrf.mxu0
    %v7555 = vadd.f32 %v7410, %v7554
    %v7556 = vpop.f32.mrf.mxu0
    %7557 = vmatprep.mubr.f32.mxu0 0.0
    %7558 = vmatmul.mubr.f32.gmra.mxu0 %v7031
    %v7559 = vpop.f32.mrf.mxu0
    %v7560 = vadd.f32 %v7415, %v7559
    %v7561 = vpop.f32.mrf.mxu0
    %7562 = vmatprep.mubr.f32.mxu0 0.0
    %7563 = vmatmul.mubr.f32.gmra.mxu0 %v7036
    %v7564 = vpop.f32.mrf.mxu0
    %v7565 = vadd.f32 %v7420, %v7564
    %v7566 = vpop.f32.mrf.mxu0
    %7567 = vmatprep.mubr.f32.mxu0 0.0
    %7568 = vmatmul.mubr.f32.gmra.mxu0 %v7041
    %v7569 = vpop.f32.mrf.mxu0
    %v7570 = vadd.f32 %v7425, %v7569
    %v7571 = vpop.f32.mrf.mxu0
    %7572 = vmatprep.mubr.f32.mxu0 0.0
    %7573 = vmatmul.mubr.f32.gmra.mxu0 %v7046
    %v7574 = vpop.f32.mrf.mxu0
    %v7575 = vadd.f32 %v7430, %v7574
    %v7576 = vpop.f32.mrf.mxu0
    %7577 = vdwg.mxu0
    %v7578 = vmax.f32 %v7500, 0.0
    %v7579 = vmax.f32 %v7505, 0.0
    %v7580 = vmax.f32 %v7510, 0.0
    %v7581 = vmax.f32 %v7515, 0.0
    %v7582 = vmax.f32 %v7520, 0.0
    %v7583 = vmax.f32 %v7525, 0.0
    %v7584 = vmax.f32 %v7530, 0.0
    %v7585 = vmax.f32 %v7535, 0.0
    %v7586 = vmax.f32 %v7540, 0.0
    %v7587 = vmax.f32 %v7545, 0.0
    %v7588 = vmax.f32 %v7550, 0.0
    %v7589 = vmax.f32 %v7555, 0.0
    %v7590 = vmax.f32 %v7560, 0.0
    %v7591 = vmax.f32 %v7565, 0.0
    %v7592 = vmax.f32 %v7570, 0.0
    %v7593 = vmax.f32 %v7575, 0.0
    %v7594 = vld [vmem:[%s7] sm:$0xff]
    %v7595 = vld [vmem:[%s8] sm:$0xff]
    %7597 = vset.pattern.permute.xlu0 0
    %7598 = vperm.xlu0 %7597, %v7595
    %v7599 = vpop.permute.xlu0 %7598
    %7601 = vmatprep.subr.mxu0 0.0
    %7602 = vmatpush1.msra.mxu0 %v7593
    %7603 = vmatprep.subr.mxu0 0.0
    %7604 = vmatpush1.msra.mxu0 %v7592
    %7605 = vmatprep.subr.mxu0 0.0
    %7606 = vmatpush1.msra.mxu0 %v7591
    %7607 = vmatprep.subr.mxu0 0.0
    %7608 = vmatpush1.msra.mxu0 %v7590
    %7609 = vmatprep.subr.mxu0 0.0
    %7610 = vmatpush1.msra.mxu0 %v7589
    %7611 = vmatprep.subr.mxu0 0.0
    %7612 = vmatpush1.msra.mxu0 %v7588
    %7613 = vmatprep.subr.mxu0 0.0
    %7614 = vmatpush1.msra.mxu0 %v7587
    %7615 = vmatprep.subr.mxu0 0.0
    %7616 = vmatpush1.msra.mxu0 %v7586
    %7617 = vmatprep.subr.mxu0 0.0
    %7618 = vmatpush1.msra.mxu0 %v7585
    %7619 = vmatprep.subr.mxu0 0.0
    %7620 = vmatpush1.msra.mxu0 %v7584
    %7621 = vmatprep.subr.mxu0 0.0
    %7622 = vmatpush1.msra.mxu0 %v7583
    %7623 = vmatprep.subr.mxu0 0.0
    %7624 = vmatpush1.msra.mxu0 %v7582
    %7625 = vmatprep.subr.mxu0 0.0
    %7626 = vmatpush1.msra.mxu0 %v7581
    %7627 = vmatprep.subr.mxu0 0.0
    %7628 = vmatpush1.msra.mxu0 %v7580
    %7629 = vmatprep.subr.mxu0 0.0
    %7630 = vmatpush1.msra.mxu0 %v7579
    %7631 = vmatprep.subr.mxu0 0.0
    %7632 = vmatpush1.msra.mxu0 %v7578
    %7633 = vmatprep.subr.mxu0 0.0
    %7634 = vmatpush2.msra.mxu0 0.0
    %7635 = vmatprep.subr.mxu0 0.0
    %7636 = vmatpush2.msra.mxu0 0.0
    %7637 = vmatprep.subr.mxu0 0.0
    %7638 = vmatpush2.msra.mxu0 0.0
    %7639 = vmatprep.subr.mxu0 0.0
    %7640 = vmatpush2.msra.mxu0 0.0
    %7641 = vmatprep.subr.mxu0 0.0
    %7642 = vmatpush2.msra.mxu0 0.0
    %7643 = vmatprep.subr.mxu0 0.0
    %7644 = vmatpush2.msra.mxu0 0.0
    %7645 = vmatprep.subr.mxu0 0.0
    %7646 = vmatpush2.msra.mxu0 0.0
    %7647 = vmatprep.subr.mxu0 0.0
    %7648 = vmatpush2.msra.mxu0 0.0
    %7649 = vmatprep.subr.mxu0 0.0
    %7650 = vmatpush2.msra.mxu0 0.0
    %7651 = vmatprep.subr.mxu0 0.0
    %7652 = vmatpush2.msra.mxu0 0.0
    %7653 = vmatprep.subr.mxu0 0.0
    %7654 = vmatpush2.msra.mxu0 0.0
    %7655 = vmatprep.subr.mxu0 0.0
    %7656 = vmatpush2.msra.mxu0 0.0
    %7657 = vmatprep.subr.mxu0 0.0
    %7658 = vmatpush2.msra.mxu0 0.0
    %7659 = vmatprep.subr.mxu0 0.0
    %7660 = vmatpush2.msra.mxu0 0.0
    %7661 = vmatprep.subr.mxu0 0.0
    %7662 = vmatpush2.msra.mxu0 0.0
    %7663 = vmatprep.subr.mxu0 0.0
    %7664 = vmatpush2.msra.mxu0 0.0
    %7665 = vmatprep.mubr.f32.mxu0 0.0
    %7666 = vmatmul.mubr.f32.gmra.mxu0 %v7594
    %v7667 = vpop.f32.mrf.mxu0
    %v7668 = vadd.f32 %v7599, %v7667
    %v7669 = vpop.f32.mrf.mxu0
    %7670 = vdwg.mxu0
    %7671 = vst [vmem:[#allocation2] sm:$0xff] %v7668
    // Predicated region
    $region38: #{forward.1} parent=1 // pred_check
      _
    $region39: #{forward.1} parent=1 // pred_check_branch
      %7673 = sbr.rel (0) target = $region41
    $region40: #{forward.1} parent=1 // pred_region
      %s7675 = ssub.s32 128, 128
      %7676 = vsyncadd [#allocation3], %s7675
      %s7678 = sshll.u32 [#allocation2], 4
      %s7679 = int_to_ptr.vmem [resolvable:$true] %s7678
      %7681 = dma.vmem_to_hbm [thread:$0]  %s7679, 128, %s9, [#allocation3]
    $region41: #{forward.1} parent=1 // pred_fallthru
      _
    // Predicated region
    $region42: #{forward.1} parent=1 // pred_check
      _
    $region43: #{forward.1} parent=1 // pred_check_branch
      %7683 = sbr.rel (0) target = $region45
    $region44: #{forward.1} parent=1 // pred_region
      %7684 = dma.done [#allocation3], 128
    $region45: #{forward.1} parent=1 // pred_fallthru
      _
    %7685 = vsyncpa [#allocation3], 1

</llo_original>
